<compile_context>
chip_gen: v6e
topology: v6e:2x2x1
jax: 0.10.0
libtpu: 0.0.40
codegen_flags: <defaults>
</compile_context>

<pallas_src>
import functools

import jax
import jax.numpy as jnp
import numpy as np
from jax.experimental import pallas as pl
from jax.experimental.pallas import tpu as pltpu


IN_CH = 3
IN_CHANNELS_LIST = [8, 16, 32]
OUT_CHANNEL = 16
SE_REDUCTION = 4
BODY_STRIDES = [1, 2, 2]


# ----------------------------------------------------------------------------
# Raw (module-style) parameters
# ----------------------------------------------------------------------------
def _dense(key, kin, kout):
    kw, kb = jax.random.split(key)
    return (0.1 * jax.random.normal(kw, (kin, kout), jnp.float32),
            0.01 * jax.random.normal(kb, (kout,), jnp.float32))


def _conv3(key, cin, cout):
    kw, kb = jax.random.split(key)
    return (0.1 * jax.random.normal(kw, (3, 3, cin, cout), jnp.float32),
            0.01 * jax.random.normal(kb, (cout,), jnp.float32))


def init_params(key):
    # TODO(synk): exact AFPN attention variant / backbone not given in the
    #             reference; a 3-stage conv body + SE channel attention is used
    #             (same structure and init as the previous version).
    keys = jax.random.split(key, 16)
    params = {"body": [], "inner": [], "att": [], "layer": []}
    cins = [IN_CH] + IN_CHANNELS_LIST[:-1]
    for i, (ci, co) in enumerate(zip(cins, IN_CHANNELS_LIST)):
        params["body"].append(_conv3(keys[i], ci, co))
    hid = OUT_CHANNEL // SE_REDUCTION
    for i, ci in enumerate(IN_CHANNELS_LIST):
        params["inner"].append(_dense(keys[3 + i], ci, OUT_CHANNEL))
        w1, b1 = _dense(keys[6 + i], OUT_CHANNEL, hid)
        w2, b2 = _dense(keys[9 + i], hid, OUT_CHANNEL)
        params["att"].append({"w1": w1, "b1": b1, "w2": w2, "b2": b2})
        params["layer"].append(_conv3(keys[12 + i], OUT_CHANNEL, OUT_CHANNEL))
    return params


# ----------------------------------------------------------------------------
# One-time parameter packing: every spatial op becomes 2D matmuls against
# constant matrices, so the fused kernel only needs dots/adds/relu/sigmoid.
# Per-image activation layout: X[h, w*C + c].
# ----------------------------------------------------------------------------
def _conv3x3_pack(w, b, h_in, w_in, stride):
    """3x3 conv (pad=1) as  Out = sum_dy RowSel[dy] @ X @ ColMat[dy] + bias."""
    w = np.asarray(w, np.float32)
    b = np.asarray(b, np.float32)
    cin, cout = w.shape[2], w.shape[3]
    h_out = (h_in + 2 - 3) // stride + 1
    w_out = (w_in + 2 - 3) // stride + 1
    rowsel, colmat = [], []
    for dy in range(3):
        rs = np.zeros((h_out, h_in), np.float32)
        for ho in range(h_out):
            hi = stride * ho + dy - 1
            if 0 <= hi < h_in:
                rs[ho, hi] = 1.0
        cm = np.zeros((w_in * cin, w_out * cout), np.float32)
        for wo in range(w_out):
            for dx in range(3):
                wi = stride * wo + dx - 1
                if 0 <= wi < w_in:
                    cm[wi * cin:(wi + 1) * cin,
                       wo * cout:(wo + 1) * cout] = w[dy, dx]
        rowsel.append(jnp.asarray(rs))
        colmat.append(jnp.asarray(cm))
    bias = jnp.asarray(np.tile(b, w_out)[None, :])
    return ({"rowsel": tuple(rowsel), "colmat": tuple(colmat), "bias": bias},
            h_out, w_out)


def _conv1x1_pack(w, b, w_lvl):
    w = np.asarray(w, np.float32)
    b = np.asarray(b, np.float32)
    cin, cout = w.shape
    m = np.zeros((w_lvl * cin, w_lvl * cout), np.float32)
    for wv in range(w_lvl):
        m[wv * cin:(wv + 1) * cin, wv * cout:(wv + 1) * cout] = w
    return {"mat": jnp.asarray(m),
            "bias": jnp.asarray(np.tile(b, w_lvl)[None, :])}


def _attention_pack(att, h_lvl, w_lvl, c):
    poolw = np.zeros((w_lvl * c, c), np.float32)       # global-avg-pool (lanes)
    tilew = np.zeros((c, w_lvl * c), np.float32)       # gate broadcast to lanes
    for wv in range(w_lvl):
        for ch in range(c):
            poolw[wv * c + ch, ch] = 1.0 / float(h_lvl * w_lvl)
            tilew[ch, wv * c + ch] = 1.0
    return {"poolw": jnp.asarray(poolw), "tilew": jnp.asarray(tilew),
            "w1": att["w1"], "b1": att["b1"][None, :],
            "w2": att["w2"], "b2": att["b2"][None, :]}


def _upsample2x_pack(h_c, w_c, c):
    uph = np.zeros((2 * h_c, h_c), np.float32)
    for hc in range(h_c):
        uph[2 * hc, hc] = 1.0
        uph[2 * hc + 1, hc] = 1.0
    upw = np.zeros((w_c * c, 2 * w_c * c), np.float32)
    for wc in range(w_c):
        for ch in range(c):
            upw[wc * c + ch, (2 * wc) * c + ch] = 1.0
            upw[wc * c + ch, (2 * wc + 1) * c + ch] = 1.0
    return {"uph": jnp.asarray(uph), "upw": jnp.asarray(upw)}


def _pool_s2_pack(h_c, w_c, c):
    # F.max_pool2d(k=1, s=2) == stride-2 subsample -> pure selection matrices.
    selh = np.zeros((h_c // 2, h_c), np.float32)
    for ho in range(h_c // 2):
        selh[ho, 2 * ho] = 1.0
    selw = np.zeros((w_c * c, (w_c // 2) * c), np.float32)
    for wo in range(w_c // 2):
        for ch in range(c):
            selw[(2 * wo) * c + ch, wo * c + ch] = 1.0
    return {"selh": jnp.asarray(selh), "selw": jnp.asarray(selw)}


def pack_params(params, height=16, width=16):
    packed = {"body": [], "inner": [], "att": [], "layer": [], "up": [],
              "pool": None}
    hh, ww = height, width
    level_dims = []
    for (w, b), s in zip(params["body"], BODY_STRIDES):
        cp, hh, ww = _conv3x3_pack(w, b, hh, ww, s)
        packed["body"].append(cp)
        level_dims.append((hh, ww))
    for lvl, (hl, wl) in enumerate(level_dims):
        wi, bi = params["inner"][lvl]
        packed["inner"].append(_conv1x1_pack(wi, bi, wl))
        packed["att"].append(_attention_pack(params["att"][lvl], hl, wl,
                                             OUT_CHANNEL))
        wlc, blc = params["layer"][lvl]
        cp, _, _ = _conv3x3_pack(wlc, blc, hl, wl, 1)
        packed["layer"].append(cp)
    # top-down nearest 2x upsample: level 2 -> 1, then level 1 -> 0
    packed["up"].append(_upsample2x_pack(*level_dims[2], OUT_CHANNEL))
    packed["up"].append(_upsample2x_pack(*level_dims[1], OUT_CHANNEL))
    # extra block (MaxpoolOnP5) on the coarsest AFPN result
    packed["pool"] = _pool_s2_pack(*level_dims[2], OUT_CHANNEL)
    return packed


# ----------------------------------------------------------------------------
# The single fused kernel (one grid step == one image, fully VMEM resident)
# ----------------------------------------------------------------------------
def _fused_kernel(*refs, treedef, n_weights):
    x_ref = refs[0]
    w_refs = refs[1:1 + n_weights]
    o_refs = refs[1 + n_weights:]
    p = jax.tree_util.tree_unflatten(treedef, [r[...] for r in w_refs])

    def mm(a, b):
        return jnp.dot(a, b, preferred_element_type=jnp.float32)

    def conv3x3(x2d, cp, relu):
        out = cp["bias"]                                   # (1, Wo*Cout)
        for dy in range(3):
            out = out + mm(mm(cp["rowsel"][dy], x2d), cp["colmat"][dy])
        return jnp.maximum(out, 0.0) if relu else out

    def inner_and_attention(feat2d, ip, ap):
        y = mm(feat2d, ip["mat"]) + ip["bias"]             # 1x1 lateral conv
        gap = mm(jnp.sum(y, axis=0, keepdims=True), ap["poolw"])   # (1, C)
        hid = jnp.maximum(mm(gap, ap["w1"]) + ap["b1"], 0.0)
        gate = jax.nn.sigmoid(mm(hid, ap["w2"]) + ap["b2"])        # (1, C)
        return y * mm(gate, ap["tilew"])                   # SE scale

    # ---- backbone body (IntermediateLayerGetter) ----
    h = x_ref[...]                                         # (H, W*Cin)
    feats = []
    for stage in range(3):
        h = conv3x3(h, p["body"][stage], relu=True)
        feats.append(h)

    # ---- AFPN top-down ----
    last = inner_and_attention(feats[2], p["inner"][2], p["att"][2])
    res2 = conv3x3(last, p["layer"][2], relu=False)

    lat = inner_and_attention(feats[1], p["inner"][1], p["att"][1])
    up = p["up"][0]
    last = lat + mm(mm(up["uph"], last), up["upw"])        # nearest-2x + add
    res1 = conv3x3(last, p["layer"][1], relu=False)

    lat = inner_and_attention(feats[0], p["inner"][0], p["att"][0])
    up = p["up"][1]
    last = lat + mm(mm(up["uph"], last), up["upw"])
    res0 = conv3x3(last, p["layer"][0], relu=False)

    # ---- extra block: MaxpoolOnP5 (k=1, s=2 subsample) ----
    pool = mm(mm(p["pool"]["selh"], res2), p["pool"]["selw"])

    for o_ref, val in zip(o_refs, (res0, res1, res2, pool)):
        o_ref[...] = val.astype(o_ref.dtype)


# ----------------------------------------------------------------------------
# Wrapper
# ----------------------------------------------------------------------------
def backbone_with_afpn_forward(packed, x_nchw):
    n, cin, hh, ww = x_nchw.shape
    x2d = jnp.transpose(x_nchw, (0, 2, 3, 1)).reshape(n, hh, ww * cin)

    flat_w, treedef = jax.tree_util.tree_flatten(packed)
    kernel = functools.partial(_fused_kernel, treedef=treedef,
                               n_weights=len(flat_w))

    # per-level (rows, lanes) output slab shapes from the packed metadata
    slab_shapes = []
    for lvl in range(3):
        slab_shapes.append((packed["layer"][lvl]["rowsel"][0].shape[0],
                            packed["layer"][lvl]["bias"].shape[1]))
    slab_shapes.append((packed["pool"]["selh"].shape[0],
                        packed["pool"]["selw"].shape[1]))

    out_shape = tuple(jax.ShapeDtypeStruct((n, r, c), jnp.float32)
                      for r, c in slab_shapes)
    out_specs = tuple(pl.BlockSpec((None, r, c), lambda i: (i, 0, 0))
                      for r, c in slab_shapes)
    in_specs = ([pl.BlockSpec((None, hh, ww * cin), lambda i: (i, 0, 0))]
                + [pl.BlockSpec(a.shape, lambda i: (0, 0)) for a in flat_w])

    outs = pl.pallas_call(
        kernel,
        out_shape=out_shape,
        grid=(n,),
        in_specs=in_specs,
        out_specs=out_specs,
        compiler_params=pltpu.CompilerParams(
            dimension_semantics=("parallel",)),   # free win on v7x (2 TCs)
    )(x2d, *flat_w)

    # unpack (rows, W*C) slabs back to the module's NCHW output convention
    result = {}
    for name, slab in zip(["0", "1", "2", "pool"], outs):
        nb, r, c = slab.shape
        wsp = c // OUT_CHANNEL
        result[name] = jnp.transpose(slab.reshape(nb, r, wsp, OUT_CHANNEL),
                                     (0, 3, 1, 2))
    return result


# ----------------------------------------------------------------------------
# Plain-JAX reference (non-Pallas) for a numerical cross-check
# ----------------------------------------------------------------------------
def _reference_forward(params, x_nchw):
    def conv3x3(x, w, b, stride, relu):
        y = jax.lax.conv_general_dilated(
            x, w, window_strides=(stride, stride), padding=((1, 1), (1, 1)),
            dimension_numbers=("NHWC", "HWIO", "NHWC"))
        y = y + b
        return jnp.maximum(y, 0.0) if relu else y

    def attention(y, p):
        s = jnp.mean(y, axis=(1, 2))
        hh = jnp.maximum(s @ p["w1"] + p["b1"], 0.0)
        g = jax.nn.sigmoid(hh @ p["w2"] + p["b2"])
        return y * g[:, None, None, :]

    x = jnp.transpose(x_nchw, (0, 2, 3, 1))
    feats = []
    h = x
    for (w, b), s in zip(params["body"], BODY_STRIDES):
        h = conv3x3(h, w, b, s, True)
        feats.append(h)

    def lateral(lvl):
        wi, bi = params["inner"][lvl]
        return attention(feats[lvl] @ wi + bi, params["att"][lvl])

    last = lateral(2)
    results = [None, None, None]
    results[2] = conv3x3(last, *params["layer"][2], 1, False)
    for lvl in (1, 0):
        td = jnp.repeat(jnp.repeat(last, 2, axis=1), 2, axis=2)
        last = lateral(lvl) + td
        results[lvl] = conv3x3(last, *params["layer"][lvl], 1, False)
    pool = results[2][:, ::2, ::2, :]
    out = {"0": results[0], "1": results[1], "2": results[2], "pool": pool}
    return {k: jnp.transpose(v, (0, 3, 1, 2)) for k, v in out.items()}


# ----------------------------------------------------------------------------
if __name__ == "__main__":
    key = jax.random.PRNGKey(0)
    kp, kx = jax.random.split(key)
    params = init_params(kp)
    packed = pack_params(params, height=16, width=16)     # one-time packing

    x = jax.random.normal(kx, (2, IN_CH, 16, 16), jnp.float32)  # NCHW input

    fwd = jax.jit(backbone_with_afpn_forward)
    out = fwd(packed, x)
    jax.block_until_ready(out)

    expected = {"0": (2, OUT_CHANNEL, 16, 16),
                "1": (2, OUT_CHANNEL, 8, 8),
                "2": (2, OUT_CHANNEL, 4, 4),
                "pool": (2, OUT_CHANNEL, 2, 2)}
    assert set(out.keys()) == set(expected.keys())
    for k, shp in expected.items():
        assert out[k].shape == shp, (k, out[k].shape, shp)
        assert bool(jnp.all(jnp.isfinite(out[k]))), k

    # numerical cross-check against the plain-JAX reference of the same module
    ref = _reference_forward(params, x)
    for k in expected:
        err = float(jnp.max(jnp.abs(out[k] - ref[k])))
        assert err < 5e-2, (k, err)

    print("KERNEL_OK")
</pallas_src>

<mosaic_0001>
module attributes {stable_mosaic.version = 11 : i64} {
  func.func @_fused_kernel(%arg0: i32, %arg1: memref<1x16x48xf32, #tpu.memory_space<vmem>>, %arg2: memref<1x4xf32, #tpu.memory_space<vmem>>, %arg3: memref<1x16xf32, #tpu.memory_space<vmem>>, %arg4: memref<256x16xf32, #tpu.memory_space<vmem>>, %arg5: memref<16x256xf32, #tpu.memory_space<vmem>>, %arg6: memref<16x4xf32, #tpu.memory_space<vmem>>, %arg7: memref<4x16xf32, #tpu.memory_space<vmem>>, %arg8: memref<1x4xf32, #tpu.memory_space<vmem>>, %arg9: memref<1x16xf32, #tpu.memory_space<vmem>>, %arg10: memref<128x16xf32, #tpu.memory_space<vmem>>, %arg11: memref<16x128xf32, #tpu.memory_space<vmem>>, %arg12: memref<16x4xf32, #tpu.memory_space<vmem>>, %arg13: memref<4x16xf32, #tpu.memory_space<vmem>>, %arg14: memref<1x4xf32, #tpu.memory_space<vmem>>, %arg15: memref<1x16xf32, #tpu.memory_space<vmem>>, %arg16: memref<64x16xf32, #tpu.memory_space<vmem>>, %arg17: memref<16x64xf32, #tpu.memory_space<vmem>>, %arg18: memref<16x4xf32, #tpu.memory_space<vmem>>, %arg19: memref<4x16xf32, #tpu.memory_space<vmem>>, %arg20: memref<1x128xf32, #tpu.memory_space<vmem>>, %arg21: memref<48x128xf32, #tpu.memory_space<vmem>>, %arg22: memref<48x128xf32, #tpu.memory_space<vmem>>, %arg23: memref<48x128xf32, #tpu.memory_space<vmem>>, %arg24: memref<16x16xf32, #tpu.memory_space<vmem>>, %arg25: memref<16x16xf32, #tpu.memory_space<vmem>>, %arg26: memref<16x16xf32, #tpu.memory_space<vmem>>, %arg27: memref<1x128xf32, #tpu.memory_space<vmem>>, %arg28: memref<128x128xf32, #tpu.memory_space<vmem>>, %arg29: memref<128x128xf32, #tpu.memory_space<vmem>>, %arg30: memref<128x128xf32, #tpu.memory_space<vmem>>, %arg31: memref<8x16xf32, #tpu.memory_space<vmem>>, %arg32: memref<8x16xf32, #tpu.memory_space<vmem>>, %arg33: memref<8x16xf32, #tpu.memory_space<vmem>>, %arg34: memref<1x128xf32, #tpu.memory_space<vmem>>, %arg35: memref<128x128xf32, #tpu.memory_space<vmem>>, %arg36: memref<128x128xf32, #tpu.memory_space<vmem>>, %arg37: memref<128x128xf32, #tpu.memory_space<vmem>>, %arg38: memref<4x8xf32, #tpu.memory_space<vmem>>, %arg39: memref<4x8xf32, #tpu.memory_space<vmem>>, %arg40: memref<4x8xf32, #tpu.memory_space<vmem>>, %arg41: memref<1x256xf32, #tpu.memory_space<vmem>>, %arg42: memref<128x256xf32, #tpu.memory_space<vmem>>, %arg43: memref<1x128xf32, #tpu.memory_space<vmem>>, %arg44: memref<128x128xf32, #tpu.memory_space<vmem>>, %arg45: memref<1x64xf32, #tpu.memory_space<vmem>>, %arg46: memref<128x64xf32, #tpu.memory_space<vmem>>, %arg47: memref<1x256xf32, #tpu.memory_space<vmem>>, %arg48: memref<256x256xf32, #tpu.memory_space<vmem>>, %arg49: memref<256x256xf32, #tpu.memory_space<vmem>>, %arg50: memref<256x256xf32, #tpu.memory_space<vmem>>, %arg51: memref<16x16xf32, #tpu.memory_space<vmem>>, %arg52: memref<16x16xf32, #tpu.memory_space<vmem>>, %arg53: memref<16x16xf32, #tpu.memory_space<vmem>>, %arg54: memref<1x128xf32, #tpu.memory_space<vmem>>, %arg55: memref<128x128xf32, #tpu.memory_space<vmem>>, %arg56: memref<128x128xf32, #tpu.memory_space<vmem>>, %arg57: memref<128x128xf32, #tpu.memory_space<vmem>>, %arg58: memref<8x8xf32, #tpu.memory_space<vmem>>, %arg59: memref<8x8xf32, #tpu.memory_space<vmem>>, %arg60: memref<8x8xf32, #tpu.memory_space<vmem>>, %arg61: memref<1x64xf32, #tpu.memory_space<vmem>>, %arg62: memref<64x64xf32, #tpu.memory_space<vmem>>, %arg63: memref<64x64xf32, #tpu.memory_space<vmem>>, %arg64: memref<64x64xf32, #tpu.memory_space<vmem>>, %arg65: memref<4x4xf32, #tpu.memory_space<vmem>>, %arg66: memref<4x4xf32, #tpu.memory_space<vmem>>, %arg67: memref<4x4xf32, #tpu.memory_space<vmem>>, %arg68: memref<2x4xf32, #tpu.memory_space<vmem>>, %arg69: memref<64x32xf32, #tpu.memory_space<vmem>>, %arg70: memref<8x4xf32, #tpu.memory_space<vmem>>, %arg71: memref<64x128xf32, #tpu.memory_space<vmem>>, %arg72: memref<16x8xf32, #tpu.memory_space<vmem>>, %arg73: memref<128x256xf32, #tpu.memory_space<vmem>>, %arg74: memref<1x16x256xf32, #tpu.memory_space<vmem>>, %arg75: memref<1x8x128xf32, #tpu.memory_space<vmem>>, %arg76: memref<1x4x64xf32, #tpu.memory_space<vmem>>, %arg77: memref<1x2x32xf32, #tpu.memory_space<vmem>>) attributes {dimension_semantics = [#tpu.dimension_semantics<parallel>], iteration_bounds = array<i64: 2>, scalar_prefetch = 0 : i64, scratch_operands = 0 : i64, tpu.core_type = #tpu.core_type<tc>, window_params = [{transform_indices = @transform_0, window_bounds = array<i64: 1, 16, 48>}, {pipeline_mode = #tpu.pipeline_mode<synchronous>, transform_indices = @transform_1, window_bounds = array<i64: 1, 4>}, {pipeline_mode = #tpu.pipeline_mode<synchronous>, transform_indices = @transform_2, window_bounds = array<i64: 1, 16>}, {pipeline_mode = #tpu.pipeline_mode<synchronous>, transform_indices = @transform_3, window_bounds = array<i64: 256, 16>}, {pipeline_mode = #tpu.pipeline_mode<synchronous>, transform_indices = @transform_4, window_bounds = array<i64: 16, 256>}, {pipeline_mode = #tpu.pipeline_mode<synchronous>, transform_indices = @transform_5, window_bounds = array<i64: 16, 4>}, {pipeline_mode = #tpu.pipeline_mode<synchronous>, transform_indices = @transform_6, window_bounds = array<i64: 4, 16>}, {pipeline_mode = #tpu.pipeline_mode<synchronous>, transform_indices = @transform_7, window_bounds = array<i64: 1, 4>}, {pipeline_mode = #tpu.pipeline_mode<synchronous>, transform_indices = @transform_8, window_bounds = array<i64: 1, 16>}, {pipeline_mode = #tpu.pipeline_mode<synchronous>, transform_indices = @transform_9, window_bounds = array<i64: 128, 16>}, {pipeline_mode = #tpu.pipeline_mode<synchronous>, transform_indices = @transform_10, window_bounds = array<i64: 16, 128>}, {pipeline_mode = #tpu.pipeline_mode<synchronous>, transform_indices = @transform_11, window_bounds = array<i64: 16, 4>}, {pipeline_mode = #tpu.pipeline_mode<synchronous>, transform_indices = @transform_12, window_bounds = array<i64: 4, 16>}, {pipeline_mode = #tpu.pipeline_mode<synchronous>, transform_indices = @transform_13, window_bounds = array<i64: 1, 4>}, {pipeline_mode = #tpu.pipeline_mode<synchronous>, transform_indices = @transform_14, window_bounds = array<i64: 1, 16>}, {pipeline_mode = #tpu.pipeline_mode<synchronous>, transform_indices = @transform_15, window_bounds = array<i64: 64, 16>}, {pipeline_mode = #tpu.pipeline_mode<synchronous>, transform_indices = @transform_16, window_bounds = array<i64: 16, 64>}, {pipeline_mode = #tpu.pipeline_mode<synchronous>, transform_indices = @transform_17, window_bounds = array<i64: 16, 4>}, {pipeline_mode = #tpu.pipeline_mode<synchronous>, transform_indices = @transform_18, window_bounds = array<i64: 4, 16>}, {pipeline_mode = #tpu.pipeline_mode<synchronous>, transform_indices = @transform_19, window_bounds = array<i64: 1, 128>}, {pipeline_mode = #tpu.pipeline_mode<synchronous>, transform_indices = @transform_20, window_bounds = array<i64: 48, 128>}, {pipeline_mode = #tpu.pipeline_mode<synchronous>, transform_indices = @transform_21, window_bounds = array<i64: 48, 128>}, {pipeline_mode = #tpu.pipeline_mode<synchronous>, transform_indices = @transform_22, window_bounds = array<i64: 48, 128>}, {pipeline_mode = #tpu.pipeline_mode<synchronous>, transform_indices = @transform_23, window_bounds = array<i64: 16, 16>}, {pipeline_mode = #tpu.pipeline_mode<synchronous>, transform_indices = @transform_24, window_bounds = array<i64: 16, 16>}, {pipeline_mode = #tpu.pipeline_mode<synchronous>, transform_indices = @transform_25, window_bounds = array<i64: 16, 16>}, {pipeline_mode = #tpu.pipeline_mode<synchronous>, transform_indices = @transform_26, window_bounds = array<i64: 1, 128>}, {pipeline_mode = #tpu.pipeline_mode<synchronous>, transform_indices = @transform_27, window_bounds = array<i64: 128, 128>}, {pipeline_mode = #tpu.pipeline_mode<synchronous>, transform_indices = @transform_28, window_bounds = array<i64: 128, 128>}, {pipeline_mode = #tpu.pipeline_mode<synchronous>, transform_indices = @transform_29, window_bounds = array<i64: 128, 128>}, {pipeline_mode = #tpu.pipeline_mode<synchronous>, transform_indices = @transform_30, window_bounds = array<i64: 8, 16>}, {pipeline_mode = #tpu.pipeline_mode<synchronous>, transform_indices = @transform_31, window_bounds = array<i64: 8, 16>}, {pipeline_mode = #tpu.pipeline_mode<synchronous>, transform_indices = @transform_32, window_bounds = array<i64: 8, 16>}, {pipeline_mode = #tpu.pipeline_mode<synchronous>, transform_indices = @transform_33, window_bounds = array<i64: 1, 128>}, {pipeline_mode = #tpu.pipeline_mode<synchronous>, transform_indices = @transform_34, window_bounds = array<i64: 128, 128>}, {pipeline_mode = #tpu.pipeline_mode<synchronous>, transform_indices = @transform_35, window_bounds = array<i64: 128, 128>}, {pipeline_mode = #tpu.pipeline_mode<synchronous>, transform_indices = @transform_36, window_bounds = array<i64: 128, 128>}, {pipeline_mode = #tpu.pipeline_mode<synchronous>, transform_indices = @transform_37, window_bounds = array<i64: 4, 8>}, {pipeline_mode = #tpu.pipeline_mode<synchronous>, transform_indices = @transform_38, window_bounds = array<i64: 4, 8>}, {pipeline_mode = #tpu.pipeline_mode<synchronous>, transform_indices = @transform_39, window_bounds = array<i64: 4, 8>}, {pipeline_mode = #tpu.pipeline_mode<synchronous>, transform_indices = @transform_40, window_bounds = array<i64: 1, 256>}, {pipeline_mode = #tpu.pipeline_mode<synchronous>, transform_indices = @transform_41, window_bounds = array<i64: 128, 256>}, {pipeline_mode = #tpu.pipeline_mode<synchronous>, transform_indices = @transform_42, window_bounds = array<i64: 1, 128>}, {pipeline_mode = #tpu.pipeline_mode<synchronous>, transform_indices = @transform_43, window_bounds = array<i64: 128, 128>}, {pipeline_mode = #tpu.pipeline_mode<synchronous>, transform_indices = @transform_44, window_bounds = array<i64: 1, 64>}, {pipeline_mode = #tpu.pipeline_mode<synchronous>, transform_indices = @transform_45, window_bounds = array<i64: 128, 64>}, {pipeline_mode = #tpu.pipeline_mode<synchronous>, transform_indices = @transform_46, window_bounds = array<i64: 1, 256>}, {pipeline_mode = #tpu.pipeline_mode<synchronous>, transform_indices = @transform_47, window_bounds = array<i64: 256, 256>}, {pipeline_mode = #tpu.pipeline_mode<synchronous>, transform_indices = @transform_48, window_bounds = array<i64: 256, 256>}, {pipeline_mode = #tpu.pipeline_mode<synchronous>, transform_indices = @transform_49, window_bounds = array<i64: 256, 256>}, {pipeline_mode = #tpu.pipeline_mode<synchronous>, transform_indices = @transform_50, window_bounds = array<i64: 16, 16>}, {pipeline_mode = #tpu.pipeline_mode<synchronous>, transform_indices = @transform_51, window_bounds = array<i64: 16, 16>}, {pipeline_mode = #tpu.pipeline_mode<synchronous>, transform_indices = @transform_52, window_bounds = array<i64: 16, 16>}, {pipeline_mode = #tpu.pipeline_mode<synchronous>, transform_indices = @transform_53, window_bounds = array<i64: 1, 128>}, {pipeline_mode = #tpu.pipeline_mode<synchronous>, transform_indices = @transform_54, window_bounds = array<i64: 128, 128>}, {pipeline_mode = #tpu.pipeline_mode<synchronous>, transform_indices = @transform_55, window_bounds = array<i64: 128, 128>}, {pipeline_mode = #tpu.pipeline_mode<synchronous>, transform_indices = @transform_56, window_bounds = array<i64: 128, 128>}, {pipeline_mode = #tpu.pipeline_mode<synchronous>, transform_indices = @transform_57, window_bounds = array<i64: 8, 8>}, {pipeline_mode = #tpu.pipeline_mode<synchronous>, transform_indices = @transform_58, window_bounds = array<i64: 8, 8>}, {pipeline_mode = #tpu.pipeline_mode<synchronous>, transform_indices = @transform_59, window_bounds = array<i64: 8, 8>}, {pipeline_mode = #tpu.pipeline_mode<synchronous>, transform_indices = @transform_60, window_bounds = array<i64: 1, 64>}, {pipeline_mode = #tpu.pipeline_mode<synchronous>, transform_indices = @transform_61, window_bounds = array<i64: 64, 64>}, {pipeline_mode = #tpu.pipeline_mode<synchronous>, transform_indices = @transform_62, window_bounds = array<i64: 64, 64>}, {pipeline_mode = #tpu.pipeline_mode<synchronous>, transform_indices = @transform_63, window_bounds = array<i64: 64, 64>}, {pipeline_mode = #tpu.pipeline_mode<synchronous>, transform_indices = @transform_64, window_bounds = array<i64: 4, 4>}, {pipeline_mode = #tpu.pipeline_mode<synchronous>, transform_indices = @transform_65, window_bounds = array<i64: 4, 4>}, {pipeline_mode = #tpu.pipeline_mode<synchronous>, transform_indices = @transform_66, window_bounds = array<i64: 4, 4>}, {pipeline_mode = #tpu.pipeline_mode<synchronous>, transform_indices = @transform_67, window_bounds = array<i64: 2, 4>}, {pipeline_mode = #tpu.pipeline_mode<synchronous>, transform_indices = @transform_68, window_bounds = array<i64: 64, 32>}, {pipeline_mode = #tpu.pipeline_mode<synchronous>, transform_indices = @transform_69, window_bounds = array<i64: 8, 4>}, {pipeline_mode = #tpu.pipeline_mode<synchronous>, transform_indices = @transform_70, window_bounds = array<i64: 64, 128>}, {pipeline_mode = #tpu.pipeline_mode<synchronous>, transform_indices = @transform_71, window_bounds = array<i64: 16, 8>}, {pipeline_mode = #tpu.pipeline_mode<synchronous>, transform_indices = @transform_72, window_bounds = array<i64: 128, 256>}, {transform_indices = @transform_73, window_bounds = array<i64: 1, 16, 256>}, {transform_indices = @transform_74, window_bounds = array<i64: 1, 8, 128>}, {transform_indices = @transform_75, window_bounds = array<i64: 1, 4, 64>}, {transform_indices = @transform_76, window_bounds = array<i64: 1, 2, 32>}]} {
    %c0 = arith.constant 0 : index
    %c0_0 = arith.constant 0 : index
    %0 = vector.load %arg2[%c0, %c0_0] : memref<1x4xf32, #tpu.memory_space<vmem>>, vector<1x4xf32>
    %c0_1 = arith.constant 0 : index
    %c0_2 = arith.constant 0 : index
    %1 = vector.load %arg3[%c0_1, %c0_2] : memref<1x16xf32, #tpu.memory_space<vmem>>, vector<1x16xf32>
    %c0_3 = arith.constant 0 : index
    %c0_4 = arith.constant 0 : index
    %2 = vector.load %arg4[%c0_3, %c0_4] : memref<256x16xf32, #tpu.memory_space<vmem>>, vector<256x16xf32>
    %c0_5 = arith.constant 0 : index
    %c0_6 = arith.constant 0 : index
    %3 = vector.load %arg5[%c0_5, %c0_6] : memref<16x256xf32, #tpu.memory_space<vmem>>, vector<16x256xf32>
    %c0_7 = arith.constant 0 : index
    %c0_8 = arith.constant 0 : index
    %4 = vector.load %arg6[%c0_7, %c0_8] : memref<16x4xf32, #tpu.memory_space<vmem>>, vector<16x4xf32>
    %c0_9 = arith.constant 0 : index
    %c0_10 = arith.constant 0 : index
    %5 = vector.load %arg7[%c0_9, %c0_10] : memref<4x16xf32, #tpu.memory_space<vmem>>, vector<4x16xf32>
    %c0_11 = arith.constant 0 : index
    %c0_12 = arith.constant 0 : index
    %6 = vector.load %arg8[%c0_11, %c0_12] : memref<1x4xf32, #tpu.memory_space<vmem>>, vector<1x4xf32>
    %c0_13 = arith.constant 0 : index
    %c0_14 = arith.constant 0 : index
    %7 = vector.load %arg9[%c0_13, %c0_14] : memref<1x16xf32, #tpu.memory_space<vmem>>, vector<1x16xf32>
    %c0_15 = arith.constant 0 : index
    %c0_16 = arith.constant 0 : index
    %8 = vector.load %arg10[%c0_15, %c0_16] : memref<128x16xf32, #tpu.memory_space<vmem>>, vector<128x16xf32>
    %c0_17 = arith.constant 0 : index
    %c0_18 = arith.constant 0 : index
    %9 = vector.load %arg11[%c0_17, %c0_18] : memref<16x128xf32, #tpu.memory_space<vmem>>, vector<16x128xf32>
    %c0_19 = arith.constant 0 : index
    %c0_20 = arith.constant 0 : index
    %10 = vector.load %arg12[%c0_19, %c0_20] : memref<16x4xf32, #tpu.memory_space<vmem>>, vector<16x4xf32>
    %c0_21 = arith.constant 0 : index
    %c0_22 = arith.constant 0 : index
    %11 = vector.load %arg13[%c0_21, %c0_22] : memref<4x16xf32, #tpu.memory_space<vmem>>, vector<4x16xf32>
    %c0_23 = arith.constant 0 : index
    %c0_24 = arith.constant 0 : index
    %12 = vector.load %arg14[%c0_23, %c0_24] : memref<1x4xf32, #tpu.memory_space<vmem>>, vector<1x4xf32>
    %c0_25 = arith.constant 0 : index
    %c0_26 = arith.constant 0 : index
    %13 = vector.load %arg15[%c0_25, %c0_26] : memref<1x16xf32, #tpu.memory_space<vmem>>, vector<1x16xf32>
    %c0_27 = arith.constant 0 : index
    %c0_28 = arith.constant 0 : index
    %14 = vector.load %arg16[%c0_27, %c0_28] : memref<64x16xf32, #tpu.memory_space<vmem>>, vector<64x16xf32>
    %c0_29 = arith.constant 0 : index
    %c0_30 = arith.constant 0 : index
    %15 = vector.load %arg17[%c0_29, %c0_30] : memref<16x64xf32, #tpu.memory_space<vmem>>, vector<16x64xf32>
    %c0_31 = arith.constant 0 : index
    %c0_32 = arith.constant 0 : index
    %16 = vector.load %arg18[%c0_31, %c0_32] : memref<16x4xf32, #tpu.memory_space<vmem>>, vector<16x4xf32>
    %c0_33 = arith.constant 0 : index
    %c0_34 = arith.constant 0 : index
    %17 = vector.load %arg19[%c0_33, %c0_34] : memref<4x16xf32, #tpu.memory_space<vmem>>, vector<4x16xf32>
    %c0_35 = arith.constant 0 : index
    %c0_36 = arith.constant 0 : index
    %18 = vector.load %arg20[%c0_35, %c0_36] : memref<1x128xf32, #tpu.memory_space<vmem>>, vector<1x128xf32>
    %c0_37 = arith.constant 0 : index
    %c0_38 = arith.constant 0 : index
    %19 = vector.load %arg21[%c0_37, %c0_38] : memref<48x128xf32, #tpu.memory_space<vmem>>, vector<48x128xf32>
    %c0_39 = arith.constant 0 : index
    %c0_40 = arith.constant 0 : index
    %20 = vector.load %arg22[%c0_39, %c0_40] : memref<48x128xf32, #tpu.memory_space<vmem>>, vector<48x128xf32>
    %c0_41 = arith.constant 0 : index
    %c0_42 = arith.constant 0 : index
    %21 = vector.load %arg23[%c0_41, %c0_42] : memref<48x128xf32, #tpu.memory_space<vmem>>, vector<48x128xf32>
    %c0_43 = arith.constant 0 : index
    %c0_44 = arith.constant 0 : index
    %22 = vector.load %arg24[%c0_43, %c0_44] : memref<16x16xf32, #tpu.memory_space<vmem>>, vector<16x16xf32>
    %c0_45 = arith.constant 0 : index
    %c0_46 = arith.constant 0 : index
    %23 = vector.load %arg25[%c0_45, %c0_46] : memref<16x16xf32, #tpu.memory_space<vmem>>, vector<16x16xf32>
    %c0_47 = arith.constant 0 : index
    %c0_48 = arith.constant 0 : index
    %24 = vector.load %arg26[%c0_47, %c0_48] : memref<16x16xf32, #tpu.memory_space<vmem>>, vector<16x16xf32>
    %c0_49 = arith.constant 0 : index
    %c0_50 = arith.constant 0 : index
    %25 = vector.load %arg27[%c0_49, %c0_50] : memref<1x128xf32, #tpu.memory_space<vmem>>, vector<1x128xf32>
    %c0_51 = arith.constant 0 : index
    %c0_52 = arith.constant 0 : index
    %26 = vector.load %arg28[%c0_51, %c0_52] : memref<128x128xf32, #tpu.memory_space<vmem>>, vector<128x128xf32>
    %c0_53 = arith.constant 0 : index
    %c0_54 = arith.constant 0 : index
    %27 = vector.load %arg29[%c0_53, %c0_54] : memref<128x128xf32, #tpu.memory_space<vmem>>, vector<128x128xf32>
    %c0_55 = arith.constant 0 : index
    %c0_56 = arith.constant 0 : index
    %28 = vector.load %arg30[%c0_55, %c0_56] : memref<128x128xf32, #tpu.memory_space<vmem>>, vector<128x128xf32>
    %c0_57 = arith.constant 0 : index
    %c0_58 = arith.constant 0 : index
    %29 = vector.load %arg31[%c0_57, %c0_58] : memref<8x16xf32, #tpu.memory_space<vmem>>, vector<8x16xf32>
    %c0_59 = arith.constant 0 : index
    %c0_60 = arith.constant 0 : index
    %30 = vector.load %arg32[%c0_59, %c0_60] : memref<8x16xf32, #tpu.memory_space<vmem>>, vector<8x16xf32>
    %c0_61 = arith.constant 0 : index
    %c0_62 = arith.constant 0 : index
    %31 = vector.load %arg33[%c0_61, %c0_62] : memref<8x16xf32, #tpu.memory_space<vmem>>, vector<8x16xf32>
    %c0_63 = arith.constant 0 : index
    %c0_64 = arith.constant 0 : index
    %32 = vector.load %arg34[%c0_63, %c0_64] : memref<1x128xf32, #tpu.memory_space<vmem>>, vector<1x128xf32>
    %c0_65 = arith.constant 0 : index
    %c0_66 = arith.constant 0 : index
    %33 = vector.load %arg35[%c0_65, %c0_66] : memref<128x128xf32, #tpu.memory_space<vmem>>, vector<128x128xf32>
    %c0_67 = arith.constant 0 : index
    %c0_68 = arith.constant 0 : index
    %34 = vector.load %arg36[%c0_67, %c0_68] : memref<128x128xf32, #tpu.memory_space<vmem>>, vector<128x128xf32>
    %c0_69 = arith.constant 0 : index
    %c0_70 = arith.constant 0 : index
    %35 = vector.load %arg37[%c0_69, %c0_70] : memref<128x128xf32, #tpu.memory_space<vmem>>, vector<128x128xf32>
    %c0_71 = arith.constant 0 : index
    %c0_72 = arith.constant 0 : index
    %36 = vector.load %arg38[%c0_71, %c0_72] : memref<4x8xf32, #tpu.memory_space<vmem>>, vector<4x8xf32>
    %c0_73 = arith.constant 0 : index
    %c0_74 = arith.constant 0 : index
    %37 = vector.load %arg39[%c0_73, %c0_74] : memref<4x8xf32, #tpu.memory_space<vmem>>, vector<4x8xf32>
    %c0_75 = arith.constant 0 : index
    %c0_76 = arith.constant 0 : index
    %38 = vector.load %arg40[%c0_75, %c0_76] : memref<4x8xf32, #tpu.memory_space<vmem>>, vector<4x8xf32>
    %c0_77 = arith.constant 0 : index
    %c0_78 = arith.constant 0 : index
    %39 = vector.load %arg41[%c0_77, %c0_78] : memref<1x256xf32, #tpu.memory_space<vmem>>, vector<1x256xf32>
    %c0_79 = arith.constant 0 : index
    %c0_80 = arith.constant 0 : index
    %40 = vector.load %arg42[%c0_79, %c0_80] : memref<128x256xf32, #tpu.memory_space<vmem>>, vector<128x256xf32>
    %c0_81 = arith.constant 0 : index
    %c0_82 = arith.constant 0 : index
    %41 = vector.load %arg43[%c0_81, %c0_82] : memref<1x128xf32, #tpu.memory_space<vmem>>, vector<1x128xf32>
    %c0_83 = arith.constant 0 : index
    %c0_84 = arith.constant 0 : index
    %42 = vector.load %arg44[%c0_83, %c0_84] : memref<128x128xf32, #tpu.memory_space<vmem>>, vector<128x128xf32>
    %c0_85 = arith.constant 0 : index
    %c0_86 = arith.constant 0 : index
    %43 = vector.load %arg45[%c0_85, %c0_86] : memref<1x64xf32, #tpu.memory_space<vmem>>, vector<1x64xf32>
    %c0_87 = arith.constant 0 : index
    %c0_88 = arith.constant 0 : index
    %44 = vector.load %arg46[%c0_87, %c0_88] : memref<128x64xf32, #tpu.memory_space<vmem>>, vector<128x64xf32>
    %c0_89 = arith.constant 0 : index
    %c0_90 = arith.constant 0 : index
    %45 = vector.load %arg47[%c0_89, %c0_90] : memref<1x256xf32, #tpu.memory_space<vmem>>, vector<1x256xf32>
    %c0_91 = arith.constant 0 : index
    %c0_92 = arith.constant 0 : index
    %46 = vector.load %arg48[%c0_91, %c0_92] : memref<256x256xf32, #tpu.memory_space<vmem>>, vector<256x256xf32>
    %c0_93 = arith.constant 0 : index
    %c0_94 = arith.constant 0 : index
    %47 = vector.load %arg49[%c0_93, %c0_94] : memref<256x256xf32, #tpu.memory_space<vmem>>, vector<256x256xf32>
    %c0_95 = arith.constant 0 : index
    %c0_96 = arith.constant 0 : index
    %48 = vector.load %arg50[%c0_95, %c0_96] : memref<256x256xf32, #tpu.memory_space<vmem>>, vector<256x256xf32>
    %c0_97 = arith.constant 0 : index
    %c0_98 = arith.constant 0 : index
    %49 = vector.load %arg51[%c0_97, %c0_98] : memref<16x16xf32, #tpu.memory_space<vmem>>, vector<16x16xf32>
    %c0_99 = arith.constant 0 : index
    %c0_100 = arith.constant 0 : index
    %50 = vector.load %arg52[%c0_99, %c0_100] : memref<16x16xf32, #tpu.memory_space<vmem>>, vector<16x16xf32>
    %c0_101 = arith.constant 0 : index
    %c0_102 = arith.constant 0 : index
    %51 = vector.load %arg53[%c0_101, %c0_102] : memref<16x16xf32, #tpu.memory_space<vmem>>, vector<16x16xf32>
    %c0_103 = arith.constant 0 : index
    %c0_104 = arith.constant 0 : index
    %52 = vector.load %arg54[%c0_103, %c0_104] : memref<1x128xf32, #tpu.memory_space<vmem>>, vector<1x128xf32>
    %c0_105 = arith.constant 0 : index
    %c0_106 = arith.constant 0 : index
    %53 = vector.load %arg55[%c0_105, %c0_106] : memref<128x128xf32, #tpu.memory_space<vmem>>, vector<128x128xf32>
    %c0_107 = arith.constant 0 : index
    %c0_108 = arith.constant 0 : index
    %54 = vector.load %arg56[%c0_107, %c0_108] : memref<128x128xf32, #tpu.memory_space<vmem>>, vector<128x128xf32>
    %c0_109 = arith.constant 0 : index
    %c0_110 = arith.constant 0 : index
    %55 = vector.load %arg57[%c0_109, %c0_110] : memref<128x128xf32, #tpu.memory_space<vmem>>, vector<128x128xf32>
    %c0_111 = arith.constant 0 : index
    %c0_112 = arith.constant 0 : index
    %56 = vector.load %arg58[%c0_111, %c0_112] : memref<8x8xf32, #tpu.memory_space<vmem>>, vector<8x8xf32>
    %c0_113 = arith.constant 0 : index
    %c0_114 = arith.constant 0 : index
    %57 = vector.load %arg59[%c0_113, %c0_114] : memref<8x8xf32, #tpu.memory_space<vmem>>, vector<8x8xf32>
    %c0_115 = arith.constant 0 : index
    %c0_116 = arith.constant 0 : index
    %58 = vector.load %arg60[%c0_115, %c0_116] : memref<8x8xf32, #tpu.memory_space<vmem>>, vector<8x8xf32>
    %c0_117 = arith.constant 0 : index
    %c0_118 = arith.constant 0 : index
    %59 = vector.load %arg61[%c0_117, %c0_118] : memref<1x64xf32, #tpu.memory_space<vmem>>, vector<1x64xf32>
    %c0_119 = arith.constant 0 : index
    %c0_120 = arith.constant 0 : index
    %60 = vector.load %arg62[%c0_119, %c0_120] : memref<64x64xf32, #tpu.memory_space<vmem>>, vector<64x64xf32>
    %c0_121 = arith.constant 0 : index
    %c0_122 = arith.constant 0 : index
    %61 = vector.load %arg63[%c0_121, %c0_122] : memref<64x64xf32, #tpu.memory_space<vmem>>, vector<64x64xf32>
    %c0_123 = arith.constant 0 : index
    %c0_124 = arith.constant 0 : index
    %62 = vector.load %arg64[%c0_123, %c0_124] : memref<64x64xf32, #tpu.memory_space<vmem>>, vector<64x64xf32>
    %c0_125 = arith.constant 0 : index
    %c0_126 = arith.constant 0 : index
    %63 = vector.load %arg65[%c0_125, %c0_126] : memref<4x4xf32, #tpu.memory_space<vmem>>, vector<4x4xf32>
    %c0_127 = arith.constant 0 : index
    %c0_128 = arith.constant 0 : index
    %64 = vector.load %arg66[%c0_127, %c0_128] : memref<4x4xf32, #tpu.memory_space<vmem>>, vector<4x4xf32>
    %c0_129 = arith.constant 0 : index
    %c0_130 = arith.constant 0 : index
    %65 = vector.load %arg67[%c0_129, %c0_130] : memref<4x4xf32, #tpu.memory_space<vmem>>, vector<4x4xf32>
    %c0_131 = arith.constant 0 : index
    %c0_132 = arith.constant 0 : index
    %66 = vector.load %arg68[%c0_131, %c0_132] : memref<2x4xf32, #tpu.memory_space<vmem>>, vector<2x4xf32>
    %c0_133 = arith.constant 0 : index
    %c0_134 = arith.constant 0 : index
    %67 = vector.load %arg69[%c0_133, %c0_134] : memref<64x32xf32, #tpu.memory_space<vmem>>, vector<64x32xf32>
    %c0_135 = arith.constant 0 : index
    %c0_136 = arith.constant 0 : index
    %68 = vector.load %arg70[%c0_135, %c0_136] : memref<8x4xf32, #tpu.memory_space<vmem>>, vector<8x4xf32>
    %c0_137 = arith.constant 0 : index
    %c0_138 = arith.constant 0 : index
    %69 = vector.load %arg71[%c0_137, %c0_138] : memref<64x128xf32, #tpu.memory_space<vmem>>, vector<64x128xf32>
    %c0_139 = arith.constant 0 : index
    %c0_140 = arith.constant 0 : index
    %70 = vector.load %arg72[%c0_139, %c0_140] : memref<16x8xf32, #tpu.memory_space<vmem>>, vector<16x8xf32>
    %c0_141 = arith.constant 0 : index
    %c0_142 = arith.constant 0 : index
    %71 = vector.load %arg73[%c0_141, %c0_142] : memref<128x256xf32, #tpu.memory_space<vmem>>, vector<128x256xf32>
    %c0_143 = arith.constant 0 : index
    %c0_144 = arith.constant 0 : index
    %c0_145 = arith.constant 0 : index
    %72 = vector.load %arg1[%c0_143, %c0_144, %c0_145] : memref<1x16x48xf32, #tpu.memory_space<vmem>>, vector<1x16x48xf32>
    %73 = vector.shape_cast %72 : vector<1x16x48xf32> to vector<16x48xf32>
    %cst = arith.constant dense<0.000000e+00> : vector<16x48xf32>
    %74 = tpu.matmul %22, %73, %cst {dimension_numbers = #tpu.dot_dimension_numbers<[1], [0], [0], [1], [0, 0, 1, 1], [], []>} : vector<16x16xf32>, vector<16x48xf32>, vector<16x48xf32> -> vector<16x48xf32>
    %cst_146 = arith.constant dense<0.000000e+00> : vector<16x128xf32>
    %75 = tpu.matmul %74, %19, %cst_146 {dimension_numbers = #tpu.dot_dimension_numbers<[1], [0], [0], [1], [0, 0, 1, 1], [], []>} : vector<16x48xf32>, vector<48x128xf32>, vector<16x128xf32> -> vector<16x128xf32>
    %76 = vector.broadcast %18 : vector<1x128xf32> to vector<16x128xf32>
    %77 = arith.addf %76, %75 : vector<16x128xf32>
    %cst_147 = arith.constant dense<0.000000e+00> : vector<16x48xf32>
    %78 = tpu.matmul %23, %73, %cst_147 {dimension_numbers = #tpu.dot_dimension_numbers<[1], [0], [0], [1], [0, 0, 1, 1], [], []>} : vector<16x16xf32>, vector<16x48xf32>, vector<16x48xf32> -> vector<16x48xf32>
    %cst_148 = arith.constant dense<0.000000e+00> : vector<16x128xf32>
    %79 = tpu.matmul %78, %20, %cst_148 {dimension_numbers = #tpu.dot_dimension_numbers<[1], [0], [0], [1], [0, 0, 1, 1], [], []>} : vector<16x48xf32>, vector<48x128xf32>, vector<16x128xf32> -> vector<16x128xf32>
    %80 = arith.addf %77, %79 : vector<16x128xf32>
    %cst_149 = arith.constant dense<0.000000e+00> : vector<16x48xf32>
    %81 = tpu.matmul %24, %73, %cst_149 {dimension_numbers = #tpu.dot_dimension_numbers<[1], [0], [0], [1], [0, 0, 1, 1], [], []>} : vector<16x16xf32>, vector<16x48xf32>, vector<16x48xf32> -> vector<16x48xf32>
    %cst_150 = arith.constant dense<0.000000e+00> : vector<16x128xf32>
    %82 = tpu.matmul %81, %21, %cst_150 {dimension_numbers = #tpu.dot_dimension_numbers<[1], [0], [0], [1], [0, 0, 1, 1], [], []>} : vector<16x48xf32>, vector<48x128xf32>, vector<16x128xf32> -> vector<16x128xf32>
    %83 = arith.addf %80, %82 : vector<16x128xf32>
    %cst_151 = arith.constant 0.000000e+00 : f32
    %84 = vector.broadcast %cst_151 : f32 to vector<16x128xf32>
    %85 = arith.maximumf %83, %84 : vector<16x128xf32>
    %cst_152 = arith.constant dense<0.000000e+00> : vector<8x128xf32>
    %86 = tpu.matmul %29, %85, %cst_152 {dimension_numbers = #tpu.dot_dimension_numbers<[1], [0], [0], [1], [0, 0, 1, 1], [], []>} : vector<8x16xf32>, vector<16x128xf32>, vector<8x128xf32> -> vector<8x128xf32>
    %cst_153 = arith.constant dense<0.000000e+00> : vector<8x128xf32>
    %87 = tpu.matmul %86, %26, %cst_153 {dimension_numbers = #tpu.dot_dimension_numbers<[1], [0], [0], [1], [0, 0, 1, 1], [], []>} : vector<8x128xf32>, vector<128x128xf32>, vector<8x128xf32> -> vector<8x128xf32>
    %88 = vector.broadcast %25 : vector<1x128xf32> to vector<8x128xf32>
    %89 = arith.addf %88, %87 : vector<8x128xf32>
    %cst_154 = arith.constant dense<0.000000e+00> : vector<8x128xf32>
    %90 = tpu.matmul %30, %85, %cst_154 {dimension_numbers = #tpu.dot_dimension_numbers<[1], [0], [0], [1], [0, 0, 1, 1], [], []>} : vector<8x16xf32>, vector<16x128xf32>, vector<8x128xf32> -> vector<8x128xf32>
    %cst_155 = arith.constant dense<0.000000e+00> : vector<8x128xf32>
    %91 = tpu.matmul %90, %27, %cst_155 {dimension_numbers = #tpu.dot_dimension_numbers<[1], [0], [0], [1], [0, 0, 1, 1], [], []>} : vector<8x128xf32>, vector<128x128xf32>, vector<8x128xf32> -> vector<8x128xf32>
    %92 = arith.addf %89, %91 : vector<8x128xf32>
    %cst_156 = arith.constant dense<0.000000e+00> : vector<8x128xf32>
    %93 = tpu.matmul %31, %85, %cst_156 {dimension_numbers = #tpu.dot_dimension_numbers<[1], [0], [0], [1], [0, 0, 1, 1], [], []>} : vector<8x16xf32>, vector<16x128xf32>, vector<8x128xf32> -> vector<8x128xf32>
    %cst_157 = arith.constant dense<0.000000e+00> : vector<8x128xf32>
    %94 = tpu.matmul %93, %28, %cst_157 {dimension_numbers = #tpu.dot_dimension_numbers<[1], [0], [0], [1], [0, 0, 1, 1], [], []>} : vector<8x128xf32>, vector<128x128xf32>, vector<8x128xf32> -> vector<8x128xf32>
    %95 = arith.addf %92, %94 : vector<8x128xf32>
    %cst_158 = arith.constant 0.000000e+00 : f32
    %96 = vector.broadcast %cst_158 : f32 to vector<8x128xf32>
    %97 = arith.maximumf %95, %96 : vector<8x128xf32>
    %cst_159 = arith.constant dense<0.000000e+00> : vector<4x128xf32>
    %98 = tpu.matmul %36, %97, %cst_159 {dimension_numbers = #tpu.dot_dimension_numbers<[1], [0], [0], [1], [0, 0, 1, 1], [], []>} : vector<4x8xf32>, vector<8x128xf32>, vector<4x128xf32> -> vector<4x128xf32>
    %cst_160 = arith.constant dense<0.000000e+00> : vector<4x128xf32>
    %99 = tpu.matmul %98, %33, %cst_160 {dimension_numbers = #tpu.dot_dimension_numbers<[1], [0], [0], [1], [0, 0, 1, 1], [], []>} : vector<4x128xf32>, vector<128x128xf32>, vector<4x128xf32> -> vector<4x128xf32>
    %100 = vector.broadcast %32 : vector<1x128xf32> to vector<4x128xf32>
    %101 = arith.addf %100, %99 : vector<4x128xf32>
    %cst_161 = arith.constant dense<0.000000e+00> : vector<4x128xf32>
    %102 = tpu.matmul %37, %97, %cst_161 {dimension_numbers = #tpu.dot_dimension_numbers<[1], [0], [0], [1], [0, 0, 1, 1], [], []>} : vector<4x8xf32>, vector<8x128xf32>, vector<4x128xf32> -> vector<4x128xf32>
    %cst_162 = arith.constant dense<0.000000e+00> : vector<4x128xf32>
    %103 = tpu.matmul %102, %34, %cst_162 {dimension_numbers = #tpu.dot_dimension_numbers<[1], [0], [0], [1], [0, 0, 1, 1], [], []>} : vector<4x128xf32>, vector<128x128xf32>, vector<4x128xf32> -> vector<4x128xf32>
    %104 = arith.addf %101, %103 : vector<4x128xf32>
    %cst_163 = arith.constant dense<0.000000e+00> : vector<4x128xf32>
    %105 = tpu.matmul %38, %97, %cst_163 {dimension_numbers = #tpu.dot_dimension_numbers<[1], [0], [0], [1], [0, 0, 1, 1], [], []>} : vector<4x8xf32>, vector<8x128xf32>, vector<4x128xf32> -> vector<4x128xf32>
    %cst_164 = arith.constant dense<0.000000e+00> : vector<4x128xf32>
    %106 = tpu.matmul %105, %35, %cst_164 {dimension_numbers = #tpu.dot_dimension_numbers<[1], [0], [0], [1], [0, 0, 1, 1], [], []>} : vector<4x128xf32>, vector<128x128xf32>, vector<4x128xf32> -> vector<4x128xf32>
    %107 = arith.addf %104, %106 : vector<4x128xf32>
    %cst_165 = arith.constant 0.000000e+00 : f32
    %108 = vector.broadcast %cst_165 : f32 to vector<4x128xf32>
    %109 = arith.maximumf %107, %108 : vector<4x128xf32>
    %cst_166 = arith.constant dense<0.000000e+00> : vector<4x64xf32>
    %110 = tpu.matmul %109, %44, %cst_166 {dimension_numbers = #tpu.dot_dimension_numbers<[1], [0], [0], [1], [0, 0, 1, 1], [], []>} : vector<4x128xf32>, vector<128x64xf32>, vector<4x64xf32> -> vector<4x64xf32>
    %111 = vector.broadcast %43 : vector<1x64xf32> to vector<4x64xf32>
    %112 = arith.addf %110, %111 : vector<4x64xf32>
    %cst_167 = arith.constant dense<0.000000e+00> : vector<64xf32>
    %113 = vector.multi_reduction <add>, %112, %cst_167 [0] : vector<4x64xf32> to vector<64xf32>
    %114 = vector.shape_cast %113 : vector<64xf32> to vector<1x64xf32>
    %cst_168 = arith.constant dense<0.000000e+00> : vector<1x16xf32>
    %115 = tpu.matmul %114, %14, %cst_168 {dimension_numbers = #tpu.dot_dimension_numbers<[1], [0], [0], [1], [0, 0, 1, 1], [], []>} : vector<1x64xf32>, vector<64x16xf32>, vector<1x16xf32> -> vector<1x16xf32>
    %cst_169 = arith.constant dense<0.000000e+00> : vector<1x4xf32>
    %116 = tpu.matmul %115, %16, %cst_169 {dimension_numbers = #tpu.dot_dimension_numbers<[1], [0], [0], [1], [0, 0, 1, 1], [], []>} : vector<1x16xf32>, vector<16x4xf32>, vector<1x4xf32> -> vector<1x4xf32>
    %117 = arith.addf %116, %12 : vector<1x4xf32>
    %cst_170 = arith.constant 0.000000e+00 : f32
    %118 = vector.broadcast %cst_170 : f32 to vector<1x4xf32>
    %119 = arith.maximumf %117, %118 : vector<1x4xf32>
    %cst_171 = arith.constant dense<0.000000e+00> : vector<1x16xf32>
    %120 = tpu.matmul %119, %17, %cst_171 {dimension_numbers = #tpu.dot_dimension_numbers<[1], [0], [0], [1], [0, 0, 1, 1], [], []>} : vector<1x4xf32>, vector<4x16xf32>, vector<1x16xf32> -> vector<1x16xf32>
    %121 = arith.addf %120, %13 : vector<1x16xf32>
    %122 = arith.negf %121 : vector<1x16xf32>
    %123 = math.exp %122 : vector<1x16xf32>
    %cst_172 = arith.constant 1.000000e+00 : f32
    %124 = vector.broadcast %cst_172 : f32 to vector<1x16xf32>
    %125 = arith.addf %124, %123 : vector<1x16xf32>
    %126 = arith.divf %124, %125 : vector<1x16xf32>
    %cst_173 = arith.constant dense<0.000000e+00> : vector<1x64xf32>
    %127 = tpu.matmul %126, %15, %cst_173 {dimension_numbers = #tpu.dot_dimension_numbers<[1], [0], [0], [1], [0, 0, 1, 1], [], []>} : vector<1x16xf32>, vector<16x64xf32>, vector<1x64xf32> -> vector<1x64xf32>
    %128 = vector.broadcast %127 : vector<1x64xf32> to vector<4x64xf32>
    %129 = arith.mulf %112, %128 : vector<4x64xf32>
    %cst_174 = arith.constant dense<0.000000e+00> : vector<4x64xf32>
    %130 = tpu.matmul %63, %129, %cst_174 {dimension_numbers = #tpu.dot_dimension_numbers<[1], [0], [0], [1], [0, 0, 1, 1], [], []>} : vector<4x4xf32>, vector<4x64xf32>, vector<4x64xf32> -> vector<4x64xf32>
    %cst_175 = arith.constant dense<0.000000e+00> : vector<4x64xf32>
    %131 = tpu.matmul %130, %60, %cst_175 {dimension_numbers = #tpu.dot_dimension_numbers<[1], [0], [0], [1], [0, 0, 1, 1], [], []>} : vector<4x64xf32>, vector<64x64xf32>, vector<4x64xf32> -> vector<4x64xf32>
    %132 = vector.broadcast %59 : vector<1x64xf32> to vector<4x64xf32>
    %133 = arith.addf %132, %131 : vector<4x64xf32>
    %cst_176 = arith.constant dense<0.000000e+00> : vector<4x64xf32>
    %134 = tpu.matmul %64, %129, %cst_176 {dimension_numbers = #tpu.dot_dimension_numbers<[1], [0], [0], [1], [0, 0, 1, 1], [], []>} : vector<4x4xf32>, vector<4x64xf32>, vector<4x64xf32> -> vector<4x64xf32>
    %cst_177 = arith.constant dense<0.000000e+00> : vector<4x64xf32>
    %135 = tpu.matmul %134, %61, %cst_177 {dimension_numbers = #tpu.dot_dimension_numbers<[1], [0], [0], [1], [0, 0, 1, 1], [], []>} : vector<4x64xf32>, vector<64x64xf32>, vector<4x64xf32> -> vector<4x64xf32>
    %136 = arith.addf %133, %135 : vector<4x64xf32>
    %cst_178 = arith.constant dense<0.000000e+00> : vector<4x64xf32>
    %137 = tpu.matmul %65, %129, %cst_178 {dimension_numbers = #tpu.dot_dimension_numbers<[1], [0], [0], [1], [0, 0, 1, 1], [], []>} : vector<4x4xf32>, vector<4x64xf32>, vector<4x64xf32> -> vector<4x64xf32>
    %cst_179 = arith.constant dense<0.000000e+00> : vector<4x64xf32>
    %138 = tpu.matmul %137, %62, %cst_179 {dimension_numbers = #tpu.dot_dimension_numbers<[1], [0], [0], [1], [0, 0, 1, 1], [], []>} : vector<4x64xf32>, vector<64x64xf32>, vector<4x64xf32> -> vector<4x64xf32>
    %139 = arith.addf %136, %138 : vector<4x64xf32>
    %cst_180 = arith.constant dense<0.000000e+00> : vector<8x128xf32>
    %140 = tpu.matmul %97, %42, %cst_180 {dimension_numbers = #tpu.dot_dimension_numbers<[1], [0], [0], [1], [0, 0, 1, 1], [], []>} : vector<8x128xf32>, vector<128x128xf32>, vector<8x128xf32> -> vector<8x128xf32>
    %141 = vector.broadcast %41 : vector<1x128xf32> to vector<8x128xf32>
    %142 = arith.addf %140, %141 : vector<8x128xf32>
    %cst_181 = arith.constant dense<0.000000e+00> : vector<128xf32>
    %143 = vector.multi_reduction <add>, %142, %cst_181 [0] : vector<8x128xf32> to vector<128xf32>
    %144 = vector.shape_cast %143 : vector<128xf32> to vector<1x128xf32>
    %cst_182 = arith.constant dense<0.000000e+00> : vector<1x16xf32>
    %145 = tpu.matmul %144, %8, %cst_182 {dimension_numbers = #tpu.dot_dimension_numbers<[1], [0], [0], [1], [0, 0, 1, 1], [], []>} : vector<1x128xf32>, vector<128x16xf32>, vector<1x16xf32> -> vector<1x16xf32>
    %cst_183 = arith.constant dense<0.000000e+00> : vector<1x4xf32>
    %146 = tpu.matmul %145, %10, %cst_183 {dimension_numbers = #tpu.dot_dimension_numbers<[1], [0], [0], [1], [0, 0, 1, 1], [], []>} : vector<1x16xf32>, vector<16x4xf32>, vector<1x4xf32> -> vector<1x4xf32>
    %147 = arith.addf %146, %6 : vector<1x4xf32>
    %cst_184 = arith.constant 0.000000e+00 : f32
    %148 = vector.broadcast %cst_184 : f32 to vector<1x4xf32>
    %149 = arith.maximumf %147, %148 : vector<1x4xf32>
    %cst_185 = arith.constant dense<0.000000e+00> : vector<1x16xf32>
    %150 = tpu.matmul %149, %11, %cst_185 {dimension_numbers = #tpu.dot_dimension_numbers<[1], [0], [0], [1], [0, 0, 1, 1], [], []>} : vector<1x4xf32>, vector<4x16xf32>, vector<1x16xf32> -> vector<1x16xf32>
    %151 = arith.addf %150, %7 : vector<1x16xf32>
    %152 = arith.negf %151 : vector<1x16xf32>
    %153 = math.exp %152 : vector<1x16xf32>
    %cst_186 = arith.constant 1.000000e+00 : f32
    %154 = vector.broadcast %cst_186 : f32 to vector<1x16xf32>
    %155 = arith.addf %154, %153 : vector<1x16xf32>
    %156 = arith.divf %154, %155 : vector<1x16xf32>
    %cst_187 = arith.constant dense<0.000000e+00> : vector<1x128xf32>
    %157 = tpu.matmul %156, %9, %cst_187 {dimension_numbers = #tpu.dot_dimension_numbers<[1], [0], [0], [1], [0, 0, 1, 1], [], []>} : vector<1x16xf32>, vector<16x128xf32>, vector<1x128xf32> -> vector<1x128xf32>
    %158 = vector.broadcast %157 : vector<1x128xf32> to vector<8x128xf32>
    %159 = arith.mulf %142, %158 : vector<8x128xf32>
    %cst_188 = arith.constant dense<0.000000e+00> : vector<8x64xf32>
    %160 = tpu.matmul %68, %129, %cst_188 {dimension_numbers = #tpu.dot_dimension_numbers<[1], [0], [0], [1], [0, 0, 1, 1], [], []>} : vector<8x4xf32>, vector<4x64xf32>, vector<8x64xf32> -> vector<8x64xf32>
    %cst_189 = arith.constant dense<0.000000e+00> : vector<8x128xf32>
    %161 = tpu.matmul %160, %69, %cst_189 {dimension_numbers = #tpu.dot_dimension_numbers<[1], [0], [0], [1], [0, 0, 1, 1], [], []>} : vector<8x64xf32>, vector<64x128xf32>, vector<8x128xf32> -> vector<8x128xf32>
    %162 = arith.addf %159, %161 : vector<8x128xf32>
    %cst_190 = arith.constant dense<0.000000e+00> : vector<8x128xf32>
    %163 = tpu.matmul %56, %162, %cst_190 {dimension_numbers = #tpu.dot_dimension_numbers<[1], [0], [0], [1], [0, 0, 1, 1], [], []>} : vector<8x8xf32>, vector<8x128xf32>, vector<8x128xf32> -> vector<8x128xf32>
    %cst_191 = arith.constant dense<0.000000e+00> : vector<8x128xf32>
    %164 = tpu.matmul %163, %53, %cst_191 {dimension_numbers = #tpu.dot_dimension_numbers<[1], [0], [0], [1], [0, 0, 1, 1], [], []>} : vector<8x128xf32>, vector<128x128xf32>, vector<8x128xf32> -> vector<8x128xf32>
    %165 = vector.broadcast %52 : vector<1x128xf32> to vector<8x128xf32>
    %166 = arith.addf %165, %164 : vector<8x128xf32>
    %cst_192 = arith.constant dense<0.000000e+00> : vector<8x128xf32>
    %167 = tpu.matmul %57, %162, %cst_192 {dimension_numbers = #tpu.dot_dimension_numbers<[1], [0], [0], [1], [0, 0, 1, 1], [], []>} : vector<8x8xf32>, vector<8x128xf32>, vector<8x128xf32> -> vector<8x128xf32>
    %cst_193 = arith.constant dense<0.000000e+00> : vector<8x128xf32>
    %168 = tpu.matmul %167, %54, %cst_193 {dimension_numbers = #tpu.dot_dimension_numbers<[1], [0], [0], [1], [0, 0, 1, 1], [], []>} : vector<8x128xf32>, vector<128x128xf32>, vector<8x128xf32> -> vector<8x128xf32>
    %169 = arith.addf %166, %168 : vector<8x128xf32>
    %cst_194 = arith.constant dense<0.000000e+00> : vector<8x128xf32>
    %170 = tpu.matmul %58, %162, %cst_194 {dimension_numbers = #tpu.dot_dimension_numbers<[1], [0], [0], [1], [0, 0, 1, 1], [], []>} : vector<8x8xf32>, vector<8x128xf32>, vector<8x128xf32> -> vector<8x128xf32>
    %cst_195 = arith.constant dense<0.000000e+00> : vector<8x128xf32>
    %171 = tpu.matmul %170, %55, %cst_195 {dimension_numbers = #tpu.dot_dimension_numbers<[1], [0], [0], [1], [0, 0, 1, 1], [], []>} : vector<8x128xf32>, vector<128x128xf32>, vector<8x128xf32> -> vector<8x128xf32>
    %172 = arith.addf %169, %171 : vector<8x128xf32>
    %cst_196 = arith.constant dense<0.000000e+00> : vector<16x256xf32>
    %173 = tpu.matmul %85, %40, %cst_196 {dimension_numbers = #tpu.dot_dimension_numbers<[1], [0], [0], [1], [0, 0, 1, 1], [], []>} : vector<16x128xf32>, vector<128x256xf32>, vector<16x256xf32> -> vector<16x256xf32>
    %174 = vector.broadcast %39 : vector<1x256xf32> to vector<16x256xf32>
    %175 = arith.addf %173, %174 : vector<16x256xf32>
    %cst_197 = arith.constant dense<0.000000e+00> : vector<256xf32>
    %176 = vector.multi_reduction <add>, %175, %cst_197 [0] : vector<16x256xf32> to vector<256xf32>
    %177 = vector.shape_cast %176 : vector<256xf32> to vector<1x256xf32>
    %cst_198 = arith.constant dense<0.000000e+00> : vector<1x16xf32>
    %178 = tpu.matmul %177, %2, %cst_198 {dimension_numbers = #tpu.dot_dimension_numbers<[1], [0], [0], [1], [0, 0, 1, 1], [], []>} : vector<1x256xf32>, vector<256x16xf32>, vector<1x16xf32> -> vector<1x16xf32>
    %cst_199 = arith.constant dense<0.000000e+00> : vector<1x4xf32>
    %179 = tpu.matmul %178, %4, %cst_199 {dimension_numbers = #tpu.dot_dimension_numbers<[1], [0], [0], [1], [0, 0, 1, 1], [], []>} : vector<1x16xf32>, vector<16x4xf32>, vector<1x4xf32> -> vector<1x4xf32>
    %180 = arith.addf %179, %0 : vector<1x4xf32>
    %cst_200 = arith.constant 0.000000e+00 : f32
    %181 = vector.broadcast %cst_200 : f32 to vector<1x4xf32>
    %182 = arith.maximumf %180, %181 : vector<1x4xf32>
    %cst_201 = arith.constant dense<0.000000e+00> : vector<1x16xf32>
    %183 = tpu.matmul %182, %5, %cst_201 {dimension_numbers = #tpu.dot_dimension_numbers<[1], [0], [0], [1], [0, 0, 1, 1], [], []>} : vector<1x4xf32>, vector<4x16xf32>, vector<1x16xf32> -> vector<1x16xf32>
    %184 = arith.addf %183, %1 : vector<1x16xf32>
    %185 = arith.negf %184 : vector<1x16xf32>
    %186 = math.exp %185 : vector<1x16xf32>
    %cst_202 = arith.constant 1.000000e+00 : f32
    %187 = vector.broadcast %cst_202 : f32 to vector<1x16xf32>
    %188 = arith.addf %187, %186 : vector<1x16xf32>
    %189 = arith.divf %187, %188 : vector<1x16xf32>
    %cst_203 = arith.constant dense<0.000000e+00> : vector<1x256xf32>
    %190 = tpu.matmul %189, %3, %cst_203 {dimension_numbers = #tpu.dot_dimension_numbers<[1], [0], [0], [1], [0, 0, 1, 1], [], []>} : vector<1x16xf32>, vector<16x256xf32>, vector<1x256xf32> -> vector<1x256xf32>
    %191 = vector.broadcast %190 : vector<1x256xf32> to vector<16x256xf32>
    %192 = arith.mulf %175, %191 : vector<16x256xf32>
    %cst_204 = arith.constant dense<0.000000e+00> : vector<16x128xf32>
    %193 = tpu.matmul %70, %162, %cst_204 {dimension_numbers = #tpu.dot_dimension_numbers<[1], [0], [0], [1], [0, 0, 1, 1], [], []>} : vector<16x8xf32>, vector<8x128xf32>, vector<16x128xf32> -> vector<16x128xf32>
    %cst_205 = arith.constant dense<0.000000e+00> : vector<16x256xf32>
    %194 = tpu.matmul %193, %71, %cst_205 {dimension_numbers = #tpu.dot_dimension_numbers<[1], [0], [0], [1], [0, 0, 1, 1], [], []>} : vector<16x128xf32>, vector<128x256xf32>, vector<16x256xf32> -> vector<16x256xf32>
    %195 = arith.addf %192, %194 : vector<16x256xf32>
    %cst_206 = arith.constant dense<0.000000e+00> : vector<16x256xf32>
    %196 = tpu.matmul %49, %195, %cst_206 {dimension_numbers = #tpu.dot_dimension_numbers<[1], [0], [0], [1], [0, 0, 1, 1], [], []>} : vector<16x16xf32>, vector<16x256xf32>, vector<16x256xf32> -> vector<16x256xf32>
    %cst_207 = arith.constant dense<0.000000e+00> : vector<16x256xf32>
    %197 = tpu.matmul %196, %46, %cst_207 {dimension_numbers = #tpu.dot_dimension_numbers<[1], [0], [0], [1], [0, 0, 1, 1], [], []>} : vector<16x256xf32>, vector<256x256xf32>, vector<16x256xf32> -> vector<16x256xf32>
    %198 = vector.broadcast %45 : vector<1x256xf32> to vector<16x256xf32>
    %199 = arith.addf %198, %197 : vector<16x256xf32>
    %cst_208 = arith.constant dense<0.000000e+00> : vector<16x256xf32>
    %200 = tpu.matmul %50, %195, %cst_208 {dimension_numbers = #tpu.dot_dimension_numbers<[1], [0], [0], [1], [0, 0, 1, 1], [], []>} : vector<16x16xf32>, vector<16x256xf32>, vector<16x256xf32> -> vector<16x256xf32>
    %cst_209 = arith.constant dense<0.000000e+00> : vector<16x256xf32>
    %201 = tpu.matmul %200, %47, %cst_209 {dimension_numbers = #tpu.dot_dimension_numbers<[1], [0], [0], [1], [0, 0, 1, 1], [], []>} : vector<16x256xf32>, vector<256x256xf32>, vector<16x256xf32> -> vector<16x256xf32>
    %202 = arith.addf %199, %201 : vector<16x256xf32>
    %cst_210 = arith.constant dense<0.000000e+00> : vector<16x256xf32>
    %203 = tpu.matmul %51, %195, %cst_210 {dimension_numbers = #tpu.dot_dimension_numbers<[1], [0], [0], [1], [0, 0, 1, 1], [], []>} : vector<16x16xf32>, vector<16x256xf32>, vector<16x256xf32> -> vector<16x256xf32>
    %cst_211 = arith.constant dense<0.000000e+00> : vector<16x256xf32>
    %204 = tpu.matmul %203, %48, %cst_211 {dimension_numbers = #tpu.dot_dimension_numbers<[1], [0], [0], [1], [0, 0, 1, 1], [], []>} : vector<16x256xf32>, vector<256x256xf32>, vector<16x256xf32> -> vector<16x256xf32>
    %205 = arith.addf %202, %204 : vector<16x256xf32>
    %cst_212 = arith.constant dense<0.000000e+00> : vector<2x64xf32>
    %206 = tpu.matmul %66, %139, %cst_212 {dimension_numbers = #tpu.dot_dimension_numbers<[1], [0], [0], [1], [0, 0, 1, 1], [], []>} : vector<2x4xf32>, vector<4x64xf32>, vector<2x64xf32> -> vector<2x64xf32>
    %cst_213 = arith.constant dense<0.000000e+00> : vector<2x32xf32>
    %207 = tpu.matmul %206, %67, %cst_213 {dimension_numbers = #tpu.dot_dimension_numbers<[1], [0], [0], [1], [0, 0, 1, 1], [], []>} : vector<2x64xf32>, vector<64x32xf32>, vector<2x32xf32> -> vector<2x32xf32>
    %c0_214 = arith.constant 0 : index
    %c0_215 = arith.constant 0 : index
    %c0_216 = arith.constant 0 : index
    %208 = vector.load %arg74[%c0_214, %c0_215, %c0_216] : memref<1x16x256xf32, #tpu.memory_space<vmem>>, vector<1x16x256xf32>
    %209 = vector.shape_cast %208 : vector<1x16x256xf32> to vector<16x256xf32>
    %210 = vector.shape_cast %205 : vector<16x256xf32> to vector<1x16x256xf32>
    tpu.vector_store %arg74[%c0_214, %c0_215, %c0_216], %210 {strides = array<i32>} : memref<1x16x256xf32, #tpu.memory_space<vmem>>, vector<1x16x256xf32>,
    %c0_217 = arith.constant 0 : index
    %c0_218 = arith.constant 0 : index
    %c0_219 = arith.constant 0 : index
    %211 = vector.load %arg75[%c0_217, %c0_218, %c0_219] : memref<1x8x128xf32, #tpu.memory_space<vmem>>, vector<1x8x128xf32>
    %212 = vector.shape_cast %211 : vector<1x8x128xf32> to vector<8x128xf32>
    %213 = vector.shape_cast %172 : vector<8x128xf32> to vector<1x8x128xf32>
    tpu.vector_store %arg75[%c0_217, %c0_218, %c0_219], %213 {strides = array<i32>} : memref<1x8x128xf32, #tpu.memory_space<vmem>>, vector<1x8x128xf32>,
    %c0_220 = arith.constant 0 : index
    %c0_221 = arith.constant 0 : index
    %c0_222 = arith.constant 0 : index
    %214 = vector.load %arg76[%c0_220, %c0_221, %c0_222] : memref<1x4x64xf32, #tpu.memory_space<vmem>>, vector<1x4x64xf32>
    %215 = vector.shape_cast %214 : vector<1x4x64xf32> to vector<4x64xf32>
    %216 = vector.shape_cast %139 : vector<4x64xf32> to vector<1x4x64xf32>
    tpu.vector_store %arg76[%c0_220, %c0_221, %c0_222], %216 {strides = array<i32>} : memref<1x4x64xf32, #tpu.memory_space<vmem>>, vector<1x4x64xf32>,
    %c0_223 = arith.constant 0 : index
    %c0_224 = arith.constant 0 : index
    %c0_225 = arith.constant 0 : index
    %217 = vector.load %arg77[%c0_223, %c0_224, %c0_225] : memref<1x2x32xf32, #tpu.memory_space<vmem>>, vector<1x2x32xf32>
    %218 = vector.shape_cast %217 : vector<1x2x32xf32> to vector<2x32xf32>
    %219 = vector.shape_cast %207 : vector<2x32xf32> to vector<1x2x32xf32>
    tpu.vector_store %arg77[%c0_223, %c0_224, %c0_225], %219 {strides = array<i32>} : memref<1x2x32xf32, #tpu.memory_space<vmem>>, vector<1x2x32xf32>,
    return
  }
  func.func @transform_0(%arg0: i32) -> (i32, i32, i32) {
    %c0_i32 = arith.constant 0 : i32
    %c0_i32_0 = arith.constant 0 : i32
    %c0_i32_1 = arith.constant 0 : i32
    return %arg0, %c0_i32, %c0_i32_0 : i32, i32, i32
  }
  func.func @transform_1(%arg0: i32) -> (i32, i32) {
    %c0_i32 = arith.constant 0 : i32
    %c0_i32_0 = arith.constant 0 : i32
    %c0_i32_1 = arith.constant 0 : i32
    return %c0_i32, %c0_i32_0 : i32, i32
  }
  func.func @transform_2(%arg0: i32) -> (i32, i32) {
    %c0_i32 = arith.constant 0 : i32
    %c0_i32_0 = arith.constant 0 : i32
    %c0_i32_1 = arith.constant 0 : i32
    return %c0_i32, %c0_i32_0 : i32, i32
  }
  func.func @transform_3(%arg0: i32) -> (i32, i32) {
    %c0_i32 = arith.constant 0 : i32
    %c0_i32_0 = arith.constant 0 : i32
    %c0_i32_1 = arith.constant 0 : i32
    return %c0_i32, %c0_i32_0 : i32, i32
  }
  func.func @transform_4(%arg0: i32) -> (i32, i32) {
    %c0_i32 = arith.constant 0 : i32
    %c0_i32_0 = arith.constant 0 : i32
    %c0_i32_1 = arith.constant 0 : i32
    return %c0_i32, %c0_i32_0 : i32, i32
  }
  func.func @transform_5(%arg0: i32) -> (i32, i32) {
    %c0_i32 = arith.constant 0 : i32
    %c0_i32_0 = arith.constant 0 : i32
    %c0_i32_1 = arith.constant 0 : i32
    return %c0_i32, %c0_i32_0 : i32, i32
  }
  func.func @transform_6(%arg0: i32) -> (i32, i32) {
    %c0_i32 = arith.constant 0 : i32
    %c0_i32_0 = arith.constant 0 : i32
    %c0_i32_1 = arith.constant 0 : i32
    return %c0_i32, %c0_i32_0 : i32, i32
  }
  func.func @transform_7(%arg0: i32) -> (i32, i32) {
    %c0_i32 = arith.constant 0 : i32
    %c0_i32_0 = arith.constant 0 : i32
    %c0_i32_1 = arith.constant 0 : i32
    return %c0_i32, %c0_i32_0 : i32, i32
  }
  func.func @transform_8(%arg0: i32) -> (i32, i32) {
    %c0_i32 = arith.constant 0 : i32
    %c0_i32_0 = arith.constant 0 : i32
    %c0_i32_1 = arith.constant 0 : i32
    return %c0_i32, %c0_i32_0 : i32, i32
  }
  func.func @transform_9(%arg0: i32) -> (i32, i32) {
    %c0_i32 = arith.constant 0 : i32
    %c0_i32_0 = arith.constant 0 : i32
    %c0_i32_1 = arith.constant 0 : i32
    return %c0_i32, %c0_i32_0 : i32, i32
  }
  func.func @transform_10(%arg0: i32) -> (i32, i32) {
    %c0_i32 = arith.constant 0 : i32
    %c0_i32_0 = arith.constant 0 : i32
    %c0_i32_1 = arith.constant 0 : i32
    return %c0_i32, %c0_i32_0 : i32, i32
  }
  func.func @transform_11(%arg0: i32) -> (i32, i32) {
    %c0_i32 = arith.constant 0 : i32
    %c0_i32_0 = arith.constant 0 : i32
    %c0_i32_1 = arith.constant 0 : i32
    return %c0_i32, %c0_i32_0 : i32, i32
  }
  func.func @transform_12(%arg0: i32) -> (i32, i32) {
    %c0_i32 = arith.constant 0 : i32
    %c0_i32_0 = arith.constant 0 : i32
    %c0_i32_1 = arith.constant 0 : i32
    return %c0_i32, %c0_i32_0 : i32, i32
  }
  func.func @transform_13(%arg0: i32) -> (i32, i32) {
    %c0_i32 = arith.constant 0 : i32
    %c0_i32_0 = arith.constant 0 : i32
    %c0_i32_1 = arith.constant 0 : i32
    return %c0_i32, %c0_i32_0 : i32, i32
  }
  func.func @transform_14(%arg0: i32) -> (i32, i32) {
    %c0_i32 = arith.constant 0 : i32
    %c0_i32_0 = arith.constant 0 : i32
    %c0_i32_1 = arith.constant 0 : i32
    return %c0_i32, %c0_i32_0 : i32, i32
  }
  func.func @transform_15(%arg0: i32) -> (i32, i32) {
    %c0_i32 = arith.constant 0 : i32
    %c0_i32_0 = arith.constant 0 : i32
    %c0_i32_1 = arith.constant 0 : i32
    return %c0_i32, %c0_i32_0 : i32, i32
  }
  func.func @transform_16(%arg0: i32) -> (i32, i32) {
    %c0_i32 = arith.constant 0 : i32
    %c0_i32_0 = arith.constant 0 : i32
    %c0_i32_1 = arith.constant 0 : i32
    return %c0_i32, %c0_i32_0 : i32, i32
  }
  func.func @transform_17(%arg0: i32) -> (i32, i32) {
    %c0_i32 = arith.constant 0 : i32
    %c0_i32_0 = arith.constant 0 : i32
    %c0_i32_1 = arith.constant 0 : i32
    return %c0_i32, %c0_i32_0 : i32, i32
  }
  func.func @transform_18(%arg0: i32) -> (i32, i32) {
    %c0_i32 = arith.constant 0 : i32
    %c0_i32_0 = arith.constant 0 : i32
    %c0_i32_1 = arith.constant 0 : i32
    return %c0_i32, %c0_i32_0 : i32, i32
  }
  func.func @transform_19(%arg0: i32) -> (i32, i32) {
    %c0_i32 = arith.constant 0 : i32
    %c0_i32_0 = arith.constant 0 : i32
    %c0_i32_1 = arith.constant 0 : i32
    return %c0_i32, %c0_i32_0 : i32, i32
  }
  func.func @transform_20(%arg0: i32) -> (i32, i32) {
    %c0_i32 = arith.constant 0 : i32
    %c0_i32_0 = arith.constant 0 : i32
    %c0_i32_1 = arith.constant 0 : i32
    return %c0_i32, %c0_i32_0 : i32, i32
  }
  func.func @transform_21(%arg0: i32) -> (i32, i32) {
    %c0_i32 = arith.constant 0 : i32
    %c0_i32_0 = arith.constant 0 : i32
    %c0_i32_1 = arith.constant 0 : i32
    return %c0_i32, %c0_i32_0 : i32, i32
  }
  func.func @transform_22(%arg0: i32) -> (i32, i32) {
    %c0_i32 = arith.constant 0 : i32
    %c0_i32_0 = arith.constant 0 : i32
    %c0_i32_1 = arith.constant 0 : i32
    return %c0_i32, %c0_i32_0 : i32, i32
  }
  func.func @transform_23(%arg0: i32) -> (i32, i32) {
    %c0_i32 = arith.constant 0 : i32
    %c0_i32_0 = arith.constant 0 : i32
    %c0_i32_1 = arith.constant 0 : i32
    return %c0_i32, %c0_i32_0 : i32, i32
  }
  func.func @transform_24(%arg0: i32) -> (i32, i32) {
    %c0_i32 = arith.constant 0 : i32
    %c0_i32_0 = arith.constant 0 : i32
    %c0_i32_1 = arith.constant 0 : i32
    return %c0_i32, %c0_i32_0 : i32, i32
  }
  func.func @transform_25(%arg0: i32) -> (i32, i32) {
    %c0_i32 = arith.constant 0 : i32
    %c0_i32_0 = arith.constant 0 : i32
    %c0_i32_1 = arith.constant 0 : i32
    return %c0_i32, %c0_i32_0 : i32, i32
  }
  func.func @transform_26(%arg0: i32) -> (i32, i32) {
    %c0_i32 = arith.constant 0 : i32
    %c0_i32_0 = arith.constant 0 : i32
    %c0_i32_1 = arith.constant 0 : i32
    return %c0_i32, %c0_i32_0 : i32, i32
  }
  func.func @transform_27(%arg0: i32) -> (i32, i32) {
    %c0_i32 = arith.constant 0 : i32
    %c0_i32_0 = arith.constant 0 : i32
    %c0_i32_1 = arith.constant 0 : i32
    return %c0_i32, %c0_i32_0 : i32, i32
  }
  func.func @transform_28(%arg0: i32) -> (i32, i32) {
    %c0_i32 = arith.constant 0 : i32
    %c0_i32_0 = arith.constant 0 : i32
    %c0_i32_1 = arith.constant 0 : i32
    return %c0_i32, %c0_i32_0 : i32, i32
  }
  func.func @transform_29(%arg0: i32) -> (i32, i32) {
    %c0_i32 = arith.constant 0 : i32
    %c0_i32_0 = arith.constant 0 : i32
    %c0_i32_1 = arith.constant 0 : i32
    return %c0_i32, %c0_i32_0 : i32, i32
  }
  func.func @transform_30(%arg0: i32) -> (i32, i32) {
    %c0_i32 = arith.constant 0 : i32
    %c0_i32_0 = arith.constant 0 : i32
    %c0_i32_1 = arith.constant 0 : i32
    return %c0_i32, %c0_i32_0 : i32, i32
  }
  func.func @transform_31(%arg0: i32) -> (i32, i32) {
    %c0_i32 = arith.constant 0 : i32
    %c0_i32_0 = arith.constant 0 : i32
    %c0_i32_1 = arith.constant 0 : i32
    return %c0_i32, %c0_i32_0 : i32, i32
  }
  func.func @transform_32(%arg0: i32) -> (i32, i32) {
    %c0_i32 = arith.constant 0 : i32
    %c0_i32_0 = arith.constant 0 : i32
    %c0_i32_1 = arith.constant 0 : i32
    return %c0_i32, %c0_i32_0 : i32, i32
  }
  func.func @transform_33(%arg0: i32) -> (i32, i32) {
    %c0_i32 = arith.constant 0 : i32
    %c0_i32_0 = arith.constant 0 : i32
    %c0_i32_1 = arith.constant 0 : i32
    return %c0_i32, %c0_i32_0 : i32, i32
  }
  func.func @transform_34(%arg0: i32) -> (i32, i32) {
    %c0_i32 = arith.constant 0 : i32
    %c0_i32_0 = arith.constant 0 : i32
    %c0_i32_1 = arith.constant 0 : i32
    return %c0_i32, %c0_i32_0 : i32, i32
  }
  func.func @transform_35(%arg0: i32) -> (i32, i32) {
    %c0_i32 = arith.constant 0 : i32
    %c0_i32_0 = arith.constant 0 : i32
    %c0_i32_1 = arith.constant 0 : i32
    return %c0_i32, %c0_i32_0 : i32, i32
  }
  func.func @transform_36(%arg0: i32) -> (i32, i32) {
    %c0_i32 = arith.constant 0 : i32
    %c0_i32_0 = arith.constant 0 : i32
    %c0_i32_1 = arith.constant 0 : i32
    return %c0_i32, %c0_i32_0 : i32, i32
  }
  func.func @transform_37(%arg0: i32) -> (i32, i32) {
    %c0_i32 = arith.constant 0 : i32
    %c0_i32_0 = arith.constant 0 : i32
    %c0_i32_1 = arith.constant 0 : i32
    return %c0_i32, %c0_i32_0 : i32, i32
  }
  func.func @transform_38(%arg0: i32) -> (i32, i32) {
    %c0_i32 = arith.constant 0 : i32
    %c0_i32_0 = arith.constant 0 : i32
    %c0_i32_1 = arith.constant 0 : i32
    return %c0_i32, %c0_i32_0 : i32, i32
  }
  func.func @transform_39(%arg0: i32) -> (i32, i32) {
    %c0_i32 = arith.constant 0 : i32
    %c0_i32_0 = arith.constant 0 : i32
    %c0_i32_1 = arith.constant 0 : i32
    return %c0_i32, %c0_i32_0 : i32, i32
  }
  func.func @transform_40(%arg0: i32) -> (i32, i32) {
    %c0_i32 = arith.constant 0 : i32
    %c0_i32_0 = arith.constant 0 : i32
    %c0_i32_1 = arith.constant 0 : i32
    return %c0_i32, %c0_i32_0 : i32, i32
  }
  func.func @transform_41(%arg0: i32) -> (i32, i32) {
    %c0_i32 = arith.constant 0 : i32
    %c0_i32_0 = arith.constant 0 : i32
    %c0_i32_1 = arith.constant 0 : i32
    return %c0_i32, %c0_i32_0 : i32, i32
  }
  func.func @transform_42(%arg0: i32) -> (i32, i32) {
    %c0_i32 = arith.constant 0 : i32
    %c0_i32_0 = arith.constant 0 : i32
    %c0_i32_1 = arith.constant 0 : i32
    return %c0_i32, %c0_i32_0 : i32, i32
  }
  func.func @transform_43(%arg0: i32) -> (i32, i32) {
    %c0_i32 = arith.constant 0 : i32
    %c0_i32_0 = arith.constant 0 : i32
    %c0_i32_1 = arith.constant 0 : i32
    return %c0_i32, %c0_i32_0 : i32, i32
  }
  func.func @transform_44(%arg0: i32) -> (i32, i32) {
    %c0_i32 = arith.constant 0 : i32
    %c0_i32_0 = arith.constant 0 : i32
    %c0_i32_1 = arith.constant 0 : i32
    return %c0_i32, %c0_i32_0 : i32, i32
  }
  func.func @transform_45(%arg0: i32) -> (i32, i32) {
    %c0_i32 = arith.constant 0 : i32
    %c0_i32_0 = arith.constant 0 : i32
    %c0_i32_1 = arith.constant 0 : i32
    return %c0_i32, %c0_i32_0 : i32, i32
  }
  func.func @transform_46(%arg0: i32) -> (i32, i32) {
    %c0_i32 = arith.constant 0 : i32
    %c0_i32_0 = arith.constant 0 : i32
    %c0_i32_1 = arith.constant 0 : i32
    return %c0_i32, %c0_i32_0 : i32, i32
  }
  func.func @transform_47(%arg0: i32) -> (i32, i32) {
    %c0_i32 = arith.constant 0 : i32
    %c0_i32_0 = arith.constant 0 : i32
    %c0_i32_1 = arith.constant 0 : i32
    return %c0_i32, %c0_i32_0 : i32, i32
  }
  func.func @transform_48(%arg0: i32) -> (i32, i32) {
    %c0_i32 = arith.constant 0 : i32
    %c0_i32_0 = arith.constant 0 : i32
    %c0_i32_1 = arith.constant 0 : i32
    return %c0_i32, %c0_i32_0 : i32, i32
  }
  func.func @transform_49(%arg0: i32) -> (i32, i32) {
    %c0_i32 = arith.constant 0 : i32
    %c0_i32_0 = arith.constant 0 : i32
    %c0_i32_1 = arith.constant 0 : i32
    return %c0_i32, %c0_i32_0 : i32, i32
  }
  func.func @transform_50(%arg0: i32) -> (i32, i32) {
    %c0_i32 = arith.constant 0 : i32
    %c0_i32_0 = arith.constant 0 : i32
    %c0_i32_1 = arith.constant 0 : i32
    return %c0_i32, %c0_i32_0 : i32, i32
  }
  func.func @transform_51(%arg0: i32) -> (i32, i32) {
    %c0_i32 = arith.constant 0 : i32
    %c0_i32_0 = arith.constant 0 : i32
    %c0_i32_1 = arith.constant 0 : i32
    return %c0_i32, %c0_i32_0 : i32, i32
  }
  func.func @transform_52(%arg0: i32) -> (i32, i32) {
    %c0_i32 = arith.constant 0 : i32
    %c0_i32_0 = arith.constant 0 : i32
    %c0_i32_1 = arith.constant 0 : i32
    return %c0_i32, %c0_i32_0 : i32, i32
  }
  func.func @transform_53(%arg0: i32) -> (i32, i32) {
    %c0_i32 = arith.constant 0 : i32
    %c0_i32_0 = arith.constant 0 : i32
    %c0_i32_1 = arith.constant 0 : i32
    return %c0_i32, %c0_i32_0 : i32, i32
  }
  func.func @transform_54(%arg0: i32) -> (i32, i32) {
    %c0_i32 = arith.constant 0 : i32
    %c0_i32_0 = arith.constant 0 : i32
    %c0_i32_1 = arith.constant 0 : i32
    return %c0_i32, %c0_i32_0 : i32, i32
  }
  func.func @transform_55(%arg0: i32) -> (i32, i32) {
    %c0_i32 = arith.constant 0 : i32
    %c0_i32_0 = arith.constant 0 : i32
    %c0_i32_1 = arith.constant 0 : i32
    return %c0_i32, %c0_i32_0 : i32, i32
  }
  func.func @transform_56(%arg0: i32) -> (i32, i32) {
    %c0_i32 = arith.constant 0 : i32
    %c0_i32_0 = arith.constant 0 : i32
    %c0_i32_1 = arith.constant 0 : i32
    return %c0_i32, %c0_i32_0 : i32, i32
  }
  func.func @transform_57(%arg0: i32) -> (i32, i32) {
    %c0_i32 = arith.constant 0 : i32
    %c0_i32_0 = arith.constant 0 : i32
    %c0_i32_1 = arith.constant 0 : i32
    return %c0_i32, %c0_i32_0 : i32, i32
  }
  func.func @transform_58(%arg0: i32) -> (i32, i32) {
    %c0_i32 = arith.constant 0 : i32
    %c0_i32_0 = arith.constant 0 : i32
    %c0_i32_1 = arith.constant 0 : i32
    return %c0_i32, %c0_i32_0 : i32, i32
  }
  func.func @transform_59(%arg0: i32) -> (i32, i32) {
    %c0_i32 = arith.constant 0 : i32
    %c0_i32_0 = arith.constant 0 : i32
    %c0_i32_1 = arith.constant 0 : i32
    return %c0_i32, %c0_i32_0 : i32, i32
  }
  func.func @transform_60(%arg0: i32) -> (i32, i32) {
    %c0_i32 = arith.constant 0 : i32
    %c0_i32_0 = arith.constant 0 : i32
    %c0_i32_1 = arith.constant 0 : i32
    return %c0_i32, %c0_i32_0 : i32, i32
  }
  func.func @transform_61(%arg0: i32) -> (i32, i32) {
    %c0_i32 = arith.constant 0 : i32
    %c0_i32_0 = arith.constant 0 : i32
    %c0_i32_1 = arith.constant 0 : i32
    return %c0_i32, %c0_i32_0 : i32, i32
  }
  func.func @transform_62(%arg0: i32) -> (i32, i32) {
    %c0_i32 = arith.constant 0 : i32
    %c0_i32_0 = arith.constant 0 : i32
    %c0_i32_1 = arith.constant 0 : i32
    return %c0_i32, %c0_i32_0 : i32, i32
  }
  func.func @transform_63(%arg0: i32) -> (i32, i32) {
    %c0_i32 = arith.constant 0 : i32
    %c0_i32_0 = arith.constant 0 : i32
    %c0_i32_1 = arith.constant 0 : i32
    return %c0_i32, %c0_i32_0 : i32, i32
  }
  func.func @transform_64(%arg0: i32) -> (i32, i32) {
    %c0_i32 = arith.constant 0 : i32
    %c0_i32_0 = arith.constant 0 : i32
    %c0_i32_1 = arith.constant 0 : i32
    return %c0_i32, %c0_i32_0 : i32, i32
  }
  func.func @transform_65(%arg0: i32) -> (i32, i32) {
    %c0_i32 = arith.constant 0 : i32
    %c0_i32_0 = arith.constant 0 : i32
    %c0_i32_1 = arith.constant 0 : i32
    return %c0_i32, %c0_i32_0 : i32, i32
  }
  func.func @transform_66(%arg0: i32) -> (i32, i32) {
    %c0_i32 = arith.constant 0 : i32
    %c0_i32_0 = arith.constant 0 : i32
    %c0_i32_1 = arith.constant 0 : i32
    return %c0_i32, %c0_i32_0 : i32, i32
  }
  func.func @transform_67(%arg0: i32) -> (i32, i32) {
    %c0_i32 = arith.constant 0 : i32
    %c0_i32_0 = arith.constant 0 : i32
    %c0_i32_1 = arith.constant 0 : i32
    return %c0_i32, %c0_i32_0 : i32, i32
  }
  func.func @transform_68(%arg0: i32) -> (i32, i32) {
    %c0_i32 = arith.constant 0 : i32
    %c0_i32_0 = arith.constant 0 : i32
    %c0_i32_1 = arith.constant 0 : i32
    return %c0_i32, %c0_i32_0 : i32, i32
  }
  func.func @transform_69(%arg0: i32) -> (i32, i32) {
    %c0_i32 = arith.constant 0 : i32
    %c0_i32_0 = arith.constant 0 : i32
    %c0_i32_1 = arith.constant 0 : i32
    return %c0_i32, %c0_i32_0 : i32, i32
  }
  func.func @transform_70(%arg0: i32) -> (i32, i32) {
    %c0_i32 = arith.constant 0 : i32
    %c0_i32_0 = arith.constant 0 : i32
    %c0_i32_1 = arith.constant 0 : i32
    return %c0_i32, %c0_i32_0 : i32, i32
  }
  func.func @transform_71(%arg0: i32) -> (i32, i32) {
    %c0_i32 = arith.constant 0 : i32
    %c0_i32_0 = arith.constant 0 : i32
    %c0_i32_1 = arith.constant 0 : i32
    return %c0_i32, %c0_i32_0 : i32, i32
  }
  func.func @transform_72(%arg0: i32) -> (i32, i32) {
    %c0_i32 = arith.constant 0 : i32
    %c0_i32_0 = arith.constant 0 : i32
    %c0_i32_1 = arith.constant 0 : i32
    return %c0_i32, %c0_i32_0 : i32, i32
  }
  func.func @transform_73(%arg0: i32) -> (i32, i32, i32) {
    %c0_i32 = arith.constant 0 : i32
    %c0_i32_0 = arith.constant 0 : i32
    %c0_i32_1 = arith.constant 0 : i32
    return %arg0, %c0_i32, %c0_i32_0 : i32, i32, i32
  }
  func.func @transform_74(%arg0: i32) -> (i32, i32, i32) {
    %c0_i32 = arith.constant 0 : i32
    %c0_i32_0 = arith.constant 0 : i32
    %c0_i32_1 = arith.constant 0 : i32
    return %arg0, %c0_i32, %c0_i32_0 : i32, i32, i32
  }
  func.func @transform_75(%arg0: i32) -> (i32, i32, i32) {
    %c0_i32 = arith.constant 0 : i32
    %c0_i32_0 = arith.constant 0 : i32
    %c0_i32_1 = arith.constant 0 : i32
    return %arg0, %c0_i32, %c0_i32_0 : i32, i32, i32
  }
  func.func @transform_76(%arg0: i32) -> (i32, i32, i32) {
    %c0_i32 = arith.constant 0 : i32
    %c0_i32_0 = arith.constant 0 : i32
    %c0_i32_1 = arith.constant 0 : i32
    return %arg0, %c0_i32, %c0_i32_0 : i32, i32, i32
  }
}

</mosaic_0001>

<llo_original>
// kernel: backbone_with_afpn_forward.1
$region0: #{backbone_with_afpn_forward.1}
  #allocation0 [shape = 'u32[]', space=smem, size = 0x4, offset = 0x4, fixed_abs, tag = 'smem constant byte address 0x4 - core index']
  #allocation1 [shape = 'u32[144,128]{1,0:T(1,128)}', space=vmem, size = 0x12000, scoped, tag = 'internal scratch']
  %s0 = inlined_call_operand.smem [shape: u32[77], index: -1, kind: input, shape index: {}]
  %s1 = sld [smem:[%s0]]
  %s2 = scalar_lea.smem %s0, 1
  %s3 = sld [smem:[%s2]]
  %s4 = scalar_lea.smem %s0, 2
  %s5 = sld [smem:[%s4]]
  %s6 = scalar_lea.smem %s0, 3
  %s7 = sld [smem:[%s6]]
  %s8 = scalar_lea.smem %s0, 4
  %s9 = sld [smem:[%s8]]
  %s10 = scalar_lea.smem %s0, 5
  %s11 = sld [smem:[%s10]]
  %s12 = scalar_lea.smem %s0, 6
  %s13 = sld [smem:[%s12]]
  %s14 = scalar_lea.smem %s0, 7
  %s15 = sld [smem:[%s14]]
  %s16 = scalar_lea.smem %s0, 8
  %s17 = sld [smem:[%s16]]
  %s18 = scalar_lea.smem %s0, 9
  %s19 = sld [smem:[%s18]]
  %s20 = scalar_lea.smem %s0, 10
  %s21 = sld [smem:[%s20]]
  %s22 = scalar_lea.smem %s0, 11
  %s23 = sld [smem:[%s22]]
  %s24 = scalar_lea.smem %s0, 12
  %s25 = sld [smem:[%s24]]
  %s26 = scalar_lea.smem %s0, 13
  %s27 = sld [smem:[%s26]]
  %s28 = scalar_lea.smem %s0, 14
  %s29 = sld [smem:[%s28]]
  %s30 = scalar_lea.smem %s0, 15
  %s31 = sld [smem:[%s30]]
  %s32 = scalar_lea.smem %s0, 16
  %s33 = sld [smem:[%s32]]
  %s34 = scalar_lea.smem %s0, 17
  %s35 = sld [smem:[%s34]]
  %s36 = scalar_lea.smem %s0, 18
  %s37 = sld [smem:[%s36]]
  %s38 = scalar_lea.smem %s0, 19
  %s39 = sld [smem:[%s38]]
  %s40 = scalar_lea.smem %s0, 20
  %s41 = sld [smem:[%s40]]
  %s42 = scalar_lea.smem %s0, 21
  %s43 = sld [smem:[%s42]]
  %s44 = scalar_lea.smem %s0, 22
  %s45 = sld [smem:[%s44]]
  %s46 = scalar_lea.smem %s0, 23
  %s47 = sld [smem:[%s46]]
  %s48 = scalar_lea.smem %s0, 24
  %s49 = sld [smem:[%s48]]
  %s50 = scalar_lea.smem %s0, 25
  %s51 = sld [smem:[%s50]]
  %s52 = scalar_lea.smem %s0, 26
  %s53 = sld [smem:[%s52]]
  %s54 = scalar_lea.smem %s0, 27
  %s55 = sld [smem:[%s54]]
  %s56 = scalar_lea.smem %s0, 28
  %s57 = sld [smem:[%s56]]
  %s58 = scalar_lea.smem %s0, 29
  %s59 = sld [smem:[%s58]]
  %s60 = scalar_lea.smem %s0, 30
  %s61 = sld [smem:[%s60]]
  %s62 = scalar_lea.smem %s0, 31
  %s63 = sld [smem:[%s62]]
  %s64 = scalar_lea.smem %s0, 32
  %s65 = sld [smem:[%s64]]
  %s66 = scalar_lea.smem %s0, 33
  %s67 = sld [smem:[%s66]]
  %s68 = scalar_lea.smem %s0, 34
  %s69 = sld [smem:[%s68]]
  %s70 = scalar_lea.smem %s0, 35
  %s71 = sld [smem:[%s70]]
  %s72 = scalar_lea.smem %s0, 36
  %s73 = sld [smem:[%s72]]
  %s74 = scalar_lea.smem %s0, 37
  %s75 = sld [smem:[%s74]]
  %s76 = scalar_lea.smem %s0, 38
  %s77 = sld [smem:[%s76]]
  %s78 = scalar_lea.smem %s0, 39
  %s79 = sld [smem:[%s78]]
  %s80 = scalar_lea.smem %s0, 40
  %s81 = sld [smem:[%s80]]
  %s82 = scalar_lea.smem %s0, 41
  %s83 = sld [smem:[%s82]]
  %s84 = scalar_lea.smem %s0, 42
  %s85 = sld [smem:[%s84]]
  %s86 = scalar_lea.smem %s0, 43
  %s87 = sld [smem:[%s86]]
  %s88 = scalar_lea.smem %s0, 44
  %s89 = sld [smem:[%s88]]
  %s90 = scalar_lea.smem %s0, 45
  %s91 = sld [smem:[%s90]]
  %s92 = scalar_lea.smem %s0, 46
  %s93 = sld [smem:[%s92]]
  %s94 = scalar_lea.smem %s0, 47
  %s95 = sld [smem:[%s94]]
  %s96 = scalar_lea.smem %s0, 48
  %s97 = sld [smem:[%s96]]
  %s98 = scalar_lea.smem %s0, 49
  %s99 = sld [smem:[%s98]]
  %s100 = scalar_lea.smem %s0, 50
  %s101 = sld [smem:[%s100]]
  %s102 = scalar_lea.smem %s0, 51
  %s103 = sld [smem:[%s102]]
  %s104 = scalar_lea.smem %s0, 52
  %s105 = sld [smem:[%s104]]
  %s106 = scalar_lea.smem %s0, 53
  %s107 = sld [smem:[%s106]]
  %s108 = scalar_lea.smem %s0, 54
  %s109 = sld [smem:[%s108]]
  %s110 = scalar_lea.smem %s0, 55
  %s111 = sld [smem:[%s110]]
  %s112 = scalar_lea.smem %s0, 56
  %s113 = sld [smem:[%s112]]
  %s114 = scalar_lea.smem %s0, 57
  %s115 = sld [smem:[%s114]]
  %s116 = scalar_lea.smem %s0, 58
  %s117 = sld [smem:[%s116]]
  %s118 = scalar_lea.smem %s0, 59
  %s119 = sld [smem:[%s118]]
  %s120 = scalar_lea.smem %s0, 60
  %s121 = sld [smem:[%s120]]
  %s122 = scalar_lea.smem %s0, 61
  %s123 = sld [smem:[%s122]]
  %s124 = scalar_lea.smem %s0, 62
  %s125 = sld [smem:[%s124]]
  %s126 = scalar_lea.smem %s0, 63
  %s127 = sld [smem:[%s126]]
  %s128 = scalar_lea.smem %s0, 64
  %s129 = sld [smem:[%s128]]
  %s130 = scalar_lea.smem %s0, 65
  %s131 = sld [smem:[%s130]]
  %s132 = scalar_lea.smem %s0, 66
  %s133 = sld [smem:[%s132]]
  %s134 = scalar_lea.smem %s0, 67
  %s135 = sld [smem:[%s134]]
  %s136 = scalar_lea.smem %s0, 68
  %s137 = sld [smem:[%s136]]
  %s138 = scalar_lea.smem %s0, 69
  %s139 = sld [smem:[%s138]]
  %s140 = scalar_lea.smem %s0, 70
  %s141 = sld [smem:[%s140]]
  %s142 = scalar_lea.smem %s0, 71
  %s143 = sld [smem:[%s142]]
  %s144 = scalar_lea.smem %s0, 72
  %s145 = sld [smem:[%s144]]
  %s146 = scalar_lea.smem %s0, 73
  %s147 = sld [smem:[%s146]]
  %s148 = scalar_lea.smem %s0, 74
  %s149 = sld [smem:[%s148]]
  %s150 = scalar_lea.smem %s0, 75
  %s151 = sld [smem:[%s150]]
  %s152 = scalar_lea.smem %s0, 76
  %s153 = sld [smem:[%s152]]
  %154 = xla_tuple %s147, %s149, %s151, %s153
  %s155 = sld [smem:[#allocation0]]
  $region577: #{backbone_with_afpn_forward.1} parent=0
    _
  %s157 = ssub.s32 1, %s155
  %s158 = scalar_select 0, %s157, %s155
  $region1: #{backbone_with_afpn_forward.1} parent=0
    #allocation2 [shape = 'u8[512]{0}', space=vmem, size = 0x400, scoped, tag = 'input window, operand 2, single buffered']
    #allocation3 [shape = 's32[2]{0}', space=sflag, size = 0x8, scoped, tag = 'scoped memory for backbone_with_afpn_forward.1']
    #allocation4 [shape = 'u8[16384]{0}', space=vmem, size = 0x4000, scoped, tag = 'input window, operand 4, single buffered']
    #allocation5 [shape = 's32[1]{0}', space=sflag, size = 0x4, scoped, tag = 'scoped memory for backbone_with_afpn_forward.1']
    #allocation6 [shape = 'u8[2048]{0}', space=vmem, size = 0x800, scoped, tag = 'input window, operand 6, single buffered']
    #allocation7 [shape = 'u8[512]{0}', space=vmem, size = 0x400, scoped, tag = 'input window, operand 7, single buffered']
    #allocation8 [shape = 's32[1]{0}', space=sflag, size = 0x4, scoped, tag = 'scoped memory for backbone_with_afpn_forward.1']
    #allocation9 [shape = 'u8[512]{0}', space=vmem, size = 0x400, scoped, tag = 'input window, operand 8, single buffered']
    #allocation10 [shape = 'u8[8192]{0}', space=vmem, size = 0x2000, scoped, tag = 'input window, operand 10, single buffered']
    #allocation11 [shape = 's32[1]{0}', space=sflag, size = 0x4, scoped, tag = 'scoped memory for backbone_with_afpn_forward.1']
    #allocation12 [shape = 'u8[2048]{0}', space=vmem, size = 0x800, scoped, tag = 'input window, operand 12, single buffered']
    #allocation13 [shape = 'u8[512]{0}', space=vmem, size = 0x400, scoped, tag = 'input window, operand 13, single buffered']
    #allocation14 [shape = 's32[1]{0}', space=sflag, size = 0x4, scoped, tag = 'scoped memory for backbone_with_afpn_forward.1']
    #allocation15 [shape = 'u8[512]{0}', space=vmem, size = 0x400, scoped, tag = 'input window, operand 14, single buffered']
    #allocation16 [shape = 'u8[8192]{0}', space=vmem, size = 0x2000, scoped, tag = 'input window, operand 16, single buffered']
    #allocation17 [shape = 's32[1]{0}', space=sflag, size = 0x4, scoped, tag = 'scoped memory for backbone_with_afpn_forward.1']
    #allocation18 [shape = 'u8[2048]{0}', space=vmem, size = 0x800, scoped, tag = 'input window, operand 18, single buffered']
    #allocation19 [shape = 'u8[512]{0}', space=vmem, size = 0x400, scoped, tag = 'input window, operand 19, single buffered']
    #allocation20 [shape = 's32[1]{0}', space=sflag, size = 0x4, scoped, tag = 'scoped memory for backbone_with_afpn_forward.1']
    #allocation21 [shape = 'u8[24576]{0}', space=vmem, size = 0x6000, scoped, tag = 'input window, operand 20, single buffered']
    #allocation22 [shape = 'u8[24576]{0}', space=vmem, size = 0x6000, scoped, tag = 'input window, operand 21, single buffered']
    #allocation23 [shape = 's32[1]{0}', space=sflag, size = 0x4, scoped, tag = 'scoped memory for backbone_with_afpn_forward.1']
    #allocation24 [shape = 'u8[24576]{0}', space=vmem, size = 0x6000, scoped, tag = 'input window, operand 22, single buffered']
    #allocation25 [shape = 'u8[8192]{0}', space=vmem, size = 0x2000, scoped, tag = 'input window, operand 23, single buffered']
    #allocation26 [shape = 's32[1]{0}', space=sflag, size = 0x4, scoped, tag = 'scoped memory for backbone_with_afpn_forward.1']
    #allocation27 [shape = 'u8[8192]{0}', space=vmem, size = 0x2000, scoped, tag = 'input window, operand 24, single buffered']
    #allocation28 [shape = 'u8[8192]{0}', space=vmem, size = 0x2000, scoped, tag = 'input window, operand 25, single buffered']
    #allocation29 [shape = 's32[1]{0}', space=sflag, size = 0x4, scoped, tag = 'scoped memory for backbone_with_afpn_forward.1']
    #allocation30 [shape = 'u8[512]{0}', space=vmem, size = 0x400, scoped, tag = 'input window, operand 26, single buffered']
    #allocation31 [shape = 'u8[65536]{0}', space=vmem, size = 0x10000, scoped, tag = 'input window, operand 29, single buffered']
    #allocation32 [shape = 's32[1]{0}', space=sflag, size = 0x4, scoped, tag = 'scoped memory for backbone_with_afpn_forward.1']
    #allocation33 [shape = 'u8[4096]{0}', space=vmem, size = 0x1000, scoped, tag = 'input window, operand 30, single buffered']
    #allocation34 [shape = 'u8[4096]{0}', space=vmem, size = 0x1000, scoped, tag = 'input window, operand 31, single buffered']
    #allocation35 [shape = 's32[1]{0}', space=sflag, size = 0x4, scoped, tag = 'scoped memory for backbone_with_afpn_forward.1']
    #allocation36 [shape = 'u8[4096]{0}', space=vmem, size = 0x1000, scoped, tag = 'input window, operand 32, single buffered']
    #allocation37 [shape = 'u8[512]{0}', space=vmem, size = 0x400, scoped, tag = 'input window, operand 33, single buffered']
    #allocation38 [shape = 's32[1]{0}', space=sflag, size = 0x4, scoped, tag = 'scoped memory for backbone_with_afpn_forward.1']
    #allocation39 [shape = 'u8[65536]{0}', space=vmem, size = 0x10000, scoped, tag = 'input window, operand 34, single buffered']
    #allocation40 [shape = 'u8[65536]{0}', space=vmem, size = 0x10000, scoped, tag = 'input window, operand 35, single buffered']
    #allocation41 [shape = 's32[1]{0}', space=sflag, size = 0x4, scoped, tag = 'scoped memory for backbone_with_afpn_forward.1']
    #allocation42 [shape = 'u8[65536]{0}', space=vmem, size = 0x10000, scoped, tag = 'input window, operand 36, single buffered']
    #allocation43 [shape = 'u8[2048]{0}', space=vmem, size = 0x800, scoped, tag = 'input window, operand 37, single buffered']
    #allocation44 [shape = 's32[1]{0}', space=sflag, size = 0x4, scoped, tag = 'scoped memory for backbone_with_afpn_forward.1']
    #allocation45 [shape = 'u8[2048]{0}', space=vmem, size = 0x800, scoped, tag = 'input window, operand 38, single buffered']
    #allocation46 [shape = 'u8[2048]{0}', space=vmem, size = 0x800, scoped, tag = 'input window, operand 39, single buffered']
    #allocation47 [shape = 's32[1]{0}', space=sflag, size = 0x4, scoped, tag = 'scoped memory for backbone_with_afpn_forward.1']
    #allocation48 [shape = 'u8[1024]{0}', space=vmem, size = 0x400, scoped, tag = 'input window, operand 40, single buffered']
    #allocation49 [shape = 'u8[131072]{0}', space=vmem, size = 0x20000, scoped, tag = 'input window, operand 41, single buffered']
    #allocation50 [shape = 's32[1]{0}', space=sflag, size = 0x4, scoped, tag = 'scoped memory for backbone_with_afpn_forward.1']
    #allocation51 [shape = 'u8[512]{0}', space=vmem, size = 0x400, scoped, tag = 'input window, operand 42, single buffered']
    #allocation52 [shape = 'u8[65536]{0}', space=vmem, size = 0x10000, scoped, tag = 'input window, operand 43, single buffered']
    #allocation53 [shape = 's32[1]{0}', space=sflag, size = 0x4, scoped, tag = 'scoped memory for backbone_with_afpn_forward.1']
    #allocation54 [shape = 'u8[512]{0}', space=vmem, size = 0x400, scoped, tag = 'input window, operand 44, single buffered']
    #allocation55 [shape = 'u8[1024]{0}', space=vmem, size = 0x400, scoped, tag = 'input window, operand 46, single buffered']
    #allocation56 [shape = 's32[1]{0}', space=sflag, size = 0x4, scoped, tag = 'scoped memory for backbone_with_afpn_forward.1']
    #allocation57 [shape = 'u8[262144]{0}', space=vmem, size = 0x40000, scoped, tag = 'input window, operand 49, single buffered']
    #allocation58 [shape = 'u8[8192]{0}', space=vmem, size = 0x2000, scoped, tag = 'input window, operand 50, single buffered']
    #allocation59 [shape = 's32[1]{0}', space=sflag, size = 0x4, scoped, tag = 'scoped memory for backbone_with_afpn_forward.1']
    #allocation60 [shape = 'u8[8192]{0}', space=vmem, size = 0x2000, scoped, tag = 'input window, operand 51, single buffered']
    #allocation61 [shape = 'u8[8192]{0}', space=vmem, size = 0x2000, scoped, tag = 'input window, operand 52, single buffered']
    #allocation62 [shape = 's32[1]{0}', space=sflag, size = 0x4, scoped, tag = 'scoped memory for backbone_with_afpn_forward.1']
    #allocation63 [shape = 'u8[512]{0}', space=vmem, size = 0x400, scoped, tag = 'input window, operand 53, single buffered']
    #allocation64 [shape = 'u8[65536]{0}', space=vmem, size = 0x10000, scoped, tag = 'input window, operand 54, single buffered']
    #allocation65 [shape = 's32[1]{0}', space=sflag, size = 0x4, scoped, tag = 'scoped memory for backbone_with_afpn_forward.1']
    #allocation66 [shape = 'u8[65536]{0}', space=vmem, size = 0x10000, scoped, tag = 'input window, operand 55, single buffered']
    #allocation67 [shape = 'u8[65536]{0}', space=vmem, size = 0x10000, scoped, tag = 'input window, operand 56, single buffered']
    #allocation68 [shape = 's32[1]{0}', space=sflag, size = 0x4, scoped, tag = 'scoped memory for backbone_with_afpn_forward.1']
    #allocation69 [shape = 'u8[4096]{0}', space=vmem, size = 0x1000, scoped, tag = 'input window, operand 57, single buffered']
    #allocation70 [shape = 'u8[4096]{0}', space=vmem, size = 0x1000, scoped, tag = 'input window, operand 58, single buffered']
    #allocation71 [shape = 's32[1]{0}', space=sflag, size = 0x4, scoped, tag = 'scoped memory for backbone_with_afpn_forward.1']
    #allocation72 [shape = 'u8[4096]{0}', space=vmem, size = 0x1000, scoped, tag = 'input window, operand 59, single buffered']
    #allocation73 [shape = 'u8[512]{0}', space=vmem, size = 0x400, scoped, tag = 'input window, operand 60, single buffered']
    #allocation74 [shape = 's32[1]{0}', space=sflag, size = 0x4, scoped, tag = 'scoped memory for backbone_with_afpn_forward.1']
    #allocation75 [shape = 'u8[32768]{0}', space=vmem, size = 0x8000, scoped, tag = 'input window, operand 61, single buffered']
    #allocation76 [shape = 'u8[32768]{0}', space=vmem, size = 0x8000, scoped, tag = 'input window, operand 62, single buffered']
    #allocation77 [shape = 's32[1]{0}', space=sflag, size = 0x4, scoped, tag = 'scoped memory for backbone_with_afpn_forward.1']
    #allocation78 [shape = 'u8[32768]{0}', space=vmem, size = 0x8000, scoped, tag = 'input window, operand 63, single buffered']
    #allocation79 [shape = 'u8[2048]{0}', space=vmem, size = 0x800, scoped, tag = 'input window, operand 64, single buffered']
    #allocation80 [shape = 's32[1]{0}', space=sflag, size = 0x4, scoped, tag = 'scoped memory for backbone_with_afpn_forward.1']
    #allocation81 [shape = 'u8[2048]{0}', space=vmem, size = 0x800, scoped, tag = 'input window, operand 65, single buffered']
    #allocation82 [shape = 'u8[2048]{0}', space=vmem, size = 0x800, scoped, tag = 'input window, operand 66, single buffered']
    #allocation83 [shape = 's32[1]{0}', space=sflag, size = 0x4, scoped, tag = 'scoped memory for backbone_with_afpn_forward.1']
    #allocation84 [shape = 'u8[1024]{0}', space=vmem, size = 0x400, scoped, tag = 'input window, operand 67, single buffered']
    #allocation85 [shape = 'u8[32768]{0}', space=vmem, size = 0x8000, scoped, tag = 'input window, operand 70, single buffered']
    #allocation86 [shape = 's32[1]{0}', space=sflag, size = 0x4, scoped, tag = 'scoped memory for backbone_with_afpn_forward.1']
    #allocation87 [shape = 'u8[131072]{0}', space=vmem, size = 0x20000, scoped, tag = 'input window, operand 72, single buffered']
    %159 = vsyncpa [#allocation3], 0
    %160 = vsyncpa [#allocation5], 0
    %161 = vsyncpa [#allocation8], 0
    %162 = vsyncpa [#allocation11], 0
    %163 = vsyncpa [#allocation14], 0
    %164 = vsyncpa [#allocation17], 0
    %165 = vsyncpa [#allocation20], 0
    %166 = vsyncpa [#allocation23], 0
    %167 = vsyncpa [#allocation26], 0
    %168 = vsyncpa [#allocation29], 0
    %169 = vsyncpa [#allocation32], 0
    %170 = vsyncpa [#allocation35], 0
    %171 = vsyncpa [#allocation38], 0
    %172 = vsyncpa [#allocation41], 0
    %173 = vsyncpa [#allocation44], 0
    %174 = vsyncpa [#allocation47], 0
    %175 = vsyncpa [#allocation50], 0
    %176 = vsyncpa [#allocation53], 0
    %177 = vsyncpa [#allocation56], 0
    %178 = vsyncpa [#allocation59], 0
    %179 = vsyncpa [#allocation62], 0
    %180 = vsyncpa [#allocation65], 0
    %181 = vsyncpa [#allocation68], 0
    %182 = vsyncpa [#allocation71], 0
    %183 = vsyncpa [#allocation74], 0
    %184 = vsyncpa [#allocation77], 0
    %185 = vsyncpa [#allocation80], 0
    %186 = vsyncpa [#allocation83], 0
    %187 = vsyncpa [#allocation86], 0
    loop: start=0, step=1, limit=4
    $region2: #{backbone_with_afpn_forward.1} parent=1 // loop_pre_header
      _
    $region3: #{backbone_with_afpn_forward.1} parent=1 // loop_header
      %s189 = sphi 0, %s193
      %p190 = scmp.ge.s32.totalorder %s189, 4
      %s199 = sphi 0, %s201
      %s202 = sphi 0, %s199
      %s203 = sphi 0, %s202
      %s219 = sphi 0, %s203
      %s223 = sphi 0, %s223
      %s225 = sphi 0, %s223
      %s226 = sphi 0, %s225
      %s240 = sphi 0, %s226
      %s244 = sphi 0, %s244
      %s246 = sphi 0, %s244
      %s247 = sphi 0, %s246
      %s261 = sphi 0, %s247
      %s265 = sphi 0, %s265
      %s267 = sphi 0, %s265
      %s268 = sphi 0, %s267
      %s282 = sphi 0, %s268
      %s286 = sphi 0, %s286
      %s288 = sphi 0, %s286
      %s289 = sphi 0, %s288
      %s303 = sphi 0, %s289
      %s307 = sphi 0, %s307
      %s309 = sphi 0, %s307
      %s310 = sphi 0, %s309
      %s324 = sphi 0, %s310
      %s328 = sphi 0, %s328
      %s330 = sphi 0, %s328
      %s331 = sphi 0, %s330
      %s345 = sphi 0, %s331
      %s349 = sphi 0, %s349
      %s351 = sphi 0, %s349
      %s352 = sphi 0, %s351
      %s366 = sphi 0, %s352
      %s370 = sphi 0, %s370
      %s372 = sphi 0, %s370
      %s373 = sphi 0, %s372
      %s387 = sphi 0, %s373
      %s391 = sphi 0, %s391
      %s393 = sphi 0, %s391
      %s394 = sphi 0, %s393
      %s408 = sphi 0, %s394
      %s412 = sphi 0, %s412
      %s414 = sphi 0, %s412
      %s415 = sphi 0, %s414
      %s429 = sphi 0, %s415
      %s433 = sphi 0, %s433
      %s435 = sphi 0, %s433
      %s436 = sphi 0, %s435
      %s450 = sphi 0, %s436
      %s454 = sphi 0, %s454
      %s456 = sphi 0, %s454
      %s457 = sphi 0, %s456
      %s471 = sphi 0, %s457
      %s475 = sphi 0, %s475
      %s477 = sphi 0, %s475
      %s478 = sphi 0, %s477
      %s492 = sphi 0, %s478
      %s496 = sphi 0, %s496
      %s498 = sphi 0, %s496
      %s499 = sphi 0, %s498
      %s513 = sphi 0, %s499
      %s517 = sphi 0, %s517
      %s519 = sphi 0, %s517
      %s520 = sphi 0, %s519
      %s534 = sphi 0, %s520
      %s538 = sphi 0, %s538
      %s540 = sphi 0, %s538
      %s541 = sphi 0, %s540
      %s555 = sphi 0, %s541
      %s559 = sphi 0, %s559
      %s561 = sphi 0, %s559
      %s562 = sphi 0, %s561
      %s576 = sphi 0, %s562
      %s580 = sphi 0, %s580
      %s582 = sphi 0, %s580
      %s583 = sphi 0, %s582
      %s597 = sphi 0, %s583
      %s601 = sphi 0, %s601
      %s603 = sphi 0, %s601
      %s604 = sphi 0, %s603
      %s618 = sphi 0, %s604
      %s622 = sphi 0, %s622
      %s624 = sphi 0, %s622
      %s625 = sphi 0, %s624
      %s639 = sphi 0, %s625
      %s643 = sphi 0, %s643
      %s645 = sphi 0, %s643
      %s646 = sphi 0, %s645
      %s660 = sphi 0, %s646
      %s664 = sphi 0, %s664
      %s666 = sphi 0, %s664
      %s667 = sphi 0, %s666
      %s681 = sphi 0, %s667
      %s685 = sphi 0, %s685
      %s687 = sphi 0, %s685
      %s688 = sphi 0, %s687
      %s702 = sphi 0, %s688
      %s706 = sphi 0, %s706
      %s708 = sphi 0, %s706
      %s709 = sphi 0, %s708
      %s723 = sphi 0, %s709
      %s727 = sphi 0, %s727
      %s729 = sphi 0, %s727
      %s730 = sphi 0, %s729
      %s744 = sphi 0, %s730
      %s748 = sphi 0, %s748
      %s750 = sphi 0, %s748
      %s751 = sphi 0, %s750
      %s765 = sphi 0, %s751
      %s769 = sphi 0, %s769
      %s771 = sphi 0, %s769
      %s772 = sphi 0, %s771
      %s786 = sphi 0, %s772
      %s790 = sphi 0, %s790
      %s792 = sphi 0, %s790
      %s793 = sphi 0, %s792
      %s807 = sphi 0, %s793
      %s811 = sphi 0, %s811
      %s813 = sphi 0, %s811
      %s814 = sphi 0, %s813
      %s828 = sphi 0, %s814
      %s832 = sphi 0, %s832
      %s834 = sphi 0, %s832
      %s835 = sphi 0, %s834
      %s849 = sphi 0, %s835
      %s853 = sphi 0, %s853
      %s855 = sphi 0, %s853
      %s856 = sphi 0, %s855
      %s870 = sphi 0, %s856
      %s874 = sphi 0, %s874
      %s876 = sphi 0, %s874
      %s877 = sphi 0, %s876
      %s891 = sphi 0, %s877
      %s895 = sphi 0, %s895
      %s897 = sphi 0, %s895
      %s898 = sphi 0, %s897
      %s912 = sphi 0, %s898
      %s916 = sphi 0, %s916
      %s918 = sphi 0, %s916
      %s919 = sphi 0, %s918
      %s933 = sphi 0, %s919
      %s937 = sphi 0, %s937
      %s939 = sphi 0, %s937
      %s940 = sphi 0, %s939
      %s954 = sphi 0, %s940
      %s958 = sphi 0, %s958
      %s960 = sphi 0, %s958
      %s961 = sphi 0, %s960
      %s975 = sphi 0, %s961
      %s979 = sphi 0, %s979
      %s981 = sphi 0, %s979
      %s982 = sphi 0, %s981
      %s996 = sphi 0, %s982
      %s1000 = sphi 0, %s1000
      %s1002 = sphi 0, %s1000
      %s1003 = sphi 0, %s1002
      %s1017 = sphi 0, %s1003
      %s1021 = sphi 0, %s1021
      %s1023 = sphi 0, %s1021
      %s1024 = sphi 0, %s1023
      %s1038 = sphi 0, %s1024
      %s1042 = sphi 0, %s1042
      %s1044 = sphi 0, %s1042
      %s1045 = sphi 0, %s1044
      %s1059 = sphi 0, %s1045
      %s1063 = sphi 0, %s1063
      %s1065 = sphi 0, %s1063
      %s1066 = sphi 0, %s1065
      %s1080 = sphi 0, %s1066
      %s1084 = sphi 0, %s1084
      %s1086 = sphi 0, %s1084
      %s1087 = sphi 0, %s1086
      %s1101 = sphi 0, %s1087
      %s1105 = sphi 0, %s1105
      %s1107 = sphi 0, %s1105
      %s1108 = sphi 0, %s1107
      %s1122 = sphi 0, %s1108
      %s1126 = sphi 0, %s1126
      %s1128 = sphi 0, %s1126
      %s1129 = sphi 0, %s1128
      %s1143 = sphi 0, %s1129
      %s1147 = sphi 0, %s1147
      %s1149 = sphi 0, %s1147
      %s1150 = sphi 0, %s1149
      %s1164 = sphi 0, %s1150
      %s1168 = sphi 0, %s1168
      %s1170 = sphi 0, %s1168
      %s1171 = sphi 0, %s1170
      %s1185 = sphi 0, %s1171
      %s1189 = sphi 0, %s1189
      %s1191 = sphi 0, %s1189
      %s1192 = sphi 0, %s1191
      %s1206 = sphi 0, %s1192
      %s1210 = sphi 0, %s1210
      %s1212 = sphi 0, %s1210
      %s1213 = sphi 0, %s1212
      %s1227 = sphi 0, %s1213
      %s1231 = sphi 0, %s1231
      %s1233 = sphi 0, %s1231
      %s1234 = sphi 0, %s1233
      %s1248 = sphi 0, %s1234
      %s1252 = sphi 0, %s1252
      %s1254 = sphi 0, %s1252
      %s1255 = sphi 0, %s1254
      %s1269 = sphi 0, %s1255
      %s1273 = sphi 0, %s1273
      %s1275 = sphi 0, %s1273
      %s1276 = sphi 0, %s1275
      %s1290 = sphi 0, %s1276
      %s1294 = sphi 0, %s1294
      %s1296 = sphi 0, %s1294
      %s1297 = sphi 0, %s1296
      %s1311 = sphi 0, %s1297
      %s1315 = sphi 0, %s1315
      %s1317 = sphi 0, %s1315
      %s1318 = sphi 0, %s1317
      %s1332 = sphi 0, %s1318
      %s1336 = sphi 0, %s1336
      %s1338 = sphi 0, %s1336
      %s1339 = sphi 0, %s1338
      %s1353 = sphi 0, %s1339
      %s1357 = sphi 0, %s1357
      %s1359 = sphi 0, %s1357
      %s1360 = sphi 0, %s1359
      %s1374 = sphi 0, %s1360
      %s1378 = sphi 0, %s1378
      %s1380 = sphi 0, %s1378
      %s1381 = sphi 0, %s1380
      %s1395 = sphi 0, %s1381
      %s1399 = sphi 0, %s1399
      %s1401 = sphi 0, %s1399
      %s1402 = sphi 0, %s1401
      %s1416 = sphi 0, %s1402
      %s1420 = sphi 0, %s1420
      %s1422 = sphi 0, %s1420
      %s1423 = sphi 0, %s1422
      %s1437 = sphi 0, %s1423
      %s1441 = sphi 0, %s1441
      %s1443 = sphi 0, %s1441
      %s1444 = sphi 0, %s1443
      %s1458 = sphi 0, %s1444
      %s1462 = sphi 0, %s1462
      %s1464 = sphi 0, %s1462
      %s1465 = sphi 0, %s1464
      %s1479 = sphi 0, %s1465
      %s1483 = sphi 0, %s1483
      %s1485 = sphi 0, %s1483
      %s1486 = sphi 0, %s1485
      %s1500 = sphi 0, %s1486
      %s1504 = sphi 0, %s1504
      %s1506 = sphi 0, %s1504
      %s1507 = sphi 0, %s1506
      %s1521 = sphi 0, %s1507
      %s1525 = sphi 0, %s1525
      %s1527 = sphi 0, %s1525
      %s1528 = sphi 0, %s1527
      %s1542 = sphi 0, %s1528
      %s1546 = sphi 0, %s1546
      %s1548 = sphi 0, %s1546
      %s1549 = sphi 0, %s1548
      %s1563 = sphi 0, %s1549
      %s1567 = sphi 0, %s1567
      %s1569 = sphi 0, %s1567
      %s1570 = sphi 0, %s1569
      %s1584 = sphi 0, %s1570
      %s1588 = sphi 0, %s1588
      %s1590 = sphi 0, %s1588
      %s1591 = sphi 0, %s1590
      %s1605 = sphi 0, %s1591
      %s1609 = sphi 0, %s1609
      %s1611 = sphi 0, %s1609
      %s1612 = sphi 0, %s1611
      %s1626 = sphi 0, %s1612
      %s1630 = sphi 0, %s1630
      %s1632 = sphi 0, %s1630
      %s1633 = sphi 0, %s1632
      %s1647 = sphi 0, %s1633
      %s1651 = sphi 0, %s1651
      %s1653 = sphi 0, %s1651
      %s1654 = sphi 0, %s1653
      %s1668 = sphi 0, %s1654
      %s1672 = sphi 0, %s1672
      %s1674 = sphi 0, %s1672
      %s1675 = sphi 0, %s1674
      %s1689 = sphi 0, %s1675
      %s1693 = sphi 0, %s1693
      %s1695 = sphi 0, %s1693
      %s1696 = sphi 0, %s1695
      %s1710 = sphi 0, %s1696
      %s1714 = sphi 0, %s1714
      %s1716 = sphi 0, %s1714
      %s1717 = sphi 0, %s1716
      %s1731 = sphi 0, %s1717
      %s1737 = sphi 0, %s1739
      %s1740 = sphi 0, %s1737
      %s1741 = sphi 0, %s1740
      %s1757 = sphi 0, %s1741
      %s1763 = sphi 0, %s1765
      %s1766 = sphi 0, %s1763
      %s1767 = sphi 0, %s1766
      %s1783 = sphi 0, %s1767
      %s1789 = sphi 0, %s1791
      %s1792 = sphi 0, %s1789
      %s1793 = sphi 0, %s1792
      %s1809 = sphi 0, %s1793
      %s1815 = sphi 0, %s1817
      %s1818 = sphi 0, %s1815
      %s1819 = sphi 0, %s1818
      %s1835 = sphi 0, %s1819
    $region4: #{backbone_with_afpn_forward.1} parent=1 // loop_header_branch
      %192 = sbr.rel (%p190) target = $region8
    $region5: #{backbone_with_afpn_forward.1} parent=1 // loop_body
      %s194 = ssub.s32 %s189, 1
      %s195 = ssub.s32 %s189, 2
      %s196 = sadd.s32 %s189, 1
      %s197 = ssub.s32 %s189, %s196
      %p198 = scmp.eq.s32.totalorder %s197, 0
      %s200 = sadd.s32 %s199, 1
      %s201 = scalar_select %p198, %s199, %s200
      %p204 = pneg %p198
      %p205 = scmp.eq.s32.totalorder %s189, 1
      %p206 = por %p204, %p205
      %p207 = scmp.ne.s32.totalorder %s199, %s202
      %p208 = scmp.eq.s32.totalorder %s189, 0
      %p209 = por %p207, %p208
      %p210 = scmp.ne.s32.totalorder %s199, %s202
      %p211 = scmp.eq.s32.totalorder %s194, 1
      %p212 = por %p210, %p211
      %p213 = scmp.ne.s32.totalorder %s202, %s203
      %p214 = scmp.eq.s32.totalorder %s194, 0
      %p215 = por %p213, %p214
      %p216 = scmp.ne.s32.totalorder %s202, %s203
      %p217 = scmp.eq.s32.totalorder %s195, 1
      %p218 = por %p216, %p217
      %p220 = scmp.ne.s32.totalorder %s203, %s219
      %p221 = scmp.eq.s32.totalorder %s195, 0
      %p222 = por %p220, %p221
      %s224 = sadd.s32 %s223, 1
      %p227 = scmp.eq.s32.totalorder %s189, 1
      %p228 = scmp.ne.s32.totalorder %s223, %s225
      %p229 = scmp.eq.s32.totalorder %s189, 0
      %p230 = por %p228, %p229
      %p231 = scmp.ne.s32.totalorder %s223, %s225
      %p232 = scmp.eq.s32.totalorder %s194, 1
      %p233 = por %p231, %p232
      %p234 = scmp.ne.s32.totalorder %s225, %s226
      %p235 = scmp.eq.s32.totalorder %s194, 0
      %p236 = por %p234, %p235
      %p237 = scmp.ne.s32.totalorder %s225, %s226
      %p238 = scmp.eq.s32.totalorder %s195, 1
      %p239 = por %p237, %p238
      %p241 = scmp.ne.s32.totalorder %s226, %s240
      %p242 = scmp.eq.s32.totalorder %s195, 0
      %p243 = por %p241, %p242
      %s245 = sadd.s32 %s244, 1
      %p248 = scmp.eq.s32.totalorder %s189, 1
      %p249 = scmp.ne.s32.totalorder %s244, %s246
      %p250 = scmp.eq.s32.totalorder %s189, 0
      %p251 = por %p249, %p250
      %p252 = scmp.ne.s32.totalorder %s244, %s246
      %p253 = scmp.eq.s32.totalorder %s194, 1
      %p254 = por %p252, %p253
      %p255 = scmp.ne.s32.totalorder %s246, %s247
      %p256 = scmp.eq.s32.totalorder %s194, 0
      %p257 = por %p255, %p256
      %p258 = scmp.ne.s32.totalorder %s246, %s247
      %p259 = scmp.eq.s32.totalorder %s195, 1
      %p260 = por %p258, %p259
      %p262 = scmp.ne.s32.totalorder %s247, %s261
      %p263 = scmp.eq.s32.totalorder %s195, 0
      %p264 = por %p262, %p263
      %s266 = sadd.s32 %s265, 1
      %p269 = scmp.eq.s32.totalorder %s189, 1
      %p270 = scmp.ne.s32.totalorder %s265, %s267
      %p271 = scmp.eq.s32.totalorder %s189, 0
      %p272 = por %p270, %p271
      %p273 = scmp.ne.s32.totalorder %s265, %s267
      %p274 = scmp.eq.s32.totalorder %s194, 1
      %p275 = por %p273, %p274
      %p276 = scmp.ne.s32.totalorder %s267, %s268
      %p277 = scmp.eq.s32.totalorder %s194, 0
      %p278 = por %p276, %p277
      %p279 = scmp.ne.s32.totalorder %s267, %s268
      %p280 = scmp.eq.s32.totalorder %s195, 1
      %p281 = por %p279, %p280
      %p283 = scmp.ne.s32.totalorder %s268, %s282
      %p284 = scmp.eq.s32.totalorder %s195, 0
      %p285 = por %p283, %p284
      %s287 = sadd.s32 %s286, 1
      %p290 = scmp.eq.s32.totalorder %s189, 1
      %p291 = scmp.ne.s32.totalorder %s286, %s288
      %p292 = scmp.eq.s32.totalorder %s189, 0
      %p293 = por %p291, %p292
      %p294 = scmp.ne.s32.totalorder %s286, %s288
      %p295 = scmp.eq.s32.totalorder %s194, 1
      %p296 = por %p294, %p295
      %p297 = scmp.ne.s32.totalorder %s288, %s289
      %p298 = scmp.eq.s32.totalorder %s194, 0
      %p299 = por %p297, %p298
      %p300 = scmp.ne.s32.totalorder %s288, %s289
      %p301 = scmp.eq.s32.totalorder %s195, 1
      %p302 = por %p300, %p301
      %p304 = scmp.ne.s32.totalorder %s289, %s303
      %p305 = scmp.eq.s32.totalorder %s195, 0
      %p306 = por %p304, %p305
      %s308 = sadd.s32 %s307, 1
      %p311 = scmp.eq.s32.totalorder %s189, 1
      %p312 = scmp.ne.s32.totalorder %s307, %s309
      %p313 = scmp.eq.s32.totalorder %s189, 0
      %p314 = por %p312, %p313
      %p315 = scmp.ne.s32.totalorder %s307, %s309
      %p316 = scmp.eq.s32.totalorder %s194, 1
      %p317 = por %p315, %p316
      %p318 = scmp.ne.s32.totalorder %s309, %s310
      %p319 = scmp.eq.s32.totalorder %s194, 0
      %p320 = por %p318, %p319
      %p321 = scmp.ne.s32.totalorder %s309, %s310
      %p322 = scmp.eq.s32.totalorder %s195, 1
      %p323 = por %p321, %p322
      %p325 = scmp.ne.s32.totalorder %s310, %s324
      %p326 = scmp.eq.s32.totalorder %s195, 0
      %p327 = por %p325, %p326
      %s329 = sadd.s32 %s328, 1
      %p332 = scmp.eq.s32.totalorder %s189, 1
      %p333 = scmp.ne.s32.totalorder %s328, %s330
      %p334 = scmp.eq.s32.totalorder %s189, 0
      %p335 = por %p333, %p334
      %p336 = scmp.ne.s32.totalorder %s328, %s330
      %p337 = scmp.eq.s32.totalorder %s194, 1
      %p338 = por %p336, %p337
      %p339 = scmp.ne.s32.totalorder %s330, %s331
      %p340 = scmp.eq.s32.totalorder %s194, 0
      %p341 = por %p339, %p340
      %p342 = scmp.ne.s32.totalorder %s330, %s331
      %p343 = scmp.eq.s32.totalorder %s195, 1
      %p344 = por %p342, %p343
      %p346 = scmp.ne.s32.totalorder %s331, %s345
      %p347 = scmp.eq.s32.totalorder %s195, 0
      %p348 = por %p346, %p347
      %s350 = sadd.s32 %s349, 1
      %p353 = scmp.eq.s32.totalorder %s189, 1
      %p354 = scmp.ne.s32.totalorder %s349, %s351
      %p355 = scmp.eq.s32.totalorder %s189, 0
      %p356 = por %p354, %p355
      %p357 = scmp.ne.s32.totalorder %s349, %s351
      %p358 = scmp.eq.s32.totalorder %s194, 1
      %p359 = por %p357, %p358
      %p360 = scmp.ne.s32.totalorder %s351, %s352
      %p361 = scmp.eq.s32.totalorder %s194, 0
      %p362 = por %p360, %p361
      %p363 = scmp.ne.s32.totalorder %s351, %s352
      %p364 = scmp.eq.s32.totalorder %s195, 1
      %p365 = por %p363, %p364
      %p367 = scmp.ne.s32.totalorder %s352, %s366
      %p368 = scmp.eq.s32.totalorder %s195, 0
      %p369 = por %p367, %p368
      %s371 = sadd.s32 %s370, 1
      %p374 = scmp.eq.s32.totalorder %s189, 1
      %p375 = scmp.ne.s32.totalorder %s370, %s372
      %p376 = scmp.eq.s32.totalorder %s189, 0
      %p377 = por %p375, %p376
      %p378 = scmp.ne.s32.totalorder %s370, %s372
      %p379 = scmp.eq.s32.totalorder %s194, 1
      %p380 = por %p378, %p379
      %p381 = scmp.ne.s32.totalorder %s372, %s373
      %p382 = scmp.eq.s32.totalorder %s194, 0
      %p383 = por %p381, %p382
      %p384 = scmp.ne.s32.totalorder %s372, %s373
      %p385 = scmp.eq.s32.totalorder %s195, 1
      %p386 = por %p384, %p385
      %p388 = scmp.ne.s32.totalorder %s373, %s387
      %p389 = scmp.eq.s32.totalorder %s195, 0
      %p390 = por %p388, %p389
      %s392 = sadd.s32 %s391, 1
      %p395 = scmp.eq.s32.totalorder %s189, 1
      %p396 = scmp.ne.s32.totalorder %s391, %s393
      %p397 = scmp.eq.s32.totalorder %s189, 0
      %p398 = por %p396, %p397
      %p399 = scmp.ne.s32.totalorder %s391, %s393
      %p400 = scmp.eq.s32.totalorder %s194, 1
      %p401 = por %p399, %p400
      %p402 = scmp.ne.s32.totalorder %s393, %s394
      %p403 = scmp.eq.s32.totalorder %s194, 0
      %p404 = por %p402, %p403
      %p405 = scmp.ne.s32.totalorder %s393, %s394
      %p406 = scmp.eq.s32.totalorder %s195, 1
      %p407 = por %p405, %p406
      %p409 = scmp.ne.s32.totalorder %s394, %s408
      %p410 = scmp.eq.s32.totalorder %s195, 0
      %p411 = por %p409, %p410
      %s413 = sadd.s32 %s412, 1
      %p416 = scmp.eq.s32.totalorder %s189, 1
      %p417 = scmp.ne.s32.totalorder %s412, %s414
      %p418 = scmp.eq.s32.totalorder %s189, 0
      %p419 = por %p417, %p418
      %p420 = scmp.ne.s32.totalorder %s412, %s414
      %p421 = scmp.eq.s32.totalorder %s194, 1
      %p422 = por %p420, %p421
      %p423 = scmp.ne.s32.totalorder %s414, %s415
      %p424 = scmp.eq.s32.totalorder %s194, 0
      %p425 = por %p423, %p424
      %p426 = scmp.ne.s32.totalorder %s414, %s415
      %p427 = scmp.eq.s32.totalorder %s195, 1
      %p428 = por %p426, %p427
      %p430 = scmp.ne.s32.totalorder %s415, %s429
      %p431 = scmp.eq.s32.totalorder %s195, 0
      %p432 = por %p430, %p431
      %s434 = sadd.s32 %s433, 1
      %p437 = scmp.eq.s32.totalorder %s189, 1
      %p438 = scmp.ne.s32.totalorder %s433, %s435
      %p439 = scmp.eq.s32.totalorder %s189, 0
      %p440 = por %p438, %p439
      %p441 = scmp.ne.s32.totalorder %s433, %s435
      %p442 = scmp.eq.s32.totalorder %s194, 1
      %p443 = por %p441, %p442
      %p444 = scmp.ne.s32.totalorder %s435, %s436
      %p445 = scmp.eq.s32.totalorder %s194, 0
      %p446 = por %p444, %p445
      %p447 = scmp.ne.s32.totalorder %s435, %s436
      %p448 = scmp.eq.s32.totalorder %s195, 1
      %p449 = por %p447, %p448
      %p451 = scmp.ne.s32.totalorder %s436, %s450
      %p452 = scmp.eq.s32.totalorder %s195, 0
      %p453 = por %p451, %p452
      %s455 = sadd.s32 %s454, 1
      %p458 = scmp.eq.s32.totalorder %s189, 1
      %p459 = scmp.ne.s32.totalorder %s454, %s456
      %p460 = scmp.eq.s32.totalorder %s189, 0
      %p461 = por %p459, %p460
      %p462 = scmp.ne.s32.totalorder %s454, %s456
      %p463 = scmp.eq.s32.totalorder %s194, 1
      %p464 = por %p462, %p463
      %p465 = scmp.ne.s32.totalorder %s456, %s457
      %p466 = scmp.eq.s32.totalorder %s194, 0
      %p467 = por %p465, %p466
      %p468 = scmp.ne.s32.totalorder %s456, %s457
      %p469 = scmp.eq.s32.totalorder %s195, 1
      %p470 = por %p468, %p469
      %p472 = scmp.ne.s32.totalorder %s457, %s471
      %p473 = scmp.eq.s32.totalorder %s195, 0
      %p474 = por %p472, %p473
      %s476 = sadd.s32 %s475, 1
      %p479 = scmp.eq.s32.totalorder %s189, 1
      %p480 = scmp.ne.s32.totalorder %s475, %s477
      %p481 = scmp.eq.s32.totalorder %s189, 0
      %p482 = por %p480, %p481
      %p483 = scmp.ne.s32.totalorder %s475, %s477
      %p484 = scmp.eq.s32.totalorder %s194, 1
      %p485 = por %p483, %p484
      %p486 = scmp.ne.s32.totalorder %s477, %s478
      %p487 = scmp.eq.s32.totalorder %s194, 0
      %p488 = por %p486, %p487
      %p489 = scmp.ne.s32.totalorder %s477, %s478
      %p490 = scmp.eq.s32.totalorder %s195, 1
      %p491 = por %p489, %p490
      %p493 = scmp.ne.s32.totalorder %s478, %s492
      %p494 = scmp.eq.s32.totalorder %s195, 0
      %p495 = por %p493, %p494
      %s497 = sadd.s32 %s496, 1
      %p500 = scmp.eq.s32.totalorder %s189, 1
      %p501 = scmp.ne.s32.totalorder %s496, %s498
      %p502 = scmp.eq.s32.totalorder %s189, 0
      %p503 = por %p501, %p502
      %p504 = scmp.ne.s32.totalorder %s496, %s498
      %p505 = scmp.eq.s32.totalorder %s194, 1
      %p506 = por %p504, %p505
      %p507 = scmp.ne.s32.totalorder %s498, %s499
      %p508 = scmp.eq.s32.totalorder %s194, 0
      %p509 = por %p507, %p508
      %p510 = scmp.ne.s32.totalorder %s498, %s499
      %p511 = scmp.eq.s32.totalorder %s195, 1
      %p512 = por %p510, %p511
      %p514 = scmp.ne.s32.totalorder %s499, %s513
      %p515 = scmp.eq.s32.totalorder %s195, 0
      %p516 = por %p514, %p515
      %s518 = sadd.s32 %s517, 1
      %p521 = scmp.eq.s32.totalorder %s189, 1
      %p522 = scmp.ne.s32.totalorder %s517, %s519
      %p523 = scmp.eq.s32.totalorder %s189, 0
      %p524 = por %p522, %p523
      %p525 = scmp.ne.s32.totalorder %s517, %s519
      %p526 = scmp.eq.s32.totalorder %s194, 1
      %p527 = por %p525, %p526
      %p528 = scmp.ne.s32.totalorder %s519, %s520
      %p529 = scmp.eq.s32.totalorder %s194, 0
      %p530 = por %p528, %p529
      %p531 = scmp.ne.s32.totalorder %s519, %s520
      %p532 = scmp.eq.s32.totalorder %s195, 1
      %p533 = por %p531, %p532
      %p535 = scmp.ne.s32.totalorder %s520, %s534
      %p536 = scmp.eq.s32.totalorder %s195, 0
      %p537 = por %p535, %p536
      %s539 = sadd.s32 %s538, 1
      %p542 = scmp.eq.s32.totalorder %s189, 1
      %p543 = scmp.ne.s32.totalorder %s538, %s540
      %p544 = scmp.eq.s32.totalorder %s189, 0
      %p545 = por %p543, %p544
      %p546 = scmp.ne.s32.totalorder %s538, %s540
      %p547 = scmp.eq.s32.totalorder %s194, 1
      %p548 = por %p546, %p547
      %p549 = scmp.ne.s32.totalorder %s540, %s541
      %p550 = scmp.eq.s32.totalorder %s194, 0
      %p551 = por %p549, %p550
      %p552 = scmp.ne.s32.totalorder %s540, %s541
      %p553 = scmp.eq.s32.totalorder %s195, 1
      %p554 = por %p552, %p553
      %p556 = scmp.ne.s32.totalorder %s541, %s555
      %p557 = scmp.eq.s32.totalorder %s195, 0
      %p558 = por %p556, %p557
      %s560 = sadd.s32 %s559, 1
      %p563 = scmp.eq.s32.totalorder %s189, 1
      %p564 = scmp.ne.s32.totalorder %s559, %s561
      %p565 = scmp.eq.s32.totalorder %s189, 0
      %p566 = por %p564, %p565
      %p567 = scmp.ne.s32.totalorder %s559, %s561
      %p568 = scmp.eq.s32.totalorder %s194, 1
      %p569 = por %p567, %p568
      %p570 = scmp.ne.s32.totalorder %s561, %s562
      %p571 = scmp.eq.s32.totalorder %s194, 0
      %p572 = por %p570, %p571
      %p573 = scmp.ne.s32.totalorder %s561, %s562
      %p574 = scmp.eq.s32.totalorder %s195, 1
      %p575 = por %p573, %p574
      %p577 = scmp.ne.s32.totalorder %s562, %s576
      %p578 = scmp.eq.s32.totalorder %s195, 0
      %p579 = por %p577, %p578
      %s581 = sadd.s32 %s580, 1
      %p584 = scmp.eq.s32.totalorder %s189, 1
      %p585 = scmp.ne.s32.totalorder %s580, %s582
      %p586 = scmp.eq.s32.totalorder %s189, 0
      %p587 = por %p585, %p586
      %p588 = scmp.ne.s32.totalorder %s580, %s582
      %p589 = scmp.eq.s32.totalorder %s194, 1
      %p590 = por %p588, %p589
      %p591 = scmp.ne.s32.totalorder %s582, %s583
      %p592 = scmp.eq.s32.totalorder %s194, 0
      %p593 = por %p591, %p592
      %p594 = scmp.ne.s32.totalorder %s582, %s583
      %p595 = scmp.eq.s32.totalorder %s195, 1
      %p596 = por %p594, %p595
      %p598 = scmp.ne.s32.totalorder %s583, %s597
      %p599 = scmp.eq.s32.totalorder %s195, 0
      %p600 = por %p598, %p599
      %s602 = sadd.s32 %s601, 1
      %p605 = scmp.eq.s32.totalorder %s189, 1
      %p606 = scmp.ne.s32.totalorder %s601, %s603
      %p607 = scmp.eq.s32.totalorder %s189, 0
      %p608 = por %p606, %p607
      %p609 = scmp.ne.s32.totalorder %s601, %s603
      %p610 = scmp.eq.s32.totalorder %s194, 1
      %p611 = por %p609, %p610
      %p612 = scmp.ne.s32.totalorder %s603, %s604
      %p613 = scmp.eq.s32.totalorder %s194, 0
      %p614 = por %p612, %p613
      %p615 = scmp.ne.s32.totalorder %s603, %s604
      %p616 = scmp.eq.s32.totalorder %s195, 1
      %p617 = por %p615, %p616
      %p619 = scmp.ne.s32.totalorder %s604, %s618
      %p620 = scmp.eq.s32.totalorder %s195, 0
      %p621 = por %p619, %p620
      %s623 = sadd.s32 %s622, 1
      %p626 = scmp.eq.s32.totalorder %s189, 1
      %p627 = scmp.ne.s32.totalorder %s622, %s624
      %p628 = scmp.eq.s32.totalorder %s189, 0
      %p629 = por %p627, %p628
      %p630 = scmp.ne.s32.totalorder %s622, %s624
      %p631 = scmp.eq.s32.totalorder %s194, 1
      %p632 = por %p630, %p631
      %p633 = scmp.ne.s32.totalorder %s624, %s625
      %p634 = scmp.eq.s32.totalorder %s194, 0
      %p635 = por %p633, %p634
      %p636 = scmp.ne.s32.totalorder %s624, %s625
      %p637 = scmp.eq.s32.totalorder %s195, 1
      %p638 = por %p636, %p637
      %p640 = scmp.ne.s32.totalorder %s625, %s639
      %p641 = scmp.eq.s32.totalorder %s195, 0
      %p642 = por %p640, %p641
      %s644 = sadd.s32 %s643, 1
      %p647 = scmp.eq.s32.totalorder %s189, 1
      %p648 = scmp.ne.s32.totalorder %s643, %s645
      %p649 = scmp.eq.s32.totalorder %s189, 0
      %p650 = por %p648, %p649
      %p651 = scmp.ne.s32.totalorder %s643, %s645
      %p652 = scmp.eq.s32.totalorder %s194, 1
      %p653 = por %p651, %p652
      %p654 = scmp.ne.s32.totalorder %s645, %s646
      %p655 = scmp.eq.s32.totalorder %s194, 0
      %p656 = por %p654, %p655
      %p657 = scmp.ne.s32.totalorder %s645, %s646
      %p658 = scmp.eq.s32.totalorder %s195, 1
      %p659 = por %p657, %p658
      %p661 = scmp.ne.s32.totalorder %s646, %s660
      %p662 = scmp.eq.s32.totalorder %s195, 0
      %p663 = por %p661, %p662
      %s665 = sadd.s32 %s664, 1
      %p668 = scmp.eq.s32.totalorder %s189, 1
      %p669 = scmp.ne.s32.totalorder %s664, %s666
      %p670 = scmp.eq.s32.totalorder %s189, 0
      %p671 = por %p669, %p670
      %p672 = scmp.ne.s32.totalorder %s664, %s666
      %p673 = scmp.eq.s32.totalorder %s194, 1
      %p674 = por %p672, %p673
      %p675 = scmp.ne.s32.totalorder %s666, %s667
      %p676 = scmp.eq.s32.totalorder %s194, 0
      %p677 = por %p675, %p676
      %p678 = scmp.ne.s32.totalorder %s666, %s667
      %p679 = scmp.eq.s32.totalorder %s195, 1
      %p680 = por %p678, %p679
      %p682 = scmp.ne.s32.totalorder %s667, %s681
      %p683 = scmp.eq.s32.totalorder %s195, 0
      %p684 = por %p682, %p683
      %s686 = sadd.s32 %s685, 1
      %p689 = scmp.eq.s32.totalorder %s189, 1
      %p690 = scmp.ne.s32.totalorder %s685, %s687
      %p691 = scmp.eq.s32.totalorder %s189, 0
      %p692 = por %p690, %p691
      %p693 = scmp.ne.s32.totalorder %s685, %s687
      %p694 = scmp.eq.s32.totalorder %s194, 1
      %p695 = por %p693, %p694
      %p696 = scmp.ne.s32.totalorder %s687, %s688
      %p697 = scmp.eq.s32.totalorder %s194, 0
      %p698 = por %p696, %p697
      %p699 = scmp.ne.s32.totalorder %s687, %s688
      %p700 = scmp.eq.s32.totalorder %s195, 1
      %p701 = por %p699, %p700
      %p703 = scmp.ne.s32.totalorder %s688, %s702
      %p704 = scmp.eq.s32.totalorder %s195, 0
      %p705 = por %p703, %p704
      %s707 = sadd.s32 %s706, 1
      %p710 = scmp.eq.s32.totalorder %s189, 1
      %p711 = scmp.ne.s32.totalorder %s706, %s708
      %p712 = scmp.eq.s32.totalorder %s189, 0
      %p713 = por %p711, %p712
      %p714 = scmp.ne.s32.totalorder %s706, %s708
      %p715 = scmp.eq.s32.totalorder %s194, 1
      %p716 = por %p714, %p715
      %p717 = scmp.ne.s32.totalorder %s708, %s709
      %p718 = scmp.eq.s32.totalorder %s194, 0
      %p719 = por %p717, %p718
      %p720 = scmp.ne.s32.totalorder %s708, %s709
      %p721 = scmp.eq.s32.totalorder %s195, 1
      %p722 = por %p720, %p721
      %p724 = scmp.ne.s32.totalorder %s709, %s723
      %p725 = scmp.eq.s32.totalorder %s195, 0
      %p726 = por %p724, %p725
      %s728 = sadd.s32 %s727, 1
      %p731 = scmp.eq.s32.totalorder %s189, 1
      %p732 = scmp.ne.s32.totalorder %s727, %s729
      %p733 = scmp.eq.s32.totalorder %s189, 0
      %p734 = por %p732, %p733
      %p735 = scmp.ne.s32.totalorder %s727, %s729
      %p736 = scmp.eq.s32.totalorder %s194, 1
      %p737 = por %p735, %p736
      %p738 = scmp.ne.s32.totalorder %s729, %s730
      %p739 = scmp.eq.s32.totalorder %s194, 0
      %p740 = por %p738, %p739
      %p741 = scmp.ne.s32.totalorder %s729, %s730
      %p742 = scmp.eq.s32.totalorder %s195, 1
      %p743 = por %p741, %p742
      %p745 = scmp.ne.s32.totalorder %s730, %s744
      %p746 = scmp.eq.s32.totalorder %s195, 0
      %p747 = por %p745, %p746
      %s749 = sadd.s32 %s748, 1
      %p752 = scmp.eq.s32.totalorder %s189, 1
      %p753 = scmp.ne.s32.totalorder %s748, %s750
      %p754 = scmp.eq.s32.totalorder %s189, 0
      %p755 = por %p753, %p754
      %p756 = scmp.ne.s32.totalorder %s748, %s750
      %p757 = scmp.eq.s32.totalorder %s194, 1
      %p758 = por %p756, %p757
      %p759 = scmp.ne.s32.totalorder %s750, %s751
      %p760 = scmp.eq.s32.totalorder %s194, 0
      %p761 = por %p759, %p760
      %p762 = scmp.ne.s32.totalorder %s750, %s751
      %p763 = scmp.eq.s32.totalorder %s195, 1
      %p764 = por %p762, %p763
      %p766 = scmp.ne.s32.totalorder %s751, %s765
      %p767 = scmp.eq.s32.totalorder %s195, 0
      %p768 = por %p766, %p767
      %s770 = sadd.s32 %s769, 1
      %p773 = scmp.eq.s32.totalorder %s189, 1
      %p774 = scmp.ne.s32.totalorder %s769, %s771
      %p775 = scmp.eq.s32.totalorder %s189, 0
      %p776 = por %p774, %p775
      %p777 = scmp.ne.s32.totalorder %s769, %s771
      %p778 = scmp.eq.s32.totalorder %s194, 1
      %p779 = por %p777, %p778
      %p780 = scmp.ne.s32.totalorder %s771, %s772
      %p781 = scmp.eq.s32.totalorder %s194, 0
      %p782 = por %p780, %p781
      %p783 = scmp.ne.s32.totalorder %s771, %s772
      %p784 = scmp.eq.s32.totalorder %s195, 1
      %p785 = por %p783, %p784
      %p787 = scmp.ne.s32.totalorder %s772, %s786
      %p788 = scmp.eq.s32.totalorder %s195, 0
      %p789 = por %p787, %p788
      %s791 = sadd.s32 %s790, 1
      %p794 = scmp.eq.s32.totalorder %s189, 1
      %p795 = scmp.ne.s32.totalorder %s790, %s792
      %p796 = scmp.eq.s32.totalorder %s189, 0
      %p797 = por %p795, %p796
      %p798 = scmp.ne.s32.totalorder %s790, %s792
      %p799 = scmp.eq.s32.totalorder %s194, 1
      %p800 = por %p798, %p799
      %p801 = scmp.ne.s32.totalorder %s792, %s793
      %p802 = scmp.eq.s32.totalorder %s194, 0
      %p803 = por %p801, %p802
      %p804 = scmp.ne.s32.totalorder %s792, %s793
      %p805 = scmp.eq.s32.totalorder %s195, 1
      %p806 = por %p804, %p805
      %p808 = scmp.ne.s32.totalorder %s793, %s807
      %p809 = scmp.eq.s32.totalorder %s195, 0
      %p810 = por %p808, %p809
      %s812 = sadd.s32 %s811, 1
      %p815 = scmp.eq.s32.totalorder %s189, 1
      %p816 = scmp.ne.s32.totalorder %s811, %s813
      %p817 = scmp.eq.s32.totalorder %s189, 0
      %p818 = por %p816, %p817
      %p819 = scmp.ne.s32.totalorder %s811, %s813
      %p820 = scmp.eq.s32.totalorder %s194, 1
      %p821 = por %p819, %p820
      %p822 = scmp.ne.s32.totalorder %s813, %s814
      %p823 = scmp.eq.s32.totalorder %s194, 0
      %p824 = por %p822, %p823
      %p825 = scmp.ne.s32.totalorder %s813, %s814
      %p826 = scmp.eq.s32.totalorder %s195, 1
      %p827 = por %p825, %p826
      %p829 = scmp.ne.s32.totalorder %s814, %s828
      %p830 = scmp.eq.s32.totalorder %s195, 0
      %p831 = por %p829, %p830
      %s833 = sadd.s32 %s832, 1
      %p836 = scmp.eq.s32.totalorder %s189, 1
      %p837 = scmp.ne.s32.totalorder %s832, %s834
      %p838 = scmp.eq.s32.totalorder %s189, 0
      %p839 = por %p837, %p838
      %p840 = scmp.ne.s32.totalorder %s832, %s834
      %p841 = scmp.eq.s32.totalorder %s194, 1
      %p842 = por %p840, %p841
      %p843 = scmp.ne.s32.totalorder %s834, %s835
      %p844 = scmp.eq.s32.totalorder %s194, 0
      %p845 = por %p843, %p844
      %p846 = scmp.ne.s32.totalorder %s834, %s835
      %p847 = scmp.eq.s32.totalorder %s195, 1
      %p848 = por %p846, %p847
      %p850 = scmp.ne.s32.totalorder %s835, %s849
      %p851 = scmp.eq.s32.totalorder %s195, 0
      %p852 = por %p850, %p851
      %s854 = sadd.s32 %s853, 1
      %p857 = scmp.eq.s32.totalorder %s189, 1
      %p858 = scmp.ne.s32.totalorder %s853, %s855
      %p859 = scmp.eq.s32.totalorder %s189, 0
      %p860 = por %p858, %p859
      %p861 = scmp.ne.s32.totalorder %s853, %s855
      %p862 = scmp.eq.s32.totalorder %s194, 1
      %p863 = por %p861, %p862
      %p864 = scmp.ne.s32.totalorder %s855, %s856
      %p865 = scmp.eq.s32.totalorder %s194, 0
      %p866 = por %p864, %p865
      %p867 = scmp.ne.s32.totalorder %s855, %s856
      %p868 = scmp.eq.s32.totalorder %s195, 1
      %p869 = por %p867, %p868
      %p871 = scmp.ne.s32.totalorder %s856, %s870
      %p872 = scmp.eq.s32.totalorder %s195, 0
      %p873 = por %p871, %p872
      %s875 = sadd.s32 %s874, 1
      %p878 = scmp.eq.s32.totalorder %s189, 1
      %p879 = scmp.ne.s32.totalorder %s874, %s876
      %p880 = scmp.eq.s32.totalorder %s189, 0
      %p881 = por %p879, %p880
      %p882 = scmp.ne.s32.totalorder %s874, %s876
      %p883 = scmp.eq.s32.totalorder %s194, 1
      %p884 = por %p882, %p883
      %p885 = scmp.ne.s32.totalorder %s876, %s877
      %p886 = scmp.eq.s32.totalorder %s194, 0
      %p887 = por %p885, %p886
      %p888 = scmp.ne.s32.totalorder %s876, %s877
      %p889 = scmp.eq.s32.totalorder %s195, 1
      %p890 = por %p888, %p889
      %p892 = scmp.ne.s32.totalorder %s877, %s891
      %p893 = scmp.eq.s32.totalorder %s195, 0
      %p894 = por %p892, %p893
      %s896 = sadd.s32 %s895, 1
      %p899 = scmp.eq.s32.totalorder %s189, 1
      %p900 = scmp.ne.s32.totalorder %s895, %s897
      %p901 = scmp.eq.s32.totalorder %s189, 0
      %p902 = por %p900, %p901
      %p903 = scmp.ne.s32.totalorder %s895, %s897
      %p904 = scmp.eq.s32.totalorder %s194, 1
      %p905 = por %p903, %p904
      %p906 = scmp.ne.s32.totalorder %s897, %s898
      %p907 = scmp.eq.s32.totalorder %s194, 0
      %p908 = por %p906, %p907
      %p909 = scmp.ne.s32.totalorder %s897, %s898
      %p910 = scmp.eq.s32.totalorder %s195, 1
      %p911 = por %p909, %p910
      %p913 = scmp.ne.s32.totalorder %s898, %s912
      %p914 = scmp.eq.s32.totalorder %s195, 0
      %p915 = por %p913, %p914
      %s917 = sadd.s32 %s916, 1
      %p920 = scmp.eq.s32.totalorder %s189, 1
      %p921 = scmp.ne.s32.totalorder %s916, %s918
      %p922 = scmp.eq.s32.totalorder %s189, 0
      %p923 = por %p921, %p922
      %p924 = scmp.ne.s32.totalorder %s916, %s918
      %p925 = scmp.eq.s32.totalorder %s194, 1
      %p926 = por %p924, %p925
      %p927 = scmp.ne.s32.totalorder %s918, %s919
      %p928 = scmp.eq.s32.totalorder %s194, 0
      %p929 = por %p927, %p928
      %p930 = scmp.ne.s32.totalorder %s918, %s919
      %p931 = scmp.eq.s32.totalorder %s195, 1
      %p932 = por %p930, %p931
      %p934 = scmp.ne.s32.totalorder %s919, %s933
      %p935 = scmp.eq.s32.totalorder %s195, 0
      %p936 = por %p934, %p935
      %s938 = sadd.s32 %s937, 1
      %p941 = scmp.eq.s32.totalorder %s189, 1
      %p942 = scmp.ne.s32.totalorder %s937, %s939
      %p943 = scmp.eq.s32.totalorder %s189, 0
      %p944 = por %p942, %p943
      %p945 = scmp.ne.s32.totalorder %s937, %s939
      %p946 = scmp.eq.s32.totalorder %s194, 1
      %p947 = por %p945, %p946
      %p948 = scmp.ne.s32.totalorder %s939, %s940
      %p949 = scmp.eq.s32.totalorder %s194, 0
      %p950 = por %p948, %p949
      %p951 = scmp.ne.s32.totalorder %s939, %s940
      %p952 = scmp.eq.s32.totalorder %s195, 1
      %p953 = por %p951, %p952
      %p955 = scmp.ne.s32.totalorder %s940, %s954
      %p956 = scmp.eq.s32.totalorder %s195, 0
      %p957 = por %p955, %p956
      %s959 = sadd.s32 %s958, 1
      %p962 = scmp.eq.s32.totalorder %s189, 1
      %p963 = scmp.ne.s32.totalorder %s958, %s960
      %p964 = scmp.eq.s32.totalorder %s189, 0
      %p965 = por %p963, %p964
      %p966 = scmp.ne.s32.totalorder %s958, %s960
      %p967 = scmp.eq.s32.totalorder %s194, 1
      %p968 = por %p966, %p967
      %p969 = scmp.ne.s32.totalorder %s960, %s961
      %p970 = scmp.eq.s32.totalorder %s194, 0
      %p971 = por %p969, %p970
      %p972 = scmp.ne.s32.totalorder %s960, %s961
      %p973 = scmp.eq.s32.totalorder %s195, 1
      %p974 = por %p972, %p973
      %p976 = scmp.ne.s32.totalorder %s961, %s975
      %p977 = scmp.eq.s32.totalorder %s195, 0
      %p978 = por %p976, %p977
      %s980 = sadd.s32 %s979, 1
      %p983 = scmp.eq.s32.totalorder %s189, 1
      %p984 = scmp.ne.s32.totalorder %s979, %s981
      %p985 = scmp.eq.s32.totalorder %s189, 0
      %p986 = por %p984, %p985
      %p987 = scmp.ne.s32.totalorder %s979, %s981
      %p988 = scmp.eq.s32.totalorder %s194, 1
      %p989 = por %p987, %p988
      %p990 = scmp.ne.s32.totalorder %s981, %s982
      %p991 = scmp.eq.s32.totalorder %s194, 0
      %p992 = por %p990, %p991
      %p993 = scmp.ne.s32.totalorder %s981, %s982
      %p994 = scmp.eq.s32.totalorder %s195, 1
      %p995 = por %p993, %p994
      %p997 = scmp.ne.s32.totalorder %s982, %s996
      %p998 = scmp.eq.s32.totalorder %s195, 0
      %p999 = por %p997, %p998
      %s1001 = sadd.s32 %s1000, 1
      %p1004 = scmp.eq.s32.totalorder %s189, 1
      %p1005 = scmp.ne.s32.totalorder %s1000, %s1002
      %p1006 = scmp.eq.s32.totalorder %s189, 0
      %p1007 = por %p1005, %p1006
      %p1008 = scmp.ne.s32.totalorder %s1000, %s1002
      %p1009 = scmp.eq.s32.totalorder %s194, 1
      %p1010 = por %p1008, %p1009
      %p1011 = scmp.ne.s32.totalorder %s1002, %s1003
      %p1012 = scmp.eq.s32.totalorder %s194, 0
      %p1013 = por %p1011, %p1012
      %p1014 = scmp.ne.s32.totalorder %s1002, %s1003
      %p1015 = scmp.eq.s32.totalorder %s195, 1
      %p1016 = por %p1014, %p1015
      %p1018 = scmp.ne.s32.totalorder %s1003, %s1017
      %p1019 = scmp.eq.s32.totalorder %s195, 0
      %p1020 = por %p1018, %p1019
      %s1022 = sadd.s32 %s1021, 1
      %p1025 = scmp.eq.s32.totalorder %s189, 1
      %p1026 = scmp.ne.s32.totalorder %s1021, %s1023
      %p1027 = scmp.eq.s32.totalorder %s189, 0
      %p1028 = por %p1026, %p1027
      %p1029 = scmp.ne.s32.totalorder %s1021, %s1023
      %p1030 = scmp.eq.s32.totalorder %s194, 1
      %p1031 = por %p1029, %p1030
      %p1032 = scmp.ne.s32.totalorder %s1023, %s1024
      %p1033 = scmp.eq.s32.totalorder %s194, 0
      %p1034 = por %p1032, %p1033
      %p1035 = scmp.ne.s32.totalorder %s1023, %s1024
      %p1036 = scmp.eq.s32.totalorder %s195, 1
      %p1037 = por %p1035, %p1036
      %p1039 = scmp.ne.s32.totalorder %s1024, %s1038
      %p1040 = scmp.eq.s32.totalorder %s195, 0
      %p1041 = por %p1039, %p1040
      %s1043 = sadd.s32 %s1042, 1
      %p1046 = scmp.eq.s32.totalorder %s189, 1
      %p1047 = scmp.ne.s32.totalorder %s1042, %s1044
      %p1048 = scmp.eq.s32.totalorder %s189, 0
      %p1049 = por %p1047, %p1048
      %p1050 = scmp.ne.s32.totalorder %s1042, %s1044
      %p1051 = scmp.eq.s32.totalorder %s194, 1
      %p1052 = por %p1050, %p1051
      %p1053 = scmp.ne.s32.totalorder %s1044, %s1045
      %p1054 = scmp.eq.s32.totalorder %s194, 0
      %p1055 = por %p1053, %p1054
      %p1056 = scmp.ne.s32.totalorder %s1044, %s1045
      %p1057 = scmp.eq.s32.totalorder %s195, 1
      %p1058 = por %p1056, %p1057
      %p1060 = scmp.ne.s32.totalorder %s1045, %s1059
      %p1061 = scmp.eq.s32.totalorder %s195, 0
      %p1062 = por %p1060, %p1061
      %s1064 = sadd.s32 %s1063, 1
      %p1067 = scmp.eq.s32.totalorder %s189, 1
      %p1068 = scmp.ne.s32.totalorder %s1063, %s1065
      %p1069 = scmp.eq.s32.totalorder %s189, 0
      %p1070 = por %p1068, %p1069
      %p1071 = scmp.ne.s32.totalorder %s1063, %s1065
      %p1072 = scmp.eq.s32.totalorder %s194, 1
      %p1073 = por %p1071, %p1072
      %p1074 = scmp.ne.s32.totalorder %s1065, %s1066
      %p1075 = scmp.eq.s32.totalorder %s194, 0
      %p1076 = por %p1074, %p1075
      %p1077 = scmp.ne.s32.totalorder %s1065, %s1066
      %p1078 = scmp.eq.s32.totalorder %s195, 1
      %p1079 = por %p1077, %p1078
      %p1081 = scmp.ne.s32.totalorder %s1066, %s1080
      %p1082 = scmp.eq.s32.totalorder %s195, 0
      %p1083 = por %p1081, %p1082
      %s1085 = sadd.s32 %s1084, 1
      %p1088 = scmp.eq.s32.totalorder %s189, 1
      %p1089 = scmp.ne.s32.totalorder %s1084, %s1086
      %p1090 = scmp.eq.s32.totalorder %s189, 0
      %p1091 = por %p1089, %p1090
      %p1092 = scmp.ne.s32.totalorder %s1084, %s1086
      %p1093 = scmp.eq.s32.totalorder %s194, 1
      %p1094 = por %p1092, %p1093
      %p1095 = scmp.ne.s32.totalorder %s1086, %s1087
      %p1096 = scmp.eq.s32.totalorder %s194, 0
      %p1097 = por %p1095, %p1096
      %p1098 = scmp.ne.s32.totalorder %s1086, %s1087
      %p1099 = scmp.eq.s32.totalorder %s195, 1
      %p1100 = por %p1098, %p1099
      %p1102 = scmp.ne.s32.totalorder %s1087, %s1101
      %p1103 = scmp.eq.s32.totalorder %s195, 0
      %p1104 = por %p1102, %p1103
      %s1106 = sadd.s32 %s1105, 1
      %p1109 = scmp.eq.s32.totalorder %s189, 1
      %p1110 = scmp.ne.s32.totalorder %s1105, %s1107
      %p1111 = scmp.eq.s32.totalorder %s189, 0
      %p1112 = por %p1110, %p1111
      %p1113 = scmp.ne.s32.totalorder %s1105, %s1107
      %p1114 = scmp.eq.s32.totalorder %s194, 1
      %p1115 = por %p1113, %p1114
      %p1116 = scmp.ne.s32.totalorder %s1107, %s1108
      %p1117 = scmp.eq.s32.totalorder %s194, 0
      %p1118 = por %p1116, %p1117
      %p1119 = scmp.ne.s32.totalorder %s1107, %s1108
      %p1120 = scmp.eq.s32.totalorder %s195, 1
      %p1121 = por %p1119, %p1120
      %p1123 = scmp.ne.s32.totalorder %s1108, %s1122
      %p1124 = scmp.eq.s32.totalorder %s195, 0
      %p1125 = por %p1123, %p1124
      %s1127 = sadd.s32 %s1126, 1
      %p1130 = scmp.eq.s32.totalorder %s189, 1
      %p1131 = scmp.ne.s32.totalorder %s1126, %s1128
      %p1132 = scmp.eq.s32.totalorder %s189, 0
      %p1133 = por %p1131, %p1132
      %p1134 = scmp.ne.s32.totalorder %s1126, %s1128
      %p1135 = scmp.eq.s32.totalorder %s194, 1
      %p1136 = por %p1134, %p1135
      %p1137 = scmp.ne.s32.totalorder %s1128, %s1129
      %p1138 = scmp.eq.s32.totalorder %s194, 0
      %p1139 = por %p1137, %p1138
      %p1140 = scmp.ne.s32.totalorder %s1128, %s1129
      %p1141 = scmp.eq.s32.totalorder %s195, 1
      %p1142 = por %p1140, %p1141
      %p1144 = scmp.ne.s32.totalorder %s1129, %s1143
      %p1145 = scmp.eq.s32.totalorder %s195, 0
      %p1146 = por %p1144, %p1145
      %s1148 = sadd.s32 %s1147, 1
      %p1151 = scmp.eq.s32.totalorder %s189, 1
      %p1152 = scmp.ne.s32.totalorder %s1147, %s1149
      %p1153 = scmp.eq.s32.totalorder %s189, 0
      %p1154 = por %p1152, %p1153
      %p1155 = scmp.ne.s32.totalorder %s1147, %s1149
      %p1156 = scmp.eq.s32.totalorder %s194, 1
      %p1157 = por %p1155, %p1156
      %p1158 = scmp.ne.s32.totalorder %s1149, %s1150
      %p1159 = scmp.eq.s32.totalorder %s194, 0
      %p1160 = por %p1158, %p1159
      %p1161 = scmp.ne.s32.totalorder %s1149, %s1150
      %p1162 = scmp.eq.s32.totalorder %s195, 1
      %p1163 = por %p1161, %p1162
      %p1165 = scmp.ne.s32.totalorder %s1150, %s1164
      %p1166 = scmp.eq.s32.totalorder %s195, 0
      %p1167 = por %p1165, %p1166
      %s1169 = sadd.s32 %s1168, 1
      %p1172 = scmp.eq.s32.totalorder %s189, 1
      %p1173 = scmp.ne.s32.totalorder %s1168, %s1170
      %p1174 = scmp.eq.s32.totalorder %s189, 0
      %p1175 = por %p1173, %p1174
      %p1176 = scmp.ne.s32.totalorder %s1168, %s1170
      %p1177 = scmp.eq.s32.totalorder %s194, 1
      %p1178 = por %p1176, %p1177
      %p1179 = scmp.ne.s32.totalorder %s1170, %s1171
      %p1180 = scmp.eq.s32.totalorder %s194, 0
      %p1181 = por %p1179, %p1180
      %p1182 = scmp.ne.s32.totalorder %s1170, %s1171
      %p1183 = scmp.eq.s32.totalorder %s195, 1
      %p1184 = por %p1182, %p1183
      %p1186 = scmp.ne.s32.totalorder %s1171, %s1185
      %p1187 = scmp.eq.s32.totalorder %s195, 0
      %p1188 = por %p1186, %p1187
      %s1190 = sadd.s32 %s1189, 1
      %p1193 = scmp.eq.s32.totalorder %s189, 1
      %p1194 = scmp.ne.s32.totalorder %s1189, %s1191
      %p1195 = scmp.eq.s32.totalorder %s189, 0
      %p1196 = por %p1194, %p1195
      %p1197 = scmp.ne.s32.totalorder %s1189, %s1191
      %p1198 = scmp.eq.s32.totalorder %s194, 1
      %p1199 = por %p1197, %p1198
      %p1200 = scmp.ne.s32.totalorder %s1191, %s1192
      %p1201 = scmp.eq.s32.totalorder %s194, 0
      %p1202 = por %p1200, %p1201
      %p1203 = scmp.ne.s32.totalorder %s1191, %s1192
      %p1204 = scmp.eq.s32.totalorder %s195, 1
      %p1205 = por %p1203, %p1204
      %p1207 = scmp.ne.s32.totalorder %s1192, %s1206
      %p1208 = scmp.eq.s32.totalorder %s195, 0
      %p1209 = por %p1207, %p1208
      %s1211 = sadd.s32 %s1210, 1
      %p1214 = scmp.eq.s32.totalorder %s189, 1
      %p1215 = scmp.ne.s32.totalorder %s1210, %s1212
      %p1216 = scmp.eq.s32.totalorder %s189, 0
      %p1217 = por %p1215, %p1216
      %p1218 = scmp.ne.s32.totalorder %s1210, %s1212
      %p1219 = scmp.eq.s32.totalorder %s194, 1
      %p1220 = por %p1218, %p1219
      %p1221 = scmp.ne.s32.totalorder %s1212, %s1213
      %p1222 = scmp.eq.s32.totalorder %s194, 0
      %p1223 = por %p1221, %p1222
      %p1224 = scmp.ne.s32.totalorder %s1212, %s1213
      %p1225 = scmp.eq.s32.totalorder %s195, 1
      %p1226 = por %p1224, %p1225
      %p1228 = scmp.ne.s32.totalorder %s1213, %s1227
      %p1229 = scmp.eq.s32.totalorder %s195, 0
      %p1230 = por %p1228, %p1229
      %s1232 = sadd.s32 %s1231, 1
      %p1235 = scmp.eq.s32.totalorder %s189, 1
      %p1236 = scmp.ne.s32.totalorder %s1231, %s1233
      %p1237 = scmp.eq.s32.totalorder %s189, 0
      %p1238 = por %p1236, %p1237
      %p1239 = scmp.ne.s32.totalorder %s1231, %s1233
      %p1240 = scmp.eq.s32.totalorder %s194, 1
      %p1241 = por %p1239, %p1240
      %p1242 = scmp.ne.s32.totalorder %s1233, %s1234
      %p1243 = scmp.eq.s32.totalorder %s194, 0
      %p1244 = por %p1242, %p1243
      %p1245 = scmp.ne.s32.totalorder %s1233, %s1234
      %p1246 = scmp.eq.s32.totalorder %s195, 1
      %p1247 = por %p1245, %p1246
      %p1249 = scmp.ne.s32.totalorder %s1234, %s1248
      %p1250 = scmp.eq.s32.totalorder %s195, 0
      %p1251 = por %p1249, %p1250
      %s1253 = sadd.s32 %s1252, 1
      %p1256 = scmp.eq.s32.totalorder %s189, 1
      %p1257 = scmp.ne.s32.totalorder %s1252, %s1254
      %p1258 = scmp.eq.s32.totalorder %s189, 0
      %p1259 = por %p1257, %p1258
      %p1260 = scmp.ne.s32.totalorder %s1252, %s1254
      %p1261 = scmp.eq.s32.totalorder %s194, 1
      %p1262 = por %p1260, %p1261
      %p1263 = scmp.ne.s32.totalorder %s1254, %s1255
      %p1264 = scmp.eq.s32.totalorder %s194, 0
      %p1265 = por %p1263, %p1264
      %p1266 = scmp.ne.s32.totalorder %s1254, %s1255
      %p1267 = scmp.eq.s32.totalorder %s195, 1
      %p1268 = por %p1266, %p1267
      %p1270 = scmp.ne.s32.totalorder %s1255, %s1269
      %p1271 = scmp.eq.s32.totalorder %s195, 0
      %p1272 = por %p1270, %p1271
      %s1274 = sadd.s32 %s1273, 1
      %p1277 = scmp.eq.s32.totalorder %s189, 1
      %p1278 = scmp.ne.s32.totalorder %s1273, %s1275
      %p1279 = scmp.eq.s32.totalorder %s189, 0
      %p1280 = por %p1278, %p1279
      %p1281 = scmp.ne.s32.totalorder %s1273, %s1275
      %p1282 = scmp.eq.s32.totalorder %s194, 1
      %p1283 = por %p1281, %p1282
      %p1284 = scmp.ne.s32.totalorder %s1275, %s1276
      %p1285 = scmp.eq.s32.totalorder %s194, 0
      %p1286 = por %p1284, %p1285
      %p1287 = scmp.ne.s32.totalorder %s1275, %s1276
      %p1288 = scmp.eq.s32.totalorder %s195, 1
      %p1289 = por %p1287, %p1288
      %p1291 = scmp.ne.s32.totalorder %s1276, %s1290
      %p1292 = scmp.eq.s32.totalorder %s195, 0
      %p1293 = por %p1291, %p1292
      %s1295 = sadd.s32 %s1294, 1
      %p1298 = scmp.eq.s32.totalorder %s189, 1
      %p1299 = scmp.ne.s32.totalorder %s1294, %s1296
      %p1300 = scmp.eq.s32.totalorder %s189, 0
      %p1301 = por %p1299, %p1300
      %p1302 = scmp.ne.s32.totalorder %s1294, %s1296
      %p1303 = scmp.eq.s32.totalorder %s194, 1
      %p1304 = por %p1302, %p1303
      %p1305 = scmp.ne.s32.totalorder %s1296, %s1297
      %p1306 = scmp.eq.s32.totalorder %s194, 0
      %p1307 = por %p1305, %p1306
      %p1308 = scmp.ne.s32.totalorder %s1296, %s1297
      %p1309 = scmp.eq.s32.totalorder %s195, 1
      %p1310 = por %p1308, %p1309
      %p1312 = scmp.ne.s32.totalorder %s1297, %s1311
      %p1313 = scmp.eq.s32.totalorder %s195, 0
      %p1314 = por %p1312, %p1313
      %s1316 = sadd.s32 %s1315, 1
      %p1319 = scmp.eq.s32.totalorder %s189, 1
      %p1320 = scmp.ne.s32.totalorder %s1315, %s1317
      %p1321 = scmp.eq.s32.totalorder %s189, 0
      %p1322 = por %p1320, %p1321
      %p1323 = scmp.ne.s32.totalorder %s1315, %s1317
      %p1324 = scmp.eq.s32.totalorder %s194, 1
      %p1325 = por %p1323, %p1324
      %p1326 = scmp.ne.s32.totalorder %s1317, %s1318
      %p1327 = scmp.eq.s32.totalorder %s194, 0
      %p1328 = por %p1326, %p1327
      %p1329 = scmp.ne.s32.totalorder %s1317, %s1318
      %p1330 = scmp.eq.s32.totalorder %s195, 1
      %p1331 = por %p1329, %p1330
      %p1333 = scmp.ne.s32.totalorder %s1318, %s1332
      %p1334 = scmp.eq.s32.totalorder %s195, 0
      %p1335 = por %p1333, %p1334
      %s1337 = sadd.s32 %s1336, 1
      %p1340 = scmp.eq.s32.totalorder %s189, 1
      %p1341 = scmp.ne.s32.totalorder %s1336, %s1338
      %p1342 = scmp.eq.s32.totalorder %s189, 0
      %p1343 = por %p1341, %p1342
      %p1344 = scmp.ne.s32.totalorder %s1336, %s1338
      %p1345 = scmp.eq.s32.totalorder %s194, 1
      %p1346 = por %p1344, %p1345
      %p1347 = scmp.ne.s32.totalorder %s1338, %s1339
      %p1348 = scmp.eq.s32.totalorder %s194, 0
      %p1349 = por %p1347, %p1348
      %p1350 = scmp.ne.s32.totalorder %s1338, %s1339
      %p1351 = scmp.eq.s32.totalorder %s195, 1
      %p1352 = por %p1350, %p1351
      %p1354 = scmp.ne.s32.totalorder %s1339, %s1353
      %p1355 = scmp.eq.s32.totalorder %s195, 0
      %p1356 = por %p1354, %p1355
      %s1358 = sadd.s32 %s1357, 1
      %p1361 = scmp.eq.s32.totalorder %s189, 1
      %p1362 = scmp.ne.s32.totalorder %s1357, %s1359
      %p1363 = scmp.eq.s32.totalorder %s189, 0
      %p1364 = por %p1362, %p1363
      %p1365 = scmp.ne.s32.totalorder %s1357, %s1359
      %p1366 = scmp.eq.s32.totalorder %s194, 1
      %p1367 = por %p1365, %p1366
      %p1368 = scmp.ne.s32.totalorder %s1359, %s1360
      %p1369 = scmp.eq.s32.totalorder %s194, 0
      %p1370 = por %p1368, %p1369
      %p1371 = scmp.ne.s32.totalorder %s1359, %s1360
      %p1372 = scmp.eq.s32.totalorder %s195, 1
      %p1373 = por %p1371, %p1372
      %p1375 = scmp.ne.s32.totalorder %s1360, %s1374
      %p1376 = scmp.eq.s32.totalorder %s195, 0
      %p1377 = por %p1375, %p1376
      %s1379 = sadd.s32 %s1378, 1
      %p1382 = scmp.eq.s32.totalorder %s189, 1
      %p1383 = scmp.ne.s32.totalorder %s1378, %s1380
      %p1384 = scmp.eq.s32.totalorder %s189, 0
      %p1385 = por %p1383, %p1384
      %p1386 = scmp.ne.s32.totalorder %s1378, %s1380
      %p1387 = scmp.eq.s32.totalorder %s194, 1
      %p1388 = por %p1386, %p1387
      %p1389 = scmp.ne.s32.totalorder %s1380, %s1381
      %p1390 = scmp.eq.s32.totalorder %s194, 0
      %p1391 = por %p1389, %p1390
      %p1392 = scmp.ne.s32.totalorder %s1380, %s1381
      %p1393 = scmp.eq.s32.totalorder %s195, 1
      %p1394 = por %p1392, %p1393
      %p1396 = scmp.ne.s32.totalorder %s1381, %s1395
      %p1397 = scmp.eq.s32.totalorder %s195, 0
      %p1398 = por %p1396, %p1397
      %s1400 = sadd.s32 %s1399, 1
      %p1403 = scmp.eq.s32.totalorder %s189, 1
      %p1404 = scmp.ne.s32.totalorder %s1399, %s1401
      %p1405 = scmp.eq.s32.totalorder %s189, 0
      %p1406 = por %p1404, %p1405
      %p1407 = scmp.ne.s32.totalorder %s1399, %s1401
      %p1408 = scmp.eq.s32.totalorder %s194, 1
      %p1409 = por %p1407, %p1408
      %p1410 = scmp.ne.s32.totalorder %s1401, %s1402
      %p1411 = scmp.eq.s32.totalorder %s194, 0
      %p1412 = por %p1410, %p1411
      %p1413 = scmp.ne.s32.totalorder %s1401, %s1402
      %p1414 = scmp.eq.s32.totalorder %s195, 1
      %p1415 = por %p1413, %p1414
      %p1417 = scmp.ne.s32.totalorder %s1402, %s1416
      %p1418 = scmp.eq.s32.totalorder %s195, 0
      %p1419 = por %p1417, %p1418
      %s1421 = sadd.s32 %s1420, 1
      %p1424 = scmp.eq.s32.totalorder %s189, 1
      %p1425 = scmp.ne.s32.totalorder %s1420, %s1422
      %p1426 = scmp.eq.s32.totalorder %s189, 0
      %p1427 = por %p1425, %p1426
      %p1428 = scmp.ne.s32.totalorder %s1420, %s1422
      %p1429 = scmp.eq.s32.totalorder %s194, 1
      %p1430 = por %p1428, %p1429
      %p1431 = scmp.ne.s32.totalorder %s1422, %s1423
      %p1432 = scmp.eq.s32.totalorder %s194, 0
      %p1433 = por %p1431, %p1432
      %p1434 = scmp.ne.s32.totalorder %s1422, %s1423
      %p1435 = scmp.eq.s32.totalorder %s195, 1
      %p1436 = por %p1434, %p1435
      %p1438 = scmp.ne.s32.totalorder %s1423, %s1437
      %p1439 = scmp.eq.s32.totalorder %s195, 0
      %p1440 = por %p1438, %p1439
      %s1442 = sadd.s32 %s1441, 1
      %p1445 = scmp.eq.s32.totalorder %s189, 1
      %p1446 = scmp.ne.s32.totalorder %s1441, %s1443
      %p1447 = scmp.eq.s32.totalorder %s189, 0
      %p1448 = por %p1446, %p1447
      %p1449 = scmp.ne.s32.totalorder %s1441, %s1443
      %p1450 = scmp.eq.s32.totalorder %s194, 1
      %p1451 = por %p1449, %p1450
      %p1452 = scmp.ne.s32.totalorder %s1443, %s1444
      %p1453 = scmp.eq.s32.totalorder %s194, 0
      %p1454 = por %p1452, %p1453
      %p1455 = scmp.ne.s32.totalorder %s1443, %s1444
      %p1456 = scmp.eq.s32.totalorder %s195, 1
      %p1457 = por %p1455, %p1456
      %p1459 = scmp.ne.s32.totalorder %s1444, %s1458
      %p1460 = scmp.eq.s32.totalorder %s195, 0
      %p1461 = por %p1459, %p1460
      %s1463 = sadd.s32 %s1462, 1
      %p1466 = scmp.eq.s32.totalorder %s189, 1
      %p1467 = scmp.ne.s32.totalorder %s1462, %s1464
      %p1468 = scmp.eq.s32.totalorder %s189, 0
      %p1469 = por %p1467, %p1468
      %p1470 = scmp.ne.s32.totalorder %s1462, %s1464
      %p1471 = scmp.eq.s32.totalorder %s194, 1
      %p1472 = por %p1470, %p1471
      %p1473 = scmp.ne.s32.totalorder %s1464, %s1465
      %p1474 = scmp.eq.s32.totalorder %s194, 0
      %p1475 = por %p1473, %p1474
      %p1476 = scmp.ne.s32.totalorder %s1464, %s1465
      %p1477 = scmp.eq.s32.totalorder %s195, 1
      %p1478 = por %p1476, %p1477
      %p1480 = scmp.ne.s32.totalorder %s1465, %s1479
      %p1481 = scmp.eq.s32.totalorder %s195, 0
      %p1482 = por %p1480, %p1481
      %s1484 = sadd.s32 %s1483, 1
      %p1487 = scmp.eq.s32.totalorder %s189, 1
      %p1488 = scmp.ne.s32.totalorder %s1483, %s1485
      %p1489 = scmp.eq.s32.totalorder %s189, 0
      %p1490 = por %p1488, %p1489
      %p1491 = scmp.ne.s32.totalorder %s1483, %s1485
      %p1492 = scmp.eq.s32.totalorder %s194, 1
      %p1493 = por %p1491, %p1492
      %p1494 = scmp.ne.s32.totalorder %s1485, %s1486
      %p1495 = scmp.eq.s32.totalorder %s194, 0
      %p1496 = por %p1494, %p1495
      %p1497 = scmp.ne.s32.totalorder %s1485, %s1486
      %p1498 = scmp.eq.s32.totalorder %s195, 1
      %p1499 = por %p1497, %p1498
      %p1501 = scmp.ne.s32.totalorder %s1486, %s1500
      %p1502 = scmp.eq.s32.totalorder %s195, 0
      %p1503 = por %p1501, %p1502
      %s1505 = sadd.s32 %s1504, 1
      %p1508 = scmp.eq.s32.totalorder %s189, 1
      %p1509 = scmp.ne.s32.totalorder %s1504, %s1506
      %p1510 = scmp.eq.s32.totalorder %s189, 0
      %p1511 = por %p1509, %p1510
      %p1512 = scmp.ne.s32.totalorder %s1504, %s1506
      %p1513 = scmp.eq.s32.totalorder %s194, 1
      %p1514 = por %p1512, %p1513
      %p1515 = scmp.ne.s32.totalorder %s1506, %s1507
      %p1516 = scmp.eq.s32.totalorder %s194, 0
      %p1517 = por %p1515, %p1516
      %p1518 = scmp.ne.s32.totalorder %s1506, %s1507
      %p1519 = scmp.eq.s32.totalorder %s195, 1
      %p1520 = por %p1518, %p1519
      %p1522 = scmp.ne.s32.totalorder %s1507, %s1521
      %p1523 = scmp.eq.s32.totalorder %s195, 0
      %p1524 = por %p1522, %p1523
      %s1526 = sadd.s32 %s1525, 1
      %p1529 = scmp.eq.s32.totalorder %s189, 1
      %p1530 = scmp.ne.s32.totalorder %s1525, %s1527
      %p1531 = scmp.eq.s32.totalorder %s189, 0
      %p1532 = por %p1530, %p1531
      %p1533 = scmp.ne.s32.totalorder %s1525, %s1527
      %p1534 = scmp.eq.s32.totalorder %s194, 1
      %p1535 = por %p1533, %p1534
      %p1536 = scmp.ne.s32.totalorder %s1527, %s1528
      %p1537 = scmp.eq.s32.totalorder %s194, 0
      %p1538 = por %p1536, %p1537
      %p1539 = scmp.ne.s32.totalorder %s1527, %s1528
      %p1540 = scmp.eq.s32.totalorder %s195, 1
      %p1541 = por %p1539, %p1540
      %p1543 = scmp.ne.s32.totalorder %s1528, %s1542
      %p1544 = scmp.eq.s32.totalorder %s195, 0
      %p1545 = por %p1543, %p1544
      %s1547 = sadd.s32 %s1546, 1
      %p1550 = scmp.eq.s32.totalorder %s189, 1
      %p1551 = scmp.ne.s32.totalorder %s1546, %s1548
      %p1552 = scmp.eq.s32.totalorder %s189, 0
      %p1553 = por %p1551, %p1552
      %p1554 = scmp.ne.s32.totalorder %s1546, %s1548
      %p1555 = scmp.eq.s32.totalorder %s194, 1
      %p1556 = por %p1554, %p1555
      %p1557 = scmp.ne.s32.totalorder %s1548, %s1549
      %p1558 = scmp.eq.s32.totalorder %s194, 0
      %p1559 = por %p1557, %p1558
      %p1560 = scmp.ne.s32.totalorder %s1548, %s1549
      %p1561 = scmp.eq.s32.totalorder %s195, 1
      %p1562 = por %p1560, %p1561
      %p1564 = scmp.ne.s32.totalorder %s1549, %s1563
      %p1565 = scmp.eq.s32.totalorder %s195, 0
      %p1566 = por %p1564, %p1565
      %s1568 = sadd.s32 %s1567, 1
      %p1571 = scmp.eq.s32.totalorder %s189, 1
      %p1572 = scmp.ne.s32.totalorder %s1567, %s1569
      %p1573 = scmp.eq.s32.totalorder %s189, 0
      %p1574 = por %p1572, %p1573
      %p1575 = scmp.ne.s32.totalorder %s1567, %s1569
      %p1576 = scmp.eq.s32.totalorder %s194, 1
      %p1577 = por %p1575, %p1576
      %p1578 = scmp.ne.s32.totalorder %s1569, %s1570
      %p1579 = scmp.eq.s32.totalorder %s194, 0
      %p1580 = por %p1578, %p1579
      %p1581 = scmp.ne.s32.totalorder %s1569, %s1570
      %p1582 = scmp.eq.s32.totalorder %s195, 1
      %p1583 = por %p1581, %p1582
      %p1585 = scmp.ne.s32.totalorder %s1570, %s1584
      %p1586 = scmp.eq.s32.totalorder %s195, 0
      %p1587 = por %p1585, %p1586
      %s1589 = sadd.s32 %s1588, 1
      %p1592 = scmp.eq.s32.totalorder %s189, 1
      %p1593 = scmp.ne.s32.totalorder %s1588, %s1590
      %p1594 = scmp.eq.s32.totalorder %s189, 0
      %p1595 = por %p1593, %p1594
      %p1596 = scmp.ne.s32.totalorder %s1588, %s1590
      %p1597 = scmp.eq.s32.totalorder %s194, 1
      %p1598 = por %p1596, %p1597
      %p1599 = scmp.ne.s32.totalorder %s1590, %s1591
      %p1600 = scmp.eq.s32.totalorder %s194, 0
      %p1601 = por %p1599, %p1600
      %p1602 = scmp.ne.s32.totalorder %s1590, %s1591
      %p1603 = scmp.eq.s32.totalorder %s195, 1
      %p1604 = por %p1602, %p1603
      %p1606 = scmp.ne.s32.totalorder %s1591, %s1605
      %p1607 = scmp.eq.s32.totalorder %s195, 0
      %p1608 = por %p1606, %p1607
      %s1610 = sadd.s32 %s1609, 1
      %p1613 = scmp.eq.s32.totalorder %s189, 1
      %p1614 = scmp.ne.s32.totalorder %s1609, %s1611
      %p1615 = scmp.eq.s32.totalorder %s189, 0
      %p1616 = por %p1614, %p1615
      %p1617 = scmp.ne.s32.totalorder %s1609, %s1611
      %p1618 = scmp.eq.s32.totalorder %s194, 1
      %p1619 = por %p1617, %p1618
      %p1620 = scmp.ne.s32.totalorder %s1611, %s1612
      %p1621 = scmp.eq.s32.totalorder %s194, 0
      %p1622 = por %p1620, %p1621
      %p1623 = scmp.ne.s32.totalorder %s1611, %s1612
      %p1624 = scmp.eq.s32.totalorder %s195, 1
      %p1625 = por %p1623, %p1624
      %p1627 = scmp.ne.s32.totalorder %s1612, %s1626
      %p1628 = scmp.eq.s32.totalorder %s195, 0
      %p1629 = por %p1627, %p1628
      %s1631 = sadd.s32 %s1630, 1
      %p1634 = scmp.eq.s32.totalorder %s189, 1
      %p1635 = scmp.ne.s32.totalorder %s1630, %s1632
      %p1636 = scmp.eq.s32.totalorder %s189, 0
      %p1637 = por %p1635, %p1636
      %p1638 = scmp.ne.s32.totalorder %s1630, %s1632
      %p1639 = scmp.eq.s32.totalorder %s194, 1
      %p1640 = por %p1638, %p1639
      %p1641 = scmp.ne.s32.totalorder %s1632, %s1633
      %p1642 = scmp.eq.s32.totalorder %s194, 0
      %p1643 = por %p1641, %p1642
      %p1644 = scmp.ne.s32.totalorder %s1632, %s1633
      %p1645 = scmp.eq.s32.totalorder %s195, 1
      %p1646 = por %p1644, %p1645
      %p1648 = scmp.ne.s32.totalorder %s1633, %s1647
      %p1649 = scmp.eq.s32.totalorder %s195, 0
      %p1650 = por %p1648, %p1649
      %s1652 = sadd.s32 %s1651, 1
      %p1655 = scmp.eq.s32.totalorder %s189, 1
      %p1656 = scmp.ne.s32.totalorder %s1651, %s1653
      %p1657 = scmp.eq.s32.totalorder %s189, 0
      %p1658 = por %p1656, %p1657
      %p1659 = scmp.ne.s32.totalorder %s1651, %s1653
      %p1660 = scmp.eq.s32.totalorder %s194, 1
      %p1661 = por %p1659, %p1660
      %p1662 = scmp.ne.s32.totalorder %s1653, %s1654
      %p1663 = scmp.eq.s32.totalorder %s194, 0
      %p1664 = por %p1662, %p1663
      %p1665 = scmp.ne.s32.totalorder %s1653, %s1654
      %p1666 = scmp.eq.s32.totalorder %s195, 1
      %p1667 = por %p1665, %p1666
      %p1669 = scmp.ne.s32.totalorder %s1654, %s1668
      %p1670 = scmp.eq.s32.totalorder %s195, 0
      %p1671 = por %p1669, %p1670
      %s1673 = sadd.s32 %s1672, 1
      %p1676 = scmp.eq.s32.totalorder %s189, 1
      %p1677 = scmp.ne.s32.totalorder %s1672, %s1674
      %p1678 = scmp.eq.s32.totalorder %s189, 0
      %p1679 = por %p1677, %p1678
      %p1680 = scmp.ne.s32.totalorder %s1672, %s1674
      %p1681 = scmp.eq.s32.totalorder %s194, 1
      %p1682 = por %p1680, %p1681
      %p1683 = scmp.ne.s32.totalorder %s1674, %s1675
      %p1684 = scmp.eq.s32.totalorder %s194, 0
      %p1685 = por %p1683, %p1684
      %p1686 = scmp.ne.s32.totalorder %s1674, %s1675
      %p1687 = scmp.eq.s32.totalorder %s195, 1
      %p1688 = por %p1686, %p1687
      %p1690 = scmp.ne.s32.totalorder %s1675, %s1689
      %p1691 = scmp.eq.s32.totalorder %s195, 0
      %p1692 = por %p1690, %p1691
      %s1694 = sadd.s32 %s1693, 1
      %p1697 = scmp.eq.s32.totalorder %s189, 1
      %p1698 = scmp.ne.s32.totalorder %s1693, %s1695
      %p1699 = scmp.eq.s32.totalorder %s189, 0
      %p1700 = por %p1698, %p1699
      %p1701 = scmp.ne.s32.totalorder %s1693, %s1695
      %p1702 = scmp.eq.s32.totalorder %s194, 1
      %p1703 = por %p1701, %p1702
      %p1704 = scmp.ne.s32.totalorder %s1695, %s1696
      %p1705 = scmp.eq.s32.totalorder %s194, 0
      %p1706 = por %p1704, %p1705
      %p1707 = scmp.ne.s32.totalorder %s1695, %s1696
      %p1708 = scmp.eq.s32.totalorder %s195, 1
      %p1709 = por %p1707, %p1708
      %p1711 = scmp.ne.s32.totalorder %s1696, %s1710
      %p1712 = scmp.eq.s32.totalorder %s195, 0
      %p1713 = por %p1711, %p1712
      %s1715 = sadd.s32 %s1714, 1
      %p1718 = scmp.eq.s32.totalorder %s189, 1
      %p1719 = scmp.ne.s32.totalorder %s1714, %s1716
      %p1720 = scmp.eq.s32.totalorder %s189, 0
      %p1721 = por %p1719, %p1720
      %p1722 = scmp.ne.s32.totalorder %s1714, %s1716
      %p1723 = scmp.eq.s32.totalorder %s194, 1
      %p1724 = por %p1722, %p1723
      %p1725 = scmp.ne.s32.totalorder %s1716, %s1717
      %p1726 = scmp.eq.s32.totalorder %s194, 0
      %p1727 = por %p1725, %p1726
      %p1728 = scmp.ne.s32.totalorder %s1716, %s1717
      %p1729 = scmp.eq.s32.totalorder %s195, 1
      %p1730 = por %p1728, %p1729
      %p1732 = scmp.ne.s32.totalorder %s1717, %s1731
      %p1733 = scmp.eq.s32.totalorder %s195, 0
      %p1734 = por %p1732, %p1733
      %s1735 = ssub.s32 %s189, %s196
      %p1736 = scmp.eq.s32.totalorder %s1735, 0
      %s1738 = sadd.s32 %s1737, 1
      %s1739 = scalar_select %p1736, %s1737, %s1738
      %p1742 = pneg %p1736
      %p1743 = scmp.eq.s32.totalorder %s189, 1
      %p1744 = por %p1742, %p1743
      %p1745 = scmp.ne.s32.totalorder %s1737, %s1740
      %p1746 = scmp.eq.s32.totalorder %s189, 0
      %p1747 = por %p1745, %p1746
      %p1748 = scmp.ne.s32.totalorder %s1737, %s1740
      %p1749 = scmp.eq.s32.totalorder %s194, 1
      %p1750 = por %p1748, %p1749
      %p1751 = scmp.ne.s32.totalorder %s1740, %s1741
      %p1752 = scmp.eq.s32.totalorder %s194, 0
      %p1753 = por %p1751, %p1752
      %p1754 = scmp.ne.s32.totalorder %s1740, %s1741
      %p1755 = scmp.eq.s32.totalorder %s195, 1
      %p1756 = por %p1754, %p1755
      %p1758 = scmp.ne.s32.totalorder %s1741, %s1757
      %p1759 = scmp.eq.s32.totalorder %s195, 0
      %p1760 = por %p1758, %p1759
      %s1761 = ssub.s32 %s189, %s196
      %p1762 = scmp.eq.s32.totalorder %s1761, 0
      %s1764 = sadd.s32 %s1763, 1
      %s1765 = scalar_select %p1762, %s1763, %s1764
      %p1768 = pneg %p1762
      %p1769 = scmp.eq.s32.totalorder %s189, 1
      %p1770 = por %p1768, %p1769
      %p1771 = scmp.ne.s32.totalorder %s1763, %s1766
      %p1772 = scmp.eq.s32.totalorder %s189, 0
      %p1773 = por %p1771, %p1772
      %p1774 = scmp.ne.s32.totalorder %s1763, %s1766
      %p1775 = scmp.eq.s32.totalorder %s194, 1
      %p1776 = por %p1774, %p1775
      %p1777 = scmp.ne.s32.totalorder %s1766, %s1767
      %p1778 = scmp.eq.s32.totalorder %s194, 0
      %p1779 = por %p1777, %p1778
      %p1780 = scmp.ne.s32.totalorder %s1766, %s1767
      %p1781 = scmp.eq.s32.totalorder %s195, 1
      %p1782 = por %p1780, %p1781
      %p1784 = scmp.ne.s32.totalorder %s1767, %s1783
      %p1785 = scmp.eq.s32.totalorder %s195, 0
      %p1786 = por %p1784, %p1785
      %s1787 = ssub.s32 %s189, %s196
      %p1788 = scmp.eq.s32.totalorder %s1787, 0
      %s1790 = sadd.s32 %s1789, 1
      %s1791 = scalar_select %p1788, %s1789, %s1790
      %p1794 = pneg %p1788
      %p1795 = scmp.eq.s32.totalorder %s189, 1
      %p1796 = por %p1794, %p1795
      %p1797 = scmp.ne.s32.totalorder %s1789, %s1792
      %p1798 = scmp.eq.s32.totalorder %s189, 0
      %p1799 = por %p1797, %p1798
      %p1800 = scmp.ne.s32.totalorder %s1789, %s1792
      %p1801 = scmp.eq.s32.totalorder %s194, 1
      %p1802 = por %p1800, %p1801
      %p1803 = scmp.ne.s32.totalorder %s1792, %s1793
      %p1804 = scmp.eq.s32.totalorder %s194, 0
      %p1805 = por %p1803, %p1804
      %p1806 = scmp.ne.s32.totalorder %s1792, %s1793
      %p1807 = scmp.eq.s32.totalorder %s195, 1
      %p1808 = por %p1806, %p1807
      %p1810 = scmp.ne.s32.totalorder %s1793, %s1809
      %p1811 = scmp.eq.s32.totalorder %s195, 0
      %p1812 = por %p1810, %p1811
      %s1813 = ssub.s32 %s189, %s196
      %p1814 = scmp.eq.s32.totalorder %s1813, 0
      %s1816 = sadd.s32 %s1815, 1
      %s1817 = scalar_select %p1814, %s1815, %s1816
      %p1820 = pneg %p1814
      %p1821 = scmp.eq.s32.totalorder %s189, 1
      %p1822 = por %p1820, %p1821
      %p1823 = scmp.ne.s32.totalorder %s1815, %s1818
      %p1824 = scmp.eq.s32.totalorder %s189, 0
      %p1825 = por %p1823, %p1824
      %p1826 = scmp.ne.s32.totalorder %s1815, %s1818
      %p1827 = scmp.eq.s32.totalorder %s194, 1
      %p1828 = por %p1826, %p1827
      %p1829 = scmp.ne.s32.totalorder %s1818, %s1819
      %p1830 = scmp.eq.s32.totalorder %s194, 0
      %p1831 = por %p1829, %p1830
      %p1832 = scmp.ne.s32.totalorder %s1818, %s1819
      %p1833 = scmp.eq.s32.totalorder %s195, 1
      %p1834 = por %p1832, %p1833
      %p1836 = scmp.ne.s32.totalorder %s1819, %s1835
      %p1837 = scmp.eq.s32.totalorder %s195, 0
      %p1838 = por %p1836, %p1837
      %p1839 = scmp.le.s32.totalorder 1, %s189
      %p1840 = scmp.lt.s32.totalorder %s189, 3
      %p1841 = pnand %p1839, %p1840
      %p1842 = pneg %p1841
      // Predicated region
      $region9: #{backbone_with_afpn_forward.1} parent=5 // pred_check
        _
      $region10: #{backbone_with_afpn_forward.1} parent=5 // pred_check_branch
        %1844 = sbr.rel (%p1841) target = $region12
      $region11: #{backbone_with_afpn_forward.1} parent=5 // pred_region
        %s1845 = ssub.s32 %s189, 1
        // Predicated region
        $region13: #{backbone_with_afpn_forward.1} parent=11 // pred_check
          %p1846 = pneg %p236
        $region14: #{backbone_with_afpn_forward.1} parent=11 // pred_check_branch
          %1848 = sbr.rel (%p1846) target = $region16
        $region15: #{backbone_with_afpn_forward.1} parent=11 // pred_region
          _
        $region16: #{backbone_with_afpn_forward.1} parent=11 // pred_fallthru
          _
        // Predicated region
        $region17: #{backbone_with_afpn_forward.1} parent=11 // pred_check
          %p1849 = pneg %p257
        $region18: #{backbone_with_afpn_forward.1} parent=11 // pred_check_branch
          %1851 = sbr.rel (%p1849) target = $region20
        $region19: #{backbone_with_afpn_forward.1} parent=11 // pred_region
          %s1853 = ssub.s32 16, 16
          %1854 = vsyncadd [#allocation3], %s1853
          %s1856 = sshll.u32 [#allocation2], 4
          %s1857 = int_to_ptr.vmem [resolvable:$true] %s1856
          %1859 = dma.hbm_to_vmem [thread:$0]  %s5, 16, %s1857, [#allocation3]
        $region20: #{backbone_with_afpn_forward.1} parent=11 // pred_fallthru
          _
        // Predicated region
        $region21: #{backbone_with_afpn_forward.1} parent=11 // pred_check
          %p1860 = pneg %p278
        $region22: #{backbone_with_afpn_forward.1} parent=11 // pred_check_branch
          %1862 = sbr.rel (%p1860) target = $region24
        $region23: #{backbone_with_afpn_forward.1} parent=11 // pred_region
          _
        $region24: #{backbone_with_afpn_forward.1} parent=11 // pred_fallthru
          _
        // Predicated region
        $region25: #{backbone_with_afpn_forward.1} parent=11 // pred_check
          %p1863 = pneg %p299
        $region26: #{backbone_with_afpn_forward.1} parent=11 // pred_check_branch
          %1865 = sbr.rel (%p1863) target = $region28
        $region27: #{backbone_with_afpn_forward.1} parent=11 // pred_region
          %s1867 = ssub.s32 512, 512
          %1868 = vsyncadd [#allocation5], %s1867
          %s1869 = sshll.u32 [#allocation4], 4
          %s1870 = int_to_ptr.vmem [resolvable:$true] %s1869
          %1875 = dma.hbm_to_vmem [thread:$0]  %s9, 512, %s1870, [#allocation5], 256, 256, 16
        $region28: #{backbone_with_afpn_forward.1} parent=11 // pred_fallthru
          _
        // Predicated region
        $region29: #{backbone_with_afpn_forward.1} parent=11 // pred_check
          %p1876 = pneg %p320
        $region30: #{backbone_with_afpn_forward.1} parent=11 // pred_check_branch
          %1878 = sbr.rel (%p1876) target = $region32
        $region31: #{backbone_with_afpn_forward.1} parent=11 // pred_region
          _
        $region32: #{backbone_with_afpn_forward.1} parent=11 // pred_fallthru
          _
        // Predicated region
        $region33: #{backbone_with_afpn_forward.1} parent=11 // pred_check
          %p1879 = pneg %p341
        $region34: #{backbone_with_afpn_forward.1} parent=11 // pred_check_branch
          %1881 = sbr.rel (%p1879) target = $region36
        $region35: #{backbone_with_afpn_forward.1} parent=11 // pred_region
          %s1883 = ssub.s32 64, 64
          %1884 = vsyncadd [#allocation5], %s1883
          %s1886 = sshll.u32 [#allocation6], 4
          %s1887 = int_to_ptr.vmem [resolvable:$true] %s1886
          %1889 = dma.hbm_to_vmem [thread:$0]  %s13, 64, %s1887, [#allocation5]
        $region36: #{backbone_with_afpn_forward.1} parent=11 // pred_fallthru
          _
        // Predicated region
        $region37: #{backbone_with_afpn_forward.1} parent=11 // pred_check
          %p1890 = pneg %p362
        $region38: #{backbone_with_afpn_forward.1} parent=11 // pred_check_branch
          %1892 = sbr.rel (%p1890) target = $region40
        $region39: #{backbone_with_afpn_forward.1} parent=11 // pred_region
          %s1894 = ssub.s32 16, 16
          %1895 = vsyncadd [#allocation8], %s1894
          %s1897 = sshll.u32 [#allocation7], 4
          %s1898 = int_to_ptr.vmem [resolvable:$true] %s1897
          %1900 = dma.hbm_to_vmem [thread:$0]  %s15, 16, %s1898, [#allocation8]
        $region40: #{backbone_with_afpn_forward.1} parent=11 // pred_fallthru
          _
        // Predicated region
        $region41: #{backbone_with_afpn_forward.1} parent=11 // pred_check
          %p1901 = pneg %p383
        $region42: #{backbone_with_afpn_forward.1} parent=11 // pred_check_branch
          %1903 = sbr.rel (%p1901) target = $region44
        $region43: #{backbone_with_afpn_forward.1} parent=11 // pred_region
          %s1905 = ssub.s32 16, 16
          %1906 = vsyncadd [#allocation8], %s1905
          %s1908 = sshll.u32 [#allocation9], 4
          %s1909 = int_to_ptr.vmem [resolvable:$true] %s1908
          %1911 = dma.hbm_to_vmem [thread:$0]  %s17, 16, %s1909, [#allocation8]
        $region44: #{backbone_with_afpn_forward.1} parent=11 // pred_fallthru
          _
        // Predicated region
        $region45: #{backbone_with_afpn_forward.1} parent=11 // pred_check
          %p1912 = pneg %p404
        $region46: #{backbone_with_afpn_forward.1} parent=11 // pred_check_branch
          %1914 = sbr.rel (%p1912) target = $region48
        $region47: #{backbone_with_afpn_forward.1} parent=11 // pred_region
          _
        $region48: #{backbone_with_afpn_forward.1} parent=11 // pred_fallthru
          _
        // Predicated region
        $region49: #{backbone_with_afpn_forward.1} parent=11 // pred_check
          %p1915 = pneg %p425
        $region50: #{backbone_with_afpn_forward.1} parent=11 // pred_check_branch
          %1917 = sbr.rel (%p1915) target = $region52
        $region51: #{backbone_with_afpn_forward.1} parent=11 // pred_region
          %s1919 = ssub.s32 256, 256
          %1920 = vsyncadd [#allocation11], %s1919
          %s1921 = sshll.u32 [#allocation10], 4
          %s1922 = int_to_ptr.vmem [resolvable:$true] %s1921
          %1927 = dma.hbm_to_vmem [thread:$0]  %s21, 256, %s1922, [#allocation11], 128, 128, 8
        $region52: #{backbone_with_afpn_forward.1} parent=11 // pred_fallthru
          _
        // Predicated region
        $region53: #{backbone_with_afpn_forward.1} parent=11 // pred_check
          %p1928 = pneg %p446
        $region54: #{backbone_with_afpn_forward.1} parent=11 // pred_check_branch
          %1930 = sbr.rel (%p1928) target = $region56
        $region55: #{backbone_with_afpn_forward.1} parent=11 // pred_region
          _
        $region56: #{backbone_with_afpn_forward.1} parent=11 // pred_fallthru
          _
        // Predicated region
        $region57: #{backbone_with_afpn_forward.1} parent=11 // pred_check
          %p1931 = pneg %p467
        $region58: #{backbone_with_afpn_forward.1} parent=11 // pred_check_branch
          %1933 = sbr.rel (%p1931) target = $region60
        $region59: #{backbone_with_afpn_forward.1} parent=11 // pred_region
          %s1935 = ssub.s32 64, 64
          %1936 = vsyncadd [#allocation11], %s1935
          %s1938 = sshll.u32 [#allocation12], 4
          %s1939 = int_to_ptr.vmem [resolvable:$true] %s1938
          %1941 = dma.hbm_to_vmem [thread:$0]  %s25, 64, %s1939, [#allocation11]
        $region60: #{backbone_with_afpn_forward.1} parent=11 // pred_fallthru
          _
        // Predicated region
        $region61: #{backbone_with_afpn_forward.1} parent=11 // pred_check
          %p1942 = pneg %p488
        $region62: #{backbone_with_afpn_forward.1} parent=11 // pred_check_branch
          %1944 = sbr.rel (%p1942) target = $region64
        $region63: #{backbone_with_afpn_forward.1} parent=11 // pred_region
          %s1946 = ssub.s32 16, 16
          %1947 = vsyncadd [#allocation14], %s1946
          %s1949 = sshll.u32 [#allocation13], 4
          %s1950 = int_to_ptr.vmem [resolvable:$true] %s1949
          %1952 = dma.hbm_to_vmem [thread:$0]  %s27, 16, %s1950, [#allocation14]
        $region64: #{backbone_with_afpn_forward.1} parent=11 // pred_fallthru
          _
        // Predicated region
        $region65: #{backbone_with_afpn_forward.1} parent=11 // pred_check
          %p1953 = pneg %p509
        $region66: #{backbone_with_afpn_forward.1} parent=11 // pred_check_branch
          %1955 = sbr.rel (%p1953) target = $region68
        $region67: #{backbone_with_afpn_forward.1} parent=11 // pred_region
          %s1957 = ssub.s32 16, 16
          %1958 = vsyncadd [#allocation14], %s1957
          %s1960 = sshll.u32 [#allocation15], 4
          %s1961 = int_to_ptr.vmem [resolvable:$true] %s1960
          %1963 = dma.hbm_to_vmem [thread:$0]  %s29, 16, %s1961, [#allocation14]
        $region68: #{backbone_with_afpn_forward.1} parent=11 // pred_fallthru
          _
        // Predicated region
        $region69: #{backbone_with_afpn_forward.1} parent=11 // pred_check
          %p1964 = pneg %p530
        $region70: #{backbone_with_afpn_forward.1} parent=11 // pred_check_branch
          %1966 = sbr.rel (%p1964) target = $region72
        $region71: #{backbone_with_afpn_forward.1} parent=11 // pred_region
          _
        $region72: #{backbone_with_afpn_forward.1} parent=11 // pred_fallthru
          _
        // Predicated region
        $region73: #{backbone_with_afpn_forward.1} parent=11 // pred_check
          %p1967 = pneg %p551
        $region74: #{backbone_with_afpn_forward.1} parent=11 // pred_check_branch
          %1969 = sbr.rel (%p1967) target = $region76
        $region75: #{backbone_with_afpn_forward.1} parent=11 // pred_region
          %s1971 = ssub.s32 256, 256
          %1972 = vsyncadd [#allocation17], %s1971
          %s1973 = sshll.u32 [#allocation16], 4
          %s1974 = int_to_ptr.vmem [resolvable:$true] %s1973
          %1979 = dma.hbm_to_vmem [thread:$0]  %s33, 256, %s1974, [#allocation17], 128, 128, 8
        $region76: #{backbone_with_afpn_forward.1} parent=11 // pred_fallthru
          _
        // Predicated region
        $region77: #{backbone_with_afpn_forward.1} parent=11 // pred_check
          %p1980 = pneg %p572
        $region78: #{backbone_with_afpn_forward.1} parent=11 // pred_check_branch
          %1982 = sbr.rel (%p1980) target = $region80
        $region79: #{backbone_with_afpn_forward.1} parent=11 // pred_region
          _
        $region80: #{backbone_with_afpn_forward.1} parent=11 // pred_fallthru
          _
        // Predicated region
        $region81: #{backbone_with_afpn_forward.1} parent=11 // pred_check
          %p1983 = pneg %p593
        $region82: #{backbone_with_afpn_forward.1} parent=11 // pred_check_branch
          %1985 = sbr.rel (%p1983) target = $region84
        $region83: #{backbone_with_afpn_forward.1} parent=11 // pred_region
          %s1987 = ssub.s32 64, 64
          %1988 = vsyncadd [#allocation17], %s1987
          %s1990 = sshll.u32 [#allocation18], 4
          %s1991 = int_to_ptr.vmem [resolvable:$true] %s1990
          %1993 = dma.hbm_to_vmem [thread:$0]  %s37, 64, %s1991, [#allocation17]
        $region84: #{backbone_with_afpn_forward.1} parent=11 // pred_fallthru
          _
        // Predicated region
        $region85: #{backbone_with_afpn_forward.1} parent=11 // pred_check
          %p1994 = pneg %p614
        $region86: #{backbone_with_afpn_forward.1} parent=11 // pred_check_branch
          %1996 = sbr.rel (%p1994) target = $region88
        $region87: #{backbone_with_afpn_forward.1} parent=11 // pred_region
          %s1998 = ssub.s32 16, 16
          %1999 = vsyncadd [#allocation20], %s1998
          %s2001 = sshll.u32 [#allocation19], 4
          %s2002 = int_to_ptr.vmem [resolvable:$true] %s2001
          %2004 = dma.hbm_to_vmem [thread:$0]  %s39, 16, %s2002, [#allocation20]
        $region88: #{backbone_with_afpn_forward.1} parent=11 // pred_fallthru
          _
        // Predicated region
        $region89: #{backbone_with_afpn_forward.1} parent=11 // pred_check
          %p2005 = pneg %p635
        $region90: #{backbone_with_afpn_forward.1} parent=11 // pred_check_branch
          %2007 = sbr.rel (%p2005) target = $region92
        $region91: #{backbone_with_afpn_forward.1} parent=11 // pred_region
          %s2009 = ssub.s32 768, 768
          %2010 = vsyncadd [#allocation20], %s2009
          %s2011 = sshll.u32 [#allocation21], 4
          %s2012 = int_to_ptr.vmem [resolvable:$true] %s2011
          %2017 = dma.hbm_to_vmem [thread:$0]  %s41, 768, %s2012, [#allocation20], 128, 128, 8
        $region92: #{backbone_with_afpn_forward.1} parent=11 // pred_fallthru
          _
        // Predicated region
        $region93: #{backbone_with_afpn_forward.1} parent=11 // pred_check
          %p2018 = pneg %p656
        $region94: #{backbone_with_afpn_forward.1} parent=11 // pred_check_branch
          %2020 = sbr.rel (%p2018) target = $region96
        $region95: #{backbone_with_afpn_forward.1} parent=11 // pred_region
          %s2022 = ssub.s32 768, 768
          %2023 = vsyncadd [#allocation23], %s2022
          %s2024 = sshll.u32 [#allocation22], 4
          %s2025 = int_to_ptr.vmem [resolvable:$true] %s2024
          %2030 = dma.hbm_to_vmem [thread:$0]  %s43, 768, %s2025, [#allocation23], 128, 128, 8
        $region96: #{backbone_with_afpn_forward.1} parent=11 // pred_fallthru
          _
        // Predicated region
        $region97: #{backbone_with_afpn_forward.1} parent=11 // pred_check
          %p2031 = pneg %p677
        $region98: #{backbone_with_afpn_forward.1} parent=11 // pred_check_branch
          %2033 = sbr.rel (%p2031) target = $region100
        $region99: #{backbone_with_afpn_forward.1} parent=11 // pred_region
          %s2035 = ssub.s32 768, 768
          %2036 = vsyncadd [#allocation23], %s2035
          %s2037 = sshll.u32 [#allocation24], 4
          %s2038 = int_to_ptr.vmem [resolvable:$true] %s2037
          %2043 = dma.hbm_to_vmem [thread:$0]  %s45, 768, %s2038, [#allocation23], 128, 128, 8
        $region100: #{backbone_with_afpn_forward.1} parent=11 // pred_fallthru
          _
        // Predicated region
        $region101: #{backbone_with_afpn_forward.1} parent=11 // pred_check
          %p2044 = pneg %p698
        $region102: #{backbone_with_afpn_forward.1} parent=11 // pred_check_branch
          %2046 = sbr.rel (%p2044) target = $region104
        $region103: #{backbone_with_afpn_forward.1} parent=11 // pred_region
          %s2048 = ssub.s32 256, 256
          %2049 = vsyncadd [#allocation26], %s2048
          %s2050 = sshll.u32 [#allocation25], 4
          %s2051 = int_to_ptr.vmem [resolvable:$true] %s2050
          %2056 = dma.hbm_to_vmem [thread:$0]  %s47, 256, %s2051, [#allocation26], 128, 128, 8
        $region104: #{backbone_with_afpn_forward.1} parent=11 // pred_fallthru
          _
        // Predicated region
        $region105: #{backbone_with_afpn_forward.1} parent=11 // pred_check
          %p2057 = pneg %p719
        $region106: #{backbone_with_afpn_forward.1} parent=11 // pred_check_branch
          %2059 = sbr.rel (%p2057) target = $region108
        $region107: #{backbone_with_afpn_forward.1} parent=11 // pred_region
          %s2061 = ssub.s32 256, 256
          %2062 = vsyncadd [#allocation26], %s2061
          %s2063 = sshll.u32 [#allocation27], 4
          %s2064 = int_to_ptr.vmem [resolvable:$true] %s2063
          %2069 = dma.hbm_to_vmem [thread:$0]  %s49, 256, %s2064, [#allocation26], 128, 128, 8
        $region108: #{backbone_with_afpn_forward.1} parent=11 // pred_fallthru
          _
        // Predicated region
        $region109: #{backbone_with_afpn_forward.1} parent=11 // pred_check
          %p2070 = pneg %p740
        $region110: #{backbone_with_afpn_forward.1} parent=11 // pred_check_branch
          %2072 = sbr.rel (%p2070) target = $region112
        $region111: #{backbone_with_afpn_forward.1} parent=11 // pred_region
          %s2074 = ssub.s32 256, 256
          %2075 = vsyncadd [#allocation29], %s2074
          %s2076 = sshll.u32 [#allocation28], 4
          %s2077 = int_to_ptr.vmem [resolvable:$true] %s2076
          %2082 = dma.hbm_to_vmem [thread:$0]  %s51, 256, %s2077, [#allocation29], 128, 128, 8
        $region112: #{backbone_with_afpn_forward.1} parent=11 // pred_fallthru
          _
        // Predicated region
        $region113: #{backbone_with_afpn_forward.1} parent=11 // pred_check
          %p2083 = pneg %p761
        $region114: #{backbone_with_afpn_forward.1} parent=11 // pred_check_branch
          %2085 = sbr.rel (%p2083) target = $region116
        $region115: #{backbone_with_afpn_forward.1} parent=11 // pred_region
          %s2087 = ssub.s32 16, 16
          %2088 = vsyncadd [#allocation29], %s2087
          %s2090 = sshll.u32 [#allocation30], 4
          %s2091 = int_to_ptr.vmem [resolvable:$true] %s2090
          %2093 = dma.hbm_to_vmem [thread:$0]  %s53, 16, %s2091, [#allocation29]
        $region116: #{backbone_with_afpn_forward.1} parent=11 // pred_fallthru
          _
        // Predicated region
        $region117: #{backbone_with_afpn_forward.1} parent=11 // pred_check
          %p2094 = pneg %p782
        $region118: #{backbone_with_afpn_forward.1} parent=11 // pred_check_branch
          %2096 = sbr.rel (%p2094) target = $region120
        $region119: #{backbone_with_afpn_forward.1} parent=11 // pred_region
          _
        $region120: #{backbone_with_afpn_forward.1} parent=11 // pred_fallthru
          _
        // Predicated region
        $region121: #{backbone_with_afpn_forward.1} parent=11 // pred_check
          %p2097 = pneg %p803
        $region122: #{backbone_with_afpn_forward.1} parent=11 // pred_check_branch
          %2099 = sbr.rel (%p2097) target = $region124
        $region123: #{backbone_with_afpn_forward.1} parent=11 // pred_region
          _
        $region124: #{backbone_with_afpn_forward.1} parent=11 // pred_fallthru
          _
        // Predicated region
        $region125: #{backbone_with_afpn_forward.1} parent=11 // pred_check
          %p2100 = pneg %p824
        $region126: #{backbone_with_afpn_forward.1} parent=11 // pred_check_branch
          %2102 = sbr.rel (%p2100) target = $region128
        $region127: #{backbone_with_afpn_forward.1} parent=11 // pred_region
          %s2104 = ssub.s32 2048, 2048
          %2105 = vsyncadd [#allocation32], %s2104
          %s2106 = sshll.u32 [#allocation31], 4
          %s2107 = int_to_ptr.vmem [resolvable:$true] %s2106
          %2112 = dma.hbm_to_vmem [thread:$0]  %s59, 2048, %s2107, [#allocation32], 128, 128, 8
        $region128: #{backbone_with_afpn_forward.1} parent=11 // pred_fallthru
          _
        // Predicated region
        $region129: #{backbone_with_afpn_forward.1} parent=11 // pred_check
          %p2113 = pneg %p845
        $region130: #{backbone_with_afpn_forward.1} parent=11 // pred_check_branch
          %2115 = sbr.rel (%p2113) target = $region132
        $region131: #{backbone_with_afpn_forward.1} parent=11 // pred_region
          %s2117 = ssub.s32 128, 128
          %2118 = vsyncadd [#allocation32], %s2117
          %s2120 = sshll.u32 [#allocation33], 4
          %s2121 = int_to_ptr.vmem [resolvable:$true] %s2120
          %2123 = dma.hbm_to_vmem [thread:$0]  %s61, 128, %s2121, [#allocation32]
        $region132: #{backbone_with_afpn_forward.1} parent=11 // pred_fallthru
          _
        // Predicated region
        $region133: #{backbone_with_afpn_forward.1} parent=11 // pred_check
          %p2124 = pneg %p866
        $region134: #{backbone_with_afpn_forward.1} parent=11 // pred_check_branch
          %2126 = sbr.rel (%p2124) target = $region136
        $region135: #{backbone_with_afpn_forward.1} parent=11 // pred_region
          %s2128 = ssub.s32 128, 128
          %2129 = vsyncadd [#allocation35], %s2128
          %s2131 = sshll.u32 [#allocation34], 4
          %s2132 = int_to_ptr.vmem [resolvable:$true] %s2131
          %2134 = dma.hbm_to_vmem [thread:$0]  %s63, 128, %s2132, [#allocation35]
        $region136: #{backbone_with_afpn_forward.1} parent=11 // pred_fallthru
          _
        // Predicated region
        $region137: #{backbone_with_afpn_forward.1} parent=11 // pred_check
          %p2135 = pneg %p887
        $region138: #{backbone_with_afpn_forward.1} parent=11 // pred_check_branch
          %2137 = sbr.rel (%p2135) target = $region140
        $region139: #{backbone_with_afpn_forward.1} parent=11 // pred_region
          %s2139 = ssub.s32 128, 128
          %2140 = vsyncadd [#allocation35], %s2139
          %s2142 = sshll.u32 [#allocation36], 4
          %s2143 = int_to_ptr.vmem [resolvable:$true] %s2142
          %2145 = dma.hbm_to_vmem [thread:$0]  %s65, 128, %s2143, [#allocation35]
        $region140: #{backbone_with_afpn_forward.1} parent=11 // pred_fallthru
          _
        // Predicated region
        $region141: #{backbone_with_afpn_forward.1} parent=11 // pred_check
          %p2146 = pneg %p908
        $region142: #{backbone_with_afpn_forward.1} parent=11 // pred_check_branch
          %2148 = sbr.rel (%p2146) target = $region144
        $region143: #{backbone_with_afpn_forward.1} parent=11 // pred_region
          %s2150 = ssub.s32 16, 16
          %2151 = vsyncadd [#allocation38], %s2150
          %s2153 = sshll.u32 [#allocation37], 4
          %s2154 = int_to_ptr.vmem [resolvable:$true] %s2153
          %2156 = dma.hbm_to_vmem [thread:$0]  %s67, 16, %s2154, [#allocation38]
        $region144: #{backbone_with_afpn_forward.1} parent=11 // pred_fallthru
          _
        // Predicated region
        $region145: #{backbone_with_afpn_forward.1} parent=11 // pred_check
          %p2157 = pneg %p929
        $region146: #{backbone_with_afpn_forward.1} parent=11 // pred_check_branch
          %2159 = sbr.rel (%p2157) target = $region148
        $region147: #{backbone_with_afpn_forward.1} parent=11 // pred_region
          %s2161 = ssub.s32 2048, 2048
          %2162 = vsyncadd [#allocation38], %s2161
          %s2163 = sshll.u32 [#allocation39], 4
          %s2164 = int_to_ptr.vmem [resolvable:$true] %s2163
          %2169 = dma.hbm_to_vmem [thread:$0]  %s69, 2048, %s2164, [#allocation38], 128, 128, 8
        $region148: #{backbone_with_afpn_forward.1} parent=11 // pred_fallthru
          _
        // Predicated region
        $region149: #{backbone_with_afpn_forward.1} parent=11 // pred_check
          %p2170 = pneg %p950
        $region150: #{backbone_with_afpn_forward.1} parent=11 // pred_check_branch
          %2172 = sbr.rel (%p2170) target = $region152
        $region151: #{backbone_with_afpn_forward.1} parent=11 // pred_region
          %s2174 = ssub.s32 2048, 2048
          %2175 = vsyncadd [#allocation41], %s2174
          %s2176 = sshll.u32 [#allocation40], 4
          %s2177 = int_to_ptr.vmem [resolvable:$true] %s2176
          %2182 = dma.hbm_to_vmem [thread:$0]  %s71, 2048, %s2177, [#allocation41], 128, 128, 8
        $region152: #{backbone_with_afpn_forward.1} parent=11 // pred_fallthru
          _
        // Predicated region
        $region153: #{backbone_with_afpn_forward.1} parent=11 // pred_check
          %p2183 = pneg %p971
        $region154: #{backbone_with_afpn_forward.1} parent=11 // pred_check_branch
          %2185 = sbr.rel (%p2183) target = $region156
        $region155: #{backbone_with_afpn_forward.1} parent=11 // pred_region
          %s2187 = ssub.s32 2048, 2048
          %2188 = vsyncadd [#allocation41], %s2187
          %s2189 = sshll.u32 [#allocation42], 4
          %s2190 = int_to_ptr.vmem [resolvable:$true] %s2189
          %2195 = dma.hbm_to_vmem [thread:$0]  %s73, 2048, %s2190, [#allocation41], 128, 128, 8
        $region156: #{backbone_with_afpn_forward.1} parent=11 // pred_fallthru
          _
        // Predicated region
        $region157: #{backbone_with_afpn_forward.1} parent=11 // pred_check
          %p2196 = pneg %p992
        $region158: #{backbone_with_afpn_forward.1} parent=11 // pred_check_branch
          %2198 = sbr.rel (%p2196) target = $region160
        $region159: #{backbone_with_afpn_forward.1} parent=11 // pred_region
          %s2200 = ssub.s32 64, 64
          %2201 = vsyncadd [#allocation44], %s2200
          %s2203 = sshll.u32 [#allocation43], 4
          %s2204 = int_to_ptr.vmem [resolvable:$true] %s2203
          %2206 = dma.hbm_to_vmem [thread:$0]  %s75, 64, %s2204, [#allocation44]
        $region160: #{backbone_with_afpn_forward.1} parent=11 // pred_fallthru
          _
        // Predicated region
        $region161: #{backbone_with_afpn_forward.1} parent=11 // pred_check
          %p2207 = pneg %p1013
        $region162: #{backbone_with_afpn_forward.1} parent=11 // pred_check_branch
          %2209 = sbr.rel (%p2207) target = $region164
        $region163: #{backbone_with_afpn_forward.1} parent=11 // pred_region
          %s2211 = ssub.s32 64, 64
          %2212 = vsyncadd [#allocation44], %s2211
          %s2214 = sshll.u32 [#allocation45], 4
          %s2215 = int_to_ptr.vmem [resolvable:$true] %s2214
          %2217 = dma.hbm_to_vmem [thread:$0]  %s77, 64, %s2215, [#allocation44]
        $region164: #{backbone_with_afpn_forward.1} parent=11 // pred_fallthru
          _
        // Predicated region
        $region165: #{backbone_with_afpn_forward.1} parent=11 // pred_check
          %p2218 = pneg %p1034
        $region166: #{backbone_with_afpn_forward.1} parent=11 // pred_check_branch
          %2220 = sbr.rel (%p2218) target = $region168
        $region167: #{backbone_with_afpn_forward.1} parent=11 // pred_region
          %s2222 = ssub.s32 64, 64
          %2223 = vsyncadd [#allocation47], %s2222
          %s2225 = sshll.u32 [#allocation46], 4
          %s2226 = int_to_ptr.vmem [resolvable:$true] %s2225
          %2228 = dma.hbm_to_vmem [thread:$0]  %s79, 64, %s2226, [#allocation47]
        $region168: #{backbone_with_afpn_forward.1} parent=11 // pred_fallthru
          _
        // Predicated region
        $region169: #{backbone_with_afpn_forward.1} parent=11 // pred_check
          %p2229 = pneg %p1055
        $region170: #{backbone_with_afpn_forward.1} parent=11 // pred_check_branch
          %2231 = sbr.rel (%p2229) target = $region172
        $region171: #{backbone_with_afpn_forward.1} parent=11 // pred_region
          %s2233 = ssub.s32 32, 32
          %2234 = vsyncadd [#allocation47], %s2233
          %s2236 = sshll.u32 [#allocation48], 4
          %s2237 = int_to_ptr.vmem [resolvable:$true] %s2236
          %2239 = dma.hbm_to_vmem [thread:$0]  %s81, 32, %s2237, [#allocation47]
        $region172: #{backbone_with_afpn_forward.1} parent=11 // pred_fallthru
          _
        // Predicated region
        $region173: #{backbone_with_afpn_forward.1} parent=11 // pred_check
          %p2240 = pneg %p1076
        $region174: #{backbone_with_afpn_forward.1} parent=11 // pred_check_branch
          %2242 = sbr.rel (%p2240) target = $region176
        $region175: #{backbone_with_afpn_forward.1} parent=11 // pred_region
          %s2244 = ssub.s32 4096, 4096
          %2245 = vsyncadd [#allocation50], %s2244
          %s2246 = sshll.u32 [#allocation49], 4
          %s2247 = int_to_ptr.vmem [resolvable:$true] %s2246
          %2252 = dma.hbm_to_vmem [thread:$0]  %s83, 4096, %s2247, [#allocation50], 256, 256, 16
        $region176: #{backbone_with_afpn_forward.1} parent=11 // pred_fallthru
          _
        // Predicated region
        $region177: #{backbone_with_afpn_forward.1} parent=11 // pred_check
          %p2253 = pneg %p1097
        $region178: #{backbone_with_afpn_forward.1} parent=11 // pred_check_branch
          %2255 = sbr.rel (%p2253) target = $region180
        $region179: #{backbone_with_afpn_forward.1} parent=11 // pred_region
          %s2257 = ssub.s32 16, 16
          %2258 = vsyncadd [#allocation50], %s2257
          %s2260 = sshll.u32 [#allocation51], 4
          %s2261 = int_to_ptr.vmem [resolvable:$true] %s2260
          %2263 = dma.hbm_to_vmem [thread:$0]  %s85, 16, %s2261, [#allocation50]
        $region180: #{backbone_with_afpn_forward.1} parent=11 // pred_fallthru
          _
        // Predicated region
        $region181: #{backbone_with_afpn_forward.1} parent=11 // pred_check
          %p2264 = pneg %p1118
        $region182: #{backbone_with_afpn_forward.1} parent=11 // pred_check_branch
          %2266 = sbr.rel (%p2264) target = $region184
        $region183: #{backbone_with_afpn_forward.1} parent=11 // pred_region
          %s2268 = ssub.s32 2048, 2048
          %2269 = vsyncadd [#allocation53], %s2268
          %s2270 = sshll.u32 [#allocation52], 4
          %s2271 = int_to_ptr.vmem [resolvable:$true] %s2270
          %2276 = dma.hbm_to_vmem [thread:$0]  %s87, 2048, %s2271, [#allocation53], 128, 128, 8
        $region184: #{backbone_with_afpn_forward.1} parent=11 // pred_fallthru
          _
        // Predicated region
        $region185: #{backbone_with_afpn_forward.1} parent=11 // pred_check
          %p2277 = pneg %p1139
        $region186: #{backbone_with_afpn_forward.1} parent=11 // pred_check_branch
          %2279 = sbr.rel (%p2277) target = $region188
        $region187: #{backbone_with_afpn_forward.1} parent=11 // pred_region
          %s2281 = ssub.s32 16, 16
          %2282 = vsyncadd [#allocation53], %s2281
          %s2284 = sshll.u32 [#allocation54], 4
          %s2285 = int_to_ptr.vmem [resolvable:$true] %s2284
          %2287 = dma.hbm_to_vmem [thread:$0]  %s89, 16, %s2285, [#allocation53]
        $region188: #{backbone_with_afpn_forward.1} parent=11 // pred_fallthru
          _
        // Predicated region
        $region189: #{backbone_with_afpn_forward.1} parent=11 // pred_check
          %p2288 = pneg %p1160
        $region190: #{backbone_with_afpn_forward.1} parent=11 // pred_check_branch
          %2290 = sbr.rel (%p2288) target = $region192
        $region191: #{backbone_with_afpn_forward.1} parent=11 // pred_region
          _
        $region192: #{backbone_with_afpn_forward.1} parent=11 // pred_fallthru
          _
        // Predicated region
        $region193: #{backbone_with_afpn_forward.1} parent=11 // pred_check
          %p2291 = pneg %p1181
        $region194: #{backbone_with_afpn_forward.1} parent=11 // pred_check_branch
          %2293 = sbr.rel (%p2291) target = $region196
        $region195: #{backbone_with_afpn_forward.1} parent=11 // pred_region
          %s2295 = ssub.s32 32, 32
          %2296 = vsyncadd [#allocation56], %s2295
          %s2298 = sshll.u32 [#allocation55], 4
          %s2299 = int_to_ptr.vmem [resolvable:$true] %s2298
          %2301 = dma.hbm_to_vmem [thread:$0]  %s93, 32, %s2299, [#allocation56]
        $region196: #{backbone_with_afpn_forward.1} parent=11 // pred_fallthru
          _
        // Predicated region
        $region197: #{backbone_with_afpn_forward.1} parent=11 // pred_check
          %p2302 = pneg %p1202
        $region198: #{backbone_with_afpn_forward.1} parent=11 // pred_check_branch
          %2304 = sbr.rel (%p2302) target = $region200
        $region199: #{backbone_with_afpn_forward.1} parent=11 // pred_region
          _
        $region200: #{backbone_with_afpn_forward.1} parent=11 // pred_fallthru
          _
        // Predicated region
        $region201: #{backbone_with_afpn_forward.1} parent=11 // pred_check
          %p2305 = pneg %p1223
        $region202: #{backbone_with_afpn_forward.1} parent=11 // pred_check_branch
          %2307 = sbr.rel (%p2305) target = $region204
        $region203: #{backbone_with_afpn_forward.1} parent=11 // pred_region
          _
        $region204: #{backbone_with_afpn_forward.1} parent=11 // pred_fallthru
          _
        // Predicated region
        $region205: #{backbone_with_afpn_forward.1} parent=11 // pred_check
          %p2308 = pneg %p1244
        $region206: #{backbone_with_afpn_forward.1} parent=11 // pred_check_branch
          %2310 = sbr.rel (%p2308) target = $region208
        $region207: #{backbone_with_afpn_forward.1} parent=11 // pred_region
          %s2312 = ssub.s32 8192, 8192
          %2313 = vsyncadd [#allocation56], %s2312
          %s2314 = sshll.u32 [#allocation57], 4
          %s2315 = int_to_ptr.vmem [resolvable:$true] %s2314
          %2320 = dma.hbm_to_vmem [thread:$0]  %s99, 8192, %s2315, [#allocation56], 256, 256, 16
        $region208: #{backbone_with_afpn_forward.1} parent=11 // pred_fallthru
          _
        // Predicated region
        $region209: #{backbone_with_afpn_forward.1} parent=11 // pred_check
          %p2321 = pneg %p1265
        $region210: #{backbone_with_afpn_forward.1} parent=11 // pred_check_branch
          %2323 = sbr.rel (%p2321) target = $region212
        $region211: #{backbone_with_afpn_forward.1} parent=11 // pred_region
          %s2325 = ssub.s32 256, 256
          %2326 = vsyncadd [#allocation59], %s2325
          %s2327 = sshll.u32 [#allocation58], 4
          %s2328 = int_to_ptr.vmem [resolvable:$true] %s2327
          %2333 = dma.hbm_to_vmem [thread:$0]  %s101, 256, %s2328, [#allocation59], 128, 128, 8
        $region212: #{backbone_with_afpn_forward.1} parent=11 // pred_fallthru
          _
        // Predicated region
        $region213: #{backbone_with_afpn_forward.1} parent=11 // pred_check
          %p2334 = pneg %p1286
        $region214: #{backbone_with_afpn_forward.1} parent=11 // pred_check_branch
          %2336 = sbr.rel (%p2334) target = $region216
        $region215: #{backbone_with_afpn_forward.1} parent=11 // pred_region
          %s2338 = ssub.s32 256, 256
          %2339 = vsyncadd [#allocation59], %s2338
          %s2340 = sshll.u32 [#allocation60], 4
          %s2341 = int_to_ptr.vmem [resolvable:$true] %s2340
          %2346 = dma.hbm_to_vmem [thread:$0]  %s103, 256, %s2341, [#allocation59], 128, 128, 8
        $region216: #{backbone_with_afpn_forward.1} parent=11 // pred_fallthru
          _
        // Predicated region
        $region217: #{backbone_with_afpn_forward.1} parent=11 // pred_check
          %p2347 = pneg %p1307
        $region218: #{backbone_with_afpn_forward.1} parent=11 // pred_check_branch
          %2349 = sbr.rel (%p2347) target = $region220
        $region219: #{backbone_with_afpn_forward.1} parent=11 // pred_region
          %s2351 = ssub.s32 256, 256
          %2352 = vsyncadd [#allocation62], %s2351
          %s2353 = sshll.u32 [#allocation61], 4
          %s2354 = int_to_ptr.vmem [resolvable:$true] %s2353
          %2359 = dma.hbm_to_vmem [thread:$0]  %s105, 256, %s2354, [#allocation62], 128, 128, 8
        $region220: #{backbone_with_afpn_forward.1} parent=11 // pred_fallthru
          _
        // Predicated region
        $region221: #{backbone_with_afpn_forward.1} parent=11 // pred_check
          %p2360 = pneg %p1328
        $region222: #{backbone_with_afpn_forward.1} parent=11 // pred_check_branch
          %2362 = sbr.rel (%p2360) target = $region224
        $region223: #{backbone_with_afpn_forward.1} parent=11 // pred_region
          %s2364 = ssub.s32 16, 16
          %2365 = vsyncadd [#allocation62], %s2364
          %s2367 = sshll.u32 [#allocation63], 4
          %s2368 = int_to_ptr.vmem [resolvable:$true] %s2367
          %2370 = dma.hbm_to_vmem [thread:$0]  %s107, 16, %s2368, [#allocation62]
        $region224: #{backbone_with_afpn_forward.1} parent=11 // pred_fallthru
          _
        // Predicated region
        $region225: #{backbone_with_afpn_forward.1} parent=11 // pred_check
          %p2371 = pneg %p1349
        $region226: #{backbone_with_afpn_forward.1} parent=11 // pred_check_branch
          %2373 = sbr.rel (%p2371) target = $region228
        $region227: #{backbone_with_afpn_forward.1} parent=11 // pred_region
          %s2375 = ssub.s32 2048, 2048
          %2376 = vsyncadd [#allocation65], %s2375
          %s2377 = sshll.u32 [#allocation64], 4
          %s2378 = int_to_ptr.vmem [resolvable:$true] %s2377
          %2383 = dma.hbm_to_vmem [thread:$0]  %s109, 2048, %s2378, [#allocation65], 128, 128, 8
        $region228: #{backbone_with_afpn_forward.1} parent=11 // pred_fallthru
          _
        // Predicated region
        $region229: #{backbone_with_afpn_forward.1} parent=11 // pred_check
          %p2384 = pneg %p1370
        $region230: #{backbone_with_afpn_forward.1} parent=11 // pred_check_branch
          %2386 = sbr.rel (%p2384) target = $region232
        $region231: #{backbone_with_afpn_forward.1} parent=11 // pred_region
          %s2388 = ssub.s32 2048, 2048
          %2389 = vsyncadd [#allocation65], %s2388
          %s2390 = sshll.u32 [#allocation66], 4
          %s2391 = int_to_ptr.vmem [resolvable:$true] %s2390
          %2396 = dma.hbm_to_vmem [thread:$0]  %s111, 2048, %s2391, [#allocation65], 128, 128, 8
        $region232: #{backbone_with_afpn_forward.1} parent=11 // pred_fallthru
          _
        // Predicated region
        $region233: #{backbone_with_afpn_forward.1} parent=11 // pred_check
          %p2397 = pneg %p1391
        $region234: #{backbone_with_afpn_forward.1} parent=11 // pred_check_branch
          %2399 = sbr.rel (%p2397) target = $region236
        $region235: #{backbone_with_afpn_forward.1} parent=11 // pred_region
          %s2401 = ssub.s32 2048, 2048
          %2402 = vsyncadd [#allocation68], %s2401
          %s2403 = sshll.u32 [#allocation67], 4
          %s2404 = int_to_ptr.vmem [resolvable:$true] %s2403
          %2409 = dma.hbm_to_vmem [thread:$0]  %s113, 2048, %s2404, [#allocation68], 128, 128, 8
        $region236: #{backbone_with_afpn_forward.1} parent=11 // pred_fallthru
          _
        // Predicated region
        $region237: #{backbone_with_afpn_forward.1} parent=11 // pred_check
          %p2410 = pneg %p1412
        $region238: #{backbone_with_afpn_forward.1} parent=11 // pred_check_branch
          %2412 = sbr.rel (%p2410) target = $region240
        $region239: #{backbone_with_afpn_forward.1} parent=11 // pred_region
          %s2414 = ssub.s32 128, 128
          %2415 = vsyncadd [#allocation68], %s2414
          %s2417 = sshll.u32 [#allocation69], 4
          %s2418 = int_to_ptr.vmem [resolvable:$true] %s2417
          %2420 = dma.hbm_to_vmem [thread:$0]  %s115, 128, %s2418, [#allocation68]
        $region240: #{backbone_with_afpn_forward.1} parent=11 // pred_fallthru
          _
        // Predicated region
        $region241: #{backbone_with_afpn_forward.1} parent=11 // pred_check
          %p2421 = pneg %p1433
        $region242: #{backbone_with_afpn_forward.1} parent=11 // pred_check_branch
          %2423 = sbr.rel (%p2421) target = $region244
        $region243: #{backbone_with_afpn_forward.1} parent=11 // pred_region
          %s2425 = ssub.s32 128, 128
          %2426 = vsyncadd [#allocation71], %s2425
          %s2428 = sshll.u32 [#allocation70], 4
          %s2429 = int_to_ptr.vmem [resolvable:$true] %s2428
          %2431 = dma.hbm_to_vmem [thread:$0]  %s117, 128, %s2429, [#allocation71]
        $region244: #{backbone_with_afpn_forward.1} parent=11 // pred_fallthru
          _
        // Predicated region
        $region245: #{backbone_with_afpn_forward.1} parent=11 // pred_check
          %p2432 = pneg %p1454
        $region246: #{backbone_with_afpn_forward.1} parent=11 // pred_check_branch
          %2434 = sbr.rel (%p2432) target = $region248
        $region247: #{backbone_with_afpn_forward.1} parent=11 // pred_region
          %s2436 = ssub.s32 128, 128
          %2437 = vsyncadd [#allocation71], %s2436
          %s2439 = sshll.u32 [#allocation72], 4
          %s2440 = int_to_ptr.vmem [resolvable:$true] %s2439
          %2442 = dma.hbm_to_vmem [thread:$0]  %s119, 128, %s2440, [#allocation71]
        $region248: #{backbone_with_afpn_forward.1} parent=11 // pred_fallthru
          _
        // Predicated region
        $region249: #{backbone_with_afpn_forward.1} parent=11 // pred_check
          %p2443 = pneg %p1475
        $region250: #{backbone_with_afpn_forward.1} parent=11 // pred_check_branch
          %2445 = sbr.rel (%p2443) target = $region252
        $region251: #{backbone_with_afpn_forward.1} parent=11 // pred_region
          %s2447 = ssub.s32 16, 16
          %2448 = vsyncadd [#allocation74], %s2447
          %s2450 = sshll.u32 [#allocation73], 4
          %s2451 = int_to_ptr.vmem [resolvable:$true] %s2450
          %2453 = dma.hbm_to_vmem [thread:$0]  %s121, 16, %s2451, [#allocation74]
        $region252: #{backbone_with_afpn_forward.1} parent=11 // pred_fallthru
          _
        // Predicated region
        $region253: #{backbone_with_afpn_forward.1} parent=11 // pred_check
          %p2454 = pneg %p1496
        $region254: #{backbone_with_afpn_forward.1} parent=11 // pred_check_branch
          %2456 = sbr.rel (%p2454) target = $region256
        $region255: #{backbone_with_afpn_forward.1} parent=11 // pred_region
          %s2458 = ssub.s32 1024, 1024
          %2459 = vsyncadd [#allocation74], %s2458
          %s2460 = sshll.u32 [#allocation75], 4
          %s2461 = int_to_ptr.vmem [resolvable:$true] %s2460
          %2466 = dma.hbm_to_vmem [thread:$0]  %s123, 1024, %s2461, [#allocation74], 128, 128, 8
        $region256: #{backbone_with_afpn_forward.1} parent=11 // pred_fallthru
          _
        // Predicated region
        $region257: #{backbone_with_afpn_forward.1} parent=11 // pred_check
          %p2467 = pneg %p1517
        $region258: #{backbone_with_afpn_forward.1} parent=11 // pred_check_branch
          %2469 = sbr.rel (%p2467) target = $region260
        $region259: #{backbone_with_afpn_forward.1} parent=11 // pred_region
          %s2471 = ssub.s32 1024, 1024
          %2472 = vsyncadd [#allocation77], %s2471
          %s2473 = sshll.u32 [#allocation76], 4
          %s2474 = int_to_ptr.vmem [resolvable:$true] %s2473
          %2479 = dma.hbm_to_vmem [thread:$0]  %s125, 1024, %s2474, [#allocation77], 128, 128, 8
        $region260: #{backbone_with_afpn_forward.1} parent=11 // pred_fallthru
          _
        // Predicated region
        $region261: #{backbone_with_afpn_forward.1} parent=11 // pred_check
          %p2480 = pneg %p1538
        $region262: #{backbone_with_afpn_forward.1} parent=11 // pred_check_branch
          %2482 = sbr.rel (%p2480) target = $region264
        $region263: #{backbone_with_afpn_forward.1} parent=11 // pred_region
          %s2484 = ssub.s32 1024, 1024
          %2485 = vsyncadd [#allocation77], %s2484
          %s2486 = sshll.u32 [#allocation78], 4
          %s2487 = int_to_ptr.vmem [resolvable:$true] %s2486
          %2492 = dma.hbm_to_vmem [thread:$0]  %s127, 1024, %s2487, [#allocation77], 128, 128, 8
        $region264: #{backbone_with_afpn_forward.1} parent=11 // pred_fallthru
          _
        // Predicated region
        $region265: #{backbone_with_afpn_forward.1} parent=11 // pred_check
          %p2493 = pneg %p1559
        $region266: #{backbone_with_afpn_forward.1} parent=11 // pred_check_branch
          %2495 = sbr.rel (%p2493) target = $region268
        $region267: #{backbone_with_afpn_forward.1} parent=11 // pred_region
          %s2497 = ssub.s32 64, 64
          %2498 = vsyncadd [#allocation80], %s2497
          %s2500 = sshll.u32 [#allocation79], 4
          %s2501 = int_to_ptr.vmem [resolvable:$true] %s2500
          %2503 = dma.hbm_to_vmem [thread:$0]  %s129, 64, %s2501, [#allocation80]
        $region268: #{backbone_with_afpn_forward.1} parent=11 // pred_fallthru
          _
        // Predicated region
        $region269: #{backbone_with_afpn_forward.1} parent=11 // pred_check
          %p2504 = pneg %p1580
        $region270: #{backbone_with_afpn_forward.1} parent=11 // pred_check_branch
          %2506 = sbr.rel (%p2504) target = $region272
        $region271: #{backbone_with_afpn_forward.1} parent=11 // pred_region
          %s2508 = ssub.s32 64, 64
          %2509 = vsyncadd [#allocation80], %s2508
          %s2511 = sshll.u32 [#allocation81], 4
          %s2512 = int_to_ptr.vmem [resolvable:$true] %s2511
          %2514 = dma.hbm_to_vmem [thread:$0]  %s131, 64, %s2512, [#allocation80]
        $region272: #{backbone_with_afpn_forward.1} parent=11 // pred_fallthru
          _
        // Predicated region
        $region273: #{backbone_with_afpn_forward.1} parent=11 // pred_check
          %p2515 = pneg %p1601
        $region274: #{backbone_with_afpn_forward.1} parent=11 // pred_check_branch
          %2517 = sbr.rel (%p2515) target = $region276
        $region275: #{backbone_with_afpn_forward.1} parent=11 // pred_region
          %s2519 = ssub.s32 64, 64
          %2520 = vsyncadd [#allocation83], %s2519
          %s2522 = sshll.u32 [#allocation82], 4
          %s2523 = int_to_ptr.vmem [resolvable:$true] %s2522
          %2525 = dma.hbm_to_vmem [thread:$0]  %s133, 64, %s2523, [#allocation83]
        $region276: #{backbone_with_afpn_forward.1} parent=11 // pred_fallthru
          _
        // Predicated region
        $region277: #{backbone_with_afpn_forward.1} parent=11 // pred_check
          %p2526 = pneg %p1622
        $region278: #{backbone_with_afpn_forward.1} parent=11 // pred_check_branch
          %2528 = sbr.rel (%p2526) target = $region280
        $region279: #{backbone_with_afpn_forward.1} parent=11 // pred_region
          %s2530 = ssub.s32 32, 32
          %2531 = vsyncadd [#allocation83], %s2530
          %s2533 = sshll.u32 [#allocation84], 4
          %s2534 = int_to_ptr.vmem [resolvable:$true] %s2533
          %2536 = dma.hbm_to_vmem [thread:$0]  %s135, 32, %s2534, [#allocation83]
        $region280: #{backbone_with_afpn_forward.1} parent=11 // pred_fallthru
          _
        // Predicated region
        $region281: #{backbone_with_afpn_forward.1} parent=11 // pred_check
          %p2537 = pneg %p1643
        $region282: #{backbone_with_afpn_forward.1} parent=11 // pred_check_branch
          %2539 = sbr.rel (%p2537) target = $region284
        $region283: #{backbone_with_afpn_forward.1} parent=11 // pred_region
          _
        $region284: #{backbone_with_afpn_forward.1} parent=11 // pred_fallthru
          _
        // Predicated region
        $region285: #{backbone_with_afpn_forward.1} parent=11 // pred_check
          %p2540 = pneg %p1664
        $region286: #{backbone_with_afpn_forward.1} parent=11 // pred_check_branch
          %2542 = sbr.rel (%p2540) target = $region288
        $region287: #{backbone_with_afpn_forward.1} parent=11 // pred_region
          _
        $region288: #{backbone_with_afpn_forward.1} parent=11 // pred_fallthru
          _
        // Predicated region
        $region289: #{backbone_with_afpn_forward.1} parent=11 // pred_check
          %p2543 = pneg %p1685
        $region290: #{backbone_with_afpn_forward.1} parent=11 // pred_check_branch
          %2545 = sbr.rel (%p2543) target = $region292
        $region291: #{backbone_with_afpn_forward.1} parent=11 // pred_region
          %s2547 = ssub.s32 1024, 1024
          %2548 = vsyncadd [#allocation86], %s2547
          %s2549 = sshll.u32 [#allocation85], 4
          %s2550 = int_to_ptr.vmem [resolvable:$true] %s2549
          %2555 = dma.hbm_to_vmem [thread:$0]  %s141, 1024, %s2550, [#allocation86], 128, 128, 8
        $region292: #{backbone_with_afpn_forward.1} parent=11 // pred_fallthru
          _
        // Predicated region
        $region293: #{backbone_with_afpn_forward.1} parent=11 // pred_check
          %p2556 = pneg %p1706
        $region294: #{backbone_with_afpn_forward.1} parent=11 // pred_check_branch
          %2558 = sbr.rel (%p2556) target = $region296
        $region295: #{backbone_with_afpn_forward.1} parent=11 // pred_region
          _
        $region296: #{backbone_with_afpn_forward.1} parent=11 // pred_fallthru
          _
        // Predicated region
        $region297: #{backbone_with_afpn_forward.1} parent=11 // pred_check
          %p2559 = pneg %p1727
        $region298: #{backbone_with_afpn_forward.1} parent=11 // pred_check_branch
          %2561 = sbr.rel (%p2559) target = $region300
        $region299: #{backbone_with_afpn_forward.1} parent=11 // pred_region
          %s2563 = ssub.s32 4096, 4096
          %2564 = vsyncadd [#allocation86], %s2563
          %s2565 = sshll.u32 [#allocation87], 4
          %s2566 = int_to_ptr.vmem [resolvable:$true] %s2565
          %2571 = dma.hbm_to_vmem [thread:$0]  %s145, 4096, %s2566, [#allocation86], 256, 256, 16
        $region300: #{backbone_with_afpn_forward.1} parent=11 // pred_fallthru
          _
      $region12: #{backbone_with_afpn_forward.1} parent=5 // pred_fallthru
        _
      %p2572 = scmp.lt.s32.totalorder %s189, 2
      // Predicated region
      $region301: #{backbone_with_afpn_forward.1} parent=5 // pred_check
        %p2573 = pneg %p2572
      $region302: #{backbone_with_afpn_forward.1} parent=5 // pred_check_branch
        %2575 = sbr.rel (%p2573) target = $region304
      $region303: #{backbone_with_afpn_forward.1} parent=5 // pred_region
        // Predicated region
        $region305: #{backbone_with_afpn_forward.1} parent=303 // pred_check
          %p2576 = pneg %p209
        $region306: #{backbone_with_afpn_forward.1} parent=303 // pred_check_branch
          %2578 = sbr.rel (%p2576) target = $region308
        $region307: #{backbone_with_afpn_forward.1} parent=303 // pred_region
          %p2579 = scmp.lt.s32.totalorder %s189, 1
          %s2580 = scalar_select %p2579, %s189, 1
          %s2581 = smul.addr %s2580, 2
          %s2582 = smul.addr %s2581, 8
          %s2583 = scalar_lea.vmem %s1, %s2582
        $region308: #{backbone_with_afpn_forward.1} parent=303 // pred_fallthru
          _
      $region304: #{backbone_with_afpn_forward.1} parent=5 // pred_fallthru
        _
      %p2584 = scmp.le.s32.totalorder 1, %s189
      %p2585 = scmp.lt.s32.totalorder %s189, 3
      %p2586 = pnand %p2584, %p2585
      %p2587 = pneg %p2586
      // Predicated region
      $region309: #{backbone_with_afpn_forward.1} parent=5 // pred_check
        _
      $region310: #{backbone_with_afpn_forward.1} parent=5 // pred_check_branch
        %2589 = sbr.rel (%p2586) target = $region312
      $region311: #{backbone_with_afpn_forward.1} parent=5 // pred_region
        %s2590 = ssub.s32 %s189, 1
        // Predicated region
        $region313: #{backbone_with_afpn_forward.1} parent=311 // pred_check
          %p2591 = pneg %p257
        $region314: #{backbone_with_afpn_forward.1} parent=311 // pred_check_branch
          %2593 = sbr.rel (%p2591) target = $region316
        $region315: #{backbone_with_afpn_forward.1} parent=311 // pred_region
          %2594 = dma.done [#allocation3], 16
        $region316: #{backbone_with_afpn_forward.1} parent=311 // pred_fallthru
          _
        // Predicated region
        $region317: #{backbone_with_afpn_forward.1} parent=311 // pred_check
          %p2595 = pneg %p299
        $region318: #{backbone_with_afpn_forward.1} parent=311 // pred_check_branch
          %2597 = sbr.rel (%p2595) target = $region320
        $region319: #{backbone_with_afpn_forward.1} parent=311 // pred_region
          %2598 = dma.done [#allocation5], 512
        $region320: #{backbone_with_afpn_forward.1} parent=311 // pred_fallthru
          _
        // Predicated region
        $region321: #{backbone_with_afpn_forward.1} parent=311 // pred_check
          %p2599 = pneg %p341
        $region322: #{backbone_with_afpn_forward.1} parent=311 // pred_check_branch
          %2601 = sbr.rel (%p2599) target = $region324
        $region323: #{backbone_with_afpn_forward.1} parent=311 // pred_region
          %2602 = dma.done [#allocation5], 64
        $region324: #{backbone_with_afpn_forward.1} parent=311 // pred_fallthru
          _
        // Predicated region
        $region325: #{backbone_with_afpn_forward.1} parent=311 // pred_check
          %p2603 = pneg %p362
        $region326: #{backbone_with_afpn_forward.1} parent=311 // pred_check_branch
          %2605 = sbr.rel (%p2603) target = $region328
        $region327: #{backbone_with_afpn_forward.1} parent=311 // pred_region
          %2606 = dma.done [#allocation8], 16
        $region328: #{backbone_with_afpn_forward.1} parent=311 // pred_fallthru
          _
        // Predicated region
        $region329: #{backbone_with_afpn_forward.1} parent=311 // pred_check
          %p2607 = pneg %p383
        $region330: #{backbone_with_afpn_forward.1} parent=311 // pred_check_branch
          %2609 = sbr.rel (%p2607) target = $region332
        $region331: #{backbone_with_afpn_forward.1} parent=311 // pred_region
          %2610 = dma.done [#allocation8], 16
        $region332: #{backbone_with_afpn_forward.1} parent=311 // pred_fallthru
          _
        // Predicated region
        $region333: #{backbone_with_afpn_forward.1} parent=311 // pred_check
          %p2611 = pneg %p425
        $region334: #{backbone_with_afpn_forward.1} parent=311 // pred_check_branch
          %2613 = sbr.rel (%p2611) target = $region336
        $region335: #{backbone_with_afpn_forward.1} parent=311 // pred_region
          %2614 = dma.done [#allocation11], 256
        $region336: #{backbone_with_afpn_forward.1} parent=311 // pred_fallthru
          _
        // Predicated region
        $region337: #{backbone_with_afpn_forward.1} parent=311 // pred_check
          %p2615 = pneg %p467
        $region338: #{backbone_with_afpn_forward.1} parent=311 // pred_check_branch
          %2617 = sbr.rel (%p2615) target = $region340
        $region339: #{backbone_with_afpn_forward.1} parent=311 // pred_region
          %2618 = dma.done [#allocation11], 64
        $region340: #{backbone_with_afpn_forward.1} parent=311 // pred_fallthru
          _
        // Predicated region
        $region341: #{backbone_with_afpn_forward.1} parent=311 // pred_check
          %p2619 = pneg %p488
        $region342: #{backbone_with_afpn_forward.1} parent=311 // pred_check_branch
          %2621 = sbr.rel (%p2619) target = $region344
        $region343: #{backbone_with_afpn_forward.1} parent=311 // pred_region
          %2622 = dma.done [#allocation14], 16
        $region344: #{backbone_with_afpn_forward.1} parent=311 // pred_fallthru
          _
        // Predicated region
        $region345: #{backbone_with_afpn_forward.1} parent=311 // pred_check
          %p2623 = pneg %p509
        $region346: #{backbone_with_afpn_forward.1} parent=311 // pred_check_branch
          %2625 = sbr.rel (%p2623) target = $region348
        $region347: #{backbone_with_afpn_forward.1} parent=311 // pred_region
          %2626 = dma.done [#allocation14], 16
        $region348: #{backbone_with_afpn_forward.1} parent=311 // pred_fallthru
          _
        // Predicated region
        $region349: #{backbone_with_afpn_forward.1} parent=311 // pred_check
          %p2627 = pneg %p551
        $region350: #{backbone_with_afpn_forward.1} parent=311 // pred_check_branch
          %2629 = sbr.rel (%p2627) target = $region352
        $region351: #{backbone_with_afpn_forward.1} parent=311 // pred_region
          %2630 = dma.done [#allocation17], 256
        $region352: #{backbone_with_afpn_forward.1} parent=311 // pred_fallthru
          _
        // Predicated region
        $region353: #{backbone_with_afpn_forward.1} parent=311 // pred_check
          %p2631 = pneg %p593
        $region354: #{backbone_with_afpn_forward.1} parent=311 // pred_check_branch
          %2633 = sbr.rel (%p2631) target = $region356
        $region355: #{backbone_with_afpn_forward.1} parent=311 // pred_region
          %2634 = dma.done [#allocation17], 64
        $region356: #{backbone_with_afpn_forward.1} parent=311 // pred_fallthru
          _
        // Predicated region
        $region357: #{backbone_with_afpn_forward.1} parent=311 // pred_check
          %p2635 = pneg %p614
        $region358: #{backbone_with_afpn_forward.1} parent=311 // pred_check_branch
          %2637 = sbr.rel (%p2635) target = $region360
        $region359: #{backbone_with_afpn_forward.1} parent=311 // pred_region
          %2638 = dma.done [#allocation20], 16
        $region360: #{backbone_with_afpn_forward.1} parent=311 // pred_fallthru
          _
        // Predicated region
        $region361: #{backbone_with_afpn_forward.1} parent=311 // pred_check
          %p2639 = pneg %p635
        $region362: #{backbone_with_afpn_forward.1} parent=311 // pred_check_branch
          %2641 = sbr.rel (%p2639) target = $region364
        $region363: #{backbone_with_afpn_forward.1} parent=311 // pred_region
          %2642 = dma.done [#allocation20], 768
        $region364: #{backbone_with_afpn_forward.1} parent=311 // pred_fallthru
          _
        // Predicated region
        $region365: #{backbone_with_afpn_forward.1} parent=311 // pred_check
          %p2643 = pneg %p656
        $region366: #{backbone_with_afpn_forward.1} parent=311 // pred_check_branch
          %2645 = sbr.rel (%p2643) target = $region368
        $region367: #{backbone_with_afpn_forward.1} parent=311 // pred_region
          %2646 = dma.done [#allocation23], 768
        $region368: #{backbone_with_afpn_forward.1} parent=311 // pred_fallthru
          _
        // Predicated region
        $region369: #{backbone_with_afpn_forward.1} parent=311 // pred_check
          %p2647 = pneg %p677
        $region370: #{backbone_with_afpn_forward.1} parent=311 // pred_check_branch
          %2649 = sbr.rel (%p2647) target = $region372
        $region371: #{backbone_with_afpn_forward.1} parent=311 // pred_region
          %2650 = dma.done [#allocation23], 768
        $region372: #{backbone_with_afpn_forward.1} parent=311 // pred_fallthru
          _
        // Predicated region
        $region373: #{backbone_with_afpn_forward.1} parent=311 // pred_check
          %p2651 = pneg %p698
        $region374: #{backbone_with_afpn_forward.1} parent=311 // pred_check_branch
          %2653 = sbr.rel (%p2651) target = $region376
        $region375: #{backbone_with_afpn_forward.1} parent=311 // pred_region
          %2654 = dma.done [#allocation26], 256
        $region376: #{backbone_with_afpn_forward.1} parent=311 // pred_fallthru
          _
        // Predicated region
        $region377: #{backbone_with_afpn_forward.1} parent=311 // pred_check
          %p2655 = pneg %p719
        $region378: #{backbone_with_afpn_forward.1} parent=311 // pred_check_branch
          %2657 = sbr.rel (%p2655) target = $region380
        $region379: #{backbone_with_afpn_forward.1} parent=311 // pred_region
          %2658 = dma.done [#allocation26], 256
        $region380: #{backbone_with_afpn_forward.1} parent=311 // pred_fallthru
          _
        // Predicated region
        $region381: #{backbone_with_afpn_forward.1} parent=311 // pred_check
          %p2659 = pneg %p740
        $region382: #{backbone_with_afpn_forward.1} parent=311 // pred_check_branch
          %2661 = sbr.rel (%p2659) target = $region384
        $region383: #{backbone_with_afpn_forward.1} parent=311 // pred_region
          %2662 = dma.done [#allocation29], 256
        $region384: #{backbone_with_afpn_forward.1} parent=311 // pred_fallthru
          _
        // Predicated region
        $region385: #{backbone_with_afpn_forward.1} parent=311 // pred_check
          %p2663 = pneg %p761
        $region386: #{backbone_with_afpn_forward.1} parent=311 // pred_check_branch
          %2665 = sbr.rel (%p2663) target = $region388
        $region387: #{backbone_with_afpn_forward.1} parent=311 // pred_region
          %2666 = dma.done [#allocation29], 16
        $region388: #{backbone_with_afpn_forward.1} parent=311 // pred_fallthru
          _
        // Predicated region
        $region389: #{backbone_with_afpn_forward.1} parent=311 // pred_check
          %p2667 = pneg %p824
        $region390: #{backbone_with_afpn_forward.1} parent=311 // pred_check_branch
          %2669 = sbr.rel (%p2667) target = $region392
        $region391: #{backbone_with_afpn_forward.1} parent=311 // pred_region
          %2670 = dma.done [#allocation32], 2048
        $region392: #{backbone_with_afpn_forward.1} parent=311 // pred_fallthru
          _
        // Predicated region
        $region393: #{backbone_with_afpn_forward.1} parent=311 // pred_check
          %p2671 = pneg %p845
        $region394: #{backbone_with_afpn_forward.1} parent=311 // pred_check_branch
          %2673 = sbr.rel (%p2671) target = $region396
        $region395: #{backbone_with_afpn_forward.1} parent=311 // pred_region
          %2674 = dma.done [#allocation32], 128
        $region396: #{backbone_with_afpn_forward.1} parent=311 // pred_fallthru
          _
        // Predicated region
        $region397: #{backbone_with_afpn_forward.1} parent=311 // pred_check
          %p2675 = pneg %p866
        $region398: #{backbone_with_afpn_forward.1} parent=311 // pred_check_branch
          %2677 = sbr.rel (%p2675) target = $region400
        $region399: #{backbone_with_afpn_forward.1} parent=311 // pred_region
          %2678 = dma.done [#allocation35], 128
        $region400: #{backbone_with_afpn_forward.1} parent=311 // pred_fallthru
          _
        // Predicated region
        $region401: #{backbone_with_afpn_forward.1} parent=311 // pred_check
          %p2679 = pneg %p887
        $region402: #{backbone_with_afpn_forward.1} parent=311 // pred_check_branch
          %2681 = sbr.rel (%p2679) target = $region404
        $region403: #{backbone_with_afpn_forward.1} parent=311 // pred_region
          %2682 = dma.done [#allocation35], 128
        $region404: #{backbone_with_afpn_forward.1} parent=311 // pred_fallthru
          _
        // Predicated region
        $region405: #{backbone_with_afpn_forward.1} parent=311 // pred_check
          %p2683 = pneg %p908
        $region406: #{backbone_with_afpn_forward.1} parent=311 // pred_check_branch
          %2685 = sbr.rel (%p2683) target = $region408
        $region407: #{backbone_with_afpn_forward.1} parent=311 // pred_region
          %2686 = dma.done [#allocation38], 16
        $region408: #{backbone_with_afpn_forward.1} parent=311 // pred_fallthru
          _
        // Predicated region
        $region409: #{backbone_with_afpn_forward.1} parent=311 // pred_check
          %p2687 = pneg %p929
        $region410: #{backbone_with_afpn_forward.1} parent=311 // pred_check_branch
          %2689 = sbr.rel (%p2687) target = $region412
        $region411: #{backbone_with_afpn_forward.1} parent=311 // pred_region
          %2690 = dma.done [#allocation38], 2048
        $region412: #{backbone_with_afpn_forward.1} parent=311 // pred_fallthru
          _
        // Predicated region
        $region413: #{backbone_with_afpn_forward.1} parent=311 // pred_check
          %p2691 = pneg %p950
        $region414: #{backbone_with_afpn_forward.1} parent=311 // pred_check_branch
          %2693 = sbr.rel (%p2691) target = $region416
        $region415: #{backbone_with_afpn_forward.1} parent=311 // pred_region
          %2694 = dma.done [#allocation41], 2048
        $region416: #{backbone_with_afpn_forward.1} parent=311 // pred_fallthru
          _
        // Predicated region
        $region417: #{backbone_with_afpn_forward.1} parent=311 // pred_check
          %p2695 = pneg %p971
        $region418: #{backbone_with_afpn_forward.1} parent=311 // pred_check_branch
          %2697 = sbr.rel (%p2695) target = $region420
        $region419: #{backbone_with_afpn_forward.1} parent=311 // pred_region
          %2698 = dma.done [#allocation41], 2048
        $region420: #{backbone_with_afpn_forward.1} parent=311 // pred_fallthru
          _
        // Predicated region
        $region421: #{backbone_with_afpn_forward.1} parent=311 // pred_check
          %p2699 = pneg %p992
        $region422: #{backbone_with_afpn_forward.1} parent=311 // pred_check_branch
          %2701 = sbr.rel (%p2699) target = $region424
        $region423: #{backbone_with_afpn_forward.1} parent=311 // pred_region
          %2702 = dma.done [#allocation44], 64
        $region424: #{backbone_with_afpn_forward.1} parent=311 // pred_fallthru
          _
        // Predicated region
        $region425: #{backbone_with_afpn_forward.1} parent=311 // pred_check
          %p2703 = pneg %p1013
        $region426: #{backbone_with_afpn_forward.1} parent=311 // pred_check_branch
          %2705 = sbr.rel (%p2703) target = $region428
        $region427: #{backbone_with_afpn_forward.1} parent=311 // pred_region
          %2706 = dma.done [#allocation44], 64
        $region428: #{backbone_with_afpn_forward.1} parent=311 // pred_fallthru
          _
        // Predicated region
        $region429: #{backbone_with_afpn_forward.1} parent=311 // pred_check
          %p2707 = pneg %p1034
        $region430: #{backbone_with_afpn_forward.1} parent=311 // pred_check_branch
          %2709 = sbr.rel (%p2707) target = $region432
        $region431: #{backbone_with_afpn_forward.1} parent=311 // pred_region
          %2710 = dma.done [#allocation47], 64
        $region432: #{backbone_with_afpn_forward.1} parent=311 // pred_fallthru
          _
        // Predicated region
        $region433: #{backbone_with_afpn_forward.1} parent=311 // pred_check
          %p2711 = pneg %p1055
        $region434: #{backbone_with_afpn_forward.1} parent=311 // pred_check_branch
          %2713 = sbr.rel (%p2711) target = $region436
        $region435: #{backbone_with_afpn_forward.1} parent=311 // pred_region
          %2714 = dma.done [#allocation47], 32
        $region436: #{backbone_with_afpn_forward.1} parent=311 // pred_fallthru
          _
        // Predicated region
        $region437: #{backbone_with_afpn_forward.1} parent=311 // pred_check
          %p2715 = pneg %p1076
        $region438: #{backbone_with_afpn_forward.1} parent=311 // pred_check_branch
          %2717 = sbr.rel (%p2715) target = $region440
        $region439: #{backbone_with_afpn_forward.1} parent=311 // pred_region
          %2718 = dma.done [#allocation50], 4096
        $region440: #{backbone_with_afpn_forward.1} parent=311 // pred_fallthru
          _
        // Predicated region
        $region441: #{backbone_with_afpn_forward.1} parent=311 // pred_check
          %p2719 = pneg %p1097
        $region442: #{backbone_with_afpn_forward.1} parent=311 // pred_check_branch
          %2721 = sbr.rel (%p2719) target = $region444
        $region443: #{backbone_with_afpn_forward.1} parent=311 // pred_region
          %2722 = dma.done [#allocation50], 16
        $region444: #{backbone_with_afpn_forward.1} parent=311 // pred_fallthru
          _
        // Predicated region
        $region445: #{backbone_with_afpn_forward.1} parent=311 // pred_check
          %p2723 = pneg %p1118
        $region446: #{backbone_with_afpn_forward.1} parent=311 // pred_check_branch
          %2725 = sbr.rel (%p2723) target = $region448
        $region447: #{backbone_with_afpn_forward.1} parent=311 // pred_region
          %2726 = dma.done [#allocation53], 2048
        $region448: #{backbone_with_afpn_forward.1} parent=311 // pred_fallthru
          _
        // Predicated region
        $region449: #{backbone_with_afpn_forward.1} parent=311 // pred_check
          %p2727 = pneg %p1139
        $region450: #{backbone_with_afpn_forward.1} parent=311 // pred_check_branch
          %2729 = sbr.rel (%p2727) target = $region452
        $region451: #{backbone_with_afpn_forward.1} parent=311 // pred_region
          %2730 = dma.done [#allocation53], 16
        $region452: #{backbone_with_afpn_forward.1} parent=311 // pred_fallthru
          _
        // Predicated region
        $region453: #{backbone_with_afpn_forward.1} parent=311 // pred_check
          %p2731 = pneg %p1181
        $region454: #{backbone_with_afpn_forward.1} parent=311 // pred_check_branch
          %2733 = sbr.rel (%p2731) target = $region456
        $region455: #{backbone_with_afpn_forward.1} parent=311 // pred_region
          %2734 = dma.done [#allocation56], 32
        $region456: #{backbone_with_afpn_forward.1} parent=311 // pred_fallthru
          _
        // Predicated region
        $region457: #{backbone_with_afpn_forward.1} parent=311 // pred_check
          %p2735 = pneg %p1244
        $region458: #{backbone_with_afpn_forward.1} parent=311 // pred_check_branch
          %2737 = sbr.rel (%p2735) target = $region460
        $region459: #{backbone_with_afpn_forward.1} parent=311 // pred_region
          %2738 = dma.done [#allocation56], 8192
        $region460: #{backbone_with_afpn_forward.1} parent=311 // pred_fallthru
          _
        // Predicated region
        $region461: #{backbone_with_afpn_forward.1} parent=311 // pred_check
          %p2739 = pneg %p1265
        $region462: #{backbone_with_afpn_forward.1} parent=311 // pred_check_branch
          %2741 = sbr.rel (%p2739) target = $region464
        $region463: #{backbone_with_afpn_forward.1} parent=311 // pred_region
          %2742 = dma.done [#allocation59], 256
        $region464: #{backbone_with_afpn_forward.1} parent=311 // pred_fallthru
          _
        // Predicated region
        $region465: #{backbone_with_afpn_forward.1} parent=311 // pred_check
          %p2743 = pneg %p1286
        $region466: #{backbone_with_afpn_forward.1} parent=311 // pred_check_branch
          %2745 = sbr.rel (%p2743) target = $region468
        $region467: #{backbone_with_afpn_forward.1} parent=311 // pred_region
          %2746 = dma.done [#allocation59], 256
        $region468: #{backbone_with_afpn_forward.1} parent=311 // pred_fallthru
          _
        // Predicated region
        $region469: #{backbone_with_afpn_forward.1} parent=311 // pred_check
          %p2747 = pneg %p1307
        $region470: #{backbone_with_afpn_forward.1} parent=311 // pred_check_branch
          %2749 = sbr.rel (%p2747) target = $region472
        $region471: #{backbone_with_afpn_forward.1} parent=311 // pred_region
          %2750 = dma.done [#allocation62], 256
        $region472: #{backbone_with_afpn_forward.1} parent=311 // pred_fallthru
          _
        // Predicated region
        $region473: #{backbone_with_afpn_forward.1} parent=311 // pred_check
          %p2751 = pneg %p1328
        $region474: #{backbone_with_afpn_forward.1} parent=311 // pred_check_branch
          %2753 = sbr.rel (%p2751) target = $region476
        $region475: #{backbone_with_afpn_forward.1} parent=311 // pred_region
          %2754 = dma.done [#allocation62], 16
        $region476: #{backbone_with_afpn_forward.1} parent=311 // pred_fallthru
          _
        // Predicated region
        $region477: #{backbone_with_afpn_forward.1} parent=311 // pred_check
          %p2755 = pneg %p1349
        $region478: #{backbone_with_afpn_forward.1} parent=311 // pred_check_branch
          %2757 = sbr.rel (%p2755) target = $region480
        $region479: #{backbone_with_afpn_forward.1} parent=311 // pred_region
          %2758 = dma.done [#allocation65], 2048
        $region480: #{backbone_with_afpn_forward.1} parent=311 // pred_fallthru
          _
        // Predicated region
        $region481: #{backbone_with_afpn_forward.1} parent=311 // pred_check
          %p2759 = pneg %p1370
        $region482: #{backbone_with_afpn_forward.1} parent=311 // pred_check_branch
          %2761 = sbr.rel (%p2759) target = $region484
        $region483: #{backbone_with_afpn_forward.1} parent=311 // pred_region
          %2762 = dma.done [#allocation65], 2048
        $region484: #{backbone_with_afpn_forward.1} parent=311 // pred_fallthru
          _
        // Predicated region
        $region485: #{backbone_with_afpn_forward.1} parent=311 // pred_check
          %p2763 = pneg %p1391
        $region486: #{backbone_with_afpn_forward.1} parent=311 // pred_check_branch
          %2765 = sbr.rel (%p2763) target = $region488
        $region487: #{backbone_with_afpn_forward.1} parent=311 // pred_region
          %2766 = dma.done [#allocation68], 2048
        $region488: #{backbone_with_afpn_forward.1} parent=311 // pred_fallthru
          _
        // Predicated region
        $region489: #{backbone_with_afpn_forward.1} parent=311 // pred_check
          %p2767 = pneg %p1412
        $region490: #{backbone_with_afpn_forward.1} parent=311 // pred_check_branch
          %2769 = sbr.rel (%p2767) target = $region492
        $region491: #{backbone_with_afpn_forward.1} parent=311 // pred_region
          %2770 = dma.done [#allocation68], 128
        $region492: #{backbone_with_afpn_forward.1} parent=311 // pred_fallthru
          _
        // Predicated region
        $region493: #{backbone_with_afpn_forward.1} parent=311 // pred_check
          %p2771 = pneg %p1433
        $region494: #{backbone_with_afpn_forward.1} parent=311 // pred_check_branch
          %2773 = sbr.rel (%p2771) target = $region496
        $region495: #{backbone_with_afpn_forward.1} parent=311 // pred_region
          %2774 = dma.done [#allocation71], 128
        $region496: #{backbone_with_afpn_forward.1} parent=311 // pred_fallthru
          _
        // Predicated region
        $region497: #{backbone_with_afpn_forward.1} parent=311 // pred_check
          %p2775 = pneg %p1454
        $region498: #{backbone_with_afpn_forward.1} parent=311 // pred_check_branch
          %2777 = sbr.rel (%p2775) target = $region500
        $region499: #{backbone_with_afpn_forward.1} parent=311 // pred_region
          %2778 = dma.done [#allocation71], 128
        $region500: #{backbone_with_afpn_forward.1} parent=311 // pred_fallthru
          _
        // Predicated region
        $region501: #{backbone_with_afpn_forward.1} parent=311 // pred_check
          %p2779 = pneg %p1475
        $region502: #{backbone_with_afpn_forward.1} parent=311 // pred_check_branch
          %2781 = sbr.rel (%p2779) target = $region504
        $region503: #{backbone_with_afpn_forward.1} parent=311 // pred_region
          %2782 = dma.done [#allocation74], 16
        $region504: #{backbone_with_afpn_forward.1} parent=311 // pred_fallthru
          _
        // Predicated region
        $region505: #{backbone_with_afpn_forward.1} parent=311 // pred_check
          %p2783 = pneg %p1496
        $region506: #{backbone_with_afpn_forward.1} parent=311 // pred_check_branch
          %2785 = sbr.rel (%p2783) target = $region508
        $region507: #{backbone_with_afpn_forward.1} parent=311 // pred_region
          %2786 = dma.done [#allocation74], 1024
        $region508: #{backbone_with_afpn_forward.1} parent=311 // pred_fallthru
          _
        // Predicated region
        $region509: #{backbone_with_afpn_forward.1} parent=311 // pred_check
          %p2787 = pneg %p1517
        $region510: #{backbone_with_afpn_forward.1} parent=311 // pred_check_branch
          %2789 = sbr.rel (%p2787) target = $region512
        $region511: #{backbone_with_afpn_forward.1} parent=311 // pred_region
          %2790 = dma.done [#allocation77], 1024
        $region512: #{backbone_with_afpn_forward.1} parent=311 // pred_fallthru
          _
        // Predicated region
        $region513: #{backbone_with_afpn_forward.1} parent=311 // pred_check
          %p2791 = pneg %p1538
        $region514: #{backbone_with_afpn_forward.1} parent=311 // pred_check_branch
          %2793 = sbr.rel (%p2791) target = $region516
        $region515: #{backbone_with_afpn_forward.1} parent=311 // pred_region
          %2794 = dma.done [#allocation77], 1024
        $region516: #{backbone_with_afpn_forward.1} parent=311 // pred_fallthru
          _
        // Predicated region
        $region517: #{backbone_with_afpn_forward.1} parent=311 // pred_check
          %p2795 = pneg %p1559
        $region518: #{backbone_with_afpn_forward.1} parent=311 // pred_check_branch
          %2797 = sbr.rel (%p2795) target = $region520
        $region519: #{backbone_with_afpn_forward.1} parent=311 // pred_region
          %2798 = dma.done [#allocation80], 64
        $region520: #{backbone_with_afpn_forward.1} parent=311 // pred_fallthru
          _
        // Predicated region
        $region521: #{backbone_with_afpn_forward.1} parent=311 // pred_check
          %p2799 = pneg %p1580
        $region522: #{backbone_with_afpn_forward.1} parent=311 // pred_check_branch
          %2801 = sbr.rel (%p2799) target = $region524
        $region523: #{backbone_with_afpn_forward.1} parent=311 // pred_region
          %2802 = dma.done [#allocation80], 64
        $region524: #{backbone_with_afpn_forward.1} parent=311 // pred_fallthru
          _
        // Predicated region
        $region525: #{backbone_with_afpn_forward.1} parent=311 // pred_check
          %p2803 = pneg %p1601
        $region526: #{backbone_with_afpn_forward.1} parent=311 // pred_check_branch
          %2805 = sbr.rel (%p2803) target = $region528
        $region527: #{backbone_with_afpn_forward.1} parent=311 // pred_region
          %2806 = dma.done [#allocation83], 64
        $region528: #{backbone_with_afpn_forward.1} parent=311 // pred_fallthru
          _
        // Predicated region
        $region529: #{backbone_with_afpn_forward.1} parent=311 // pred_check
          %p2807 = pneg %p1622
        $region530: #{backbone_with_afpn_forward.1} parent=311 // pred_check_branch
          %2809 = sbr.rel (%p2807) target = $region532
        $region531: #{backbone_with_afpn_forward.1} parent=311 // pred_region
          %2810 = dma.done [#allocation83], 32
        $region532: #{backbone_with_afpn_forward.1} parent=311 // pred_fallthru
          _
        // Predicated region
        $region533: #{backbone_with_afpn_forward.1} parent=311 // pred_check
          %p2811 = pneg %p1685
        $region534: #{backbone_with_afpn_forward.1} parent=311 // pred_check_branch
          %2813 = sbr.rel (%p2811) target = $region536
        $region535: #{backbone_with_afpn_forward.1} parent=311 // pred_region
          %2814 = dma.done [#allocation86], 1024
        $region536: #{backbone_with_afpn_forward.1} parent=311 // pred_fallthru
          _
        // Predicated region
        $region537: #{backbone_with_afpn_forward.1} parent=311 // pred_check
          %p2815 = pneg %p1727
        $region538: #{backbone_with_afpn_forward.1} parent=311 // pred_check_branch
          %2817 = sbr.rel (%p2815) target = $region540
        $region539: #{backbone_with_afpn_forward.1} parent=311 // pred_region
          %2818 = dma.done [#allocation86], 4096
        $region540: #{backbone_with_afpn_forward.1} parent=311 // pred_fallthru
          _
        %p2819 = scmp.lt.s32.totalorder %s194, 1
        %s2820 = scalar_select %p2819, %s194, 1
        %s2821 = smul.addr %s2820, 2
        %s2822 = smul.addr %s2821, 8
        %s2823 = scalar_lea.vmem %s1, %s2822
        %p2824 = pneg %p215
        %p2825 = pneg %p212
        %p2826 = pneg %p236
        %p2827 = pneg %p233
        %p2828 = pneg %p257
        %p2829 = pneg %p254
        %p2830 = pneg %p278
        %p2831 = pneg %p275
        %p2832 = pneg %p299
        %p2833 = pneg %p296
        %p2834 = pneg %p320
        %p2835 = pneg %p317
        %p2836 = pneg %p341
        %p2837 = pneg %p338
        %p2838 = pneg %p362
        %p2839 = pneg %p359
        %p2840 = pneg %p383
        %p2841 = pneg %p380
        %p2842 = pneg %p404
        %p2843 = pneg %p401
        %p2844 = pneg %p425
        %p2845 = pneg %p422
        %p2846 = pneg %p446
        %p2847 = pneg %p443
        %p2848 = pneg %p467
        %p2849 = pneg %p464
        %p2850 = pneg %p488
        %p2851 = pneg %p485
        %p2852 = pneg %p509
        %p2853 = pneg %p506
        %p2854 = pneg %p530
        %p2855 = pneg %p527
        %p2856 = pneg %p551
        %p2857 = pneg %p548
        %p2858 = pneg %p572
        %p2859 = pneg %p569
        %p2860 = pneg %p593
        %p2861 = pneg %p590
        %p2862 = pneg %p614
        %p2863 = pneg %p611
        %p2864 = pneg %p635
        %p2865 = pneg %p632
        %p2866 = pneg %p656
        %p2867 = pneg %p653
        %p2868 = pneg %p677
        %p2869 = pneg %p674
        %p2870 = pneg %p698
        %p2871 = pneg %p695
        %p2872 = pneg %p719
        %p2873 = pneg %p716
        %p2874 = pneg %p740
        %p2875 = pneg %p737
        %p2876 = pneg %p761
        %p2877 = pneg %p758
        %p2878 = pneg %p782
        %p2879 = pneg %p779
        %p2880 = pneg %p803
        %p2881 = pneg %p800
        %p2882 = pneg %p824
        %p2883 = pneg %p821
        %p2884 = pneg %p845
        %p2885 = pneg %p842
        %p2886 = pneg %p866
        %p2887 = pneg %p863
        %p2888 = pneg %p887
        %p2889 = pneg %p884
        %p2890 = pneg %p908
        %p2891 = pneg %p905
        %p2892 = pneg %p929
        %p2893 = pneg %p926
        %p2894 = pneg %p950
        %p2895 = pneg %p947
        %p2896 = pneg %p971
        %p2897 = pneg %p968
        %p2898 = pneg %p992
        %p2899 = pneg %p989
        %p2900 = pneg %p1013
        %p2901 = pneg %p1010
        %p2902 = pneg %p1034
        %p2903 = pneg %p1031
        %p2904 = pneg %p1055
        %p2905 = pneg %p1052
        %p2906 = pneg %p1076
        %p2907 = pneg %p1073
        %p2908 = pneg %p1097
        %p2909 = pneg %p1094
        %p2910 = pneg %p1118
        %p2911 = pneg %p1115
        %p2912 = pneg %p1139
        %p2913 = pneg %p1136
        %p2914 = pneg %p1160
        %p2915 = pneg %p1157
        %p2916 = pneg %p1181
        %p2917 = pneg %p1178
        %p2918 = pneg %p1202
        %p2919 = pneg %p1199
        %p2920 = pneg %p1223
        %p2921 = pneg %p1220
        %p2922 = pneg %p1244
        %p2923 = pneg %p1241
        %p2924 = pneg %p1265
        %p2925 = pneg %p1262
        %p2926 = pneg %p1286
        %p2927 = pneg %p1283
        %p2928 = pneg %p1307
        %p2929 = pneg %p1304
        %p2930 = pneg %p1328
        %p2931 = pneg %p1325
        %p2932 = pneg %p1349
        %p2933 = pneg %p1346
        %p2934 = pneg %p1370
        %p2935 = pneg %p1367
        %p2936 = pneg %p1391
        %p2937 = pneg %p1388
        %p2938 = pneg %p1412
        %p2939 = pneg %p1409
        %p2940 = pneg %p1433
        %p2941 = pneg %p1430
        %p2942 = pneg %p1454
        %p2943 = pneg %p1451
        %p2944 = pneg %p1475
        %p2945 = pneg %p1472
        %p2946 = pneg %p1496
        %p2947 = pneg %p1493
        %p2948 = pneg %p1517
        %p2949 = pneg %p1514
        %p2950 = pneg %p1538
        %p2951 = pneg %p1535
        %p2952 = pneg %p1559
        %p2953 = pneg %p1556
        %p2954 = pneg %p1580
        %p2955 = pneg %p1577
        %p2956 = pneg %p1601
        %p2957 = pneg %p1598
        %p2958 = pneg %p1622
        %p2959 = pneg %p1619
        %p2960 = pneg %p1643
        %p2961 = pneg %p1640
        %p2962 = pneg %p1664
        %p2963 = pneg %p1661
        %p2964 = pneg %p1685
        %p2965 = pneg %p1682
        %p2966 = pneg %p1706
        %p2967 = pneg %p1703
        %p2968 = pneg %p1727
        %p2969 = pneg %p1724
        %p2970 = pneg %p1753
        %p2971 = pneg %p1750
        %p2972 = scmp.lt.s32.totalorder %s194, 1
        %s2973 = scalar_select %p2972, %s194, 1
        %s2974 = smul.addr %s2973, 4
        %s2975 = smul.addr %s2974, 8
        %s2976 = scalar_lea.vmem %s147, %s2975
        %p2977 = pneg %p1779
        %p2978 = pneg %p1776
        %p2979 = scmp.lt.s32.totalorder %s194, 1
        %s2980 = scalar_select %p2979, %s194, 1
        %s2981 = smul.addr %s2980, 8
        %s2982 = scalar_lea.vmem %s149, %s2981
        %p2983 = pneg %p1805
        %p2984 = pneg %p1802
        %p2985 = scmp.lt.s32.totalorder %s194, 1
        %s2986 = scalar_select %p2985, %s194, 1
        %s2987 = smul.addr %s2986, 4
        %s2988 = scalar_lea.vmem %s151, %s2987
        %p2989 = pneg %p1831
        %p2990 = pneg %p1828
        %p2991 = scmp.lt.s32.totalorder %s194, 1
        %s2992 = scalar_select %p2991, %s194, 1
        %s2993 = smul.addr %s2992, 2
        %s2994 = scalar_lea.vmem %s153, %s2993
        %p2995 = scmp.lt.s32.totalorder %s194, 1
        %s2996 = scalar_select %p2995, %s194, 1
        %s2997 = smul.addr %s2996, 2
        %s2998 = smul.addr %s2997, 8
        %s2999 = scalar_lea.vmem %s1, %s2998
        %p3000 = scmp.lt.s32.totalorder %s194, 1
        %s3001 = scalar_select %p3000, %s194, 1
        %s3002 = smul.addr %s3001, 4
        %s3003 = smul.addr %s3002, 8
        %s3004 = scalar_lea.vmem %s147, %s3003
        %p3005 = scmp.lt.s32.totalorder %s194, 1
        %s3006 = scalar_select %p3005, %s194, 1
        %s3007 = smul.addr %s3006, 8
        %s3008 = scalar_lea.vmem %s149, %s3007
        %p3009 = scmp.lt.s32.totalorder %s194, 1
        %s3010 = scalar_select %p3009, %s194, 1
        %s3011 = smul.addr %s3010, 4
        %s3012 = scalar_lea.vmem %s151, %s3011
        %p3013 = scmp.lt.s32.totalorder %s194, 1
        %s3014 = scalar_select %p3013, %s194, 1
        %s3015 = smul.addr %s3014, 2
        %s3016 = scalar_lea.vmem %s153, %s3015
        %v3017 = vld [vmem:[%s3] sm:$0x1]
        %v3018 = vld [vmem:[#allocation2] sm:$0x1]
        %v3019 = vld [vmem:[%s7] sm:$0xff]
        %v3020 = vld [vmem:[%s7 + $0x8] sm:$0xff]
        %v3021 = vld [vmem:[%s7 + $0x10] sm:$0xff]
        %v3022 = vld [vmem:[%s7 + $0x18] sm:$0xff]
        %v3023 = vld [vmem:[%s7 + $0x20] sm:$0xff]
        %v3024 = vld [vmem:[%s7 + $0x28] sm:$0xff]
        %v3025 = vld [vmem:[%s7 + $0x30] sm:$0xff]
        %v3026 = vld [vmem:[%s7 + $0x38] sm:$0xff]
        %v3027 = vld [vmem:[%s7 + $0x40] sm:$0xff]
        %v3028 = vld [vmem:[%s7 + $0x48] sm:$0xff]
        %v3029 = vld [vmem:[%s7 + $0x50] sm:$0xff]
        %v3030 = vld [vmem:[%s7 + $0x58] sm:$0xff]
        %v3031 = vld [vmem:[%s7 + $0x60] sm:$0xff]
        %v3032 = vld [vmem:[%s7 + $0x68] sm:$0xff]
        %v3033 = vld [vmem:[%s7 + $0x70] sm:$0xff]
        %v3034 = vld [vmem:[%s7 + $0x78] sm:$0xff]
        %v3035 = vld [vmem:[%s7 + $0x80] sm:$0xff]
        %v3036 = vld [vmem:[%s7 + $0x88] sm:$0xff]
        %v3037 = vld [vmem:[%s7 + $0x90] sm:$0xff]
        %v3038 = vld [vmem:[%s7 + $0x98] sm:$0xff]
        %v3039 = vld [vmem:[%s7 + $0xa0] sm:$0xff]
        %v3040 = vld [vmem:[%s7 + $0xa8] sm:$0xff]
        %v3041 = vld [vmem:[%s7 + $0xb0] sm:$0xff]
        %v3042 = vld [vmem:[%s7 + $0xb8] sm:$0xff]
        %v3043 = vld [vmem:[%s7 + $0xc0] sm:$0xff]
        %v3044 = vld [vmem:[%s7 + $0xc8] sm:$0xff]
        %v3045 = vld [vmem:[%s7 + $0xd0] sm:$0xff]
        %v3046 = vld [vmem:[%s7 + $0xd8] sm:$0xff]
        %v3047 = vld [vmem:[%s7 + $0xe0] sm:$0xff]
        %v3048 = vld [vmem:[%s7 + $0xe8] sm:$0xff]
        %v3049 = vld [vmem:[%s7 + $0xf0] sm:$0xff]
        %v3050 = vld [vmem:[%s7 + $0xf8] sm:$0xff]
        %v3051 = vld [vmem:[#allocation4] sm:$0xff]
        %v3052 = vld [vmem:[#allocation4 + $0x8] sm:$0xff]
        %v3053 = vld [vmem:[#allocation4 + $0x10] sm:$0xff]
        %v3054 = vld [vmem:[#allocation4 + $0x18] sm:$0xff]
        %v3055 = vld [vmem:[%s11] sm:$0xff]
        %v3056 = vld [vmem:[%s11 + $0x8] sm:$0xff]
        %v3057 = vld [vmem:[#allocation6] sm:$0xf]
        %v3058 = vld [vmem:[#allocation7] sm:$0x1]
        %v3059 = vld [vmem:[#allocation9] sm:$0x1]
        %v3060 = vld [vmem:[%s19] sm:$0xff]
        %v3061 = vld [vmem:[%s19 + $0x8] sm:$0xff]
        %v3062 = vld [vmem:[%s19 + $0x10] sm:$0xff]
        %v3063 = vld [vmem:[%s19 + $0x18] sm:$0xff]
        %v3064 = vld [vmem:[%s19 + $0x20] sm:$0xff]
        %v3065 = vld [vmem:[%s19 + $0x28] sm:$0xff]
        %v3066 = vld [vmem:[%s19 + $0x30] sm:$0xff]
        %v3067 = vld [vmem:[%s19 + $0x38] sm:$0xff]
        %v3068 = vld [vmem:[%s19 + $0x40] sm:$0xff]
        %v3069 = vld [vmem:[%s19 + $0x48] sm:$0xff]
        %v3070 = vld [vmem:[%s19 + $0x50] sm:$0xff]
        %v3071 = vld [vmem:[%s19 + $0x58] sm:$0xff]
        %v3072 = vld [vmem:[%s19 + $0x60] sm:$0xff]
        %v3073 = vld [vmem:[%s19 + $0x68] sm:$0xff]
        %v3074 = vld [vmem:[%s19 + $0x70] sm:$0xff]
        %v3075 = vld [vmem:[%s19 + $0x78] sm:$0xff]
        %v3076 = vld [vmem:[#allocation10] sm:$0xff]
        %v3077 = vld [vmem:[#allocation10 + $0x8] sm:$0xff]
        %v3078 = vld [vmem:[%s23] sm:$0xff]
        %v3079 = vld [vmem:[%s23 + $0x8] sm:$0xff]
        %v3080 = vld [vmem:[#allocation12] sm:$0xf]
        %v3081 = vld [vmem:[#allocation13] sm:$0x1]
        %v3082 = vld [vmem:[#allocation15] sm:$0x1]
        %v3083 = vld [vmem:[%s31] sm:$0xff]
        %v3084 = vld [vmem:[%s31 + $0x8] sm:$0xff]
        %v3085 = vld [vmem:[%s31 + $0x10] sm:$0xff]
        %v3086 = vld [vmem:[%s31 + $0x18] sm:$0xff]
        %v3087 = vld [vmem:[%s31 + $0x20] sm:$0xff]
        %v3088 = vld [vmem:[%s31 + $0x28] sm:$0xff]
        %v3089 = vld [vmem:[%s31 + $0x30] sm:$0xff]
        %v3090 = vld [vmem:[%s31 + $0x38] sm:$0xff]
        %v3091 = vld [vmem:[#allocation16] sm:$0xff]
        %v3092 = vld [vmem:[#allocation16 + $0x8] sm:$0xff]
        %v3093 = vld [vmem:[%s35] sm:$0xff]
        %v3094 = vld [vmem:[%s35 + $0x8] sm:$0xff]
        %v3095 = vld [vmem:[#allocation18] sm:$0xf]
        %v3096 = vld [vmem:[#allocation19] sm:$0x1]
        %v3097 = vld [vmem:[#allocation21] sm:$0xff]
        %v3098 = vld [vmem:[#allocation21 + $0x8] sm:$0xff]
        %v3099 = vld [vmem:[#allocation21 + $0x10] sm:$0xff]
        %v3100 = vld [vmem:[#allocation21 + $0x18] sm:$0xff]
        %v3101 = vld [vmem:[#allocation21 + $0x20] sm:$0xff]
        %v3102 = vld [vmem:[#allocation21 + $0x28] sm:$0xff]
        %v3103 = vld [vmem:[#allocation22] sm:$0xff]
        %v3104 = vld [vmem:[#allocation22 + $0x8] sm:$0xff]
        %v3105 = vld [vmem:[#allocation22 + $0x10] sm:$0xff]
        %v3106 = vld [vmem:[#allocation22 + $0x18] sm:$0xff]
        %v3107 = vld [vmem:[#allocation22 + $0x20] sm:$0xff]
        %v3108 = vld [vmem:[#allocation22 + $0x28] sm:$0xff]
        %v3109 = vld [vmem:[#allocation24] sm:$0xff]
        %v3110 = vld [vmem:[#allocation24 + $0x8] sm:$0xff]
        %v3111 = vld [vmem:[#allocation24 + $0x10] sm:$0xff]
        %v3112 = vld [vmem:[#allocation24 + $0x18] sm:$0xff]
        %v3113 = vld [vmem:[#allocation24 + $0x20] sm:$0xff]
        %v3114 = vld [vmem:[#allocation24 + $0x28] sm:$0xff]
        %v3115 = vld [vmem:[#allocation25] sm:$0xff]
        %v3116 = vld [vmem:[#allocation25 + $0x8] sm:$0xff]
        %v3117 = vld [vmem:[#allocation27] sm:$0xff]
        %v3118 = vld [vmem:[#allocation27 + $0x8] sm:$0xff]
        %v3119 = vld [vmem:[#allocation28] sm:$0xff]
        %v3120 = vld [vmem:[#allocation28 + $0x8] sm:$0xff]
        %v3121 = vld [vmem:[#allocation30] sm:$0x1]
        %v3122 = vld [vmem:[%s55] sm:$0xff]
        %v3123 = vld [vmem:[%s55 + $0x8] sm:$0xff]
        %v3124 = vld [vmem:[%s55 + $0x10] sm:$0xff]
        %v3125 = vld [vmem:[%s55 + $0x18] sm:$0xff]
        %v3126 = vld [vmem:[%s55 + $0x20] sm:$0xff]
        %v3127 = vld [vmem:[%s55 + $0x28] sm:$0xff]
        %v3128 = vld [vmem:[%s55 + $0x30] sm:$0xff]
        %v3129 = vld [vmem:[%s55 + $0x38] sm:$0xff]
        %v3130 = vld [vmem:[%s55 + $0x40] sm:$0xff]
        %v3131 = vld [vmem:[%s55 + $0x48] sm:$0xff]
        %v3132 = vld [vmem:[%s55 + $0x50] sm:$0xff]
        %v3133 = vld [vmem:[%s55 + $0x58] sm:$0xff]
        %v3134 = vld [vmem:[%s55 + $0x60] sm:$0xff]
        %v3135 = vld [vmem:[%s55 + $0x68] sm:$0xff]
        %v3136 = vld [vmem:[%s55 + $0x70] sm:$0xff]
        %v3137 = vld [vmem:[%s55 + $0x78] sm:$0xff]
        %v3138 = vld [vmem:[%s57] sm:$0xff]
        %v3139 = vld [vmem:[%s57 + $0x8] sm:$0xff]
        %v3140 = vld [vmem:[%s57 + $0x10] sm:$0xff]
        %v3141 = vld [vmem:[%s57 + $0x18] sm:$0xff]
        %v3142 = vld [vmem:[%s57 + $0x20] sm:$0xff]
        %v3143 = vld [vmem:[%s57 + $0x28] sm:$0xff]
        %v3144 = vld [vmem:[%s57 + $0x30] sm:$0xff]
        %v3145 = vld [vmem:[%s57 + $0x38] sm:$0xff]
        %v3146 = vld [vmem:[%s57 + $0x40] sm:$0xff]
        %v3147 = vld [vmem:[%s57 + $0x48] sm:$0xff]
        %v3148 = vld [vmem:[%s57 + $0x50] sm:$0xff]
        %v3149 = vld [vmem:[%s57 + $0x58] sm:$0xff]
        %v3150 = vld [vmem:[%s57 + $0x60] sm:$0xff]
        %v3151 = vld [vmem:[%s57 + $0x68] sm:$0xff]
        %v3152 = vld [vmem:[%s57 + $0x70] sm:$0xff]
        %v3153 = vld [vmem:[%s57 + $0x78] sm:$0xff]
        %v3154 = vld [vmem:[#allocation31] sm:$0xff]
        %v3155 = vld [vmem:[#allocation31 + $0x8] sm:$0xff]
        %v3156 = vld [vmem:[#allocation31 + $0x10] sm:$0xff]
        %v3157 = vld [vmem:[#allocation31 + $0x18] sm:$0xff]
        %v3158 = vld [vmem:[#allocation31 + $0x20] sm:$0xff]
        %v3159 = vld [vmem:[#allocation31 + $0x28] sm:$0xff]
        %v3160 = vld [vmem:[#allocation31 + $0x30] sm:$0xff]
        %v3161 = vld [vmem:[#allocation31 + $0x38] sm:$0xff]
        %v3162 = vld [vmem:[#allocation31 + $0x40] sm:$0xff]
        %v3163 = vld [vmem:[#allocation31 + $0x48] sm:$0xff]
        %v3164 = vld [vmem:[#allocation31 + $0x50] sm:$0xff]
        %v3165 = vld [vmem:[#allocation31 + $0x58] sm:$0xff]
        %v3166 = vld [vmem:[#allocation31 + $0x60] sm:$0xff]
        %v3167 = vld [vmem:[#allocation31 + $0x68] sm:$0xff]
        %v3168 = vld [vmem:[#allocation31 + $0x70] sm:$0xff]
        %v3169 = vld [vmem:[#allocation31 + $0x78] sm:$0xff]
        %v3170 = vld [vmem:[#allocation33] sm:$0xff]
        %v3171 = vld [vmem:[#allocation34] sm:$0xff]
        %v3172 = vld [vmem:[#allocation36] sm:$0xff]
        %v3173 = vld [vmem:[#allocation37] sm:$0x1]
        %v3174 = vld [vmem:[#allocation39] sm:$0xff]
        %v3175 = vld [vmem:[#allocation39 + $0x8] sm:$0xff]
        %v3176 = vld [vmem:[#allocation39 + $0x10] sm:$0xff]
        %v3177 = vld [vmem:[#allocation39 + $0x18] sm:$0xff]
        %v3178 = vld [vmem:[#allocation39 + $0x20] sm:$0xff]
        %v3179 = vld [vmem:[#allocation39 + $0x28] sm:$0xff]
        %v3180 = vld [vmem:[#allocation39 + $0x30] sm:$0xff]
        %v3181 = vld [vmem:[#allocation39 + $0x38] sm:$0xff]
        %v3182 = vld [vmem:[#allocation39 + $0x40] sm:$0xff]
        %v3183 = vld [vmem:[#allocation39 + $0x48] sm:$0xff]
        %v3184 = vld [vmem:[#allocation39 + $0x50] sm:$0xff]
        %v3185 = vld [vmem:[#allocation39 + $0x58] sm:$0xff]
        %v3186 = vld [vmem:[#allocation39 + $0x60] sm:$0xff]
        %v3187 = vld [vmem:[#allocation39 + $0x68] sm:$0xff]
        %v3188 = vld [vmem:[#allocation39 + $0x70] sm:$0xff]
        %v3189 = vld [vmem:[#allocation39 + $0x78] sm:$0xff]
        %v3190 = vld [vmem:[#allocation40] sm:$0xff]
        %v3191 = vld [vmem:[#allocation40 + $0x8] sm:$0xff]
        %v3192 = vld [vmem:[#allocation40 + $0x10] sm:$0xff]
        %v3193 = vld [vmem:[#allocation40 + $0x18] sm:$0xff]
        %v3194 = vld [vmem:[#allocation40 + $0x20] sm:$0xff]
        %v3195 = vld [vmem:[#allocation40 + $0x28] sm:$0xff]
        %v3196 = vld [vmem:[#allocation40 + $0x30] sm:$0xff]
        %v3197 = vld [vmem:[#allocation40 + $0x38] sm:$0xff]
        %v3198 = vld [vmem:[#allocation40 + $0x40] sm:$0xff]
        %v3199 = vld [vmem:[#allocation40 + $0x48] sm:$0xff]
        %v3200 = vld [vmem:[#allocation40 + $0x50] sm:$0xff]
        %v3201 = vld [vmem:[#allocation40 + $0x58] sm:$0xff]
        %v3202 = vld [vmem:[#allocation40 + $0x60] sm:$0xff]
        %v3203 = vld [vmem:[#allocation40 + $0x68] sm:$0xff]
        %v3204 = vld [vmem:[#allocation40 + $0x70] sm:$0xff]
        %v3205 = vld [vmem:[#allocation40 + $0x78] sm:$0xff]
        %v3206 = vld [vmem:[#allocation42] sm:$0xff]
        %v3207 = vld [vmem:[#allocation42 + $0x8] sm:$0xff]
        %v3208 = vld [vmem:[#allocation42 + $0x10] sm:$0xff]
        %v3209 = vld [vmem:[#allocation42 + $0x18] sm:$0xff]
        %v3210 = vld [vmem:[#allocation42 + $0x20] sm:$0xff]
        %v3211 = vld [vmem:[#allocation42 + $0x28] sm:$0xff]
        %v3212 = vld [vmem:[#allocation42 + $0x30] sm:$0xff]
        %v3213 = vld [vmem:[#allocation42 + $0x38] sm:$0xff]
        %v3214 = vld [vmem:[#allocation42 + $0x40] sm:$0xff]
        %v3215 = vld [vmem:[#allocation42 + $0x48] sm:$0xff]
        %v3216 = vld [vmem:[#allocation42 + $0x50] sm:$0xff]
        %v3217 = vld [vmem:[#allocation42 + $0x58] sm:$0xff]
        %v3218 = vld [vmem:[#allocation42 + $0x60] sm:$0xff]
        %v3219 = vld [vmem:[#allocation42 + $0x68] sm:$0xff]
        %v3220 = vld [vmem:[#allocation42 + $0x70] sm:$0xff]
        %v3221 = vld [vmem:[#allocation42 + $0x78] sm:$0xff]
        %v3222 = vld [vmem:[#allocation43] sm:$0xf]
        %v3223 = vld [vmem:[#allocation45] sm:$0xf]
        %v3224 = vld [vmem:[#allocation46] sm:$0xf]
        %v3225 = vld [vmem:[#allocation48] sm:$0x3]
        %v3226 = vld [vmem:[#allocation49] sm:$0xff]
        %v3227 = vld [vmem:[#allocation49 + $0x8] sm:$0xff]
        %v3228 = vld [vmem:[#allocation49 + $0x10] sm:$0xff]
        %v3229 = vld [vmem:[#allocation49 + $0x18] sm:$0xff]
        %v3230 = vld [vmem:[#allocation49 + $0x20] sm:$0xff]
        %v3231 = vld [vmem:[#allocation49 + $0x28] sm:$0xff]
        %v3232 = vld [vmem:[#allocation49 + $0x30] sm:$0xff]
        %v3233 = vld [vmem:[#allocation49 + $0x38] sm:$0xff]
        %v3234 = vld [vmem:[#allocation49 + $0x40] sm:$0xff]
        %v3235 = vld [vmem:[#allocation49 + $0x48] sm:$0xff]
        %v3236 = vld [vmem:[#allocation49 + $0x50] sm:$0xff]
        %v3237 = vld [vmem:[#allocation49 + $0x58] sm:$0xff]
        %v3238 = vld [vmem:[#allocation49 + $0x60] sm:$0xff]
        %v3239 = vld [vmem:[#allocation49 + $0x68] sm:$0xff]
        %v3240 = vld [vmem:[#allocation49 + $0x70] sm:$0xff]
        %v3241 = vld [vmem:[#allocation49 + $0x78] sm:$0xff]
        %v3242 = vld [vmem:[#allocation49 + $0x80] sm:$0xff]
        %v3243 = vld [vmem:[#allocation49 + $0x88] sm:$0xff]
        %v3244 = vld [vmem:[#allocation49 + $0x90] sm:$0xff]
        %v3245 = vld [vmem:[#allocation49 + $0x98] sm:$0xff]
        %v3246 = vld [vmem:[#allocation49 + $0xa0] sm:$0xff]
        %v3247 = vld [vmem:[#allocation49 + $0xa8] sm:$0xff]
        %v3248 = vld [vmem:[#allocation49 + $0xb0] sm:$0xff]
        %v3249 = vld [vmem:[#allocation49 + $0xb8] sm:$0xff]
        %v3250 = vld [vmem:[#allocation49 + $0xc0] sm:$0xff]
        %v3251 = vld [vmem:[#allocation49 + $0xc8] sm:$0xff]
        %v3252 = vld [vmem:[#allocation49 + $0xd0] sm:$0xff]
        %v3253 = vld [vmem:[#allocation49 + $0xd8] sm:$0xff]
        %v3254 = vld [vmem:[#allocation49 + $0xe0] sm:$0xff]
        %v3255 = vld [vmem:[#allocation49 + $0xe8] sm:$0xff]
        %v3256 = vld [vmem:[#allocation49 + $0xf0] sm:$0xff]
        %v3257 = vld [vmem:[#allocation49 + $0xf8] sm:$0xff]
        %v3258 = vld [vmem:[#allocation51] sm:$0x1]
        %v3259 = vld [vmem:[#allocation52] sm:$0xff]
        %v3260 = vld [vmem:[#allocation52 + $0x8] sm:$0xff]
        %v3261 = vld [vmem:[#allocation52 + $0x10] sm:$0xff]
        %v3262 = vld [vmem:[#allocation52 + $0x18] sm:$0xff]
        %v3263 = vld [vmem:[#allocation52 + $0x20] sm:$0xff]
        %v3264 = vld [vmem:[#allocation52 + $0x28] sm:$0xff]
        %v3265 = vld [vmem:[#allocation52 + $0x30] sm:$0xff]
        %v3266 = vld [vmem:[#allocation52 + $0x38] sm:$0xff]
        %v3267 = vld [vmem:[#allocation52 + $0x40] sm:$0xff]
        %v3268 = vld [vmem:[#allocation52 + $0x48] sm:$0xff]
        %v3269 = vld [vmem:[#allocation52 + $0x50] sm:$0xff]
        %v3270 = vld [vmem:[#allocation52 + $0x58] sm:$0xff]
        %v3271 = vld [vmem:[#allocation52 + $0x60] sm:$0xff]
        %v3272 = vld [vmem:[#allocation52 + $0x68] sm:$0xff]
        %v3273 = vld [vmem:[#allocation52 + $0x70] sm:$0xff]
        %v3274 = vld [vmem:[#allocation52 + $0x78] sm:$0xff]
        %v3275 = vld [vmem:[#allocation54] sm:$0x1]
        %v3276 = vld [vmem:[%s91] sm:$0xff]
        %v3277 = vld [vmem:[%s91 + $0x8] sm:$0xff]
        %v3278 = vld [vmem:[%s91 + $0x10] sm:$0xff]
        %v3279 = vld [vmem:[%s91 + $0x18] sm:$0xff]
        %v3280 = vld [vmem:[%s91 + $0x20] sm:$0xff]
        %v3281 = vld [vmem:[%s91 + $0x28] sm:$0xff]
        %v3282 = vld [vmem:[%s91 + $0x30] sm:$0xff]
        %v3283 = vld [vmem:[%s91 + $0x38] sm:$0xff]
        %v3284 = vld [vmem:[%s91 + $0x40] sm:$0xff]
        %v3285 = vld [vmem:[%s91 + $0x48] sm:$0xff]
        %v3286 = vld [vmem:[%s91 + $0x50] sm:$0xff]
        %v3287 = vld [vmem:[%s91 + $0x58] sm:$0xff]
        %v3288 = vld [vmem:[%s91 + $0x60] sm:$0xff]
        %v3289 = vld [vmem:[%s91 + $0x68] sm:$0xff]
        %v3290 = vld [vmem:[%s91 + $0x70] sm:$0xff]
        %v3291 = vld [vmem:[%s91 + $0x78] sm:$0xff]
        %v3292 = vld [vmem:[#allocation55] sm:$0x3]
        %v3293 = vld [vmem:[%s95] sm:$0xff]
        %v3294 = vld [vmem:[%s95 + $0x8] sm:$0xff]
        %v3295 = vld [vmem:[%s95 + $0x10] sm:$0xff]
        %v3296 = vld [vmem:[%s95 + $0x18] sm:$0xff]
        %v3297 = vld [vmem:[%s95 + $0x20] sm:$0xff]
        %v3298 = vld [vmem:[%s95 + $0x28] sm:$0xff]
        %v3299 = vld [vmem:[%s95 + $0x30] sm:$0xff]
        %v3300 = vld [vmem:[%s95 + $0x38] sm:$0xff]
        %v3301 = vld [vmem:[%s95 + $0x40] sm:$0xff]
        %v3302 = vld [vmem:[%s95 + $0x48] sm:$0xff]
        %v3303 = vld [vmem:[%s95 + $0x50] sm:$0xff]
        %v3304 = vld [vmem:[%s95 + $0x58] sm:$0xff]
        %v3305 = vld [vmem:[%s95 + $0x60] sm:$0xff]
        %v3306 = vld [vmem:[%s95 + $0x68] sm:$0xff]
        %v3307 = vld [vmem:[%s95 + $0x70] sm:$0xff]
        %v3308 = vld [vmem:[%s95 + $0x78] sm:$0xff]
        %v3309 = vld [vmem:[%s95 + $0x80] sm:$0xff]
        %v3310 = vld [vmem:[%s95 + $0x88] sm:$0xff]
        %v3311 = vld [vmem:[%s95 + $0x90] sm:$0xff]
        %v3312 = vld [vmem:[%s95 + $0x98] sm:$0xff]
        %v3313 = vld [vmem:[%s95 + $0xa0] sm:$0xff]
        %v3314 = vld [vmem:[%s95 + $0xa8] sm:$0xff]
        %v3315 = vld [vmem:[%s95 + $0xb0] sm:$0xff]
        %v3316 = vld [vmem:[%s95 + $0xb8] sm:$0xff]
        %v3317 = vld [vmem:[%s95 + $0xc0] sm:$0xff]
        %v3318 = vld [vmem:[%s95 + $0xc8] sm:$0xff]
        %v3319 = vld [vmem:[%s95 + $0xd0] sm:$0xff]
        %v3320 = vld [vmem:[%s95 + $0xd8] sm:$0xff]
        %v3321 = vld [vmem:[%s95 + $0xe0] sm:$0xff]
        %v3322 = vld [vmem:[%s95 + $0xe8] sm:$0xff]
        %v3323 = vld [vmem:[%s95 + $0xf0] sm:$0xff]
        %v3324 = vld [vmem:[%s95 + $0xf8] sm:$0xff]
        %v3325 = vld [vmem:[%s95 + $0x100] sm:$0xff]
        %v3326 = vld [vmem:[%s95 + $0x108] sm:$0xff]
        %v3327 = vld [vmem:[%s95 + $0x110] sm:$0xff]
        %v3328 = vld [vmem:[%s95 + $0x118] sm:$0xff]
        %v3329 = vld [vmem:[%s95 + $0x120] sm:$0xff]
        %v3330 = vld [vmem:[%s95 + $0x128] sm:$0xff]
        %v3331 = vld [vmem:[%s95 + $0x130] sm:$0xff]
        %v3332 = vld [vmem:[%s95 + $0x138] sm:$0xff]
        %v3333 = vld [vmem:[%s95 + $0x140] sm:$0xff]
        %v3334 = vld [vmem:[%s95 + $0x148] sm:$0xff]
        %v3335 = vld [vmem:[%s95 + $0x150] sm:$0xff]
        %v3336 = vld [vmem:[%s95 + $0x158] sm:$0xff]
        %v3337 = vld [vmem:[%s95 + $0x160] sm:$0xff]
        %v3338 = vld [vmem:[%s95 + $0x168] sm:$0xff]
        %v3339 = vld [vmem:[%s95 + $0x170] sm:$0xff]
        %v3340 = vld [vmem:[%s95 + $0x178] sm:$0xff]
        %v3341 = vld [vmem:[%s95 + $0x180] sm:$0xff]
        %v3342 = vld [vmem:[%s95 + $0x188] sm:$0xff]
        %v3343 = vld [vmem:[%s95 + $0x190] sm:$0xff]
        %v3344 = vld [vmem:[%s95 + $0x198] sm:$0xff]
        %v3345 = vld [vmem:[%s95 + $0x1a0] sm:$0xff]
        %v3346 = vld [vmem:[%s95 + $0x1a8] sm:$0xff]
        %v3347 = vld [vmem:[%s95 + $0x1b0] sm:$0xff]
        %v3348 = vld [vmem:[%s95 + $0x1b8] sm:$0xff]
        %v3349 = vld [vmem:[%s95 + $0x1c0] sm:$0xff]
        %v3350 = vld [vmem:[%s95 + $0x1c8] sm:$0xff]
        %v3351 = vld [vmem:[%s95 + $0x1d0] sm:$0xff]
        %v3352 = vld [vmem:[%s95 + $0x1d8] sm:$0xff]
        %v3353 = vld [vmem:[%s95 + $0x1e0] sm:$0xff]
        %v3354 = vld [vmem:[%s95 + $0x1e8] sm:$0xff]
        %v3355 = vld [vmem:[%s95 + $0x1f0] sm:$0xff]
        %v3356 = vld [vmem:[%s95 + $0x1f8] sm:$0xff]
        %v3357 = vld [vmem:[%s97] sm:$0xff]
        %v3358 = vld [vmem:[%s97 + $0x8] sm:$0xff]
        %v3359 = vld [vmem:[%s97 + $0x10] sm:$0xff]
        %v3360 = vld [vmem:[%s97 + $0x18] sm:$0xff]
        %v3361 = vld [vmem:[%s97 + $0x20] sm:$0xff]
        %v3362 = vld [vmem:[%s97 + $0x28] sm:$0xff]
        %v3363 = vld [vmem:[%s97 + $0x30] sm:$0xff]
        %v3364 = vld [vmem:[%s97 + $0x38] sm:$0xff]
        %v3365 = vld [vmem:[%s97 + $0x40] sm:$0xff]
        %v3366 = vld [vmem:[%s97 + $0x48] sm:$0xff]
        %v3367 = vld [vmem:[%s97 + $0x50] sm:$0xff]
        %v3368 = vld [vmem:[%s97 + $0x58] sm:$0xff]
        %v3369 = vld [vmem:[%s97 + $0x60] sm:$0xff]
        %v3370 = vld [vmem:[%s97 + $0x68] sm:$0xff]
        %v3371 = vld [vmem:[%s97 + $0x70] sm:$0xff]
        %v3372 = vld [vmem:[%s97 + $0x78] sm:$0xff]
        %v3373 = vld [vmem:[%s97 + $0x80] sm:$0xff]
        %v3374 = vld [vmem:[%s97 + $0x88] sm:$0xff]
        %v3375 = vld [vmem:[%s97 + $0x90] sm:$0xff]
        %v3376 = vld [vmem:[%s97 + $0x98] sm:$0xff]
        %v3377 = vld [vmem:[%s97 + $0xa0] sm:$0xff]
        %v3378 = vld [vmem:[%s97 + $0xa8] sm:$0xff]
        %v3379 = vld [vmem:[%s97 + $0xb0] sm:$0xff]
        %v3380 = vld [vmem:[%s97 + $0xb8] sm:$0xff]
        %v3381 = vld [vmem:[%s97 + $0xc0] sm:$0xff]
        %v3382 = vld [vmem:[%s97 + $0xc8] sm:$0xff]
        %v3383 = vld [vmem:[%s97 + $0xd0] sm:$0xff]
        %v3384 = vld [vmem:[%s97 + $0xd8] sm:$0xff]
        %v3385 = vld [vmem:[%s97 + $0xe0] sm:$0xff]
        %v3386 = vld [vmem:[%s97 + $0xe8] sm:$0xff]
        %v3387 = vld [vmem:[%s97 + $0xf0] sm:$0xff]
        %v3388 = vld [vmem:[%s97 + $0xf8] sm:$0xff]
        %v3389 = vld [vmem:[%s97 + $0x100] sm:$0xff]
        %v3390 = vld [vmem:[%s97 + $0x108] sm:$0xff]
        %v3391 = vld [vmem:[%s97 + $0x110] sm:$0xff]
        %v3392 = vld [vmem:[%s97 + $0x118] sm:$0xff]
        %v3393 = vld [vmem:[%s97 + $0x120] sm:$0xff]
        %v3394 = vld [vmem:[%s97 + $0x128] sm:$0xff]
        %v3395 = vld [vmem:[%s97 + $0x130] sm:$0xff]
        %v3396 = vld [vmem:[%s97 + $0x138] sm:$0xff]
        %v3397 = vld [vmem:[%s97 + $0x140] sm:$0xff]
        %v3398 = vld [vmem:[%s97 + $0x148] sm:$0xff]
        %v3399 = vld [vmem:[%s97 + $0x150] sm:$0xff]
        %v3400 = vld [vmem:[%s97 + $0x158] sm:$0xff]
        %v3401 = vld [vmem:[%s97 + $0x160] sm:$0xff]
        %v3402 = vld [vmem:[%s97 + $0x168] sm:$0xff]
        %v3403 = vld [vmem:[%s97 + $0x170] sm:$0xff]
        %v3404 = vld [vmem:[%s97 + $0x178] sm:$0xff]
        %v3405 = vld [vmem:[%s97 + $0x180] sm:$0xff]
        %v3406 = vld [vmem:[%s97 + $0x188] sm:$0xff]
        %v3407 = vld [vmem:[%s97 + $0x190] sm:$0xff]
        %v3408 = vld [vmem:[%s97 + $0x198] sm:$0xff]
        %v3409 = vld [vmem:[%s97 + $0x1a0] sm:$0xff]
        %v3410 = vld [vmem:[%s97 + $0x1a8] sm:$0xff]
        %v3411 = vld [vmem:[%s97 + $0x1b0] sm:$0xff]
        %v3412 = vld [vmem:[%s97 + $0x1b8] sm:$0xff]
        %v3413 = vld [vmem:[%s97 + $0x1c0] sm:$0xff]
        %v3414 = vld [vmem:[%s97 + $0x1c8] sm:$0xff]
        %v3415 = vld [vmem:[%s97 + $0x1d0] sm:$0xff]
        %v3416 = vld [vmem:[%s97 + $0x1d8] sm:$0xff]
        %v3417 = vld [vmem:[%s97 + $0x1e0] sm:$0xff]
        %v3418 = vld [vmem:[%s97 + $0x1e8] sm:$0xff]
        %v3419 = vld [vmem:[%s97 + $0x1f0] sm:$0xff]
        %v3420 = vld [vmem:[%s97 + $0x1f8] sm:$0xff]
        %v3421 = vld [vmem:[#allocation57] sm:$0xff]
        %v3422 = vld [vmem:[#allocation57 + $0x8] sm:$0xff]
        %v3423 = vld [vmem:[#allocation57 + $0x10] sm:$0xff]
        %v3424 = vld [vmem:[#allocation57 + $0x18] sm:$0xff]
        %v3425 = vld [vmem:[#allocation57 + $0x20] sm:$0xff]
        %v3426 = vld [vmem:[#allocation57 + $0x28] sm:$0xff]
        %v3427 = vld [vmem:[#allocation57 + $0x30] sm:$0xff]
        %v3428 = vld [vmem:[#allocation57 + $0x38] sm:$0xff]
        %v3429 = vld [vmem:[#allocation57 + $0x40] sm:$0xff]
        %v3430 = vld [vmem:[#allocation57 + $0x48] sm:$0xff]
        %v3431 = vld [vmem:[#allocation57 + $0x50] sm:$0xff]
        %v3432 = vld [vmem:[#allocation57 + $0x58] sm:$0xff]
        %v3433 = vld [vmem:[#allocation57 + $0x60] sm:$0xff]
        %v3434 = vld [vmem:[#allocation57 + $0x68] sm:$0xff]
        %v3435 = vld [vmem:[#allocation57 + $0x70] sm:$0xff]
        %v3436 = vld [vmem:[#allocation57 + $0x78] sm:$0xff]
        %v3437 = vld [vmem:[#allocation57 + $0x80] sm:$0xff]
        %v3438 = vld [vmem:[#allocation57 + $0x88] sm:$0xff]
        %v3439 = vld [vmem:[#allocation57 + $0x90] sm:$0xff]
        %v3440 = vld [vmem:[#allocation57 + $0x98] sm:$0xff]
        %v3441 = vld [vmem:[#allocation57 + $0xa0] sm:$0xff]
        %v3442 = vld [vmem:[#allocation57 + $0xa8] sm:$0xff]
        %v3443 = vld [vmem:[#allocation57 + $0xb0] sm:$0xff]
        %v3444 = vld [vmem:[#allocation57 + $0xb8] sm:$0xff]
        %v3445 = vld [vmem:[#allocation57 + $0xc0] sm:$0xff]
        %v3446 = vld [vmem:[#allocation57 + $0xc8] sm:$0xff]
        %v3447 = vld [vmem:[#allocation57 + $0xd0] sm:$0xff]
        %v3448 = vld [vmem:[#allocation57 + $0xd8] sm:$0xff]
        %v3449 = vld [vmem:[#allocation57 + $0xe0] sm:$0xff]
        %v3450 = vld [vmem:[#allocation57 + $0xe8] sm:$0xff]
        %v3451 = vld [vmem:[#allocation57 + $0xf0] sm:$0xff]
        %v3452 = vld [vmem:[#allocation57 + $0xf8] sm:$0xff]
        %v3453 = vld [vmem:[#allocation57 + $0x100] sm:$0xff]
        %v3454 = vld [vmem:[#allocation57 + $0x108] sm:$0xff]
        %v3455 = vld [vmem:[#allocation57 + $0x110] sm:$0xff]
        %v3456 = vld [vmem:[#allocation57 + $0x118] sm:$0xff]
        %v3457 = vld [vmem:[#allocation57 + $0x120] sm:$0xff]
        %v3458 = vld [vmem:[#allocation57 + $0x128] sm:$0xff]
        %v3459 = vld [vmem:[#allocation57 + $0x130] sm:$0xff]
        %v3460 = vld [vmem:[#allocation57 + $0x138] sm:$0xff]
        %v3461 = vld [vmem:[#allocation57 + $0x140] sm:$0xff]
        %v3462 = vld [vmem:[#allocation57 + $0x148] sm:$0xff]
        %v3463 = vld [vmem:[#allocation57 + $0x150] sm:$0xff]
        %v3464 = vld [vmem:[#allocation57 + $0x158] sm:$0xff]
        %v3465 = vld [vmem:[#allocation57 + $0x160] sm:$0xff]
        %v3466 = vld [vmem:[#allocation57 + $0x168] sm:$0xff]
        %v3467 = vld [vmem:[#allocation57 + $0x170] sm:$0xff]
        %v3468 = vld [vmem:[#allocation57 + $0x178] sm:$0xff]
        %v3469 = vld [vmem:[#allocation57 + $0x180] sm:$0xff]
        %v3470 = vld [vmem:[#allocation57 + $0x188] sm:$0xff]
        %v3471 = vld [vmem:[#allocation57 + $0x190] sm:$0xff]
        %v3472 = vld [vmem:[#allocation57 + $0x198] sm:$0xff]
        %v3473 = vld [vmem:[#allocation57 + $0x1a0] sm:$0xff]
        %v3474 = vld [vmem:[#allocation57 + $0x1a8] sm:$0xff]
        %v3475 = vld [vmem:[#allocation57 + $0x1b0] sm:$0xff]
        %v3476 = vld [vmem:[#allocation57 + $0x1b8] sm:$0xff]
        %v3477 = vld [vmem:[#allocation57 + $0x1c0] sm:$0xff]
        %v3478 = vld [vmem:[#allocation57 + $0x1c8] sm:$0xff]
        %v3479 = vld [vmem:[#allocation57 + $0x1d0] sm:$0xff]
        %v3480 = vld [vmem:[#allocation57 + $0x1d8] sm:$0xff]
        %v3481 = vld [vmem:[#allocation57 + $0x1e0] sm:$0xff]
        %v3482 = vld [vmem:[#allocation57 + $0x1e8] sm:$0xff]
        %v3483 = vld [vmem:[#allocation57 + $0x1f0] sm:$0xff]
        %v3484 = vld [vmem:[#allocation57 + $0x1f8] sm:$0xff]
        %v3485 = vld [vmem:[#allocation58] sm:$0xff]
        %v3486 = vld [vmem:[#allocation58 + $0x8] sm:$0xff]
        %v3487 = vld [vmem:[#allocation60] sm:$0xff]
        %v3488 = vld [vmem:[#allocation60 + $0x8] sm:$0xff]
        %v3489 = vld [vmem:[#allocation61] sm:$0xff]
        %v3490 = vld [vmem:[#allocation61 + $0x8] sm:$0xff]
        %v3491 = vld [vmem:[#allocation63] sm:$0x1]
        %v3492 = vld [vmem:[#allocation64] sm:$0xff]
        %v3493 = vld [vmem:[#allocation64 + $0x8] sm:$0xff]
        %v3494 = vld [vmem:[#allocation64 + $0x10] sm:$0xff]
        %v3495 = vld [vmem:[#allocation64 + $0x18] sm:$0xff]
        %v3496 = vld [vmem:[#allocation64 + $0x20] sm:$0xff]
        %v3497 = vld [vmem:[#allocation64 + $0x28] sm:$0xff]
        %v3498 = vld [vmem:[#allocation64 + $0x30] sm:$0xff]
        %v3499 = vld [vmem:[#allocation64 + $0x38] sm:$0xff]
        %v3500 = vld [vmem:[#allocation64 + $0x40] sm:$0xff]
        %v3501 = vld [vmem:[#allocation64 + $0x48] sm:$0xff]
        %v3502 = vld [vmem:[#allocation64 + $0x50] sm:$0xff]
        %v3503 = vld [vmem:[#allocation64 + $0x58] sm:$0xff]
        %v3504 = vld [vmem:[#allocation64 + $0x60] sm:$0xff]
        %v3505 = vld [vmem:[#allocation64 + $0x68] sm:$0xff]
        %v3506 = vld [vmem:[#allocation64 + $0x70] sm:$0xff]
        %v3507 = vld [vmem:[#allocation64 + $0x78] sm:$0xff]
        %v3508 = vld [vmem:[#allocation66] sm:$0xff]
        %v3509 = vld [vmem:[#allocation66 + $0x8] sm:$0xff]
        %v3510 = vld [vmem:[#allocation66 + $0x10] sm:$0xff]
        %v3511 = vld [vmem:[#allocation66 + $0x18] sm:$0xff]
        %v3512 = vld [vmem:[#allocation66 + $0x20] sm:$0xff]
        %v3513 = vld [vmem:[#allocation66 + $0x28] sm:$0xff]
        %v3514 = vld [vmem:[#allocation66 + $0x30] sm:$0xff]
        %v3515 = vld [vmem:[#allocation66 + $0x38] sm:$0xff]
        %v3516 = vld [vmem:[#allocation66 + $0x40] sm:$0xff]
        %v3517 = vld [vmem:[#allocation66 + $0x48] sm:$0xff]
        %v3518 = vld [vmem:[#allocation66 + $0x50] sm:$0xff]
        %v3519 = vld [vmem:[#allocation66 + $0x58] sm:$0xff]
        %v3520 = vld [vmem:[#allocation66 + $0x60] sm:$0xff]
        %v3521 = vld [vmem:[#allocation66 + $0x68] sm:$0xff]
        %v3522 = vld [vmem:[#allocation66 + $0x70] sm:$0xff]
        %v3523 = vld [vmem:[#allocation66 + $0x78] sm:$0xff]
        %v3524 = vld [vmem:[#allocation67] sm:$0xff]
        %v3525 = vld [vmem:[#allocation67 + $0x8] sm:$0xff]
        %v3526 = vld [vmem:[#allocation67 + $0x10] sm:$0xff]
        %v3527 = vld [vmem:[#allocation67 + $0x18] sm:$0xff]
        %v3528 = vld [vmem:[#allocation67 + $0x20] sm:$0xff]
        %v3529 = vld [vmem:[#allocation67 + $0x28] sm:$0xff]
        %v3530 = vld [vmem:[#allocation67 + $0x30] sm:$0xff]
        %v3531 = vld [vmem:[#allocation67 + $0x38] sm:$0xff]
        %v3532 = vld [vmem:[#allocation67 + $0x40] sm:$0xff]
        %v3533 = vld [vmem:[#allocation67 + $0x48] sm:$0xff]
        %v3534 = vld [vmem:[#allocation67 + $0x50] sm:$0xff]
        %v3535 = vld [vmem:[#allocation67 + $0x58] sm:$0xff]
        %v3536 = vld [vmem:[#allocation67 + $0x60] sm:$0xff]
        %v3537 = vld [vmem:[#allocation67 + $0x68] sm:$0xff]
        %v3538 = vld [vmem:[#allocation67 + $0x70] sm:$0xff]
        %v3539 = vld [vmem:[#allocation67 + $0x78] sm:$0xff]
        %v3540 = vld [vmem:[#allocation69] sm:$0xff]
        %v3541 = vld [vmem:[#allocation70] sm:$0xff]
        %v3542 = vld [vmem:[#allocation72] sm:$0xff]
        %v3543 = vld [vmem:[#allocation73] sm:$0x1]
        %v3544 = vld [vmem:[#allocation75] sm:$0xff]
        %v3545 = vld [vmem:[#allocation75 + $0x8] sm:$0xff]
        %v3546 = vld [vmem:[#allocation75 + $0x10] sm:$0xff]
        %v3547 = vld [vmem:[#allocation75 + $0x18] sm:$0xff]
        %v3548 = vld [vmem:[#allocation75 + $0x20] sm:$0xff]
        %v3549 = vld [vmem:[#allocation75 + $0x28] sm:$0xff]
        %v3550 = vld [vmem:[#allocation75 + $0x30] sm:$0xff]
        %v3551 = vld [vmem:[#allocation75 + $0x38] sm:$0xff]
        %v3552 = vld [vmem:[#allocation76] sm:$0xff]
        %v3553 = vld [vmem:[#allocation76 + $0x8] sm:$0xff]
        %v3554 = vld [vmem:[#allocation76 + $0x10] sm:$0xff]
        %v3555 = vld [vmem:[#allocation76 + $0x18] sm:$0xff]
        %v3556 = vld [vmem:[#allocation76 + $0x20] sm:$0xff]
        %v3557 = vld [vmem:[#allocation76 + $0x28] sm:$0xff]
        %v3558 = vld [vmem:[#allocation76 + $0x30] sm:$0xff]
        %v3559 = vld [vmem:[#allocation76 + $0x38] sm:$0xff]
        %v3560 = vld [vmem:[#allocation78] sm:$0xff]
        %v3561 = vld [vmem:[#allocation78 + $0x8] sm:$0xff]
        %v3562 = vld [vmem:[#allocation78 + $0x10] sm:$0xff]
        %v3563 = vld [vmem:[#allocation78 + $0x18] sm:$0xff]
        %v3564 = vld [vmem:[#allocation78 + $0x20] sm:$0xff]
        %v3565 = vld [vmem:[#allocation78 + $0x28] sm:$0xff]
        %v3566 = vld [vmem:[#allocation78 + $0x30] sm:$0xff]
        %v3567 = vld [vmem:[#allocation78 + $0x38] sm:$0xff]
        %v3568 = vld [vmem:[#allocation79] sm:$0xf]
        %v3569 = vld [vmem:[#allocation81] sm:$0xf]
        %v3570 = vld [vmem:[#allocation82] sm:$0xf]
        %v3571 = vld [vmem:[#allocation84] sm:$0x3]
        %v3572 = vld [vmem:[%s137] sm:$0xff]
        %v3573 = vld [vmem:[%s137 + $0x8] sm:$0xff]
        %v3574 = vld [vmem:[%s137 + $0x10] sm:$0xff]
        %v3575 = vld [vmem:[%s137 + $0x18] sm:$0xff]
        %v3576 = vld [vmem:[%s137 + $0x20] sm:$0xff]
        %v3577 = vld [vmem:[%s137 + $0x28] sm:$0xff]
        %v3578 = vld [vmem:[%s137 + $0x30] sm:$0xff]
        %v3579 = vld [vmem:[%s137 + $0x38] sm:$0xff]
        %v3580 = vld [vmem:[%s139] sm:$0xff]
        %v3581 = vld [vmem:[#allocation85] sm:$0xff]
        %v3582 = vld [vmem:[#allocation85 + $0x8] sm:$0xff]
        %v3583 = vld [vmem:[#allocation85 + $0x10] sm:$0xff]
        %v3584 = vld [vmem:[#allocation85 + $0x18] sm:$0xff]
        %v3585 = vld [vmem:[#allocation85 + $0x20] sm:$0xff]
        %v3586 = vld [vmem:[#allocation85 + $0x28] sm:$0xff]
        %v3587 = vld [vmem:[#allocation85 + $0x30] sm:$0xff]
        %v3588 = vld [vmem:[#allocation85 + $0x38] sm:$0xff]
        %v3589 = vld [vmem:[%s143] sm:$0xff]
        %v3590 = vld [vmem:[%s143 + $0x8] sm:$0xff]
        %v3591 = vld [vmem:[#allocation87] sm:$0xff]
        %v3592 = vld [vmem:[#allocation87 + $0x8] sm:$0xff]
        %v3593 = vld [vmem:[#allocation87 + $0x10] sm:$0xff]
        %v3594 = vld [vmem:[#allocation87 + $0x18] sm:$0xff]
        %v3595 = vld [vmem:[#allocation87 + $0x20] sm:$0xff]
        %v3596 = vld [vmem:[#allocation87 + $0x28] sm:$0xff]
        %v3597 = vld [vmem:[#allocation87 + $0x30] sm:$0xff]
        %v3598 = vld [vmem:[#allocation87 + $0x38] sm:$0xff]
        %v3599 = vld [vmem:[#allocation87 + $0x40] sm:$0xff]
        %v3600 = vld [vmem:[#allocation87 + $0x48] sm:$0xff]
        %v3601 = vld [vmem:[#allocation87 + $0x50] sm:$0xff]
        %v3602 = vld [vmem:[#allocation87 + $0x58] sm:$0xff]
        %v3603 = vld [vmem:[#allocation87 + $0x60] sm:$0xff]
        %v3604 = vld [vmem:[#allocation87 + $0x68] sm:$0xff]
        %v3605 = vld [vmem:[#allocation87 + $0x70] sm:$0xff]
        %v3606 = vld [vmem:[#allocation87 + $0x78] sm:$0xff]
        %v3607 = vld [vmem:[#allocation87 + $0x80] sm:$0xff]
        %v3608 = vld [vmem:[#allocation87 + $0x88] sm:$0xff]
        %v3609 = vld [vmem:[#allocation87 + $0x90] sm:$0xff]
        %v3610 = vld [vmem:[#allocation87 + $0x98] sm:$0xff]
        %v3611 = vld [vmem:[#allocation87 + $0xa0] sm:$0xff]
        %v3612 = vld [vmem:[#allocation87 + $0xa8] sm:$0xff]
        %v3613 = vld [vmem:[#allocation87 + $0xb0] sm:$0xff]
        %v3614 = vld [vmem:[#allocation87 + $0xb8] sm:$0xff]
        %v3615 = vld [vmem:[#allocation87 + $0xc0] sm:$0xff]
        %v3616 = vld [vmem:[#allocation87 + $0xc8] sm:$0xff]
        %v3617 = vld [vmem:[#allocation87 + $0xd0] sm:$0xff]
        %v3618 = vld [vmem:[#allocation87 + $0xd8] sm:$0xff]
        %v3619 = vld [vmem:[#allocation87 + $0xe0] sm:$0xff]
        %v3620 = vld [vmem:[#allocation87 + $0xe8] sm:$0xff]
        %v3621 = vld [vmem:[#allocation87 + $0xf0] sm:$0xff]
        %v3622 = vld [vmem:[#allocation87 + $0xf8] sm:$0xff]
        %v3623 = vld [vmem:[%s2999] sm:$0xff]
        %v3624 = vld [vmem:[%s2999 + $0x8] sm:$0xff]
        %vm3625 = vcmask 130048
        %v3627 = vsel %vm3625, %v3115, 0
        %v3630 = vsel %vm3625, %v3116, 0
        %3632 = vmatprep.subr.mxu0 0.0
        %3633 = vmatpush1.msra.mxu0 0.0
        %3634 = vmatprep.subr.mxu0 0.0
        %3635 = vmatpush1.msra.mxu0 0.0
        %3636 = vmatprep.subr.mxu0 0.0
        %3637 = vmatpush1.msra.mxu0 0.0
        %3638 = vmatprep.subr.mxu0 0.0
        %3639 = vmatpush1.msra.mxu0 0.0
        %3640 = vmatprep.subr.mxu0 0.0
        %3641 = vmatpush1.msra.mxu0 0.0
        %3642 = vmatprep.subr.mxu0 0.0
        %3643 = vmatpush1.msra.mxu0 0.0
        %3644 = vmatprep.subr.mxu0 0.0
        %3645 = vmatpush1.msra.mxu0 0.0
        %3646 = vmatprep.subr.mxu0 0.0
        %3647 = vmatpush1.msra.mxu0 0.0
        %3648 = vmatprep.subr.mxu0 0.0
        %3649 = vmatpush1.msra.mxu0 0.0
        %3650 = vmatprep.subr.mxu0 0.0
        %3651 = vmatpush1.msra.mxu0 0.0
        %3652 = vmatprep.subr.mxu0 0.0
        %3653 = vmatpush1.msra.mxu0 0.0
        %3654 = vmatprep.subr.mxu0 0.0
        %3655 = vmatpush1.msra.mxu0 0.0
        %3656 = vmatprep.subr.mxu0 0.0
        %3657 = vmatpush1.msra.mxu0 0.0
        %3658 = vmatprep.subr.mxu0 0.0
        %3659 = vmatpush1.msra.mxu0 0.0
        %3660 = vmatprep.subr.mxu0 0.0
        %3661 = vmatpush1.msra.mxu0 %v3624
        %3662 = vmatprep.subr.mxu0 0.0
        %3663 = vmatpush1.msra.mxu0 %v3623
        %3664 = vmatprep.subr.mxu0 0.0
        %3665 = vmatpush2.msra.mxu0 0.0
        %3666 = vmatprep.subr.mxu0 0.0
        %3667 = vmatpush2.msra.mxu0 0.0
        %3668 = vmatprep.subr.mxu0 0.0
        %3669 = vmatpush2.msra.mxu0 0.0
        %3670 = vmatprep.subr.mxu0 0.0
        %3671 = vmatpush2.msra.mxu0 0.0
        %3672 = vmatprep.subr.mxu0 0.0
        %3673 = vmatpush2.msra.mxu0 0.0
        %3674 = vmatprep.subr.mxu0 0.0
        %3675 = vmatpush2.msra.mxu0 0.0
        %3676 = vmatprep.subr.mxu0 0.0
        %3677 = vmatpush2.msra.mxu0 0.0
        %3678 = vmatprep.subr.mxu0 0.0
        %3679 = vmatpush2.msra.mxu0 0.0
        %3680 = vmatprep.subr.mxu0 0.0
        %3681 = vmatpush2.msra.mxu0 0.0
        %3682 = vmatprep.subr.mxu0 0.0
        %3683 = vmatpush2.msra.mxu0 0.0
        %3684 = vmatprep.subr.mxu0 0.0
        %3685 = vmatpush2.msra.mxu0 0.0
        %3686 = vmatprep.subr.mxu0 0.0
        %3687 = vmatpush2.msra.mxu0 0.0
        %3688 = vmatprep.subr.mxu0 0.0
        %3689 = vmatpush2.msra.mxu0 0.0
        %3690 = vmatprep.subr.mxu0 0.0
        %3691 = vmatpush2.msra.mxu0 0.0
        %3692 = vmatprep.subr.mxu0 0.0
        %3693 = vmatpush2.msra.mxu0 0.0
        %3694 = vmatprep.subr.mxu0 0.0
        %3695 = vmatpush2.msra.mxu0 0.0
        %3696 = vmatprep.mubr.f32.mxu0 0.0
        %3697 = vmatmul.mubr.f32.gmra.mxu0 %v3627
        %v3698 = vpop.f32.mrf.mxu0
        %v3699 = vadd.f32 0.0, %v3698
        %v3700 = vpop.f32.mrf.mxu0
        %3701 = vmatprep.mubr.f32.mxu0 0.0
        %3702 = vmatmul.mubr.f32.gmra.mxu0 %v3630
        %v3703 = vpop.f32.mrf.mxu0
        %v3704 = vadd.f32 0.0, %v3703
        %v3705 = vpop.f32.mrf.mxu0
        %3706 = vdwg.mxu0
        %vm3707 = vcmask 392192
        %v3709 = vsel %vm3707, %v3699, 0
        %v3712 = vsel %vm3707, %v3704, 0
        %3714 = vmatprep.subr.mxu0 0.0
        %3715 = vmatpush1.msra.mxu0 0.0
        %3716 = vmatprep.subr.mxu0 0.0
        %3717 = vmatpush1.msra.mxu0 0.0
        %3718 = vmatprep.subr.mxu0 0.0
        %3719 = vmatpush1.msra.mxu0 0.0
        %3720 = vmatprep.subr.mxu0 0.0
        %3721 = vmatpush1.msra.mxu0 0.0
        %3722 = vmatprep.subr.mxu0 0.0
        %3723 = vmatpush1.msra.mxu0 0.0
        %3724 = vmatprep.subr.mxu0 0.0
        %3725 = vmatpush1.msra.mxu0 0.0
        %3726 = vmatprep.subr.mxu0 0.0
        %3727 = vmatpush1.msra.mxu0 0.0
        %3728 = vmatprep.subr.mxu0 0.0
        %3729 = vmatpush1.msra.mxu0 0.0
        %3730 = vmatprep.subr.mxu0 0.0
        %3731 = vmatpush1.msra.mxu0 0.0
        %3732 = vmatprep.subr.mxu0 0.0
        %3733 = vmatpush1.msra.mxu0 0.0
        %3734 = vmatprep.subr.mxu0 0.0
        %3735 = vmatpush1.msra.mxu0 %v3102
        %3736 = vmatprep.subr.mxu0 0.0
        %3737 = vmatpush1.msra.mxu0 %v3101
        %3738 = vmatprep.subr.mxu0 0.0
        %3739 = vmatpush1.msra.mxu0 %v3100
        %3740 = vmatprep.subr.mxu0 0.0
        %3741 = vmatpush1.msra.mxu0 %v3099
        %3742 = vmatprep.subr.mxu0 0.0
        %3743 = vmatpush1.msra.mxu0 %v3098
        %3744 = vmatprep.subr.mxu0 0.0
        %3745 = vmatpush1.msra.mxu0 %v3097
        %3746 = vmatprep.subr.mxu0 0.0
        %3747 = vmatpush2.msra.mxu0 0.0
        %3748 = vmatprep.subr.mxu0 0.0
        %3749 = vmatpush2.msra.mxu0 0.0
        %3750 = vmatprep.subr.mxu0 0.0
        %3751 = vmatpush2.msra.mxu0 0.0
        %3752 = vmatprep.subr.mxu0 0.0
        %3753 = vmatpush2.msra.mxu0 0.0
        %3754 = vmatprep.subr.mxu0 0.0
        %3755 = vmatpush2.msra.mxu0 0.0
        %3756 = vmatprep.subr.mxu0 0.0
        %3757 = vmatpush2.msra.mxu0 0.0
        %3758 = vmatprep.subr.mxu0 0.0
        %3759 = vmatpush2.msra.mxu0 0.0
        %3760 = vmatprep.subr.mxu0 0.0
        %3761 = vmatpush2.msra.mxu0 0.0
        %3762 = vmatprep.subr.mxu0 0.0
        %3763 = vmatpush2.msra.mxu0 0.0
        %3764 = vmatprep.subr.mxu0 0.0
        %3765 = vmatpush2.msra.mxu0 0.0
        %3766 = vmatprep.subr.mxu0 0.0
        %3767 = vmatpush2.msra.mxu0 0.0
        %3768 = vmatprep.subr.mxu0 0.0
        %3769 = vmatpush2.msra.mxu0 0.0
        %3770 = vmatprep.subr.mxu0 0.0
        %3771 = vmatpush2.msra.mxu0 0.0
        %3772 = vmatprep.subr.mxu0 0.0
        %3773 = vmatpush2.msra.mxu0 0.0
        %3774 = vmatprep.subr.mxu0 0.0
        %3775 = vmatpush2.msra.mxu0 0.0
        %3776 = vmatprep.subr.mxu0 0.0
        %3777 = vmatpush2.msra.mxu0 0.0
        %3778 = vmatprep.mubr.f32.mxu0 0.0
        %3779 = vmatmul.mubr.f32.gmra.mxu0 %v3709
        %v3780 = vpop.f32.mrf.mxu0
        %v3781 = vadd.f32 0.0, %v3780
        %v3782 = vpop.f32.mrf.mxu0
        %3783 = vmatprep.mubr.f32.mxu0 0.0
        %3784 = vmatmul.mubr.f32.gmra.mxu0 %v3712
        %v3785 = vpop.f32.mrf.mxu0
        %v3786 = vadd.f32 0.0, %v3785
        %v3787 = vpop.f32.mrf.mxu0
        %3788 = vdwg.mxu0
        %v3790 = vlaneseq
        %v3791 = vshrl.u32 %v3790, 7
        %v3792 = vsub.s32 0, %v3791
        %v3793 = vrot.slane %v3096, %v3792
        %v3795 = vadd.f32 %v3793, %v3781
        %v3796 = vadd.f32 %v3793, %v3786
        %v3798 = vsel %vm3625, %v3117, 0
        %v3801 = vsel %vm3625, %v3118, 0
        %3803 = vmatprep.subr.mxu0 0.0
        %3804 = vmatpush1.msra.mxu0 0.0
        %3805 = vmatprep.subr.mxu0 0.0
        %3806 = vmatpush1.msra.mxu0 0.0
        %3807 = vmatprep.subr.mxu0 0.0
        %3808 = vmatpush1.msra.mxu0 0.0
        %3809 = vmatprep.subr.mxu0 0.0
        %3810 = vmatpush1.msra.mxu0 0.0
        %3811 = vmatprep.subr.mxu0 0.0
        %3812 = vmatpush1.msra.mxu0 0.0
        %3813 = vmatprep.subr.mxu0 0.0
        %3814 = vmatpush1.msra.mxu0 0.0
        %3815 = vmatprep.subr.mxu0 0.0
        %3816 = vmatpush1.msra.mxu0 0.0
        %3817 = vmatprep.subr.mxu0 0.0
        %3818 = vmatpush1.msra.mxu0 0.0
        %3819 = vmatprep.subr.mxu0 0.0
        %3820 = vmatpush1.msra.mxu0 0.0
        %3821 = vmatprep.subr.mxu0 0.0
        %3822 = vmatpush1.msra.mxu0 0.0
        %3823 = vmatprep.subr.mxu0 0.0
        %3824 = vmatpush1.msra.mxu0 0.0
        %3825 = vmatprep.subr.mxu0 0.0
        %3826 = vmatpush1.msra.mxu0 0.0
        %3827 = vmatprep.subr.mxu0 0.0
        %3828 = vmatpush1.msra.mxu0 0.0
        %3829 = vmatprep.subr.mxu0 0.0
        %3830 = vmatpush1.msra.mxu0 0.0
        %3831 = vmatprep.subr.mxu0 0.0
        %3832 = vmatpush1.msra.mxu0 %v3624
        %3833 = vmatprep.subr.mxu0 0.0
        %3834 = vmatpush1.msra.mxu0 %v3623
        %3835 = vmatprep.subr.mxu0 0.0
        %3836 = vmatpush2.msra.mxu0 0.0
        %3837 = vmatprep.subr.mxu0 0.0
        %3838 = vmatpush2.msra.mxu0 0.0
        %3839 = vmatprep.subr.mxu0 0.0
        %3840 = vmatpush2.msra.mxu0 0.0
        %3841 = vmatprep.subr.mxu0 0.0
        %3842 = vmatpush2.msra.mxu0 0.0
        %3843 = vmatprep.subr.mxu0 0.0
        %3844 = vmatpush2.msra.mxu0 0.0
        %3845 = vmatprep.subr.mxu0 0.0
        %3846 = vmatpush2.msra.mxu0 0.0
        %3847 = vmatprep.subr.mxu0 0.0
        %3848 = vmatpush2.msra.mxu0 0.0
        %3849 = vmatprep.subr.mxu0 0.0
        %3850 = vmatpush2.msra.mxu0 0.0
        %3851 = vmatprep.subr.mxu0 0.0
        %3852 = vmatpush2.msra.mxu0 0.0
        %3853 = vmatprep.subr.mxu0 0.0
        %3854 = vmatpush2.msra.mxu0 0.0
        %3855 = vmatprep.subr.mxu0 0.0
        %3856 = vmatpush2.msra.mxu0 0.0
        %3857 = vmatprep.subr.mxu0 0.0
        %3858 = vmatpush2.msra.mxu0 0.0
        %3859 = vmatprep.subr.mxu0 0.0
        %3860 = vmatpush2.msra.mxu0 0.0
        %3861 = vmatprep.subr.mxu0 0.0
        %3862 = vmatpush2.msra.mxu0 0.0
        %3863 = vmatprep.subr.mxu0 0.0
        %3864 = vmatpush2.msra.mxu0 0.0
        %3865 = vmatprep.subr.mxu0 0.0
        %3866 = vmatpush2.msra.mxu0 0.0
        %3867 = vmatprep.mubr.f32.mxu0 0.0
        %3868 = vmatmul.mubr.f32.gmra.mxu0 %v3798
        %v3869 = vpop.f32.mrf.mxu0
        %v3870 = vadd.f32 0.0, %v3869
        %v3871 = vpop.f32.mrf.mxu0
        %3872 = vmatprep.mubr.f32.mxu0 0.0
        %3873 = vmatmul.mubr.f32.gmra.mxu0 %v3801
        %v3874 = vpop.f32.mrf.mxu0
        %v3875 = vadd.f32 0.0, %v3874
        %v3876 = vpop.f32.mrf.mxu0
        %3877 = vdwg.mxu0
        %v3879 = vsel %vm3707, %v3870, 0
        %v3882 = vsel %vm3707, %v3875, 0
        %3884 = vmatprep.subr.mxu0 0.0
        %3885 = vmatpush1.msra.mxu0 0.0
        %3886 = vmatprep.subr.mxu0 0.0
        %3887 = vmatpush1.msra.mxu0 0.0
        %3888 = vmatprep.subr.mxu0 0.0
        %3889 = vmatpush1.msra.mxu0 0.0
        %3890 = vmatprep.subr.mxu0 0.0
        %3891 = vmatpush1.msra.mxu0 0.0
        %3892 = vmatprep.subr.mxu0 0.0
        %3893 = vmatpush1.msra.mxu0 0.0
        %3894 = vmatprep.subr.mxu0 0.0
        %3895 = vmatpush1.msra.mxu0 0.0
        %3896 = vmatprep.subr.mxu0 0.0
        %3897 = vmatpush1.msra.mxu0 0.0
        %3898 = vmatprep.subr.mxu0 0.0
        %3899 = vmatpush1.msra.mxu0 0.0
        %3900 = vmatprep.subr.mxu0 0.0
        %3901 = vmatpush1.msra.mxu0 0.0
        %3902 = vmatprep.subr.mxu0 0.0
        %3903 = vmatpush1.msra.mxu0 0.0
        %3904 = vmatprep.subr.mxu0 0.0
        %3905 = vmatpush1.msra.mxu0 %v3108
        %3906 = vmatprep.subr.mxu0 0.0
        %3907 = vmatpush1.msra.mxu0 %v3107
        %3908 = vmatprep.subr.mxu0 0.0
        %3909 = vmatpush1.msra.mxu0 %v3106
        %3910 = vmatprep.subr.mxu0 0.0
        %3911 = vmatpush1.msra.mxu0 %v3105
        %3912 = vmatprep.subr.mxu0 0.0
        %3913 = vmatpush1.msra.mxu0 %v3104
        %3914 = vmatprep.subr.mxu0 0.0
        %3915 = vmatpush1.msra.mxu0 %v3103
        %3916 = vmatprep.subr.mxu0 0.0
        %3917 = vmatpush2.msra.mxu0 0.0
        %3918 = vmatprep.subr.mxu0 0.0
        %3919 = vmatpush2.msra.mxu0 0.0
        %3920 = vmatprep.subr.mxu0 0.0
        %3921 = vmatpush2.msra.mxu0 0.0
        %3922 = vmatprep.subr.mxu0 0.0
        %3923 = vmatpush2.msra.mxu0 0.0
        %3924 = vmatprep.subr.mxu0 0.0
        %3925 = vmatpush2.msra.mxu0 0.0
        %3926 = vmatprep.subr.mxu0 0.0
        %3927 = vmatpush2.msra.mxu0 0.0
        %3928 = vmatprep.subr.mxu0 0.0
        %3929 = vmatpush2.msra.mxu0 0.0
        %3930 = vmatprep.subr.mxu0 0.0
        %3931 = vmatpush2.msra.mxu0 0.0
        %3932 = vmatprep.subr.mxu0 0.0
        %3933 = vmatpush2.msra.mxu0 0.0
        %3934 = vmatprep.subr.mxu0 0.0
        %3935 = vmatpush2.msra.mxu0 0.0
        %3936 = vmatprep.subr.mxu0 0.0
        %3937 = vmatpush2.msra.mxu0 0.0
        %3938 = vmatprep.subr.mxu0 0.0
        %3939 = vmatpush2.msra.mxu0 0.0
        %3940 = vmatprep.subr.mxu0 0.0
        %3941 = vmatpush2.msra.mxu0 0.0
        %3942 = vmatprep.subr.mxu0 0.0
        %3943 = vmatpush2.msra.mxu0 0.0
        %3944 = vmatprep.subr.mxu0 0.0
        %3945 = vmatpush2.msra.mxu0 0.0
        %3946 = vmatprep.subr.mxu0 0.0
        %3947 = vmatpush2.msra.mxu0 0.0
        %3948 = vmatprep.mubr.f32.mxu0 0.0
        %3949 = vmatmul.mubr.f32.gmra.mxu0 %v3879
        %v3950 = vpop.f32.mrf.mxu0
        %v3951 = vadd.f32 0.0, %v3950
        %v3952 = vpop.f32.mrf.mxu0
        %3953 = vmatprep.mubr.f32.mxu0 0.0
        %3954 = vmatmul.mubr.f32.gmra.mxu0 %v3882
        %v3955 = vpop.f32.mrf.mxu0
        %v3956 = vadd.f32 0.0, %v3955
        %v3957 = vpop.f32.mrf.mxu0
        %3958 = vdwg.mxu0
        %v3959 = vadd.f32 %v3795, %v3951
        %v3960 = vadd.f32 %v3796, %v3956
        %v3962 = vsel %vm3625, %v3119, 0
        %v3965 = vsel %vm3625, %v3120, 0
        %3967 = vmatprep.subr.mxu0 0.0
        %3968 = vmatpush1.msra.mxu0 0.0
        %3969 = vmatprep.subr.mxu0 0.0
        %3970 = vmatpush1.msra.mxu0 0.0
        %3971 = vmatprep.subr.mxu0 0.0
        %3972 = vmatpush1.msra.mxu0 0.0
        %3973 = vmatprep.subr.mxu0 0.0
        %3974 = vmatpush1.msra.mxu0 0.0
        %3975 = vmatprep.subr.mxu0 0.0
        %3976 = vmatpush1.msra.mxu0 0.0
        %3977 = vmatprep.subr.mxu0 0.0
        %3978 = vmatpush1.msra.mxu0 0.0
        %3979 = vmatprep.subr.mxu0 0.0
        %3980 = vmatpush1.msra.mxu0 0.0
        %3981 = vmatprep.subr.mxu0 0.0
        %3982 = vmatpush1.msra.mxu0 0.0
        %3983 = vmatprep.subr.mxu0 0.0
        %3984 = vmatpush1.msra.mxu0 0.0
        %3985 = vmatprep.subr.mxu0 0.0
        %3986 = vmatpush1.msra.mxu0 0.0
        %3987 = vmatprep.subr.mxu0 0.0
        %3988 = vmatpush1.msra.mxu0 0.0
        %3989 = vmatprep.subr.mxu0 0.0
        %3990 = vmatpush1.msra.mxu0 0.0
        %3991 = vmatprep.subr.mxu0 0.0
        %3992 = vmatpush1.msra.mxu0 0.0
        %3993 = vmatprep.subr.mxu0 0.0
        %3994 = vmatpush1.msra.mxu0 0.0
        %3995 = vmatprep.subr.mxu0 0.0
        %3996 = vmatpush1.msra.mxu0 %v3624
        %3997 = vmatprep.subr.mxu0 0.0
        %3998 = vmatpush1.msra.mxu0 %v3623
        %3999 = vmatprep.subr.mxu0 0.0
        %4000 = vmatpush2.msra.mxu0 0.0
        %4001 = vmatprep.subr.mxu0 0.0
        %4002 = vmatpush2.msra.mxu0 0.0
        %4003 = vmatprep.subr.mxu0 0.0
        %4004 = vmatpush2.msra.mxu0 0.0
        %4005 = vmatprep.subr.mxu0 0.0
        %4006 = vmatpush2.msra.mxu0 0.0
        %4007 = vmatprep.subr.mxu0 0.0
        %4008 = vmatpush2.msra.mxu0 0.0
        %4009 = vmatprep.subr.mxu0 0.0
        %4010 = vmatpush2.msra.mxu0 0.0
        %4011 = vmatprep.subr.mxu0 0.0
        %4012 = vmatpush2.msra.mxu0 0.0
        %4013 = vmatprep.subr.mxu0 0.0
        %4014 = vmatpush2.msra.mxu0 0.0
        %4015 = vmatprep.subr.mxu0 0.0
        %4016 = vmatpush2.msra.mxu0 0.0
        %4017 = vmatprep.subr.mxu0 0.0
        %4018 = vmatpush2.msra.mxu0 0.0
        %4019 = vmatprep.subr.mxu0 0.0
        %4020 = vmatpush2.msra.mxu0 0.0
        %4021 = vmatprep.subr.mxu0 0.0
        %4022 = vmatpush2.msra.mxu0 0.0
        %4023 = vmatprep.subr.mxu0 0.0
        %4024 = vmatpush2.msra.mxu0 0.0
        %4025 = vmatprep.subr.mxu0 0.0
        %4026 = vmatpush2.msra.mxu0 0.0
        %4027 = vmatprep.subr.mxu0 0.0
        %4028 = vmatpush2.msra.mxu0 0.0
        %4029 = vmatprep.subr.mxu0 0.0
        %4030 = vmatpush2.msra.mxu0 0.0
        %4031 = vmatprep.mubr.f32.mxu0 0.0
        %4032 = vmatmul.mubr.f32.gmra.mxu0 %v3962
        %v4033 = vpop.f32.mrf.mxu0
        %v4034 = vadd.f32 0.0, %v4033
        %v4035 = vpop.f32.mrf.mxu0
        %4036 = vmatprep.mubr.f32.mxu0 0.0
        %4037 = vmatmul.mubr.f32.gmra.mxu0 %v3965
        %v4038 = vpop.f32.mrf.mxu0
        %v4039 = vadd.f32 0.0, %v4038
        %v4040 = vpop.f32.mrf.mxu0
        %4041 = vdwg.mxu0
        %v4043 = vsel %vm3707, %v4034, 0
        %v4046 = vsel %vm3707, %v4039, 0
        %4048 = vmatprep.subr.mxu0 0.0
        %4049 = vmatpush1.msra.mxu0 0.0
        %4050 = vmatprep.subr.mxu0 0.0
        %4051 = vmatpush1.msra.mxu0 0.0
        %4052 = vmatprep.subr.mxu0 0.0
        %4053 = vmatpush1.msra.mxu0 0.0
        %4054 = vmatprep.subr.mxu0 0.0
        %4055 = vmatpush1.msra.mxu0 0.0
        %4056 = vmatprep.subr.mxu0 0.0
        %4057 = vmatpush1.msra.mxu0 0.0
        %4058 = vmatprep.subr.mxu0 0.0
        %4059 = vmatpush1.msra.mxu0 0.0
        %4060 = vmatprep.subr.mxu0 0.0
        %4061 = vmatpush1.msra.mxu0 0.0
        %4062 = vmatprep.subr.mxu0 0.0
        %4063 = vmatpush1.msra.mxu0 0.0
        %4064 = vmatprep.subr.mxu0 0.0
        %4065 = vmatpush1.msra.mxu0 0.0
        %4066 = vmatprep.subr.mxu0 0.0
        %4067 = vmatpush1.msra.mxu0 0.0
        %4068 = vmatprep.subr.mxu0 0.0
        %4069 = vmatpush1.msra.mxu0 %v3114
        %4070 = vmatprep.subr.mxu0 0.0
        %4071 = vmatpush1.msra.mxu0 %v3113
        %4072 = vmatprep.subr.mxu0 0.0
        %4073 = vmatpush1.msra.mxu0 %v3112
        %4074 = vmatprep.subr.mxu0 0.0
        %4075 = vmatpush1.msra.mxu0 %v3111
        %4076 = vmatprep.subr.mxu0 0.0
        %4077 = vmatpush1.msra.mxu0 %v3110
        %4078 = vmatprep.subr.mxu0 0.0
        %4079 = vmatpush1.msra.mxu0 %v3109
        %4080 = vmatprep.subr.mxu0 0.0
        %4081 = vmatpush2.msra.mxu0 0.0
        %4082 = vmatprep.subr.mxu0 0.0
        %4083 = vmatpush2.msra.mxu0 0.0
        %4084 = vmatprep.subr.mxu0 0.0
        %4085 = vmatpush2.msra.mxu0 0.0
        %4086 = vmatprep.subr.mxu0 0.0
        %4087 = vmatpush2.msra.mxu0 0.0
        %4088 = vmatprep.subr.mxu0 0.0
        %4089 = vmatpush2.msra.mxu0 0.0
        %4090 = vmatprep.subr.mxu0 0.0
        %4091 = vmatpush2.msra.mxu0 0.0
        %4092 = vmatprep.subr.mxu0 0.0
        %4093 = vmatpush2.msra.mxu0 0.0
        %4094 = vmatprep.subr.mxu0 0.0
        %4095 = vmatpush2.msra.mxu0 0.0
        %4096 = vmatprep.subr.mxu0 0.0
        %4097 = vmatpush2.msra.mxu0 0.0
        %4098 = vmatprep.subr.mxu0 0.0
        %4099 = vmatpush2.msra.mxu0 0.0
        %4100 = vmatprep.subr.mxu0 0.0
        %4101 = vmatpush2.msra.mxu0 0.0
        %4102 = vmatprep.subr.mxu0 0.0
        %4103 = vmatpush2.msra.mxu0 0.0
        %4104 = vmatprep.subr.mxu0 0.0
        %4105 = vmatpush2.msra.mxu0 0.0
        %4106 = vmatprep.subr.mxu0 0.0
        %4107 = vmatpush2.msra.mxu0 0.0
        %4108 = vmatprep.subr.mxu0 0.0
        %4109 = vmatpush2.msra.mxu0 0.0
        %4110 = vmatprep.subr.mxu0 0.0
        %4111 = vmatpush2.msra.mxu0 0.0
        %4112 = vmatprep.mubr.f32.mxu0 0.0
        %4113 = vmatmul.mubr.f32.gmra.mxu0 %v4043
        %v4114 = vpop.f32.mrf.mxu0
        %v4115 = vadd.f32 0.0, %v4114
        %v4116 = vpop.f32.mrf.mxu0
        %4117 = vmatprep.mubr.f32.mxu0 0.0
        %4118 = vmatmul.mubr.f32.gmra.mxu0 %v4046
        %v4119 = vpop.f32.mrf.mxu0
        %v4120 = vadd.f32 0.0, %v4119
        %v4121 = vpop.f32.mrf.mxu0
        %4122 = vdwg.mxu0
        %v4123 = vadd.f32 %v3959, %v4115
        %v4124 = vadd.f32 %v3960, %v4120
        %v4125 = vmax.f32 %v4123, 0.0
        %v4126 = vmax.f32 %v4124, 0.0
        %v4128 = vsel %vm3625, %v3170, 0
        %4130 = vmatprep.subr.mxu0 0.0
        %4131 = vmatpush1.msra.mxu0 0.0
        %4132 = vmatprep.subr.mxu0 0.0
        %4133 = vmatpush1.msra.mxu0 0.0
        %4134 = vmatprep.subr.mxu0 0.0
        %4135 = vmatpush1.msra.mxu0 0.0
        %4136 = vmatprep.subr.mxu0 0.0
        %4137 = vmatpush1.msra.mxu0 0.0
        %4138 = vmatprep.subr.mxu0 0.0
        %4139 = vmatpush1.msra.mxu0 0.0
        %4140 = vmatprep.subr.mxu0 0.0
        %4141 = vmatpush1.msra.mxu0 0.0
        %4142 = vmatprep.subr.mxu0 0.0
        %4143 = vmatpush1.msra.mxu0 0.0
        %4144 = vmatprep.subr.mxu0 0.0
        %4145 = vmatpush1.msra.mxu0 0.0
        %4146 = vmatprep.subr.mxu0 0.0
        %4147 = vmatpush1.msra.mxu0 0.0
        %4148 = vmatprep.subr.mxu0 0.0
        %4149 = vmatpush1.msra.mxu0 0.0
        %4150 = vmatprep.subr.mxu0 0.0
        %4151 = vmatpush1.msra.mxu0 0.0
        %4152 = vmatprep.subr.mxu0 0.0
        %4153 = vmatpush1.msra.mxu0 0.0
        %4154 = vmatprep.subr.mxu0 0.0
        %4155 = vmatpush1.msra.mxu0 0.0
        %4156 = vmatprep.subr.mxu0 0.0
        %4157 = vmatpush1.msra.mxu0 0.0
        %4158 = vmatprep.subr.mxu0 0.0
        %4159 = vmatpush1.msra.mxu0 %v4126
        %4160 = vmatprep.subr.mxu0 0.0
        %4161 = vmatpush1.msra.mxu0 %v4125
        %4162 = vmatprep.subr.mxu0 0.0
        %4163 = vmatpush2.msra.mxu0 0.0
        %4164 = vmatprep.subr.mxu0 0.0
        %4165 = vmatpush2.msra.mxu0 0.0
        %4166 = vmatprep.subr.mxu0 0.0
        %4167 = vmatpush2.msra.mxu0 0.0
        %4168 = vmatprep.subr.mxu0 0.0
        %4169 = vmatpush2.msra.mxu0 0.0
        %4170 = vmatprep.subr.mxu0 0.0
        %4171 = vmatpush2.msra.mxu0 0.0
        %4172 = vmatprep.subr.mxu0 0.0
        %4173 = vmatpush2.msra.mxu0 0.0
        %4174 = vmatprep.subr.mxu0 0.0
        %4175 = vmatpush2.msra.mxu0 0.0
        %4176 = vmatprep.subr.mxu0 0.0
        %4177 = vmatpush2.msra.mxu0 0.0
        %4178 = vmatprep.subr.mxu0 0.0
        %4179 = vmatpush2.msra.mxu0 0.0
        %4180 = vmatprep.subr.mxu0 0.0
        %4181 = vmatpush2.msra.mxu0 0.0
        %4182 = vmatprep.subr.mxu0 0.0
        %4183 = vmatpush2.msra.mxu0 0.0
        %4184 = vmatprep.subr.mxu0 0.0
        %4185 = vmatpush2.msra.mxu0 0.0
        %4186 = vmatprep.subr.mxu0 0.0
        %4187 = vmatpush2.msra.mxu0 0.0
        %4188 = vmatprep.subr.mxu0 0.0
        %4189 = vmatpush2.msra.mxu0 0.0
        %4190 = vmatprep.subr.mxu0 0.0
        %4191 = vmatpush2.msra.mxu0 0.0
        %4192 = vmatprep.subr.mxu0 0.0
        %4193 = vmatpush2.msra.mxu0 0.0
        %4194 = vmatprep.mubr.f32.mxu0 0.0
        %4195 = vmatmul.mubr.f32.gmra.mxu0 %v4128
        %v4196 = vpop.f32.mrf.mxu0
        %v4197 = vadd.f32 0.0, %v4196
        %v4198 = vpop.f32.mrf.mxu0
        %4199 = vdwg.mxu0
        %4200 = vmatprep.subr.mxu0 0.0
        %4201 = vmatpush1.msra.mxu0 %v3137
        %4202 = vmatprep.subr.mxu0 0.0
        %4203 = vmatpush1.msra.mxu0 %v3136
        %4204 = vmatprep.subr.mxu0 0.0
        %4205 = vmatpush1.msra.mxu0 %v3135
        %4206 = vmatprep.subr.mxu0 0.0
        %4207 = vmatpush1.msra.mxu0 %v3134
        %4208 = vmatprep.subr.mxu0 0.0
        %4209 = vmatpush1.msra.mxu0 %v3133
        %4210 = vmatprep.subr.mxu0 0.0
        %4211 = vmatpush1.msra.mxu0 %v3132
        %4212 = vmatprep.subr.mxu0 0.0
        %4213 = vmatpush1.msra.mxu0 %v3131
        %4214 = vmatprep.subr.mxu0 0.0
        %4215 = vmatpush1.msra.mxu0 %v3130
        %4216 = vmatprep.subr.mxu0 0.0
        %4217 = vmatpush1.msra.mxu0 %v3129
        %4218 = vmatprep.subr.mxu0 0.0
        %4219 = vmatpush1.msra.mxu0 %v3128
        %4220 = vmatprep.subr.mxu0 0.0
        %4221 = vmatpush1.msra.mxu0 %v3127
        %4222 = vmatprep.subr.mxu0 0.0
        %4223 = vmatpush1.msra.mxu0 %v3126
        %4224 = vmatprep.subr.mxu0 0.0
        %4225 = vmatpush1.msra.mxu0 %v3125
        %4226 = vmatprep.subr.mxu0 0.0
        %4227 = vmatpush1.msra.mxu0 %v3124
        %4228 = vmatprep.subr.mxu0 0.0
        %4229 = vmatpush1.msra.mxu0 %v3123
        %4230 = vmatprep.subr.mxu0 0.0
        %4231 = vmatpush1.msra.mxu0 %v3122
        %4232 = vmatprep.subr.mxu0 0.0
        %4233 = vmatpush2.msra.mxu0 0.0
        %4234 = vmatprep.subr.mxu0 0.0
        %4235 = vmatpush2.msra.mxu0 0.0
        %4236 = vmatprep.subr.mxu0 0.0
        %4237 = vmatpush2.msra.mxu0 0.0
        %4238 = vmatprep.subr.mxu0 0.0
        %4239 = vmatpush2.msra.mxu0 0.0
        %4240 = vmatprep.subr.mxu0 0.0
        %4241 = vmatpush2.msra.mxu0 0.0
        %4242 = vmatprep.subr.mxu0 0.0
        %4243 = vmatpush2.msra.mxu0 0.0
        %4244 = vmatprep.subr.mxu0 0.0
        %4245 = vmatpush2.msra.mxu0 0.0
        %4246 = vmatprep.subr.mxu0 0.0
        %4247 = vmatpush2.msra.mxu0 0.0
        %4248 = vmatprep.subr.mxu0 0.0
        %4249 = vmatpush2.msra.mxu0 0.0
        %4250 = vmatprep.subr.mxu0 0.0
        %4251 = vmatpush2.msra.mxu0 0.0
        %4252 = vmatprep.subr.mxu0 0.0
        %4253 = vmatpush2.msra.mxu0 0.0
        %4254 = vmatprep.subr.mxu0 0.0
        %4255 = vmatpush2.msra.mxu0 0.0
        %4256 = vmatprep.subr.mxu0 0.0
        %4257 = vmatpush2.msra.mxu0 0.0
        %4258 = vmatprep.subr.mxu0 0.0
        %4259 = vmatpush2.msra.mxu0 0.0
        %4260 = vmatprep.subr.mxu0 0.0
        %4261 = vmatpush2.msra.mxu0 0.0
        %4262 = vmatprep.subr.mxu0 0.0
        %4263 = vmatpush2.msra.mxu0 0.0
        %4264 = vmatprep.mubr.f32.mxu0 0.0
        %4265 = vmatmul.mubr.f32.gmra.mxu0 %v4197
        %v4266 = vpop.f32.mrf.mxu0
        %v4267 = vadd.f32 0.0, %v4266
        %v4268 = vpop.f32.mrf.mxu0
        %4269 = vdwg.mxu0
        %v4271 = vlaneseq
        %v4272 = vshrl.u32 %v4271, 7
        %v4273 = vsub.s32 0, %v4272
        %v4274 = vrot.slane %v3121, %v4273
        %v4276 = vadd.f32 %v4274, %v4267
        %v4278 = vsel %vm3625, %v3171, 0
        %4280 = vmatprep.subr.mxu0 0.0
        %4281 = vmatpush1.msra.mxu0 0.0
        %4282 = vmatprep.subr.mxu0 0.0
        %4283 = vmatpush1.msra.mxu0 0.0
        %4284 = vmatprep.subr.mxu0 0.0
        %4285 = vmatpush1.msra.mxu0 0.0
        %4286 = vmatprep.subr.mxu0 0.0
        %4287 = vmatpush1.msra.mxu0 0.0
        %4288 = vmatprep.subr.mxu0 0.0
        %4289 = vmatpush1.msra.mxu0 0.0
        %4290 = vmatprep.subr.mxu0 0.0
        %4291 = vmatpush1.msra.mxu0 0.0
        %4292 = vmatprep.subr.mxu0 0.0
        %4293 = vmatpush1.msra.mxu0 0.0
        %4294 = vmatprep.subr.mxu0 0.0
        %4295 = vmatpush1.msra.mxu0 0.0
        %4296 = vmatprep.subr.mxu0 0.0
        %4297 = vmatpush1.msra.mxu0 0.0
        %4298 = vmatprep.subr.mxu0 0.0
        %4299 = vmatpush1.msra.mxu0 0.0
        %4300 = vmatprep.subr.mxu0 0.0
        %4301 = vmatpush1.msra.mxu0 0.0
        %4302 = vmatprep.subr.mxu0 0.0
        %4303 = vmatpush1.msra.mxu0 0.0
        %4304 = vmatprep.subr.mxu0 0.0
        %4305 = vmatpush1.msra.mxu0 0.0
        %4306 = vmatprep.subr.mxu0 0.0
        %4307 = vmatpush1.msra.mxu0 0.0
        %4308 = vmatprep.subr.mxu0 0.0
        %4309 = vmatpush1.msra.mxu0 %v4126
        %4310 = vmatprep.subr.mxu0 0.0
        %4311 = vmatpush1.msra.mxu0 %v4125
        %4312 = vmatprep.subr.mxu0 0.0
        %4313 = vmatpush2.msra.mxu0 0.0
        %4314 = vmatprep.subr.mxu0 0.0
        %4315 = vmatpush2.msra.mxu0 0.0
        %4316 = vmatprep.subr.mxu0 0.0
        %4317 = vmatpush2.msra.mxu0 0.0
        %4318 = vmatprep.subr.mxu0 0.0
        %4319 = vmatpush2.msra.mxu0 0.0
        %4320 = vmatprep.subr.mxu0 0.0
        %4321 = vmatpush2.msra.mxu0 0.0
        %4322 = vmatprep.subr.mxu0 0.0
        %4323 = vmatpush2.msra.mxu0 0.0
        %4324 = vmatprep.subr.mxu0 0.0
        %4325 = vmatpush2.msra.mxu0 0.0
        %4326 = vmatprep.subr.mxu0 0.0
        %4327 = vmatpush2.msra.mxu0 0.0
        %4328 = vmatprep.subr.mxu0 0.0
        %4329 = vmatpush2.msra.mxu0 0.0
        %4330 = vmatprep.subr.mxu0 0.0
        %4331 = vmatpush2.msra.mxu0 0.0
        %4332 = vmatprep.subr.mxu0 0.0
        %4333 = vmatpush2.msra.mxu0 0.0
        %4334 = vmatprep.subr.mxu0 0.0
        %4335 = vmatpush2.msra.mxu0 0.0
        %4336 = vmatprep.subr.mxu0 0.0
        %4337 = vmatpush2.msra.mxu0 0.0
        %4338 = vmatprep.subr.mxu0 0.0
        %4339 = vmatpush2.msra.mxu0 0.0
        %4340 = vmatprep.subr.mxu0 0.0
        %4341 = vmatpush2.msra.mxu0 0.0
        %4342 = vmatprep.subr.mxu0 0.0
        %4343 = vmatpush2.msra.mxu0 0.0
        %4344 = vmatprep.mubr.f32.mxu0 0.0
        %4345 = vmatmul.mubr.f32.gmra.mxu0 %v4278
        %v4346 = vpop.f32.mrf.mxu0
        %v4347 = vadd.f32 0.0, %v4346
        %v4348 = vpop.f32.mrf.mxu0
        %4349 = vdwg.mxu0
        %4350 = vmatprep.subr.mxu0 0.0
        %4351 = vmatpush1.msra.mxu0 %v3153
        %4352 = vmatprep.subr.mxu0 0.0
        %4353 = vmatpush1.msra.mxu0 %v3152
        %4354 = vmatprep.subr.mxu0 0.0
        %4355 = vmatpush1.msra.mxu0 %v3151
        %4356 = vmatprep.subr.mxu0 0.0
        %4357 = vmatpush1.msra.mxu0 %v3150
        %4358 = vmatprep.subr.mxu0 0.0
        %4359 = vmatpush1.msra.mxu0 %v3149
        %4360 = vmatprep.subr.mxu0 0.0
        %4361 = vmatpush1.msra.mxu0 %v3148
        %4362 = vmatprep.subr.mxu0 0.0
        %4363 = vmatpush1.msra.mxu0 %v3147
        %4364 = vmatprep.subr.mxu0 0.0
        %4365 = vmatpush1.msra.mxu0 %v3146
        %4366 = vmatprep.subr.mxu0 0.0
        %4367 = vmatpush1.msra.mxu0 %v3145
        %4368 = vmatprep.subr.mxu0 0.0
        %4369 = vmatpush1.msra.mxu0 %v3144
        %4370 = vmatprep.subr.mxu0 0.0
        %4371 = vmatpush1.msra.mxu0 %v3143
        %4372 = vmatprep.subr.mxu0 0.0
        %4373 = vmatpush1.msra.mxu0 %v3142
        %4374 = vmatprep.subr.mxu0 0.0
        %4375 = vmatpush1.msra.mxu0 %v3141
        %4376 = vmatprep.subr.mxu0 0.0
        %4377 = vmatpush1.msra.mxu0 %v3140
        %4378 = vmatprep.subr.mxu0 0.0
        %4379 = vmatpush1.msra.mxu0 %v3139
        %4380 = vmatprep.subr.mxu0 0.0
        %4381 = vmatpush1.msra.mxu0 %v3138
        %4382 = vmatprep.subr.mxu0 0.0
        %4383 = vmatpush2.msra.mxu0 0.0
        %4384 = vmatprep.subr.mxu0 0.0
        %4385 = vmatpush2.msra.mxu0 0.0
        %4386 = vmatprep.subr.mxu0 0.0
        %4387 = vmatpush2.msra.mxu0 0.0
        %4388 = vmatprep.subr.mxu0 0.0
        %4389 = vmatpush2.msra.mxu0 0.0
        %4390 = vmatprep.subr.mxu0 0.0
        %4391 = vmatpush2.msra.mxu0 0.0
        %4392 = vmatprep.subr.mxu0 0.0
        %4393 = vmatpush2.msra.mxu0 0.0
        %4394 = vmatprep.subr.mxu0 0.0
        %4395 = vmatpush2.msra.mxu0 0.0
        %4396 = vmatprep.subr.mxu0 0.0
        %4397 = vmatpush2.msra.mxu0 0.0
        %4398 = vmatprep.subr.mxu0 0.0
        %4399 = vmatpush2.msra.mxu0 0.0
        %4400 = vmatprep.subr.mxu0 0.0
        %4401 = vmatpush2.msra.mxu0 0.0
        %4402 = vmatprep.subr.mxu0 0.0
        %4403 = vmatpush2.msra.mxu0 0.0
        %4404 = vmatprep.subr.mxu0 0.0
        %4405 = vmatpush2.msra.mxu0 0.0
        %4406 = vmatprep.subr.mxu0 0.0
        %4407 = vmatpush2.msra.mxu0 0.0
        %4408 = vmatprep.subr.mxu0 0.0
        %4409 = vmatpush2.msra.mxu0 0.0
        %4410 = vmatprep.subr.mxu0 0.0
        %4411 = vmatpush2.msra.mxu0 0.0
        %4412 = vmatprep.subr.mxu0 0.0
        %4413 = vmatpush2.msra.mxu0 0.0
        %4414 = vmatprep.mubr.f32.mxu0 0.0
        %4415 = vmatmul.mubr.f32.gmra.mxu0 %v4347
        %v4416 = vpop.f32.mrf.mxu0
        %v4417 = vadd.f32 0.0, %v4416
        %v4418 = vpop.f32.mrf.mxu0
        %4419 = vdwg.mxu0
        %v4420 = vadd.f32 %v4276, %v4417
        %v4422 = vsel %vm3625, %v3172, 0
        %4424 = vmatprep.subr.mxu0 0.0
        %4425 = vmatpush1.msra.mxu0 0.0
        %4426 = vmatprep.subr.mxu0 0.0
        %4427 = vmatpush1.msra.mxu0 0.0
        %4428 = vmatprep.subr.mxu0 0.0
        %4429 = vmatpush1.msra.mxu0 0.0
        %4430 = vmatprep.subr.mxu0 0.0
        %4431 = vmatpush1.msra.mxu0 0.0
        %4432 = vmatprep.subr.mxu0 0.0
        %4433 = vmatpush1.msra.mxu0 0.0
        %4434 = vmatprep.subr.mxu0 0.0
        %4435 = vmatpush1.msra.mxu0 0.0
        %4436 = vmatprep.subr.mxu0 0.0
        %4437 = vmatpush1.msra.mxu0 0.0
        %4438 = vmatprep.subr.mxu0 0.0
        %4439 = vmatpush1.msra.mxu0 0.0
        %4440 = vmatprep.subr.mxu0 0.0
        %4441 = vmatpush1.msra.mxu0 0.0
        %4442 = vmatprep.subr.mxu0 0.0
        %4443 = vmatpush1.msra.mxu0 0.0
        %4444 = vmatprep.subr.mxu0 0.0
        %4445 = vmatpush1.msra.mxu0 0.0
        %4446 = vmatprep.subr.mxu0 0.0
        %4447 = vmatpush1.msra.mxu0 0.0
        %4448 = vmatprep.subr.mxu0 0.0
        %4449 = vmatpush1.msra.mxu0 0.0
        %4450 = vmatprep.subr.mxu0 0.0
        %4451 = vmatpush1.msra.mxu0 0.0
        %4452 = vmatprep.subr.mxu0 0.0
        %4453 = vmatpush1.msra.mxu0 %v4126
        %4454 = vmatprep.subr.mxu0 0.0
        %4455 = vmatpush1.msra.mxu0 %v4125
        %4456 = vmatprep.subr.mxu0 0.0
        %4457 = vmatpush2.msra.mxu0 0.0
        %4458 = vmatprep.subr.mxu0 0.0
        %4459 = vmatpush2.msra.mxu0 0.0
        %4460 = vmatprep.subr.mxu0 0.0
        %4461 = vmatpush2.msra.mxu0 0.0
        %4462 = vmatprep.subr.mxu0 0.0
        %4463 = vmatpush2.msra.mxu0 0.0
        %4464 = vmatprep.subr.mxu0 0.0
        %4465 = vmatpush2.msra.mxu0 0.0
        %4466 = vmatprep.subr.mxu0 0.0
        %4467 = vmatpush2.msra.mxu0 0.0
        %4468 = vmatprep.subr.mxu0 0.0
        %4469 = vmatpush2.msra.mxu0 0.0
        %4470 = vmatprep.subr.mxu0 0.0
        %4471 = vmatpush2.msra.mxu0 0.0
        %4472 = vmatprep.subr.mxu0 0.0
        %4473 = vmatpush2.msra.mxu0 0.0
        %4474 = vmatprep.subr.mxu0 0.0
        %4475 = vmatpush2.msra.mxu0 0.0
        %4476 = vmatprep.subr.mxu0 0.0
        %4477 = vmatpush2.msra.mxu0 0.0
        %4478 = vmatprep.subr.mxu0 0.0
        %4479 = vmatpush2.msra.mxu0 0.0
        %4480 = vmatprep.subr.mxu0 0.0
        %4481 = vmatpush2.msra.mxu0 0.0
        %4482 = vmatprep.subr.mxu0 0.0
        %4483 = vmatpush2.msra.mxu0 0.0
        %4484 = vmatprep.subr.mxu0 0.0
        %4485 = vmatpush2.msra.mxu0 0.0
        %4486 = vmatprep.subr.mxu0 0.0
        %4487 = vmatpush2.msra.mxu0 0.0
        %4488 = vmatprep.mubr.f32.mxu0 0.0
        %4489 = vmatmul.mubr.f32.gmra.mxu0 %v4422
        %v4490 = vpop.f32.mrf.mxu0
        %v4491 = vadd.f32 0.0, %v4490
        %v4492 = vpop.f32.mrf.mxu0
        %4493 = vdwg.mxu0
        %4494 = vmatprep.subr.mxu0 0.0
        %4495 = vmatpush1.msra.mxu0 %v3169
        %4496 = vmatprep.subr.mxu0 0.0
        %4497 = vmatpush1.msra.mxu0 %v3168
        %4498 = vmatprep.subr.mxu0 0.0
        %4499 = vmatpush1.msra.mxu0 %v3167
        %4500 = vmatprep.subr.mxu0 0.0
        %4501 = vmatpush1.msra.mxu0 %v3166
        %4502 = vmatprep.subr.mxu0 0.0
        %4503 = vmatpush1.msra.mxu0 %v3165
        %4504 = vmatprep.subr.mxu0 0.0
        %4505 = vmatpush1.msra.mxu0 %v3164
        %4506 = vmatprep.subr.mxu0 0.0
        %4507 = vmatpush1.msra.mxu0 %v3163
        %4508 = vmatprep.subr.mxu0 0.0
        %4509 = vmatpush1.msra.mxu0 %v3162
        %4510 = vmatprep.subr.mxu0 0.0
        %4511 = vmatpush1.msra.mxu0 %v3161
        %4512 = vmatprep.subr.mxu0 0.0
        %4513 = vmatpush1.msra.mxu0 %v3160
        %4514 = vmatprep.subr.mxu0 0.0
        %4515 = vmatpush1.msra.mxu0 %v3159
        %4516 = vmatprep.subr.mxu0 0.0
        %4517 = vmatpush1.msra.mxu0 %v3158
        %4518 = vmatprep.subr.mxu0 0.0
        %4519 = vmatpush1.msra.mxu0 %v3157
        %4520 = vmatprep.subr.mxu0 0.0
        %4521 = vmatpush1.msra.mxu0 %v3156
        %4522 = vmatprep.subr.mxu0 0.0
        %4523 = vmatpush1.msra.mxu0 %v3155
        %4524 = vmatprep.subr.mxu0 0.0
        %4525 = vmatpush1.msra.mxu0 %v3154
        %4526 = vmatprep.subr.mxu0 0.0
        %4527 = vmatpush2.msra.mxu0 0.0
        %4528 = vmatprep.subr.mxu0 0.0
        %4529 = vmatpush2.msra.mxu0 0.0
        %4530 = vmatprep.subr.mxu0 0.0
        %4531 = vmatpush2.msra.mxu0 0.0
        %4532 = vmatprep.subr.mxu0 0.0
        %4533 = vmatpush2.msra.mxu0 0.0
        %4534 = vmatprep.subr.mxu0 0.0
        %4535 = vmatpush2.msra.mxu0 0.0
        %4536 = vmatprep.subr.mxu0 0.0
        %4537 = vmatpush2.msra.mxu0 0.0
        %4538 = vmatprep.subr.mxu0 0.0
        %4539 = vmatpush2.msra.mxu0 0.0
        %4540 = vmatprep.subr.mxu0 0.0
        %4541 = vmatpush2.msra.mxu0 0.0
        %4542 = vmatprep.subr.mxu0 0.0
        %4543 = vmatpush2.msra.mxu0 0.0
        %4544 = vmatprep.subr.mxu0 0.0
        %4545 = vmatpush2.msra.mxu0 0.0
        %4546 = vmatprep.subr.mxu0 0.0
        %4547 = vmatpush2.msra.mxu0 0.0
        %4548 = vmatprep.subr.mxu0 0.0
        %4549 = vmatpush2.msra.mxu0 0.0
        %4550 = vmatprep.subr.mxu0 0.0
        %4551 = vmatpush2.msra.mxu0 0.0
        %4552 = vmatprep.subr.mxu0 0.0
        %4553 = vmatpush2.msra.mxu0 0.0
        %4554 = vmatprep.subr.mxu0 0.0
        %4555 = vmatpush2.msra.mxu0 0.0
        %4556 = vmatprep.subr.mxu0 0.0
        %4557 = vmatpush2.msra.mxu0 0.0
        %4558 = vmatprep.mubr.f32.mxu0 0.0
        %4559 = vmatmul.mubr.f32.gmra.mxu0 %v4491
        %v4560 = vpop.f32.mrf.mxu0
        %v4561 = vadd.f32 0.0, %v4560
        %v4562 = vpop.f32.mrf.mxu0
        %4563 = vdwg.mxu0
        %v4564 = vadd.f32 %v4420, %v4561
        %v4565 = vmax.f32 %v4564, 0.0
        %vm4566 = vcmask 64512
        %v4568 = vsel %vm4566, %v3222, 0
        %4570 = vmatprep.subr.mxu0 0.0
        %4571 = vmatpush1.msra.mxu0 0.0
        %4572 = vmatprep.subr.mxu0 0.0
        %4573 = vmatpush1.msra.mxu0 0.0
        %4574 = vmatprep.subr.mxu0 0.0
        %4575 = vmatpush1.msra.mxu0 0.0
        %4576 = vmatprep.subr.mxu0 0.0
        %4577 = vmatpush1.msra.mxu0 0.0
        %4578 = vmatprep.subr.mxu0 0.0
        %4579 = vmatpush1.msra.mxu0 0.0
        %4580 = vmatprep.subr.mxu0 0.0
        %4581 = vmatpush1.msra.mxu0 0.0
        %4582 = vmatprep.subr.mxu0 0.0
        %4583 = vmatpush1.msra.mxu0 0.0
        %4584 = vmatprep.subr.mxu0 0.0
        %4585 = vmatpush1.msra.mxu0 0.0
        %4586 = vmatprep.subr.mxu0 0.0
        %4587 = vmatpush1.msra.mxu0 0.0
        %4588 = vmatprep.subr.mxu0 0.0
        %4589 = vmatpush1.msra.mxu0 0.0
        %4590 = vmatprep.subr.mxu0 0.0
        %4591 = vmatpush1.msra.mxu0 0.0
        %4592 = vmatprep.subr.mxu0 0.0
        %4593 = vmatpush1.msra.mxu0 0.0
        %4594 = vmatprep.subr.mxu0 0.0
        %4595 = vmatpush1.msra.mxu0 0.0
        %4596 = vmatprep.subr.mxu0 0.0
        %4597 = vmatpush1.msra.mxu0 0.0
        %4598 = vmatprep.subr.mxu0 0.0
        %4599 = vmatpush1.msra.mxu0 0.0
        %4600 = vmatprep.subr.mxu0 0.0
        %4601 = vmatpush1.msra.mxu0 %v4565
        %4602 = vmatprep.subr.mxu0 0.0
        %4603 = vmatpush2.msra.mxu0 0.0
        %4604 = vmatprep.subr.mxu0 0.0
        %4605 = vmatpush2.msra.mxu0 0.0
        %4606 = vmatprep.subr.mxu0 0.0
        %4607 = vmatpush2.msra.mxu0 0.0
        %4608 = vmatprep.subr.mxu0 0.0
        %4609 = vmatpush2.msra.mxu0 0.0
        %4610 = vmatprep.subr.mxu0 0.0
        %4611 = vmatpush2.msra.mxu0 0.0
        %4612 = vmatprep.subr.mxu0 0.0
        %4613 = vmatpush2.msra.mxu0 0.0
        %4614 = vmatprep.subr.mxu0 0.0
        %4615 = vmatpush2.msra.mxu0 0.0
        %4616 = vmatprep.subr.mxu0 0.0
        %4617 = vmatpush2.msra.mxu0 0.0
        %4618 = vmatprep.subr.mxu0 0.0
        %4619 = vmatpush2.msra.mxu0 0.0
        %4620 = vmatprep.subr.mxu0 0.0
        %4621 = vmatpush2.msra.mxu0 0.0
        %4622 = vmatprep.subr.mxu0 0.0
        %4623 = vmatpush2.msra.mxu0 0.0
        %4624 = vmatprep.subr.mxu0 0.0
        %4625 = vmatpush2.msra.mxu0 0.0
        %4626 = vmatprep.subr.mxu0 0.0
        %4627 = vmatpush2.msra.mxu0 0.0
        %4628 = vmatprep.subr.mxu0 0.0
        %4629 = vmatpush2.msra.mxu0 0.0
        %4630 = vmatprep.subr.mxu0 0.0
        %4631 = vmatpush2.msra.mxu0 0.0
        %4632 = vmatprep.subr.mxu0 0.0
        %4633 = vmatpush2.msra.mxu0 0.0
        %4634 = vmatprep.mubr.f32.mxu0 0.0
        %4635 = vmatmul.mubr.f32.gmra.mxu0 %v4568
        %v4636 = vpop.f32.mrf.mxu0
        %v4637 = vadd.f32 0.0, %v4636
        %v4638 = vpop.f32.mrf.mxu0
        %4639 = vdwg.mxu0
        %4640 = vmatprep.subr.mxu0 0.0
        %4641 = vmatpush1.msra.mxu0 %v3189
        %4642 = vmatprep.subr.mxu0 0.0
        %4643 = vmatpush1.msra.mxu0 %v3188
        %4644 = vmatprep.subr.mxu0 0.0
        %4645 = vmatpush1.msra.mxu0 %v3187
        %4646 = vmatprep.subr.mxu0 0.0
        %4647 = vmatpush1.msra.mxu0 %v3186
        %4648 = vmatprep.subr.mxu0 0.0
        %4649 = vmatpush1.msra.mxu0 %v3185
        %4650 = vmatprep.subr.mxu0 0.0
        %4651 = vmatpush1.msra.mxu0 %v3184
        %4652 = vmatprep.subr.mxu0 0.0
        %4653 = vmatpush1.msra.mxu0 %v3183
        %4654 = vmatprep.subr.mxu0 0.0
        %4655 = vmatpush1.msra.mxu0 %v3182
        %4656 = vmatprep.subr.mxu0 0.0
        %4657 = vmatpush1.msra.mxu0 %v3181
        %4658 = vmatprep.subr.mxu0 0.0
        %4659 = vmatpush1.msra.mxu0 %v3180
        %4660 = vmatprep.subr.mxu0 0.0
        %4661 = vmatpush1.msra.mxu0 %v3179
        %4662 = vmatprep.subr.mxu0 0.0
        %4663 = vmatpush1.msra.mxu0 %v3178
        %4664 = vmatprep.subr.mxu0 0.0
        %4665 = vmatpush1.msra.mxu0 %v3177
        %4666 = vmatprep.subr.mxu0 0.0
        %4667 = vmatpush1.msra.mxu0 %v3176
        %4668 = vmatprep.subr.mxu0 0.0
        %4669 = vmatpush1.msra.mxu0 %v3175
        %4670 = vmatprep.subr.mxu0 0.0
        %4671 = vmatpush1.msra.mxu0 %v3174
        %4672 = vmatprep.subr.mxu0 0.0
        %4673 = vmatpush2.msra.mxu0 0.0
        %4674 = vmatprep.subr.mxu0 0.0
        %4675 = vmatpush2.msra.mxu0 0.0
        %4676 = vmatprep.subr.mxu0 0.0
        %4677 = vmatpush2.msra.mxu0 0.0
        %4678 = vmatprep.subr.mxu0 0.0
        %4679 = vmatpush2.msra.mxu0 0.0
        %4680 = vmatprep.subr.mxu0 0.0
        %4681 = vmatpush2.msra.mxu0 0.0
        %4682 = vmatprep.subr.mxu0 0.0
        %4683 = vmatpush2.msra.mxu0 0.0
        %4684 = vmatprep.subr.mxu0 0.0
        %4685 = vmatpush2.msra.mxu0 0.0
        %4686 = vmatprep.subr.mxu0 0.0
        %4687 = vmatpush2.msra.mxu0 0.0
        %4688 = vmatprep.subr.mxu0 0.0
        %4689 = vmatpush2.msra.mxu0 0.0
        %4690 = vmatprep.subr.mxu0 0.0
        %4691 = vmatpush2.msra.mxu0 0.0
        %4692 = vmatprep.subr.mxu0 0.0
        %4693 = vmatpush2.msra.mxu0 0.0
        %4694 = vmatprep.subr.mxu0 0.0
        %4695 = vmatpush2.msra.mxu0 0.0
        %4696 = vmatprep.subr.mxu0 0.0
        %4697 = vmatpush2.msra.mxu0 0.0
        %4698 = vmatprep.subr.mxu0 0.0
        %4699 = vmatpush2.msra.mxu0 0.0
        %4700 = vmatprep.subr.mxu0 0.0
        %4701 = vmatpush2.msra.mxu0 0.0
        %4702 = vmatprep.subr.mxu0 0.0
        %4703 = vmatpush2.msra.mxu0 0.0
        %4704 = vmatprep.mubr.f32.mxu0 0.0
        %4705 = vmatmul.mubr.f32.gmra.mxu0 %v4637
        %v4706 = vpop.f32.mrf.mxu0
        %v4707 = vadd.f32 0.0, %v4706
        %v4708 = vpop.f32.mrf.mxu0
        %4709 = vdwg.mxu0
        %v4711 = vlaneseq
        %v4712 = vshrl.u32 %v4711, 7
        %v4713 = vsub.s32 0, %v4712
        %v4714 = vrot.slane %v3173, %v4713
        %v4716 = vadd.f32 %v4714, %v4707
        %v4718 = vsel %vm4566, %v3223, 0
        %4720 = vmatprep.subr.mxu0 0.0
        %4721 = vmatpush1.msra.mxu0 0.0
        %4722 = vmatprep.subr.mxu0 0.0
        %4723 = vmatpush1.msra.mxu0 0.0
        %4724 = vmatprep.subr.mxu0 0.0
        %4725 = vmatpush1.msra.mxu0 0.0
        %4726 = vmatprep.subr.mxu0 0.0
        %4727 = vmatpush1.msra.mxu0 0.0
        %4728 = vmatprep.subr.mxu0 0.0
        %4729 = vmatpush1.msra.mxu0 0.0
        %4730 = vmatprep.subr.mxu0 0.0
        %4731 = vmatpush1.msra.mxu0 0.0
        %4732 = vmatprep.subr.mxu0 0.0
        %4733 = vmatpush1.msra.mxu0 0.0
        %4734 = vmatprep.subr.mxu0 0.0
        %4735 = vmatpush1.msra.mxu0 0.0
        %4736 = vmatprep.subr.mxu0 0.0
        %4737 = vmatpush1.msra.mxu0 0.0
        %4738 = vmatprep.subr.mxu0 0.0
        %4739 = vmatpush1.msra.mxu0 0.0
        %4740 = vmatprep.subr.mxu0 0.0
        %4741 = vmatpush1.msra.mxu0 0.0
        %4742 = vmatprep.subr.mxu0 0.0
        %4743 = vmatpush1.msra.mxu0 0.0
        %4744 = vmatprep.subr.mxu0 0.0
        %4745 = vmatpush1.msra.mxu0 0.0
        %4746 = vmatprep.subr.mxu0 0.0
        %4747 = vmatpush1.msra.mxu0 0.0
        %4748 = vmatprep.subr.mxu0 0.0
        %4749 = vmatpush1.msra.mxu0 0.0
        %4750 = vmatprep.subr.mxu0 0.0
        %4751 = vmatpush1.msra.mxu0 %v4565
        %4752 = vmatprep.subr.mxu0 0.0
        %4753 = vmatpush2.msra.mxu0 0.0
        %4754 = vmatprep.subr.mxu0 0.0
        %4755 = vmatpush2.msra.mxu0 0.0
        %4756 = vmatprep.subr.mxu0 0.0
        %4757 = vmatpush2.msra.mxu0 0.0
        %4758 = vmatprep.subr.mxu0 0.0
        %4759 = vmatpush2.msra.mxu0 0.0
        %4760 = vmatprep.subr.mxu0 0.0
        %4761 = vmatpush2.msra.mxu0 0.0
        %4762 = vmatprep.subr.mxu0 0.0
        %4763 = vmatpush2.msra.mxu0 0.0
        %4764 = vmatprep.subr.mxu0 0.0
        %4765 = vmatpush2.msra.mxu0 0.0
        %4766 = vmatprep.subr.mxu0 0.0
        %4767 = vmatpush2.msra.mxu0 0.0
        %4768 = vmatprep.subr.mxu0 0.0
        %4769 = vmatpush2.msra.mxu0 0.0
        %4770 = vmatprep.subr.mxu0 0.0
        %4771 = vmatpush2.msra.mxu0 0.0
        %4772 = vmatprep.subr.mxu0 0.0
        %4773 = vmatpush2.msra.mxu0 0.0
        %4774 = vmatprep.subr.mxu0 0.0
        %4775 = vmatpush2.msra.mxu0 0.0
        %4776 = vmatprep.subr.mxu0 0.0
        %4777 = vmatpush2.msra.mxu0 0.0
        %4778 = vmatprep.subr.mxu0 0.0
        %4779 = vmatpush2.msra.mxu0 0.0
        %4780 = vmatprep.subr.mxu0 0.0
        %4781 = vmatpush2.msra.mxu0 0.0
        %4782 = vmatprep.subr.mxu0 0.0
        %4783 = vmatpush2.msra.mxu0 0.0
        %4784 = vmatprep.mubr.f32.mxu0 0.0
        %4785 = vmatmul.mubr.f32.gmra.mxu0 %v4718
        %v4786 = vpop.f32.mrf.mxu0
        %v4787 = vadd.f32 0.0, %v4786
        %v4788 = vpop.f32.mrf.mxu0
        %4789 = vdwg.mxu0
        %4790 = vmatprep.subr.mxu0 0.0
        %4791 = vmatpush1.msra.mxu0 %v3205
        %4792 = vmatprep.subr.mxu0 0.0
        %4793 = vmatpush1.msra.mxu0 %v3204
        %4794 = vmatprep.subr.mxu0 0.0
        %4795 = vmatpush1.msra.mxu0 %v3203
        %4796 = vmatprep.subr.mxu0 0.0
        %4797 = vmatpush1.msra.mxu0 %v3202
        %4798 = vmatprep.subr.mxu0 0.0
        %4799 = vmatpush1.msra.mxu0 %v3201
        %4800 = vmatprep.subr.mxu0 0.0
        %4801 = vmatpush1.msra.mxu0 %v3200
        %4802 = vmatprep.subr.mxu0 0.0
        %4803 = vmatpush1.msra.mxu0 %v3199
        %4804 = vmatprep.subr.mxu0 0.0
        %4805 = vmatpush1.msra.mxu0 %v3198
        %4806 = vmatprep.subr.mxu0 0.0
        %4807 = vmatpush1.msra.mxu0 %v3197
        %4808 = vmatprep.subr.mxu0 0.0
        %4809 = vmatpush1.msra.mxu0 %v3196
        %4810 = vmatprep.subr.mxu0 0.0
        %4811 = vmatpush1.msra.mxu0 %v3195
        %4812 = vmatprep.subr.mxu0 0.0
        %4813 = vmatpush1.msra.mxu0 %v3194
        %4814 = vmatprep.subr.mxu0 0.0
        %4815 = vmatpush1.msra.mxu0 %v3193
        %4816 = vmatprep.subr.mxu0 0.0
        %4817 = vmatpush1.msra.mxu0 %v3192
        %4818 = vmatprep.subr.mxu0 0.0
        %4819 = vmatpush1.msra.mxu0 %v3191
        %4820 = vmatprep.subr.mxu0 0.0
        %4821 = vmatpush1.msra.mxu0 %v3190
        %4822 = vmatprep.subr.mxu0 0.0
        %4823 = vmatpush2.msra.mxu0 0.0
        %4824 = vmatprep.subr.mxu0 0.0
        %4825 = vmatpush2.msra.mxu0 0.0
        %4826 = vmatprep.subr.mxu0 0.0
        %4827 = vmatpush2.msra.mxu0 0.0
        %4828 = vmatprep.subr.mxu0 0.0
        %4829 = vmatpush2.msra.mxu0 0.0
        %4830 = vmatprep.subr.mxu0 0.0
        %4831 = vmatpush2.msra.mxu0 0.0
        %4832 = vmatprep.subr.mxu0 0.0
        %4833 = vmatpush2.msra.mxu0 0.0
        %4834 = vmatprep.subr.mxu0 0.0
        %4835 = vmatpush2.msra.mxu0 0.0
        %4836 = vmatprep.subr.mxu0 0.0
        %4837 = vmatpush2.msra.mxu0 0.0
        %4838 = vmatprep.subr.mxu0 0.0
        %4839 = vmatpush2.msra.mxu0 0.0
        %4840 = vmatprep.subr.mxu0 0.0
        %4841 = vmatpush2.msra.mxu0 0.0
        %4842 = vmatprep.subr.mxu0 0.0
        %4843 = vmatpush2.msra.mxu0 0.0
        %4844 = vmatprep.subr.mxu0 0.0
        %4845 = vmatpush2.msra.mxu0 0.0
        %4846 = vmatprep.subr.mxu0 0.0
        %4847 = vmatpush2.msra.mxu0 0.0
        %4848 = vmatprep.subr.mxu0 0.0
        %4849 = vmatpush2.msra.mxu0 0.0
        %4850 = vmatprep.subr.mxu0 0.0
        %4851 = vmatpush2.msra.mxu0 0.0
        %4852 = vmatprep.subr.mxu0 0.0
        %4853 = vmatpush2.msra.mxu0 0.0
        %4854 = vmatprep.mubr.f32.mxu0 0.0
        %4855 = vmatmul.mubr.f32.gmra.mxu0 %v4787
        %v4856 = vpop.f32.mrf.mxu0
        %v4857 = vadd.f32 0.0, %v4856
        %v4858 = vpop.f32.mrf.mxu0
        %4859 = vdwg.mxu0
        %v4860 = vadd.f32 %v4716, %v4857
        %v4862 = vsel %vm4566, %v3224, 0
        %4864 = vmatprep.subr.mxu0 0.0
        %4865 = vmatpush1.msra.mxu0 0.0
        %4866 = vmatprep.subr.mxu0 0.0
        %4867 = vmatpush1.msra.mxu0 0.0
        %4868 = vmatprep.subr.mxu0 0.0
        %4869 = vmatpush1.msra.mxu0 0.0
        %4870 = vmatprep.subr.mxu0 0.0
        %4871 = vmatpush1.msra.mxu0 0.0
        %4872 = vmatprep.subr.mxu0 0.0
        %4873 = vmatpush1.msra.mxu0 0.0
        %4874 = vmatprep.subr.mxu0 0.0
        %4875 = vmatpush1.msra.mxu0 0.0
        %4876 = vmatprep.subr.mxu0 0.0
        %4877 = vmatpush1.msra.mxu0 0.0
        %4878 = vmatprep.subr.mxu0 0.0
        %4879 = vmatpush1.msra.mxu0 0.0
        %4880 = vmatprep.subr.mxu0 0.0
        %4881 = vmatpush1.msra.mxu0 0.0
        %4882 = vmatprep.subr.mxu0 0.0
        %4883 = vmatpush1.msra.mxu0 0.0
        %4884 = vmatprep.subr.mxu0 0.0
        %4885 = vmatpush1.msra.mxu0 0.0
        %4886 = vmatprep.subr.mxu0 0.0
        %4887 = vmatpush1.msra.mxu0 0.0
        %4888 = vmatprep.subr.mxu0 0.0
        %4889 = vmatpush1.msra.mxu0 0.0
        %4890 = vmatprep.subr.mxu0 0.0
        %4891 = vmatpush1.msra.mxu0 0.0
        %4892 = vmatprep.subr.mxu0 0.0
        %4893 = vmatpush1.msra.mxu0 0.0
        %4894 = vmatprep.subr.mxu0 0.0
        %4895 = vmatpush1.msra.mxu0 %v4565
        %4896 = vmatprep.subr.mxu0 0.0
        %4897 = vmatpush2.msra.mxu0 0.0
        %4898 = vmatprep.subr.mxu0 0.0
        %4899 = vmatpush2.msra.mxu0 0.0
        %4900 = vmatprep.subr.mxu0 0.0
        %4901 = vmatpush2.msra.mxu0 0.0
        %4902 = vmatprep.subr.mxu0 0.0
        %4903 = vmatpush2.msra.mxu0 0.0
        %4904 = vmatprep.subr.mxu0 0.0
        %4905 = vmatpush2.msra.mxu0 0.0
        %4906 = vmatprep.subr.mxu0 0.0
        %4907 = vmatpush2.msra.mxu0 0.0
        %4908 = vmatprep.subr.mxu0 0.0
        %4909 = vmatpush2.msra.mxu0 0.0
        %4910 = vmatprep.subr.mxu0 0.0
        %4911 = vmatpush2.msra.mxu0 0.0
        %4912 = vmatprep.subr.mxu0 0.0
        %4913 = vmatpush2.msra.mxu0 0.0
        %4914 = vmatprep.subr.mxu0 0.0
        %4915 = vmatpush2.msra.mxu0 0.0
        %4916 = vmatprep.subr.mxu0 0.0
        %4917 = vmatpush2.msra.mxu0 0.0
        %4918 = vmatprep.subr.mxu0 0.0
        %4919 = vmatpush2.msra.mxu0 0.0
        %4920 = vmatprep.subr.mxu0 0.0
        %4921 = vmatpush2.msra.mxu0 0.0
        %4922 = vmatprep.subr.mxu0 0.0
        %4923 = vmatpush2.msra.mxu0 0.0
        %4924 = vmatprep.subr.mxu0 0.0
        %4925 = vmatpush2.msra.mxu0 0.0
        %4926 = vmatprep.subr.mxu0 0.0
        %4927 = vmatpush2.msra.mxu0 0.0
        %4928 = vmatprep.mubr.f32.mxu0 0.0
        %4929 = vmatmul.mubr.f32.gmra.mxu0 %v4862
        %v4930 = vpop.f32.mrf.mxu0
        %v4931 = vadd.f32 0.0, %v4930
        %v4932 = vpop.f32.mrf.mxu0
        %4933 = vdwg.mxu0
        %4934 = vmatprep.subr.mxu0 0.0
        %4935 = vmatpush1.msra.mxu0 %v3221
        %4936 = vmatprep.subr.mxu0 0.0
        %4937 = vmatpush1.msra.mxu0 %v3220
        %4938 = vmatprep.subr.mxu0 0.0
        %4939 = vmatpush1.msra.mxu0 %v3219
        %4940 = vmatprep.subr.mxu0 0.0
        %4941 = vmatpush1.msra.mxu0 %v3218
        %4942 = vmatprep.subr.mxu0 0.0
        %4943 = vmatpush1.msra.mxu0 %v3217
        %4944 = vmatprep.subr.mxu0 0.0
        %4945 = vmatpush1.msra.mxu0 %v3216
        %4946 = vmatprep.subr.mxu0 0.0
        %4947 = vmatpush1.msra.mxu0 %v3215
        %4948 = vmatprep.subr.mxu0 0.0
        %4949 = vmatpush1.msra.mxu0 %v3214
        %4950 = vmatprep.subr.mxu0 0.0
        %4951 = vmatpush1.msra.mxu0 %v3213
        %4952 = vmatprep.subr.mxu0 0.0
        %4953 = vmatpush1.msra.mxu0 %v3212
        %4954 = vmatprep.subr.mxu0 0.0
        %4955 = vmatpush1.msra.mxu0 %v3211
        %4956 = vmatprep.subr.mxu0 0.0
        %4957 = vmatpush1.msra.mxu0 %v3210
        %4958 = vmatprep.subr.mxu0 0.0
        %4959 = vmatpush1.msra.mxu0 %v3209
        %4960 = vmatprep.subr.mxu0 0.0
        %4961 = vmatpush1.msra.mxu0 %v3208
        %4962 = vmatprep.subr.mxu0 0.0
        %4963 = vmatpush1.msra.mxu0 %v3207
        %4964 = vmatprep.subr.mxu0 0.0
        %4965 = vmatpush1.msra.mxu0 %v3206
        %4966 = vmatprep.subr.mxu0 0.0
        %4967 = vmatpush2.msra.mxu0 0.0
        %4968 = vmatprep.subr.mxu0 0.0
        %4969 = vmatpush2.msra.mxu0 0.0
        %4970 = vmatprep.subr.mxu0 0.0
        %4971 = vmatpush2.msra.mxu0 0.0
        %4972 = vmatprep.subr.mxu0 0.0
        %4973 = vmatpush2.msra.mxu0 0.0
        %4974 = vmatprep.subr.mxu0 0.0
        %4975 = vmatpush2.msra.mxu0 0.0
        %4976 = vmatprep.subr.mxu0 0.0
        %4977 = vmatpush2.msra.mxu0 0.0
        %4978 = vmatprep.subr.mxu0 0.0
        %4979 = vmatpush2.msra.mxu0 0.0
        %4980 = vmatprep.subr.mxu0 0.0
        %4981 = vmatpush2.msra.mxu0 0.0
        %4982 = vmatprep.subr.mxu0 0.0
        %4983 = vmatpush2.msra.mxu0 0.0
        %4984 = vmatprep.subr.mxu0 0.0
        %4985 = vmatpush2.msra.mxu0 0.0
        %4986 = vmatprep.subr.mxu0 0.0
        %4987 = vmatpush2.msra.mxu0 0.0
        %4988 = vmatprep.subr.mxu0 0.0
        %4989 = vmatpush2.msra.mxu0 0.0
        %4990 = vmatprep.subr.mxu0 0.0
        %4991 = vmatpush2.msra.mxu0 0.0
        %4992 = vmatprep.subr.mxu0 0.0
        %4993 = vmatpush2.msra.mxu0 0.0
        %4994 = vmatprep.subr.mxu0 0.0
        %4995 = vmatpush2.msra.mxu0 0.0
        %4996 = vmatprep.subr.mxu0 0.0
        %4997 = vmatpush2.msra.mxu0 0.0
        %4998 = vmatprep.mubr.f32.mxu0 0.0
        %4999 = vmatmul.mubr.f32.gmra.mxu0 %v4931
        %v5000 = vpop.f32.mrf.mxu0
        %v5001 = vadd.f32 0.0, %v5000
        %v5002 = vpop.f32.mrf.mxu0
        %5003 = vdwg.mxu0
        %v5004 = vadd.f32 %v4860, %v5001
        %v5005 = vmax.f32 %v5004, 0.0
        %v5007 = vlaneseq
        %v5008 = vshrl.u32 %v5007, 7
        %v5009 = vsub.s32 0, %v5008
        %v5010 = vrot.slane %v3275, %v5009
        %5012 = vmatprep.subr.mxu0 0.0
        %5013 = vmatpush1.msra.mxu0 %v3291
        %5014 = vmatprep.subr.mxu0 0.0
        %5015 = vmatpush1.msra.mxu0 %v3290
        %5016 = vmatprep.subr.mxu0 0.0
        %5017 = vmatpush1.msra.mxu0 %v3289
        %5018 = vmatprep.subr.mxu0 0.0
        %5019 = vmatpush1.msra.mxu0 %v3288
        %5020 = vmatprep.subr.mxu0 0.0
        %5021 = vmatpush1.msra.mxu0 %v3287
        %5022 = vmatprep.subr.mxu0 0.0
        %5023 = vmatpush1.msra.mxu0 %v3286
        %5024 = vmatprep.subr.mxu0 0.0
        %5025 = vmatpush1.msra.mxu0 %v3285
        %5026 = vmatprep.subr.mxu0 0.0
        %5027 = vmatpush1.msra.mxu0 %v3284
        %5028 = vmatprep.subr.mxu0 0.0
        %5029 = vmatpush1.msra.mxu0 %v3283
        %5030 = vmatprep.subr.mxu0 0.0
        %5031 = vmatpush1.msra.mxu0 %v3282
        %5032 = vmatprep.subr.mxu0 0.0
        %5033 = vmatpush1.msra.mxu0 %v3281
        %5034 = vmatprep.subr.mxu0 0.0
        %5035 = vmatpush1.msra.mxu0 %v3280
        %5036 = vmatprep.subr.mxu0 0.0
        %5037 = vmatpush1.msra.mxu0 %v3279
        %5038 = vmatprep.subr.mxu0 0.0
        %5039 = vmatpush1.msra.mxu0 %v3278
        %5040 = vmatprep.subr.mxu0 0.0
        %5041 = vmatpush1.msra.mxu0 %v3277
        %5042 = vmatprep.subr.mxu0 0.0
        %5043 = vmatpush1.msra.mxu0 %v3276
        %5044 = vmatprep.subr.mxu0 0.0
        %5045 = vmatpush2.msra.mxu0 0.0
        %5046 = vmatprep.subr.mxu0 0.0
        %5047 = vmatpush2.msra.mxu0 0.0
        %5048 = vmatprep.subr.mxu0 0.0
        %5049 = vmatpush2.msra.mxu0 0.0
        %5050 = vmatprep.subr.mxu0 0.0
        %5051 = vmatpush2.msra.mxu0 0.0
        %5052 = vmatprep.subr.mxu0 0.0
        %5053 = vmatpush2.msra.mxu0 0.0
        %5054 = vmatprep.subr.mxu0 0.0
        %5055 = vmatpush2.msra.mxu0 0.0
        %5056 = vmatprep.subr.mxu0 0.0
        %5057 = vmatpush2.msra.mxu0 0.0
        %5058 = vmatprep.subr.mxu0 0.0
        %5059 = vmatpush2.msra.mxu0 0.0
        %5060 = vmatprep.subr.mxu0 0.0
        %5061 = vmatpush2.msra.mxu0 0.0
        %5062 = vmatprep.subr.mxu0 0.0
        %5063 = vmatpush2.msra.mxu0 0.0
        %5064 = vmatprep.subr.mxu0 0.0
        %5065 = vmatpush2.msra.mxu0 0.0
        %5066 = vmatprep.subr.mxu0 0.0
        %5067 = vmatpush2.msra.mxu0 0.0
        %5068 = vmatprep.subr.mxu0 0.0
        %5069 = vmatpush2.msra.mxu0 0.0
        %5070 = vmatprep.subr.mxu0 0.0
        %5071 = vmatpush2.msra.mxu0 0.0
        %5072 = vmatprep.subr.mxu0 0.0
        %5073 = vmatpush2.msra.mxu0 0.0
        %5074 = vmatprep.subr.mxu0 0.0
        %5075 = vmatpush2.msra.mxu0 0.0
        %5076 = vmatprep.mubr.f32.mxu0 0.0
        %5077 = vmatmul.mubr.f32.gmra.mxu0 %v5005
        %v5078 = vpop.f32.mrf.mxu0
        %v5079 = vadd.f32 %v5010, %v5078
        %v5080 = vpop.f32.mrf.mxu0
        %5081 = vdwg.mxu0
        %vm5082 = vcmask 519168
        %v5083 = vsel %vm5082, %v5079, 0.0
        %v5084 = vrot.slane %v5083, 4
        %v5085 = vadd.f32 %v5083, %v5084
        %v5086 = vrot.slane %v5085, 2
        %v5087 = vadd.f32 %v5085, %v5086
        %v5088 = vrot.slane %v5087, 1
        %v5089 = vadd.f32 %v5087, %v5088
        %vm5090 = vcmask 523264
        %v5092 = vsel %vm5090, %v5089, 0
        %5094 = vmatprep.subr.mxu0 0.0
        %5095 = vmatpush1.msra.mxu0 0.0
        %5096 = vmatprep.subr.mxu0 0.0
        %5097 = vmatpush1.msra.mxu0 0.0
        %5098 = vmatprep.subr.mxu0 0.0
        %5099 = vmatpush1.msra.mxu0 0.0
        %5100 = vmatprep.subr.mxu0 0.0
        %5101 = vmatpush1.msra.mxu0 0.0
        %5102 = vmatprep.subr.mxu0 0.0
        %5103 = vmatpush1.msra.mxu0 0.0
        %5104 = vmatprep.subr.mxu0 0.0
        %5105 = vmatpush1.msra.mxu0 0.0
        %5106 = vmatprep.subr.mxu0 0.0
        %5107 = vmatpush1.msra.mxu0 0.0
        %5108 = vmatprep.subr.mxu0 0.0
        %5109 = vmatpush1.msra.mxu0 0.0
        %5110 = vmatprep.subr.mxu0 0.0
        %5111 = vmatpush1.msra.mxu0 %v3090
        %5112 = vmatprep.subr.mxu0 0.0
        %5113 = vmatpush1.msra.mxu0 %v3089
        %5114 = vmatprep.subr.mxu0 0.0
        %5115 = vmatpush1.msra.mxu0 %v3088
        %5116 = vmatprep.subr.mxu0 0.0
        %5117 = vmatpush1.msra.mxu0 %v3087
        %5118 = vmatprep.subr.mxu0 0.0
        %5119 = vmatpush1.msra.mxu0 %v3086
        %5120 = vmatprep.subr.mxu0 0.0
        %5121 = vmatpush1.msra.mxu0 %v3085
        %5122 = vmatprep.subr.mxu0 0.0
        %5123 = vmatpush1.msra.mxu0 %v3084
        %5124 = vmatprep.subr.mxu0 0.0
        %5125 = vmatpush1.msra.mxu0 %v3083
        %5126 = vmatprep.subr.mxu0 0.0
        %5127 = vmatpush2.msra.mxu0 0.0
        %5128 = vmatprep.subr.mxu0 0.0
        %5129 = vmatpush2.msra.mxu0 0.0
        %5130 = vmatprep.subr.mxu0 0.0
        %5131 = vmatpush2.msra.mxu0 0.0
        %5132 = vmatprep.subr.mxu0 0.0
        %5133 = vmatpush2.msra.mxu0 0.0
        %5134 = vmatprep.subr.mxu0 0.0
        %5135 = vmatpush2.msra.mxu0 0.0
        %5136 = vmatprep.subr.mxu0 0.0
        %5137 = vmatpush2.msra.mxu0 0.0
        %5138 = vmatprep.subr.mxu0 0.0
        %5139 = vmatpush2.msra.mxu0 0.0
        %5140 = vmatprep.subr.mxu0 0.0
        %5141 = vmatpush2.msra.mxu0 0.0
        %5142 = vmatprep.subr.mxu0 0.0
        %5143 = vmatpush2.msra.mxu0 0.0
        %5144 = vmatprep.subr.mxu0 0.0
        %5145 = vmatpush2.msra.mxu0 0.0
        %5146 = vmatprep.subr.mxu0 0.0
        %5147 = vmatpush2.msra.mxu0 0.0
        %5148 = vmatprep.subr.mxu0 0.0
        %5149 = vmatpush2.msra.mxu0 0.0
        %5150 = vmatprep.subr.mxu0 0.0
        %5151 = vmatpush2.msra.mxu0 0.0
        %5152 = vmatprep.subr.mxu0 0.0
        %5153 = vmatpush2.msra.mxu0 0.0
        %5154 = vmatprep.subr.mxu0 0.0
        %5155 = vmatpush2.msra.mxu0 0.0
        %5156 = vmatprep.subr.mxu0 0.0
        %5157 = vmatpush2.msra.mxu0 0.0
        %5158 = vmatprep.mubr.f32.mxu0 0.0
        %5159 = vmatmul.mubr.f32.gmra.mxu0 %v5092
        %v5160 = vpop.f32.mrf.mxu0
        %v5161 = vadd.f32 0.0, %v5160
        %v5162 = vpop.f32.mrf.mxu0
        %5163 = vdwg.mxu0
        %v5165 = vsel %vm3625, %v5161, 0
        %5167 = vmatprep.subr.mxu0 0.0
        %5168 = vmatpush1.msra.mxu0 0.0
        %5169 = vmatprep.subr.mxu0 0.0
        %5170 = vmatpush1.msra.mxu0 0.0
        %5171 = vmatprep.subr.mxu0 0.0
        %5172 = vmatpush1.msra.mxu0 0.0
        %5173 = vmatprep.subr.mxu0 0.0
        %5174 = vmatpush1.msra.mxu0 0.0
        %5175 = vmatprep.subr.mxu0 0.0
        %5176 = vmatpush1.msra.mxu0 0.0
        %5177 = vmatprep.subr.mxu0 0.0
        %5178 = vmatpush1.msra.mxu0 0.0
        %5179 = vmatprep.subr.mxu0 0.0
        %5180 = vmatpush1.msra.mxu0 0.0
        %5181 = vmatprep.subr.mxu0 0.0
        %5182 = vmatpush1.msra.mxu0 0.0
        %5183 = vmatprep.subr.mxu0 0.0
        %5184 = vmatpush1.msra.mxu0 0.0
        %5185 = vmatprep.subr.mxu0 0.0
        %5186 = vmatpush1.msra.mxu0 0.0
        %5187 = vmatprep.subr.mxu0 0.0
        %5188 = vmatpush1.msra.mxu0 0.0
        %5189 = vmatprep.subr.mxu0 0.0
        %5190 = vmatpush1.msra.mxu0 0.0
        %5191 = vmatprep.subr.mxu0 0.0
        %5192 = vmatpush1.msra.mxu0 0.0
        %5193 = vmatprep.subr.mxu0 0.0
        %5194 = vmatpush1.msra.mxu0 0.0
        %5195 = vmatprep.subr.mxu0 0.0
        %5196 = vmatpush1.msra.mxu0 %v3094
        %5197 = vmatprep.subr.mxu0 0.0
        %5198 = vmatpush1.msra.mxu0 %v3093
        %5199 = vmatprep.subr.mxu0 0.0
        %5200 = vmatpush2.msra.mxu0 0.0
        %5201 = vmatprep.subr.mxu0 0.0
        %5202 = vmatpush2.msra.mxu0 0.0
        %5203 = vmatprep.subr.mxu0 0.0
        %5204 = vmatpush2.msra.mxu0 0.0
        %5205 = vmatprep.subr.mxu0 0.0
        %5206 = vmatpush2.msra.mxu0 0.0
        %5207 = vmatprep.subr.mxu0 0.0
        %5208 = vmatpush2.msra.mxu0 0.0
        %5209 = vmatprep.subr.mxu0 0.0
        %5210 = vmatpush2.msra.mxu0 0.0
        %5211 = vmatprep.subr.mxu0 0.0
        %5212 = vmatpush2.msra.mxu0 0.0
        %5213 = vmatprep.subr.mxu0 0.0
        %5214 = vmatpush2.msra.mxu0 0.0
        %5215 = vmatprep.subr.mxu0 0.0
        %5216 = vmatpush2.msra.mxu0 0.0
        %5217 = vmatprep.subr.mxu0 0.0
        %5218 = vmatpush2.msra.mxu0 0.0
        %5219 = vmatprep.subr.mxu0 0.0
        %5220 = vmatpush2.msra.mxu0 0.0
        %5221 = vmatprep.subr.mxu0 0.0
        %5222 = vmatpush2.msra.mxu0 0.0
        %5223 = vmatprep.subr.mxu0 0.0
        %5224 = vmatpush2.msra.mxu0 0.0
        %5225 = vmatprep.subr.mxu0 0.0
        %5226 = vmatpush2.msra.mxu0 0.0
        %5227 = vmatprep.subr.mxu0 0.0
        %5228 = vmatpush2.msra.mxu0 0.0
        %5229 = vmatprep.subr.mxu0 0.0
        %5230 = vmatpush2.msra.mxu0 0.0
        %5231 = vmatprep.mubr.f32.mxu0 0.0
        %5232 = vmatmul.mubr.f32.gmra.mxu0 %v5165
        %v5233 = vpop.f32.mrf.mxu0
        %v5234 = vadd.f32 %v3081, %v5233
        %v5235 = vpop.f32.mrf.mxu0
        %5236 = vdwg.mxu0
        %v5237 = vmax.f32 %v5234, 0.0
        %vm5238 = vcmask 31744
        %v5240 = vsel %vm5238, %v5237, 0
        %vm5242 = vcmask 1043456
        %v5244 = vsel %vm5242, %v3095, 0
        %5246 = vmatprep.subr.mxu0 0.0
        %5247 = vmatpush1.msra.mxu0 0.0
        %5248 = vmatprep.subr.mxu0 0.0
        %5249 = vmatpush1.msra.mxu0 0.0
        %5250 = vmatprep.subr.mxu0 0.0
        %5251 = vmatpush1.msra.mxu0 0.0
        %5252 = vmatprep.subr.mxu0 0.0
        %5253 = vmatpush1.msra.mxu0 0.0
        %5254 = vmatprep.subr.mxu0 0.0
        %5255 = vmatpush1.msra.mxu0 0.0
        %5256 = vmatprep.subr.mxu0 0.0
        %5257 = vmatpush1.msra.mxu0 0.0
        %5258 = vmatprep.subr.mxu0 0.0
        %5259 = vmatpush1.msra.mxu0 0.0
        %5260 = vmatprep.subr.mxu0 0.0
        %5261 = vmatpush1.msra.mxu0 0.0
        %5262 = vmatprep.subr.mxu0 0.0
        %5263 = vmatpush1.msra.mxu0 0.0
        %5264 = vmatprep.subr.mxu0 0.0
        %5265 = vmatpush1.msra.mxu0 0.0
        %5266 = vmatprep.subr.mxu0 0.0
        %5267 = vmatpush1.msra.mxu0 0.0
        %5268 = vmatprep.subr.mxu0 0.0
        %5269 = vmatpush1.msra.mxu0 0.0
        %5270 = vmatprep.subr.mxu0 0.0
        %5271 = vmatpush1.msra.mxu0 0.0
        %5272 = vmatprep.subr.mxu0 0.0
        %5273 = vmatpush1.msra.mxu0 0.0
        %5274 = vmatprep.subr.mxu0 0.0
        %5275 = vmatpush1.msra.mxu0 0.0
        %5276 = vmatprep.subr.mxu0 0.0
        %5277 = vmatpush1.msra.mxu0 %v5244
        %5278 = vmatprep.subr.mxu0 0.0
        %5279 = vmatpush2.msra.mxu0 0.0
        %5280 = vmatprep.subr.mxu0 0.0
        %5281 = vmatpush2.msra.mxu0 0.0
        %5282 = vmatprep.subr.mxu0 0.0
        %5283 = vmatpush2.msra.mxu0 0.0
        %5284 = vmatprep.subr.mxu0 0.0
        %5285 = vmatpush2.msra.mxu0 0.0
        %5286 = vmatprep.subr.mxu0 0.0
        %5287 = vmatpush2.msra.mxu0 0.0
        %5288 = vmatprep.subr.mxu0 0.0
        %5289 = vmatpush2.msra.mxu0 0.0
        %5290 = vmatprep.subr.mxu0 0.0
        %5291 = vmatpush2.msra.mxu0 0.0
        %5292 = vmatprep.subr.mxu0 0.0
        %5293 = vmatpush2.msra.mxu0 0.0
        %5294 = vmatprep.subr.mxu0 0.0
        %5295 = vmatpush2.msra.mxu0 0.0
        %5296 = vmatprep.subr.mxu0 0.0
        %5297 = vmatpush2.msra.mxu0 0.0
        %5298 = vmatprep.subr.mxu0 0.0
        %5299 = vmatpush2.msra.mxu0 0.0
        %5300 = vmatprep.subr.mxu0 0.0
        %5301 = vmatpush2.msra.mxu0 0.0
        %5302 = vmatprep.subr.mxu0 0.0
        %5303 = vmatpush2.msra.mxu0 0.0
        %5304 = vmatprep.subr.mxu0 0.0
        %5305 = vmatpush2.msra.mxu0 0.0
        %5306 = vmatprep.subr.mxu0 0.0
        %5307 = vmatpush2.msra.mxu0 0.0
        %5308 = vmatprep.subr.mxu0 0.0
        %5309 = vmatpush2.msra.mxu0 0.0
        %5310 = vmatprep.mubr.f32.mxu0 0.0
        %5311 = vmatmul.mubr.f32.gmra.mxu0 %v5240
        %v5312 = vpop.f32.mrf.mxu0
        %v5313 = vadd.f32 %v3082, %v5312
        %v5314 = vpop.f32.mrf.mxu0
        %5315 = vdwg.mxu0
        %v5316 = vxor.u32 %v5313, 2147483648
        %v5317 = vmul.f32 %v5316, 1.442695
        %v5318 = vpow.pop %v5317
        %v5319 = vadd.f32 %v5318, 1.0
        %v5320 = vrcp.pop %v5319
        %v5321 = vmul.f32 1.0, %v5320
        %v5323 = vsel %vm3625, %v5321, 0
        %5325 = vmatprep.subr.mxu0 0.0
        %5326 = vmatpush1.msra.mxu0 0.0
        %5327 = vmatprep.subr.mxu0 0.0
        %5328 = vmatpush1.msra.mxu0 0.0
        %5329 = vmatprep.subr.mxu0 0.0
        %5330 = vmatpush1.msra.mxu0 0.0
        %5331 = vmatprep.subr.mxu0 0.0
        %5332 = vmatpush1.msra.mxu0 0.0
        %5333 = vmatprep.subr.mxu0 0.0
        %5334 = vmatpush1.msra.mxu0 0.0
        %5335 = vmatprep.subr.mxu0 0.0
        %5336 = vmatpush1.msra.mxu0 0.0
        %5337 = vmatprep.subr.mxu0 0.0
        %5338 = vmatpush1.msra.mxu0 0.0
        %5339 = vmatprep.subr.mxu0 0.0
        %5340 = vmatpush1.msra.mxu0 0.0
        %5341 = vmatprep.subr.mxu0 0.0
        %5342 = vmatpush1.msra.mxu0 0.0
        %5343 = vmatprep.subr.mxu0 0.0
        %5344 = vmatpush1.msra.mxu0 0.0
        %5345 = vmatprep.subr.mxu0 0.0
        %5346 = vmatpush1.msra.mxu0 0.0
        %5347 = vmatprep.subr.mxu0 0.0
        %5348 = vmatpush1.msra.mxu0 0.0
        %5349 = vmatprep.subr.mxu0 0.0
        %5350 = vmatpush1.msra.mxu0 0.0
        %5351 = vmatprep.subr.mxu0 0.0
        %5352 = vmatpush1.msra.mxu0 0.0
        %5353 = vmatprep.subr.mxu0 0.0
        %5354 = vmatpush1.msra.mxu0 %v3092
        %5355 = vmatprep.subr.mxu0 0.0
        %5356 = vmatpush1.msra.mxu0 %v3091
        %5357 = vmatprep.subr.mxu0 0.0
        %5358 = vmatpush2.msra.mxu0 0.0
        %5359 = vmatprep.subr.mxu0 0.0
        %5360 = vmatpush2.msra.mxu0 0.0
        %5361 = vmatprep.subr.mxu0 0.0
        %5362 = vmatpush2.msra.mxu0 0.0
        %5363 = vmatprep.subr.mxu0 0.0
        %5364 = vmatpush2.msra.mxu0 0.0
        %5365 = vmatprep.subr.mxu0 0.0
        %5366 = vmatpush2.msra.mxu0 0.0
        %5367 = vmatprep.subr.mxu0 0.0
        %5368 = vmatpush2.msra.mxu0 0.0
        %5369 = vmatprep.subr.mxu0 0.0
        %5370 = vmatpush2.msra.mxu0 0.0
        %5371 = vmatprep.subr.mxu0 0.0
        %5372 = vmatpush2.msra.mxu0 0.0
        %5373 = vmatprep.subr.mxu0 0.0
        %5374 = vmatpush2.msra.mxu0 0.0
        %5375 = vmatprep.subr.mxu0 0.0
        %5376 = vmatpush2.msra.mxu0 0.0
        %5377 = vmatprep.subr.mxu0 0.0
        %5378 = vmatpush2.msra.mxu0 0.0
        %5379 = vmatprep.subr.mxu0 0.0
        %5380 = vmatpush2.msra.mxu0 0.0
        %5381 = vmatprep.subr.mxu0 0.0
        %5382 = vmatpush2.msra.mxu0 0.0
        %5383 = vmatprep.subr.mxu0 0.0
        %5384 = vmatpush2.msra.mxu0 0.0
        %5385 = vmatprep.subr.mxu0 0.0
        %5386 = vmatpush2.msra.mxu0 0.0
        %5387 = vmatprep.subr.mxu0 0.0
        %5388 = vmatpush2.msra.mxu0 0.0
        %5389 = vmatprep.mubr.f32.mxu0 0.0
        %5390 = vmatmul.mubr.f32.gmra.mxu0 %v5323
        %v5391 = vpop.f32.mrf.mxu0
        %v5392 = vadd.f32 0.0, %v5391
        %v5393 = vpop.f32.mrf.mxu0
        %5394 = vdwg.mxu0
        %v5395 = vlaneseq
        %v5396 = vshrl.u32 %v5395, 7
        %v5397 = vsub.s32 0, %v5396
        %v5398 = vrot.slane %v5392, %v5397
        %v5399 = vmul.f32 %v5079, %v5398
        %v5401 = vsel %vm5238, %v3568, 0
        %v5404 = vsel %vm5242, %v5399, 0
        %5406 = vmatprep.subr.mxu0 0.0
        %5407 = vmatpush1.msra.mxu0 0.0
        %5408 = vmatprep.subr.mxu0 0.0
        %5409 = vmatpush1.msra.mxu0 0.0
        %5410 = vmatprep.subr.mxu0 0.0
        %5411 = vmatpush1.msra.mxu0 0.0
        %5412 = vmatprep.subr.mxu0 0.0
        %5413 = vmatpush1.msra.mxu0 0.0
        %5414 = vmatprep.subr.mxu0 0.0
        %5415 = vmatpush1.msra.mxu0 0.0
        %5416 = vmatprep.subr.mxu0 0.0
        %5417 = vmatpush1.msra.mxu0 0.0
        %5418 = vmatprep.subr.mxu0 0.0
        %5419 = vmatpush1.msra.mxu0 0.0
        %5420 = vmatprep.subr.mxu0 0.0
        %5421 = vmatpush1.msra.mxu0 0.0
        %5422 = vmatprep.subr.mxu0 0.0
        %5423 = vmatpush1.msra.mxu0 0.0
        %5424 = vmatprep.subr.mxu0 0.0
        %5425 = vmatpush1.msra.mxu0 0.0
        %5426 = vmatprep.subr.mxu0 0.0
        %5427 = vmatpush1.msra.mxu0 0.0
        %5428 = vmatprep.subr.mxu0 0.0
        %5429 = vmatpush1.msra.mxu0 0.0
        %5430 = vmatprep.subr.mxu0 0.0
        %5431 = vmatpush1.msra.mxu0 0.0
        %5432 = vmatprep.subr.mxu0 0.0
        %5433 = vmatpush1.msra.mxu0 0.0
        %5434 = vmatprep.subr.mxu0 0.0
        %5435 = vmatpush1.msra.mxu0 0.0
        %5436 = vmatprep.subr.mxu0 0.0
        %5437 = vmatpush1.msra.mxu0 %v5404
        %5438 = vmatprep.subr.mxu0 0.0
        %5439 = vmatpush2.msra.mxu0 0.0
        %5440 = vmatprep.subr.mxu0 0.0
        %5441 = vmatpush2.msra.mxu0 0.0
        %5442 = vmatprep.subr.mxu0 0.0
        %5443 = vmatpush2.msra.mxu0 0.0
        %5444 = vmatprep.subr.mxu0 0.0
        %5445 = vmatpush2.msra.mxu0 0.0
        %5446 = vmatprep.subr.mxu0 0.0
        %5447 = vmatpush2.msra.mxu0 0.0
        %5448 = vmatprep.subr.mxu0 0.0
        %5449 = vmatpush2.msra.mxu0 0.0
        %5450 = vmatprep.subr.mxu0 0.0
        %5451 = vmatpush2.msra.mxu0 0.0
        %5452 = vmatprep.subr.mxu0 0.0
        %5453 = vmatpush2.msra.mxu0 0.0
        %5454 = vmatprep.subr.mxu0 0.0
        %5455 = vmatpush2.msra.mxu0 0.0
        %5456 = vmatprep.subr.mxu0 0.0
        %5457 = vmatpush2.msra.mxu0 0.0
        %5458 = vmatprep.subr.mxu0 0.0
        %5459 = vmatpush2.msra.mxu0 0.0
        %5460 = vmatprep.subr.mxu0 0.0
        %5461 = vmatpush2.msra.mxu0 0.0
        %5462 = vmatprep.subr.mxu0 0.0
        %5463 = vmatpush2.msra.mxu0 0.0
        %5464 = vmatprep.subr.mxu0 0.0
        %5465 = vmatpush2.msra.mxu0 0.0
        %5466 = vmatprep.subr.mxu0 0.0
        %5467 = vmatpush2.msra.mxu0 0.0
        %5468 = vmatprep.subr.mxu0 0.0
        %5469 = vmatpush2.msra.mxu0 0.0
        %5470 = vmatprep.mubr.f32.mxu0 0.0
        %5471 = vmatmul.mubr.f32.gmra.mxu0 %v5401
        %v5472 = vpop.f32.mrf.mxu0
        %v5473 = vadd.f32 0.0, %v5472
        %v5474 = vpop.f32.mrf.mxu0
        %5475 = vdwg.mxu0
        %v5477 = vsel %vm5090, %v5473, 0
        %5479 = vmatprep.subr.mxu0 0.0
        %5480 = vmatpush1.msra.mxu0 0.0
        %5481 = vmatprep.subr.mxu0 0.0
        %5482 = vmatpush1.msra.mxu0 0.0
        %5483 = vmatprep.subr.mxu0 0.0
        %5484 = vmatpush1.msra.mxu0 0.0
        %5485 = vmatprep.subr.mxu0 0.0
        %5486 = vmatpush1.msra.mxu0 0.0
        %5487 = vmatprep.subr.mxu0 0.0
        %5488 = vmatpush1.msra.mxu0 0.0
        %5489 = vmatprep.subr.mxu0 0.0
        %5490 = vmatpush1.msra.mxu0 0.0
        %5491 = vmatprep.subr.mxu0 0.0
        %5492 = vmatpush1.msra.mxu0 0.0
        %5493 = vmatprep.subr.mxu0 0.0
        %5494 = vmatpush1.msra.mxu0 0.0
        %5495 = vmatprep.subr.mxu0 0.0
        %5496 = vmatpush1.msra.mxu0 %v3551
        %5497 = vmatprep.subr.mxu0 0.0
        %5498 = vmatpush1.msra.mxu0 %v3550
        %5499 = vmatprep.subr.mxu0 0.0
        %5500 = vmatpush1.msra.mxu0 %v3549
        %5501 = vmatprep.subr.mxu0 0.0
        %5502 = vmatpush1.msra.mxu0 %v3548
        %5503 = vmatprep.subr.mxu0 0.0
        %5504 = vmatpush1.msra.mxu0 %v3547
        %5505 = vmatprep.subr.mxu0 0.0
        %5506 = vmatpush1.msra.mxu0 %v3546
        %5507 = vmatprep.subr.mxu0 0.0
        %5508 = vmatpush1.msra.mxu0 %v3545
        %5509 = vmatprep.subr.mxu0 0.0
        %5510 = vmatpush1.msra.mxu0 %v3544
        %5511 = vmatprep.subr.mxu0 0.0
        %5512 = vmatpush2.msra.mxu0 0.0
        %5513 = vmatprep.subr.mxu0 0.0
        %5514 = vmatpush2.msra.mxu0 0.0
        %5515 = vmatprep.subr.mxu0 0.0
        %5516 = vmatpush2.msra.mxu0 0.0
        %5517 = vmatprep.subr.mxu0 0.0
        %5518 = vmatpush2.msra.mxu0 0.0
        %5519 = vmatprep.subr.mxu0 0.0
        %5520 = vmatpush2.msra.mxu0 0.0
        %5521 = vmatprep.subr.mxu0 0.0
        %5522 = vmatpush2.msra.mxu0 0.0
        %5523 = vmatprep.subr.mxu0 0.0
        %5524 = vmatpush2.msra.mxu0 0.0
        %5525 = vmatprep.subr.mxu0 0.0
        %5526 = vmatpush2.msra.mxu0 0.0
        %5527 = vmatprep.subr.mxu0 0.0
        %5528 = vmatpush2.msra.mxu0 0.0
        %5529 = vmatprep.subr.mxu0 0.0
        %5530 = vmatpush2.msra.mxu0 0.0
        %5531 = vmatprep.subr.mxu0 0.0
        %5532 = vmatpush2.msra.mxu0 0.0
        %5533 = vmatprep.subr.mxu0 0.0
        %5534 = vmatpush2.msra.mxu0 0.0
        %5535 = vmatprep.subr.mxu0 0.0
        %5536 = vmatpush2.msra.mxu0 0.0
        %5537 = vmatprep.subr.mxu0 0.0
        %5538 = vmatpush2.msra.mxu0 0.0
        %5539 = vmatprep.subr.mxu0 0.0
        %5540 = vmatpush2.msra.mxu0 0.0
        %5541 = vmatprep.subr.mxu0 0.0
        %5542 = vmatpush2.msra.mxu0 0.0
        %5543 = vmatprep.mubr.f32.mxu0 0.0
        %5544 = vmatmul.mubr.f32.gmra.mxu0 %v5477
        %v5545 = vpop.f32.mrf.mxu0
        %v5546 = vadd.f32 0.0, %v5545
        %v5547 = vpop.f32.mrf.mxu0
        %5548 = vdwg.mxu0
        %v5550 = vlaneseq
        %v5551 = vshrl.u32 %v5550, 7
        %v5552 = vsub.s32 0, %v5551
        %v5553 = vrot.slane %v3543, %v5552
        %v5555 = vadd.f32 %v5553, %v5546
        %v5557 = vsel %vm5238, %v3569, 0
        %5559 = vmatprep.subr.mxu0 0.0
        %5560 = vmatpush1.msra.mxu0 0.0
        %5561 = vmatprep.subr.mxu0 0.0
        %5562 = vmatpush1.msra.mxu0 0.0
        %5563 = vmatprep.subr.mxu0 0.0
        %5564 = vmatpush1.msra.mxu0 0.0
        %5565 = vmatprep.subr.mxu0 0.0
        %5566 = vmatpush1.msra.mxu0 0.0
        %5567 = vmatprep.subr.mxu0 0.0
        %5568 = vmatpush1.msra.mxu0 0.0
        %5569 = vmatprep.subr.mxu0 0.0
        %5570 = vmatpush1.msra.mxu0 0.0
        %5571 = vmatprep.subr.mxu0 0.0
        %5572 = vmatpush1.msra.mxu0 0.0
        %5573 = vmatprep.subr.mxu0 0.0
        %5574 = vmatpush1.msra.mxu0 0.0
        %5575 = vmatprep.subr.mxu0 0.0
        %5576 = vmatpush1.msra.mxu0 0.0
        %5577 = vmatprep.subr.mxu0 0.0
        %5578 = vmatpush1.msra.mxu0 0.0
        %5579 = vmatprep.subr.mxu0 0.0
        %5580 = vmatpush1.msra.mxu0 0.0
        %5581 = vmatprep.subr.mxu0 0.0
        %5582 = vmatpush1.msra.mxu0 0.0
        %5583 = vmatprep.subr.mxu0 0.0
        %5584 = vmatpush1.msra.mxu0 0.0
        %5585 = vmatprep.subr.mxu0 0.0
        %5586 = vmatpush1.msra.mxu0 0.0
        %5587 = vmatprep.subr.mxu0 0.0
        %5588 = vmatpush1.msra.mxu0 0.0
        %5589 = vmatprep.subr.mxu0 0.0
        %5590 = vmatpush1.msra.mxu0 %v5404
        %5591 = vmatprep.subr.mxu0 0.0
        %5592 = vmatpush2.msra.mxu0 0.0
        %5593 = vmatprep.subr.mxu0 0.0
        %5594 = vmatpush2.msra.mxu0 0.0
        %5595 = vmatprep.subr.mxu0 0.0
        %5596 = vmatpush2.msra.mxu0 0.0
        %5597 = vmatprep.subr.mxu0 0.0
        %5598 = vmatpush2.msra.mxu0 0.0
        %5599 = vmatprep.subr.mxu0 0.0
        %5600 = vmatpush2.msra.mxu0 0.0
        %5601 = vmatprep.subr.mxu0 0.0
        %5602 = vmatpush2.msra.mxu0 0.0
        %5603 = vmatprep.subr.mxu0 0.0
        %5604 = vmatpush2.msra.mxu0 0.0
        %5605 = vmatprep.subr.mxu0 0.0
        %5606 = vmatpush2.msra.mxu0 0.0
        %5607 = vmatprep.subr.mxu0 0.0
        %5608 = vmatpush2.msra.mxu0 0.0
        %5609 = vmatprep.subr.mxu0 0.0
        %5610 = vmatpush2.msra.mxu0 0.0
        %5611 = vmatprep.subr.mxu0 0.0
        %5612 = vmatpush2.msra.mxu0 0.0
        %5613 = vmatprep.subr.mxu0 0.0
        %5614 = vmatpush2.msra.mxu0 0.0
        %5615 = vmatprep.subr.mxu0 0.0
        %5616 = vmatpush2.msra.mxu0 0.0
        %5617 = vmatprep.subr.mxu0 0.0
        %5618 = vmatpush2.msra.mxu0 0.0
        %5619 = vmatprep.subr.mxu0 0.0
        %5620 = vmatpush2.msra.mxu0 0.0
        %5621 = vmatprep.subr.mxu0 0.0
        %5622 = vmatpush2.msra.mxu0 0.0
        %5623 = vmatprep.mubr.f32.mxu0 0.0
        %5624 = vmatmul.mubr.f32.gmra.mxu0 %v5557
        %v5625 = vpop.f32.mrf.mxu0
        %v5626 = vadd.f32 0.0, %v5625
        %v5627 = vpop.f32.mrf.mxu0
        %5628 = vdwg.mxu0
        %v5630 = vsel %vm5090, %v5626, 0
        %5632 = vmatprep.subr.mxu0 0.0
        %5633 = vmatpush1.msra.mxu0 0.0
        %5634 = vmatprep.subr.mxu0 0.0
        %5635 = vmatpush1.msra.mxu0 0.0
        %5636 = vmatprep.subr.mxu0 0.0
        %5637 = vmatpush1.msra.mxu0 0.0
        %5638 = vmatprep.subr.mxu0 0.0
        %5639 = vmatpush1.msra.mxu0 0.0
        %5640 = vmatprep.subr.mxu0 0.0
        %5641 = vmatpush1.msra.mxu0 0.0
        %5642 = vmatprep.subr.mxu0 0.0
        %5643 = vmatpush1.msra.mxu0 0.0
        %5644 = vmatprep.subr.mxu0 0.0
        %5645 = vmatpush1.msra.mxu0 0.0
        %5646 = vmatprep.subr.mxu0 0.0
        %5647 = vmatpush1.msra.mxu0 0.0
        %5648 = vmatprep.subr.mxu0 0.0
        %5649 = vmatpush1.msra.mxu0 %v3559
        %5650 = vmatprep.subr.mxu0 0.0
        %5651 = vmatpush1.msra.mxu0 %v3558
        %5652 = vmatprep.subr.mxu0 0.0
        %5653 = vmatpush1.msra.mxu0 %v3557
        %5654 = vmatprep.subr.mxu0 0.0
        %5655 = vmatpush1.msra.mxu0 %v3556
        %5656 = vmatprep.subr.mxu0 0.0
        %5657 = vmatpush1.msra.mxu0 %v3555
        %5658 = vmatprep.subr.mxu0 0.0
        %5659 = vmatpush1.msra.mxu0 %v3554
        %5660 = vmatprep.subr.mxu0 0.0
        %5661 = vmatpush1.msra.mxu0 %v3553
        %5662 = vmatprep.subr.mxu0 0.0
        %5663 = vmatpush1.msra.mxu0 %v3552
        %5664 = vmatprep.subr.mxu0 0.0
        %5665 = vmatpush2.msra.mxu0 0.0
        %5666 = vmatprep.subr.mxu0 0.0
        %5667 = vmatpush2.msra.mxu0 0.0
        %5668 = vmatprep.subr.mxu0 0.0
        %5669 = vmatpush2.msra.mxu0 0.0
        %5670 = vmatprep.subr.mxu0 0.0
        %5671 = vmatpush2.msra.mxu0 0.0
        %5672 = vmatprep.subr.mxu0 0.0
        %5673 = vmatpush2.msra.mxu0 0.0
        %5674 = vmatprep.subr.mxu0 0.0
        %5675 = vmatpush2.msra.mxu0 0.0
        %5676 = vmatprep.subr.mxu0 0.0
        %5677 = vmatpush2.msra.mxu0 0.0
        %5678 = vmatprep.subr.mxu0 0.0
        %5679 = vmatpush2.msra.mxu0 0.0
        %5680 = vmatprep.subr.mxu0 0.0
        %5681 = vmatpush2.msra.mxu0 0.0
        %5682 = vmatprep.subr.mxu0 0.0
        %5683 = vmatpush2.msra.mxu0 0.0
        %5684 = vmatprep.subr.mxu0 0.0
        %5685 = vmatpush2.msra.mxu0 0.0
        %5686 = vmatprep.subr.mxu0 0.0
        %5687 = vmatpush2.msra.mxu0 0.0
        %5688 = vmatprep.subr.mxu0 0.0
        %5689 = vmatpush2.msra.mxu0 0.0
        %5690 = vmatprep.subr.mxu0 0.0
        %5691 = vmatpush2.msra.mxu0 0.0
        %5692 = vmatprep.subr.mxu0 0.0
        %5693 = vmatpush2.msra.mxu0 0.0
        %5694 = vmatprep.subr.mxu0 0.0
        %5695 = vmatpush2.msra.mxu0 0.0
        %5696 = vmatprep.mubr.f32.mxu0 0.0
        %5697 = vmatmul.mubr.f32.gmra.mxu0 %v5630
        %v5698 = vpop.f32.mrf.mxu0
        %v5699 = vadd.f32 0.0, %v5698
        %v5700 = vpop.f32.mrf.mxu0
        %5701 = vdwg.mxu0
        %v5702 = vadd.f32 %v5555, %v5699
        %v5704 = vsel %vm5238, %v3570, 0
        %5706 = vmatprep.subr.mxu0 0.0
        %5707 = vmatpush1.msra.mxu0 0.0
        %5708 = vmatprep.subr.mxu0 0.0
        %5709 = vmatpush1.msra.mxu0 0.0
        %5710 = vmatprep.subr.mxu0 0.0
        %5711 = vmatpush1.msra.mxu0 0.0
        %5712 = vmatprep.subr.mxu0 0.0
        %5713 = vmatpush1.msra.mxu0 0.0
        %5714 = vmatprep.subr.mxu0 0.0
        %5715 = vmatpush1.msra.mxu0 0.0
        %5716 = vmatprep.subr.mxu0 0.0
        %5717 = vmatpush1.msra.mxu0 0.0
        %5718 = vmatprep.subr.mxu0 0.0
        %5719 = vmatpush1.msra.mxu0 0.0
        %5720 = vmatprep.subr.mxu0 0.0
        %5721 = vmatpush1.msra.mxu0 0.0
        %5722 = vmatprep.subr.mxu0 0.0
        %5723 = vmatpush1.msra.mxu0 0.0
        %5724 = vmatprep.subr.mxu0 0.0
        %5725 = vmatpush1.msra.mxu0 0.0
        %5726 = vmatprep.subr.mxu0 0.0
        %5727 = vmatpush1.msra.mxu0 0.0
        %5728 = vmatprep.subr.mxu0 0.0
        %5729 = vmatpush1.msra.mxu0 0.0
        %5730 = vmatprep.subr.mxu0 0.0
        %5731 = vmatpush1.msra.mxu0 0.0
        %5732 = vmatprep.subr.mxu0 0.0
        %5733 = vmatpush1.msra.mxu0 0.0
        %5734 = vmatprep.subr.mxu0 0.0
        %5735 = vmatpush1.msra.mxu0 0.0
        %5736 = vmatprep.subr.mxu0 0.0
        %5737 = vmatpush1.msra.mxu0 %v5404
        %5738 = vmatprep.subr.mxu0 0.0
        %5739 = vmatpush2.msra.mxu0 0.0
        %5740 = vmatprep.subr.mxu0 0.0
        %5741 = vmatpush2.msra.mxu0 0.0
        %5742 = vmatprep.subr.mxu0 0.0
        %5743 = vmatpush2.msra.mxu0 0.0
        %5744 = vmatprep.subr.mxu0 0.0
        %5745 = vmatpush2.msra.mxu0 0.0
        %5746 = vmatprep.subr.mxu0 0.0
        %5747 = vmatpush2.msra.mxu0 0.0
        %5748 = vmatprep.subr.mxu0 0.0
        %5749 = vmatpush2.msra.mxu0 0.0
        %5750 = vmatprep.subr.mxu0 0.0
        %5751 = vmatpush2.msra.mxu0 0.0
        %5752 = vmatprep.subr.mxu0 0.0
        %5753 = vmatpush2.msra.mxu0 0.0
        %5754 = vmatprep.subr.mxu0 0.0
        %5755 = vmatpush2.msra.mxu0 0.0
        %5756 = vmatprep.subr.mxu0 0.0
        %5757 = vmatpush2.msra.mxu0 0.0
        %5758 = vmatprep.subr.mxu0 0.0
        %5759 = vmatpush2.msra.mxu0 0.0
        %5760 = vmatprep.subr.mxu0 0.0
        %5761 = vmatpush2.msra.mxu0 0.0
        %5762 = vmatprep.subr.mxu0 0.0
        %5763 = vmatpush2.msra.mxu0 0.0
        %5764 = vmatprep.subr.mxu0 0.0
        %5765 = vmatpush2.msra.mxu0 0.0
        %5766 = vmatprep.subr.mxu0 0.0
        %5767 = vmatpush2.msra.mxu0 0.0
        %5768 = vmatprep.subr.mxu0 0.0
        %5769 = vmatpush2.msra.mxu0 0.0
        %5770 = vmatprep.mubr.f32.mxu0 0.0
        %5771 = vmatmul.mubr.f32.gmra.mxu0 %v5704
        %v5772 = vpop.f32.mrf.mxu0
        %v5773 = vadd.f32 0.0, %v5772
        %v5774 = vpop.f32.mrf.mxu0
        %5775 = vdwg.mxu0
        %v5777 = vsel %vm5090, %v5773, 0
        %5779 = vmatprep.subr.mxu0 0.0
        %5780 = vmatpush1.msra.mxu0 0.0
        %5781 = vmatprep.subr.mxu0 0.0
        %5782 = vmatpush1.msra.mxu0 0.0
        %5783 = vmatprep.subr.mxu0 0.0
        %5784 = vmatpush1.msra.mxu0 0.0
        %5785 = vmatprep.subr.mxu0 0.0
        %5786 = vmatpush1.msra.mxu0 0.0
        %5787 = vmatprep.subr.mxu0 0.0
        %5788 = vmatpush1.msra.mxu0 0.0
        %5789 = vmatprep.subr.mxu0 0.0
        %5790 = vmatpush1.msra.mxu0 0.0
        %5791 = vmatprep.subr.mxu0 0.0
        %5792 = vmatpush1.msra.mxu0 0.0
        %5793 = vmatprep.subr.mxu0 0.0
        %5794 = vmatpush1.msra.mxu0 0.0
        %5795 = vmatprep.subr.mxu0 0.0
        %5796 = vmatpush1.msra.mxu0 %v3567
        %5797 = vmatprep.subr.mxu0 0.0
        %5798 = vmatpush1.msra.mxu0 %v3566
        %5799 = vmatprep.subr.mxu0 0.0
        %5800 = vmatpush1.msra.mxu0 %v3565
        %5801 = vmatprep.subr.mxu0 0.0
        %5802 = vmatpush1.msra.mxu0 %v3564
        %5803 = vmatprep.subr.mxu0 0.0
        %5804 = vmatpush1.msra.mxu0 %v3563
        %5805 = vmatprep.subr.mxu0 0.0
        %5806 = vmatpush1.msra.mxu0 %v3562
        %5807 = vmatprep.subr.mxu0 0.0
        %5808 = vmatpush1.msra.mxu0 %v3561
        %5809 = vmatprep.subr.mxu0 0.0
        %5810 = vmatpush1.msra.mxu0 %v3560
        %5811 = vmatprep.subr.mxu0 0.0
        %5812 = vmatpush2.msra.mxu0 0.0
        %5813 = vmatprep.subr.mxu0 0.0
        %5814 = vmatpush2.msra.mxu0 0.0
        %5815 = vmatprep.subr.mxu0 0.0
        %5816 = vmatpush2.msra.mxu0 0.0
        %5817 = vmatprep.subr.mxu0 0.0
        %5818 = vmatpush2.msra.mxu0 0.0
        %5819 = vmatprep.subr.mxu0 0.0
        %5820 = vmatpush2.msra.mxu0 0.0
        %5821 = vmatprep.subr.mxu0 0.0
        %5822 = vmatpush2.msra.mxu0 0.0
        %5823 = vmatprep.subr.mxu0 0.0
        %5824 = vmatpush2.msra.mxu0 0.0
        %5825 = vmatprep.subr.mxu0 0.0
        %5826 = vmatpush2.msra.mxu0 0.0
        %5827 = vmatprep.subr.mxu0 0.0
        %5828 = vmatpush2.msra.mxu0 0.0
        %5829 = vmatprep.subr.mxu0 0.0
        %5830 = vmatpush2.msra.mxu0 0.0
        %5831 = vmatprep.subr.mxu0 0.0
        %5832 = vmatpush2.msra.mxu0 0.0
        %5833 = vmatprep.subr.mxu0 0.0
        %5834 = vmatpush2.msra.mxu0 0.0
        %5835 = vmatprep.subr.mxu0 0.0
        %5836 = vmatpush2.msra.mxu0 0.0
        %5837 = vmatprep.subr.mxu0 0.0
        %5838 = vmatpush2.msra.mxu0 0.0
        %5839 = vmatprep.subr.mxu0 0.0
        %5840 = vmatpush2.msra.mxu0 0.0
        %5841 = vmatprep.subr.mxu0 0.0
        %5842 = vmatpush2.msra.mxu0 0.0
        %5843 = vmatprep.mubr.f32.mxu0 0.0
        %5844 = vmatmul.mubr.f32.gmra.mxu0 %v5777
        %v5845 = vpop.f32.mrf.mxu0
        %v5846 = vadd.f32 0.0, %v5845
        %v5847 = vpop.f32.mrf.mxu0
        %5848 = vdwg.mxu0
        %v5849 = vadd.f32 %v5702, %v5846
        %v5851 = vlaneseq
        %v5852 = vshrl.u32 %v5851, 7
        %v5853 = vsub.s32 0, %v5852
        %v5854 = vrot.slane %v3258, %v5853
        %5856 = vmatprep.subr.mxu0 0.0
        %5857 = vmatpush1.msra.mxu0 %v3274
        %5858 = vmatprep.subr.mxu0 0.0
        %5859 = vmatpush1.msra.mxu0 %v3273
        %5860 = vmatprep.subr.mxu0 0.0
        %5861 = vmatpush1.msra.mxu0 %v3272
        %5862 = vmatprep.subr.mxu0 0.0
        %5863 = vmatpush1.msra.mxu0 %v3271
        %5864 = vmatprep.subr.mxu0 0.0
        %5865 = vmatpush1.msra.mxu0 %v3270
        %5866 = vmatprep.subr.mxu0 0.0
        %5867 = vmatpush1.msra.mxu0 %v3269
        %5868 = vmatprep.subr.mxu0 0.0
        %5869 = vmatpush1.msra.mxu0 %v3268
        %5870 = vmatprep.subr.mxu0 0.0
        %5871 = vmatpush1.msra.mxu0 %v3267
        %5872 = vmatprep.subr.mxu0 0.0
        %5873 = vmatpush1.msra.mxu0 %v3266
        %5874 = vmatprep.subr.mxu0 0.0
        %5875 = vmatpush1.msra.mxu0 %v3265
        %5876 = vmatprep.subr.mxu0 0.0
        %5877 = vmatpush1.msra.mxu0 %v3264
        %5878 = vmatprep.subr.mxu0 0.0
        %5879 = vmatpush1.msra.mxu0 %v3263
        %5880 = vmatprep.subr.mxu0 0.0
        %5881 = vmatpush1.msra.mxu0 %v3262
        %5882 = vmatprep.subr.mxu0 0.0
        %5883 = vmatpush1.msra.mxu0 %v3261
        %5884 = vmatprep.subr.mxu0 0.0
        %5885 = vmatpush1.msra.mxu0 %v3260
        %5886 = vmatprep.subr.mxu0 0.0
        %5887 = vmatpush1.msra.mxu0 %v3259
        %5888 = vmatprep.subr.mxu0 0.0
        %5889 = vmatpush2.msra.mxu0 0.0
        %5890 = vmatprep.subr.mxu0 0.0
        %5891 = vmatpush2.msra.mxu0 0.0
        %5892 = vmatprep.subr.mxu0 0.0
        %5893 = vmatpush2.msra.mxu0 0.0
        %5894 = vmatprep.subr.mxu0 0.0
        %5895 = vmatpush2.msra.mxu0 0.0
        %5896 = vmatprep.subr.mxu0 0.0
        %5897 = vmatpush2.msra.mxu0 0.0
        %5898 = vmatprep.subr.mxu0 0.0
        %5899 = vmatpush2.msra.mxu0 0.0
        %5900 = vmatprep.subr.mxu0 0.0
        %5901 = vmatpush2.msra.mxu0 0.0
        %5902 = vmatprep.subr.mxu0 0.0
        %5903 = vmatpush2.msra.mxu0 0.0
        %5904 = vmatprep.subr.mxu0 0.0
        %5905 = vmatpush2.msra.mxu0 0.0
        %5906 = vmatprep.subr.mxu0 0.0
        %5907 = vmatpush2.msra.mxu0 0.0
        %5908 = vmatprep.subr.mxu0 0.0
        %5909 = vmatpush2.msra.mxu0 0.0
        %5910 = vmatprep.subr.mxu0 0.0
        %5911 = vmatpush2.msra.mxu0 0.0
        %5912 = vmatprep.subr.mxu0 0.0
        %5913 = vmatpush2.msra.mxu0 0.0
        %5914 = vmatprep.subr.mxu0 0.0
        %5915 = vmatpush2.msra.mxu0 0.0
        %5916 = vmatprep.subr.mxu0 0.0
        %5917 = vmatpush2.msra.mxu0 0.0
        %5918 = vmatprep.subr.mxu0 0.0
        %5919 = vmatpush2.msra.mxu0 0.0
        %5920 = vmatprep.mubr.f32.mxu0 0.0
        %5921 = vmatmul.mubr.f32.gmra.mxu0 %v4565
        %v5922 = vpop.f32.mrf.mxu0
        %v5923 = vadd.f32 %v5854, %v5922
        %v5924 = vpop.f32.mrf.mxu0
        %5925 = vdwg.mxu0
        %v5926 = vrot.slane %v5923, 4
        %v5927 = vadd.f32 %v5923, %v5926
        %v5928 = vrot.slane %v5927, 2
        %v5929 = vadd.f32 %v5927, %v5928
        %v5930 = vrot.slane %v5929, 1
        %v5931 = vadd.f32 %v5929, %v5930
        %5932 = vmatprep.subr.mxu0 0.0
        %5933 = vmatpush1.msra.mxu0 %v3075
        %5934 = vmatprep.subr.mxu0 0.0
        %5935 = vmatpush1.msra.mxu0 %v3074
        %5936 = vmatprep.subr.mxu0 0.0
        %5937 = vmatpush1.msra.mxu0 %v3073
        %5938 = vmatprep.subr.mxu0 0.0
        %5939 = vmatpush1.msra.mxu0 %v3072
        %5940 = vmatprep.subr.mxu0 0.0
        %5941 = vmatpush1.msra.mxu0 %v3071
        %5942 = vmatprep.subr.mxu0 0.0
        %5943 = vmatpush1.msra.mxu0 %v3070
        %5944 = vmatprep.subr.mxu0 0.0
        %5945 = vmatpush1.msra.mxu0 %v3069
        %5946 = vmatprep.subr.mxu0 0.0
        %5947 = vmatpush1.msra.mxu0 %v3068
        %5948 = vmatprep.subr.mxu0 0.0
        %5949 = vmatpush1.msra.mxu0 %v3067
        %5950 = vmatprep.subr.mxu0 0.0
        %5951 = vmatpush1.msra.mxu0 %v3066
        %5952 = vmatprep.subr.mxu0 0.0
        %5953 = vmatpush1.msra.mxu0 %v3065
        %5954 = vmatprep.subr.mxu0 0.0
        %5955 = vmatpush1.msra.mxu0 %v3064
        %5956 = vmatprep.subr.mxu0 0.0
        %5957 = vmatpush1.msra.mxu0 %v3063
        %5958 = vmatprep.subr.mxu0 0.0
        %5959 = vmatpush1.msra.mxu0 %v3062
        %5960 = vmatprep.subr.mxu0 0.0
        %5961 = vmatpush1.msra.mxu0 %v3061
        %5962 = vmatprep.subr.mxu0 0.0
        %5963 = vmatpush1.msra.mxu0 %v3060
        %5964 = vmatprep.subr.mxu0 0.0
        %5965 = vmatpush2.msra.mxu0 0.0
        %5966 = vmatprep.subr.mxu0 0.0
        %5967 = vmatpush2.msra.mxu0 0.0
        %5968 = vmatprep.subr.mxu0 0.0
        %5969 = vmatpush2.msra.mxu0 0.0
        %5970 = vmatprep.subr.mxu0 0.0
        %5971 = vmatpush2.msra.mxu0 0.0
        %5972 = vmatprep.subr.mxu0 0.0
        %5973 = vmatpush2.msra.mxu0 0.0
        %5974 = vmatprep.subr.mxu0 0.0
        %5975 = vmatpush2.msra.mxu0 0.0
        %5976 = vmatprep.subr.mxu0 0.0
        %5977 = vmatpush2.msra.mxu0 0.0
        %5978 = vmatprep.subr.mxu0 0.0
        %5979 = vmatpush2.msra.mxu0 0.0
        %5980 = vmatprep.subr.mxu0 0.0
        %5981 = vmatpush2.msra.mxu0 0.0
        %5982 = vmatprep.subr.mxu0 0.0
        %5983 = vmatpush2.msra.mxu0 0.0
        %5984 = vmatprep.subr.mxu0 0.0
        %5985 = vmatpush2.msra.mxu0 0.0
        %5986 = vmatprep.subr.mxu0 0.0
        %5987 = vmatpush2.msra.mxu0 0.0
        %5988 = vmatprep.subr.mxu0 0.0
        %5989 = vmatpush2.msra.mxu0 0.0
        %5990 = vmatprep.subr.mxu0 0.0
        %5991 = vmatpush2.msra.mxu0 0.0
        %5992 = vmatprep.subr.mxu0 0.0
        %5993 = vmatpush2.msra.mxu0 0.0
        %5994 = vmatprep.subr.mxu0 0.0
        %5995 = vmatpush2.msra.mxu0 0.0
        %5996 = vmatprep.mubr.f32.mxu0 0.0
        %5997 = vmatmul.mubr.f32.gmra.mxu0 %v5931
        %v5998 = vpop.f32.mrf.mxu0
        %v5999 = vadd.f32 0.0, %v5998
        %v6000 = vpop.f32.mrf.mxu0
        %6001 = vdwg.mxu0
        %v6003 = vsel %vm3625, %v5999, 0
        %6005 = vmatprep.subr.mxu0 0.0
        %6006 = vmatpush1.msra.mxu0 0.0
        %6007 = vmatprep.subr.mxu0 0.0
        %6008 = vmatpush1.msra.mxu0 0.0
        %6009 = vmatprep.subr.mxu0 0.0
        %6010 = vmatpush1.msra.mxu0 0.0
        %6011 = vmatprep.subr.mxu0 0.0
        %6012 = vmatpush1.msra.mxu0 0.0
        %6013 = vmatprep.subr.mxu0 0.0
        %6014 = vmatpush1.msra.mxu0 0.0
        %6015 = vmatprep.subr.mxu0 0.0
        %6016 = vmatpush1.msra.mxu0 0.0
        %6017 = vmatprep.subr.mxu0 0.0
        %6018 = vmatpush1.msra.mxu0 0.0
        %6019 = vmatprep.subr.mxu0 0.0
        %6020 = vmatpush1.msra.mxu0 0.0
        %6021 = vmatprep.subr.mxu0 0.0
        %6022 = vmatpush1.msra.mxu0 0.0
        %6023 = vmatprep.subr.mxu0 0.0
        %6024 = vmatpush1.msra.mxu0 0.0
        %6025 = vmatprep.subr.mxu0 0.0
        %6026 = vmatpush1.msra.mxu0 0.0
        %6027 = vmatprep.subr.mxu0 0.0
        %6028 = vmatpush1.msra.mxu0 0.0
        %6029 = vmatprep.subr.mxu0 0.0
        %6030 = vmatpush1.msra.mxu0 0.0
        %6031 = vmatprep.subr.mxu0 0.0
        %6032 = vmatpush1.msra.mxu0 0.0
        %6033 = vmatprep.subr.mxu0 0.0
        %6034 = vmatpush1.msra.mxu0 %v3079
        %6035 = vmatprep.subr.mxu0 0.0
        %6036 = vmatpush1.msra.mxu0 %v3078
        %6037 = vmatprep.subr.mxu0 0.0
        %6038 = vmatpush2.msra.mxu0 0.0
        %6039 = vmatprep.subr.mxu0 0.0
        %6040 = vmatpush2.msra.mxu0 0.0
        %6041 = vmatprep.subr.mxu0 0.0
        %6042 = vmatpush2.msra.mxu0 0.0
        %6043 = vmatprep.subr.mxu0 0.0
        %6044 = vmatpush2.msra.mxu0 0.0
        %6045 = vmatprep.subr.mxu0 0.0
        %6046 = vmatpush2.msra.mxu0 0.0
        %6047 = vmatprep.subr.mxu0 0.0
        %6048 = vmatpush2.msra.mxu0 0.0
        %6049 = vmatprep.subr.mxu0 0.0
        %6050 = vmatpush2.msra.mxu0 0.0
        %6051 = vmatprep.subr.mxu0 0.0
        %6052 = vmatpush2.msra.mxu0 0.0
        %6053 = vmatprep.subr.mxu0 0.0
        %6054 = vmatpush2.msra.mxu0 0.0
        %6055 = vmatprep.subr.mxu0 0.0
        %6056 = vmatpush2.msra.mxu0 0.0
        %6057 = vmatprep.subr.mxu0 0.0
        %6058 = vmatpush2.msra.mxu0 0.0
        %6059 = vmatprep.subr.mxu0 0.0
        %6060 = vmatpush2.msra.mxu0 0.0
        %6061 = vmatprep.subr.mxu0 0.0
        %6062 = vmatpush2.msra.mxu0 0.0
        %6063 = vmatprep.subr.mxu0 0.0
        %6064 = vmatpush2.msra.mxu0 0.0
        %6065 = vmatprep.subr.mxu0 0.0
        %6066 = vmatpush2.msra.mxu0 0.0
        %6067 = vmatprep.subr.mxu0 0.0
        %6068 = vmatpush2.msra.mxu0 0.0
        %6069 = vmatprep.mubr.f32.mxu0 0.0
        %6070 = vmatmul.mubr.f32.gmra.mxu0 %v6003
        %v6071 = vpop.f32.mrf.mxu0
        %v6072 = vadd.f32 %v3058, %v6071
        %v6073 = vpop.f32.mrf.mxu0
        %6074 = vdwg.mxu0
        %v6075 = vmax.f32 %v6072, 0.0
        %v6077 = vsel %vm5238, %v6075, 0
        %v6080 = vsel %vm5242, %v3080, 0
        %6082 = vmatprep.subr.mxu0 0.0
        %6083 = vmatpush1.msra.mxu0 0.0
        %6084 = vmatprep.subr.mxu0 0.0
        %6085 = vmatpush1.msra.mxu0 0.0
        %6086 = vmatprep.subr.mxu0 0.0
        %6087 = vmatpush1.msra.mxu0 0.0
        %6088 = vmatprep.subr.mxu0 0.0
        %6089 = vmatpush1.msra.mxu0 0.0
        %6090 = vmatprep.subr.mxu0 0.0
        %6091 = vmatpush1.msra.mxu0 0.0
        %6092 = vmatprep.subr.mxu0 0.0
        %6093 = vmatpush1.msra.mxu0 0.0
        %6094 = vmatprep.subr.mxu0 0.0
        %6095 = vmatpush1.msra.mxu0 0.0
        %6096 = vmatprep.subr.mxu0 0.0
        %6097 = vmatpush1.msra.mxu0 0.0
        %6098 = vmatprep.subr.mxu0 0.0
        %6099 = vmatpush1.msra.mxu0 0.0
        %6100 = vmatprep.subr.mxu0 0.0
        %6101 = vmatpush1.msra.mxu0 0.0
        %6102 = vmatprep.subr.mxu0 0.0
        %6103 = vmatpush1.msra.mxu0 0.0
        %6104 = vmatprep.subr.mxu0 0.0
        %6105 = vmatpush1.msra.mxu0 0.0
        %6106 = vmatprep.subr.mxu0 0.0
        %6107 = vmatpush1.msra.mxu0 0.0
        %6108 = vmatprep.subr.mxu0 0.0
        %6109 = vmatpush1.msra.mxu0 0.0
        %6110 = vmatprep.subr.mxu0 0.0
        %6111 = vmatpush1.msra.mxu0 0.0
        %6112 = vmatprep.subr.mxu0 0.0
        %6113 = vmatpush1.msra.mxu0 %v6080
        %6114 = vmatprep.subr.mxu0 0.0
        %6115 = vmatpush2.msra.mxu0 0.0
        %6116 = vmatprep.subr.mxu0 0.0
        %6117 = vmatpush2.msra.mxu0 0.0
        %6118 = vmatprep.subr.mxu0 0.0
        %6119 = vmatpush2.msra.mxu0 0.0
        %6120 = vmatprep.subr.mxu0 0.0
        %6121 = vmatpush2.msra.mxu0 0.0
        %6122 = vmatprep.subr.mxu0 0.0
        %6123 = vmatpush2.msra.mxu0 0.0
        %6124 = vmatprep.subr.mxu0 0.0
        %6125 = vmatpush2.msra.mxu0 0.0
        %6126 = vmatprep.subr.mxu0 0.0
        %6127 = vmatpush2.msra.mxu0 0.0
        %6128 = vmatprep.subr.mxu0 0.0
        %6129 = vmatpush2.msra.mxu0 0.0
        %6130 = vmatprep.subr.mxu0 0.0
        %6131 = vmatpush2.msra.mxu0 0.0
        %6132 = vmatprep.subr.mxu0 0.0
        %6133 = vmatpush2.msra.mxu0 0.0
        %6134 = vmatprep.subr.mxu0 0.0
        %6135 = vmatpush2.msra.mxu0 0.0
        %6136 = vmatprep.subr.mxu0 0.0
        %6137 = vmatpush2.msra.mxu0 0.0
        %6138 = vmatprep.subr.mxu0 0.0
        %6139 = vmatpush2.msra.mxu0 0.0
        %6140 = vmatprep.subr.mxu0 0.0
        %6141 = vmatpush2.msra.mxu0 0.0
        %6142 = vmatprep.subr.mxu0 0.0
        %6143 = vmatpush2.msra.mxu0 0.0
        %6144 = vmatprep.subr.mxu0 0.0
        %6145 = vmatpush2.msra.mxu0 0.0
        %6146 = vmatprep.mubr.f32.mxu0 0.0
        %6147 = vmatmul.mubr.f32.gmra.mxu0 %v6077
        %v6148 = vpop.f32.mrf.mxu0
        %v6149 = vadd.f32 %v3059, %v6148
        %v6150 = vpop.f32.mrf.mxu0
        %6151 = vdwg.mxu0
        %v6152 = vxor.u32 %v6149, 2147483648
        %v6153 = vmul.f32 %v6152, 1.442695
        %v6154 = vpow.pop %v6153
        %v6155 = vadd.f32 %v6154, 1.0
        %v6156 = vrcp.pop %v6155
        %v6157 = vmul.f32 1.0, %v6156
        %v6159 = vsel %vm3625, %v6157, 0
        %6161 = vmatprep.subr.mxu0 0.0
        %6162 = vmatpush1.msra.mxu0 0.0
        %6163 = vmatprep.subr.mxu0 0.0
        %6164 = vmatpush1.msra.mxu0 0.0
        %6165 = vmatprep.subr.mxu0 0.0
        %6166 = vmatpush1.msra.mxu0 0.0
        %6167 = vmatprep.subr.mxu0 0.0
        %6168 = vmatpush1.msra.mxu0 0.0
        %6169 = vmatprep.subr.mxu0 0.0
        %6170 = vmatpush1.msra.mxu0 0.0
        %6171 = vmatprep.subr.mxu0 0.0
        %6172 = vmatpush1.msra.mxu0 0.0
        %6173 = vmatprep.subr.mxu0 0.0
        %6174 = vmatpush1.msra.mxu0 0.0
        %6175 = vmatprep.subr.mxu0 0.0
        %6176 = vmatpush1.msra.mxu0 0.0
        %6177 = vmatprep.subr.mxu0 0.0
        %6178 = vmatpush1.msra.mxu0 0.0
        %6179 = vmatprep.subr.mxu0 0.0
        %6180 = vmatpush1.msra.mxu0 0.0
        %6181 = vmatprep.subr.mxu0 0.0
        %6182 = vmatpush1.msra.mxu0 0.0
        %6183 = vmatprep.subr.mxu0 0.0
        %6184 = vmatpush1.msra.mxu0 0.0
        %6185 = vmatprep.subr.mxu0 0.0
        %6186 = vmatpush1.msra.mxu0 0.0
        %6187 = vmatprep.subr.mxu0 0.0
        %6188 = vmatpush1.msra.mxu0 0.0
        %6189 = vmatprep.subr.mxu0 0.0
        %6190 = vmatpush1.msra.mxu0 %v3077
        %6191 = vmatprep.subr.mxu0 0.0
        %6192 = vmatpush1.msra.mxu0 %v3076
        %6193 = vmatprep.subr.mxu0 0.0
        %6194 = vmatpush2.msra.mxu0 0.0
        %6195 = vmatprep.subr.mxu0 0.0
        %6196 = vmatpush2.msra.mxu0 0.0
        %6197 = vmatprep.subr.mxu0 0.0
        %6198 = vmatpush2.msra.mxu0 0.0
        %6199 = vmatprep.subr.mxu0 0.0
        %6200 = vmatpush2.msra.mxu0 0.0
        %6201 = vmatprep.subr.mxu0 0.0
        %6202 = vmatpush2.msra.mxu0 0.0
        %6203 = vmatprep.subr.mxu0 0.0
        %6204 = vmatpush2.msra.mxu0 0.0
        %6205 = vmatprep.subr.mxu0 0.0
        %6206 = vmatpush2.msra.mxu0 0.0
        %6207 = vmatprep.subr.mxu0 0.0
        %6208 = vmatpush2.msra.mxu0 0.0
        %6209 = vmatprep.subr.mxu0 0.0
        %6210 = vmatpush2.msra.mxu0 0.0
        %6211 = vmatprep.subr.mxu0 0.0
        %6212 = vmatpush2.msra.mxu0 0.0
        %6213 = vmatprep.subr.mxu0 0.0
        %6214 = vmatpush2.msra.mxu0 0.0
        %6215 = vmatprep.subr.mxu0 0.0
        %6216 = vmatpush2.msra.mxu0 0.0
        %6217 = vmatprep.subr.mxu0 0.0
        %6218 = vmatpush2.msra.mxu0 0.0
        %6219 = vmatprep.subr.mxu0 0.0
        %6220 = vmatpush2.msra.mxu0 0.0
        %6221 = vmatprep.subr.mxu0 0.0
        %6222 = vmatpush2.msra.mxu0 0.0
        %6223 = vmatprep.subr.mxu0 0.0
        %6224 = vmatpush2.msra.mxu0 0.0
        %6225 = vmatprep.mubr.f32.mxu0 0.0
        %6226 = vmatmul.mubr.f32.gmra.mxu0 %v6159
        %v6227 = vpop.f32.mrf.mxu0
        %v6228 = vadd.f32 0.0, %v6227
        %v6229 = vpop.f32.mrf.mxu0
        %6230 = vdwg.mxu0
        %v6231 = vlaneseq
        %v6232 = vshrl.u32 %v6231, 7
        %v6233 = vsub.s32 0, %v6232
        %v6234 = vrot.slane %v6228, %v6233
        %v6235 = vmul.f32 %v5923, %v6234
        %v6237 = vsel %vm5238, %v3580, 0
        %6239 = vmatprep.subr.mxu0 0.0
        %6240 = vmatpush1.msra.mxu0 0.0
        %6241 = vmatprep.subr.mxu0 0.0
        %6242 = vmatpush1.msra.mxu0 0.0
        %6243 = vmatprep.subr.mxu0 0.0
        %6244 = vmatpush1.msra.mxu0 0.0
        %6245 = vmatprep.subr.mxu0 0.0
        %6246 = vmatpush1.msra.mxu0 0.0
        %6247 = vmatprep.subr.mxu0 0.0
        %6248 = vmatpush1.msra.mxu0 0.0
        %6249 = vmatprep.subr.mxu0 0.0
        %6250 = vmatpush1.msra.mxu0 0.0
        %6251 = vmatprep.subr.mxu0 0.0
        %6252 = vmatpush1.msra.mxu0 0.0
        %6253 = vmatprep.subr.mxu0 0.0
        %6254 = vmatpush1.msra.mxu0 0.0
        %6255 = vmatprep.subr.mxu0 0.0
        %6256 = vmatpush1.msra.mxu0 0.0
        %6257 = vmatprep.subr.mxu0 0.0
        %6258 = vmatpush1.msra.mxu0 0.0
        %6259 = vmatprep.subr.mxu0 0.0
        %6260 = vmatpush1.msra.mxu0 0.0
        %6261 = vmatprep.subr.mxu0 0.0
        %6262 = vmatpush1.msra.mxu0 0.0
        %6263 = vmatprep.subr.mxu0 0.0
        %6264 = vmatpush1.msra.mxu0 0.0
        %6265 = vmatprep.subr.mxu0 0.0
        %6266 = vmatpush1.msra.mxu0 0.0
        %6267 = vmatprep.subr.mxu0 0.0
        %6268 = vmatpush1.msra.mxu0 0.0
        %6269 = vmatprep.subr.mxu0 0.0
        %6270 = vmatpush1.msra.mxu0 %v5404
        %6271 = vmatprep.subr.mxu0 0.0
        %6272 = vmatpush2.msra.mxu0 0.0
        %6273 = vmatprep.subr.mxu0 0.0
        %6274 = vmatpush2.msra.mxu0 0.0
        %6275 = vmatprep.subr.mxu0 0.0
        %6276 = vmatpush2.msra.mxu0 0.0
        %6277 = vmatprep.subr.mxu0 0.0
        %6278 = vmatpush2.msra.mxu0 0.0
        %6279 = vmatprep.subr.mxu0 0.0
        %6280 = vmatpush2.msra.mxu0 0.0
        %6281 = vmatprep.subr.mxu0 0.0
        %6282 = vmatpush2.msra.mxu0 0.0
        %6283 = vmatprep.subr.mxu0 0.0
        %6284 = vmatpush2.msra.mxu0 0.0
        %6285 = vmatprep.subr.mxu0 0.0
        %6286 = vmatpush2.msra.mxu0 0.0
        %6287 = vmatprep.subr.mxu0 0.0
        %6288 = vmatpush2.msra.mxu0 0.0
        %6289 = vmatprep.subr.mxu0 0.0
        %6290 = vmatpush2.msra.mxu0 0.0
        %6291 = vmatprep.subr.mxu0 0.0
        %6292 = vmatpush2.msra.mxu0 0.0
        %6293 = vmatprep.subr.mxu0 0.0
        %6294 = vmatpush2.msra.mxu0 0.0
        %6295 = vmatprep.subr.mxu0 0.0
        %6296 = vmatpush2.msra.mxu0 0.0
        %6297 = vmatprep.subr.mxu0 0.0
        %6298 = vmatpush2.msra.mxu0 0.0
        %6299 = vmatprep.subr.mxu0 0.0
        %6300 = vmatpush2.msra.mxu0 0.0
        %6301 = vmatprep.subr.mxu0 0.0
        %6302 = vmatpush2.msra.mxu0 0.0
        %6303 = vmatprep.mubr.f32.mxu0 0.0
        %6304 = vmatmul.mubr.f32.gmra.mxu0 %v6237
        %v6305 = vpop.f32.mrf.mxu0
        %v6306 = vadd.f32 0.0, %v6305
        %v6307 = vpop.f32.mrf.mxu0
        %6308 = vdwg.mxu0
        %v6310 = vsel %vm5090, %v6306, 0
        %6312 = vmatprep.subr.mxu0 0.0
        %6313 = vmatpush1.msra.mxu0 0.0
        %6314 = vmatprep.subr.mxu0 0.0
        %6315 = vmatpush1.msra.mxu0 0.0
        %6316 = vmatprep.subr.mxu0 0.0
        %6317 = vmatpush1.msra.mxu0 0.0
        %6318 = vmatprep.subr.mxu0 0.0
        %6319 = vmatpush1.msra.mxu0 0.0
        %6320 = vmatprep.subr.mxu0 0.0
        %6321 = vmatpush1.msra.mxu0 0.0
        %6322 = vmatprep.subr.mxu0 0.0
        %6323 = vmatpush1.msra.mxu0 0.0
        %6324 = vmatprep.subr.mxu0 0.0
        %6325 = vmatpush1.msra.mxu0 0.0
        %6326 = vmatprep.subr.mxu0 0.0
        %6327 = vmatpush1.msra.mxu0 0.0
        %6328 = vmatprep.subr.mxu0 0.0
        %6329 = vmatpush1.msra.mxu0 %v3588
        %6330 = vmatprep.subr.mxu0 0.0
        %6331 = vmatpush1.msra.mxu0 %v3587
        %6332 = vmatprep.subr.mxu0 0.0
        %6333 = vmatpush1.msra.mxu0 %v3586
        %6334 = vmatprep.subr.mxu0 0.0
        %6335 = vmatpush1.msra.mxu0 %v3585
        %6336 = vmatprep.subr.mxu0 0.0
        %6337 = vmatpush1.msra.mxu0 %v3584
        %6338 = vmatprep.subr.mxu0 0.0
        %6339 = vmatpush1.msra.mxu0 %v3583
        %6340 = vmatprep.subr.mxu0 0.0
        %6341 = vmatpush1.msra.mxu0 %v3582
        %6342 = vmatprep.subr.mxu0 0.0
        %6343 = vmatpush1.msra.mxu0 %v3581
        %6344 = vmatprep.subr.mxu0 0.0
        %6345 = vmatpush2.msra.mxu0 0.0
        %6346 = vmatprep.subr.mxu0 0.0
        %6347 = vmatpush2.msra.mxu0 0.0
        %6348 = vmatprep.subr.mxu0 0.0
        %6349 = vmatpush2.msra.mxu0 0.0
        %6350 = vmatprep.subr.mxu0 0.0
        %6351 = vmatpush2.msra.mxu0 0.0
        %6352 = vmatprep.subr.mxu0 0.0
        %6353 = vmatpush2.msra.mxu0 0.0
        %6354 = vmatprep.subr.mxu0 0.0
        %6355 = vmatpush2.msra.mxu0 0.0
        %6356 = vmatprep.subr.mxu0 0.0
        %6357 = vmatpush2.msra.mxu0 0.0
        %6358 = vmatprep.subr.mxu0 0.0
        %6359 = vmatpush2.msra.mxu0 0.0
        %6360 = vmatprep.subr.mxu0 0.0
        %6361 = vmatpush2.msra.mxu0 0.0
        %6362 = vmatprep.subr.mxu0 0.0
        %6363 = vmatpush2.msra.mxu0 0.0
        %6364 = vmatprep.subr.mxu0 0.0
        %6365 = vmatpush2.msra.mxu0 0.0
        %6366 = vmatprep.subr.mxu0 0.0
        %6367 = vmatpush2.msra.mxu0 0.0
        %6368 = vmatprep.subr.mxu0 0.0
        %6369 = vmatpush2.msra.mxu0 0.0
        %6370 = vmatprep.subr.mxu0 0.0
        %6371 = vmatpush2.msra.mxu0 0.0
        %6372 = vmatprep.subr.mxu0 0.0
        %6373 = vmatpush2.msra.mxu0 0.0
        %6374 = vmatprep.subr.mxu0 0.0
        %6375 = vmatpush2.msra.mxu0 0.0
        %6376 = vmatprep.mubr.f32.mxu0 0.0
        %6377 = vmatmul.mubr.f32.gmra.mxu0 %v6310
        %v6378 = vpop.f32.mrf.mxu0
        %v6379 = vadd.f32 0.0, %v6378
        %v6380 = vpop.f32.mrf.mxu0
        %6381 = vdwg.mxu0
        %v6382 = vadd.f32 %v6235, %v6379
        %v6384 = vsel %vm4566, %v3540, 0
        %6386 = vmatprep.subr.mxu0 0.0
        %6387 = vmatpush1.msra.mxu0 0.0
        %6388 = vmatprep.subr.mxu0 0.0
        %6389 = vmatpush1.msra.mxu0 0.0
        %6390 = vmatprep.subr.mxu0 0.0
        %6391 = vmatpush1.msra.mxu0 0.0
        %6392 = vmatprep.subr.mxu0 0.0
        %6393 = vmatpush1.msra.mxu0 0.0
        %6394 = vmatprep.subr.mxu0 0.0
        %6395 = vmatpush1.msra.mxu0 0.0
        %6396 = vmatprep.subr.mxu0 0.0
        %6397 = vmatpush1.msra.mxu0 0.0
        %6398 = vmatprep.subr.mxu0 0.0
        %6399 = vmatpush1.msra.mxu0 0.0
        %6400 = vmatprep.subr.mxu0 0.0
        %6401 = vmatpush1.msra.mxu0 0.0
        %6402 = vmatprep.subr.mxu0 0.0
        %6403 = vmatpush1.msra.mxu0 0.0
        %6404 = vmatprep.subr.mxu0 0.0
        %6405 = vmatpush1.msra.mxu0 0.0
        %6406 = vmatprep.subr.mxu0 0.0
        %6407 = vmatpush1.msra.mxu0 0.0
        %6408 = vmatprep.subr.mxu0 0.0
        %6409 = vmatpush1.msra.mxu0 0.0
        %6410 = vmatprep.subr.mxu0 0.0
        %6411 = vmatpush1.msra.mxu0 0.0
        %6412 = vmatprep.subr.mxu0 0.0
        %6413 = vmatpush1.msra.mxu0 0.0
        %6414 = vmatprep.subr.mxu0 0.0
        %6415 = vmatpush1.msra.mxu0 0.0
        %6416 = vmatprep.subr.mxu0 0.0
        %6417 = vmatpush1.msra.mxu0 %v6382
        %6418 = vmatprep.subr.mxu0 0.0
        %6419 = vmatpush2.msra.mxu0 0.0
        %6420 = vmatprep.subr.mxu0 0.0
        %6421 = vmatpush2.msra.mxu0 0.0
        %6422 = vmatprep.subr.mxu0 0.0
        %6423 = vmatpush2.msra.mxu0 0.0
        %6424 = vmatprep.subr.mxu0 0.0
        %6425 = vmatpush2.msra.mxu0 0.0
        %6426 = vmatprep.subr.mxu0 0.0
        %6427 = vmatpush2.msra.mxu0 0.0
        %6428 = vmatprep.subr.mxu0 0.0
        %6429 = vmatpush2.msra.mxu0 0.0
        %6430 = vmatprep.subr.mxu0 0.0
        %6431 = vmatpush2.msra.mxu0 0.0
        %6432 = vmatprep.subr.mxu0 0.0
        %6433 = vmatpush2.msra.mxu0 0.0
        %6434 = vmatprep.subr.mxu0 0.0
        %6435 = vmatpush2.msra.mxu0 0.0
        %6436 = vmatprep.subr.mxu0 0.0
        %6437 = vmatpush2.msra.mxu0 0.0
        %6438 = vmatprep.subr.mxu0 0.0
        %6439 = vmatpush2.msra.mxu0 0.0
        %6440 = vmatprep.subr.mxu0 0.0
        %6441 = vmatpush2.msra.mxu0 0.0
        %6442 = vmatprep.subr.mxu0 0.0
        %6443 = vmatpush2.msra.mxu0 0.0
        %6444 = vmatprep.subr.mxu0 0.0
        %6445 = vmatpush2.msra.mxu0 0.0
        %6446 = vmatprep.subr.mxu0 0.0
        %6447 = vmatpush2.msra.mxu0 0.0
        %6448 = vmatprep.subr.mxu0 0.0
        %6449 = vmatpush2.msra.mxu0 0.0
        %6450 = vmatprep.mubr.f32.mxu0 0.0
        %6451 = vmatmul.mubr.f32.gmra.mxu0 %v6384
        %v6452 = vpop.f32.mrf.mxu0
        %v6453 = vadd.f32 0.0, %v6452
        %v6454 = vpop.f32.mrf.mxu0
        %6455 = vdwg.mxu0
        %6456 = vmatprep.subr.mxu0 0.0
        %6457 = vmatpush1.msra.mxu0 %v3507
        %6458 = vmatprep.subr.mxu0 0.0
        %6459 = vmatpush1.msra.mxu0 %v3506
        %6460 = vmatprep.subr.mxu0 0.0
        %6461 = vmatpush1.msra.mxu0 %v3505
        %6462 = vmatprep.subr.mxu0 0.0
        %6463 = vmatpush1.msra.mxu0 %v3504
        %6464 = vmatprep.subr.mxu0 0.0
        %6465 = vmatpush1.msra.mxu0 %v3503
        %6466 = vmatprep.subr.mxu0 0.0
        %6467 = vmatpush1.msra.mxu0 %v3502
        %6468 = vmatprep.subr.mxu0 0.0
        %6469 = vmatpush1.msra.mxu0 %v3501
        %6470 = vmatprep.subr.mxu0 0.0
        %6471 = vmatpush1.msra.mxu0 %v3500
        %6472 = vmatprep.subr.mxu0 0.0
        %6473 = vmatpush1.msra.mxu0 %v3499
        %6474 = vmatprep.subr.mxu0 0.0
        %6475 = vmatpush1.msra.mxu0 %v3498
        %6476 = vmatprep.subr.mxu0 0.0
        %6477 = vmatpush1.msra.mxu0 %v3497
        %6478 = vmatprep.subr.mxu0 0.0
        %6479 = vmatpush1.msra.mxu0 %v3496
        %6480 = vmatprep.subr.mxu0 0.0
        %6481 = vmatpush1.msra.mxu0 %v3495
        %6482 = vmatprep.subr.mxu0 0.0
        %6483 = vmatpush1.msra.mxu0 %v3494
        %6484 = vmatprep.subr.mxu0 0.0
        %6485 = vmatpush1.msra.mxu0 %v3493
        %6486 = vmatprep.subr.mxu0 0.0
        %6487 = vmatpush1.msra.mxu0 %v3492
        %6488 = vmatprep.subr.mxu0 0.0
        %6489 = vmatpush2.msra.mxu0 0.0
        %6490 = vmatprep.subr.mxu0 0.0
        %6491 = vmatpush2.msra.mxu0 0.0
        %6492 = vmatprep.subr.mxu0 0.0
        %6493 = vmatpush2.msra.mxu0 0.0
        %6494 = vmatprep.subr.mxu0 0.0
        %6495 = vmatpush2.msra.mxu0 0.0
        %6496 = vmatprep.subr.mxu0 0.0
        %6497 = vmatpush2.msra.mxu0 0.0
        %6498 = vmatprep.subr.mxu0 0.0
        %6499 = vmatpush2.msra.mxu0 0.0
        %6500 = vmatprep.subr.mxu0 0.0
        %6501 = vmatpush2.msra.mxu0 0.0
        %6502 = vmatprep.subr.mxu0 0.0
        %6503 = vmatpush2.msra.mxu0 0.0
        %6504 = vmatprep.subr.mxu0 0.0
        %6505 = vmatpush2.msra.mxu0 0.0
        %6506 = vmatprep.subr.mxu0 0.0
        %6507 = vmatpush2.msra.mxu0 0.0
        %6508 = vmatprep.subr.mxu0 0.0
        %6509 = vmatpush2.msra.mxu0 0.0
        %6510 = vmatprep.subr.mxu0 0.0
        %6511 = vmatpush2.msra.mxu0 0.0
        %6512 = vmatprep.subr.mxu0 0.0
        %6513 = vmatpush2.msra.mxu0 0.0
        %6514 = vmatprep.subr.mxu0 0.0
        %6515 = vmatpush2.msra.mxu0 0.0
        %6516 = vmatprep.subr.mxu0 0.0
        %6517 = vmatpush2.msra.mxu0 0.0
        %6518 = vmatprep.subr.mxu0 0.0
        %6519 = vmatpush2.msra.mxu0 0.0
        %6520 = vmatprep.mubr.f32.mxu0 0.0
        %6521 = vmatmul.mubr.f32.gmra.mxu0 %v6453
        %v6522 = vpop.f32.mrf.mxu0
        %v6523 = vadd.f32 0.0, %v6522
        %v6524 = vpop.f32.mrf.mxu0
        %6525 = vdwg.mxu0
        %v6527 = vlaneseq
        %v6528 = vshrl.u32 %v6527, 7
        %v6529 = vsub.s32 0, %v6528
        %v6530 = vrot.slane %v3491, %v6529
        %v6532 = vadd.f32 %v6530, %v6523
        %v6534 = vsel %vm4566, %v3541, 0
        %6536 = vmatprep.subr.mxu0 0.0
        %6537 = vmatpush1.msra.mxu0 0.0
        %6538 = vmatprep.subr.mxu0 0.0
        %6539 = vmatpush1.msra.mxu0 0.0
        %6540 = vmatprep.subr.mxu0 0.0
        %6541 = vmatpush1.msra.mxu0 0.0
        %6542 = vmatprep.subr.mxu0 0.0
        %6543 = vmatpush1.msra.mxu0 0.0
        %6544 = vmatprep.subr.mxu0 0.0
        %6545 = vmatpush1.msra.mxu0 0.0
        %6546 = vmatprep.subr.mxu0 0.0
        %6547 = vmatpush1.msra.mxu0 0.0
        %6548 = vmatprep.subr.mxu0 0.0
        %6549 = vmatpush1.msra.mxu0 0.0
        %6550 = vmatprep.subr.mxu0 0.0
        %6551 = vmatpush1.msra.mxu0 0.0
        %6552 = vmatprep.subr.mxu0 0.0
        %6553 = vmatpush1.msra.mxu0 0.0
        %6554 = vmatprep.subr.mxu0 0.0
        %6555 = vmatpush1.msra.mxu0 0.0
        %6556 = vmatprep.subr.mxu0 0.0
        %6557 = vmatpush1.msra.mxu0 0.0
        %6558 = vmatprep.subr.mxu0 0.0
        %6559 = vmatpush1.msra.mxu0 0.0
        %6560 = vmatprep.subr.mxu0 0.0
        %6561 = vmatpush1.msra.mxu0 0.0
        %6562 = vmatprep.subr.mxu0 0.0
        %6563 = vmatpush1.msra.mxu0 0.0
        %6564 = vmatprep.subr.mxu0 0.0
        %6565 = vmatpush1.msra.mxu0 0.0
        %6566 = vmatprep.subr.mxu0 0.0
        %6567 = vmatpush1.msra.mxu0 %v6382
        %6568 = vmatprep.subr.mxu0 0.0
        %6569 = vmatpush2.msra.mxu0 0.0
        %6570 = vmatprep.subr.mxu0 0.0
        %6571 = vmatpush2.msra.mxu0 0.0
        %6572 = vmatprep.subr.mxu0 0.0
        %6573 = vmatpush2.msra.mxu0 0.0
        %6574 = vmatprep.subr.mxu0 0.0
        %6575 = vmatpush2.msra.mxu0 0.0
        %6576 = vmatprep.subr.mxu0 0.0
        %6577 = vmatpush2.msra.mxu0 0.0
        %6578 = vmatprep.subr.mxu0 0.0
        %6579 = vmatpush2.msra.mxu0 0.0
        %6580 = vmatprep.subr.mxu0 0.0
        %6581 = vmatpush2.msra.mxu0 0.0
        %6582 = vmatprep.subr.mxu0 0.0
        %6583 = vmatpush2.msra.mxu0 0.0
        %6584 = vmatprep.subr.mxu0 0.0
        %6585 = vmatpush2.msra.mxu0 0.0
        %6586 = vmatprep.subr.mxu0 0.0
        %6587 = vmatpush2.msra.mxu0 0.0
        %6588 = vmatprep.subr.mxu0 0.0
        %6589 = vmatpush2.msra.mxu0 0.0
        %6590 = vmatprep.subr.mxu0 0.0
        %6591 = vmatpush2.msra.mxu0 0.0
        %6592 = vmatprep.subr.mxu0 0.0
        %6593 = vmatpush2.msra.mxu0 0.0
        %6594 = vmatprep.subr.mxu0 0.0
        %6595 = vmatpush2.msra.mxu0 0.0
        %6596 = vmatprep.subr.mxu0 0.0
        %6597 = vmatpush2.msra.mxu0 0.0
        %6598 = vmatprep.subr.mxu0 0.0
        %6599 = vmatpush2.msra.mxu0 0.0
        %6600 = vmatprep.mubr.f32.mxu0 0.0
        %6601 = vmatmul.mubr.f32.gmra.mxu0 %v6534
        %v6602 = vpop.f32.mrf.mxu0
        %v6603 = vadd.f32 0.0, %v6602
        %v6604 = vpop.f32.mrf.mxu0
        %6605 = vdwg.mxu0
        %6606 = vmatprep.subr.mxu0 0.0
        %6607 = vmatpush1.msra.mxu0 %v3523
        %6608 = vmatprep.subr.mxu0 0.0
        %6609 = vmatpush1.msra.mxu0 %v3522
        %6610 = vmatprep.subr.mxu0 0.0
        %6611 = vmatpush1.msra.mxu0 %v3521
        %6612 = vmatprep.subr.mxu0 0.0
        %6613 = vmatpush1.msra.mxu0 %v3520
        %6614 = vmatprep.subr.mxu0 0.0
        %6615 = vmatpush1.msra.mxu0 %v3519
        %6616 = vmatprep.subr.mxu0 0.0
        %6617 = vmatpush1.msra.mxu0 %v3518
        %6618 = vmatprep.subr.mxu0 0.0
        %6619 = vmatpush1.msra.mxu0 %v3517
        %6620 = vmatprep.subr.mxu0 0.0
        %6621 = vmatpush1.msra.mxu0 %v3516
        %6622 = vmatprep.subr.mxu0 0.0
        %6623 = vmatpush1.msra.mxu0 %v3515
        %6624 = vmatprep.subr.mxu0 0.0
        %6625 = vmatpush1.msra.mxu0 %v3514
        %6626 = vmatprep.subr.mxu0 0.0
        %6627 = vmatpush1.msra.mxu0 %v3513
        %6628 = vmatprep.subr.mxu0 0.0
        %6629 = vmatpush1.msra.mxu0 %v3512
        %6630 = vmatprep.subr.mxu0 0.0
        %6631 = vmatpush1.msra.mxu0 %v3511
        %6632 = vmatprep.subr.mxu0 0.0
        %6633 = vmatpush1.msra.mxu0 %v3510
        %6634 = vmatprep.subr.mxu0 0.0
        %6635 = vmatpush1.msra.mxu0 %v3509
        %6636 = vmatprep.subr.mxu0 0.0
        %6637 = vmatpush1.msra.mxu0 %v3508
        %6638 = vmatprep.subr.mxu0 0.0
        %6639 = vmatpush2.msra.mxu0 0.0
        %6640 = vmatprep.subr.mxu0 0.0
        %6641 = vmatpush2.msra.mxu0 0.0
        %6642 = vmatprep.subr.mxu0 0.0
        %6643 = vmatpush2.msra.mxu0 0.0
        %6644 = vmatprep.subr.mxu0 0.0
        %6645 = vmatpush2.msra.mxu0 0.0
        %6646 = vmatprep.subr.mxu0 0.0
        %6647 = vmatpush2.msra.mxu0 0.0
        %6648 = vmatprep.subr.mxu0 0.0
        %6649 = vmatpush2.msra.mxu0 0.0
        %6650 = vmatprep.subr.mxu0 0.0
        %6651 = vmatpush2.msra.mxu0 0.0
        %6652 = vmatprep.subr.mxu0 0.0
        %6653 = vmatpush2.msra.mxu0 0.0
        %6654 = vmatprep.subr.mxu0 0.0
        %6655 = vmatpush2.msra.mxu0 0.0
        %6656 = vmatprep.subr.mxu0 0.0
        %6657 = vmatpush2.msra.mxu0 0.0
        %6658 = vmatprep.subr.mxu0 0.0
        %6659 = vmatpush2.msra.mxu0 0.0
        %6660 = vmatprep.subr.mxu0 0.0
        %6661 = vmatpush2.msra.mxu0 0.0
        %6662 = vmatprep.subr.mxu0 0.0
        %6663 = vmatpush2.msra.mxu0 0.0
        %6664 = vmatprep.subr.mxu0 0.0
        %6665 = vmatpush2.msra.mxu0 0.0
        %6666 = vmatprep.subr.mxu0 0.0
        %6667 = vmatpush2.msra.mxu0 0.0
        %6668 = vmatprep.subr.mxu0 0.0
        %6669 = vmatpush2.msra.mxu0 0.0
        %6670 = vmatprep.mubr.f32.mxu0 0.0
        %6671 = vmatmul.mubr.f32.gmra.mxu0 %v6603
        %v6672 = vpop.f32.mrf.mxu0
        %v6673 = vadd.f32 0.0, %v6672
        %v6674 = vpop.f32.mrf.mxu0
        %6675 = vdwg.mxu0
        %v6676 = vadd.f32 %v6532, %v6673
        %v6678 = vsel %vm4566, %v3542, 0
        %6680 = vmatprep.subr.mxu0 0.0
        %6681 = vmatpush1.msra.mxu0 0.0
        %6682 = vmatprep.subr.mxu0 0.0
        %6683 = vmatpush1.msra.mxu0 0.0
        %6684 = vmatprep.subr.mxu0 0.0
        %6685 = vmatpush1.msra.mxu0 0.0
        %6686 = vmatprep.subr.mxu0 0.0
        %6687 = vmatpush1.msra.mxu0 0.0
        %6688 = vmatprep.subr.mxu0 0.0
        %6689 = vmatpush1.msra.mxu0 0.0
        %6690 = vmatprep.subr.mxu0 0.0
        %6691 = vmatpush1.msra.mxu0 0.0
        %6692 = vmatprep.subr.mxu0 0.0
        %6693 = vmatpush1.msra.mxu0 0.0
        %6694 = vmatprep.subr.mxu0 0.0
        %6695 = vmatpush1.msra.mxu0 0.0
        %6696 = vmatprep.subr.mxu0 0.0
        %6697 = vmatpush1.msra.mxu0 0.0
        %6698 = vmatprep.subr.mxu0 0.0
        %6699 = vmatpush1.msra.mxu0 0.0
        %6700 = vmatprep.subr.mxu0 0.0
        %6701 = vmatpush1.msra.mxu0 0.0
        %6702 = vmatprep.subr.mxu0 0.0
        %6703 = vmatpush1.msra.mxu0 0.0
        %6704 = vmatprep.subr.mxu0 0.0
        %6705 = vmatpush1.msra.mxu0 0.0
        %6706 = vmatprep.subr.mxu0 0.0
        %6707 = vmatpush1.msra.mxu0 0.0
        %6708 = vmatprep.subr.mxu0 0.0
        %6709 = vmatpush1.msra.mxu0 0.0
        %6710 = vmatprep.subr.mxu0 0.0
        %6711 = vmatpush1.msra.mxu0 %v6382
        %6712 = vmatprep.subr.mxu0 0.0
        %6713 = vmatpush2.msra.mxu0 0.0
        %6714 = vmatprep.subr.mxu0 0.0
        %6715 = vmatpush2.msra.mxu0 0.0
        %6716 = vmatprep.subr.mxu0 0.0
        %6717 = vmatpush2.msra.mxu0 0.0
        %6718 = vmatprep.subr.mxu0 0.0
        %6719 = vmatpush2.msra.mxu0 0.0
        %6720 = vmatprep.subr.mxu0 0.0
        %6721 = vmatpush2.msra.mxu0 0.0
        %6722 = vmatprep.subr.mxu0 0.0
        %6723 = vmatpush2.msra.mxu0 0.0
        %6724 = vmatprep.subr.mxu0 0.0
        %6725 = vmatpush2.msra.mxu0 0.0
        %6726 = vmatprep.subr.mxu0 0.0
        %6727 = vmatpush2.msra.mxu0 0.0
        %6728 = vmatprep.subr.mxu0 0.0
        %6729 = vmatpush2.msra.mxu0 0.0
        %6730 = vmatprep.subr.mxu0 0.0
        %6731 = vmatpush2.msra.mxu0 0.0
        %6732 = vmatprep.subr.mxu0 0.0
        %6733 = vmatpush2.msra.mxu0 0.0
        %6734 = vmatprep.subr.mxu0 0.0
        %6735 = vmatpush2.msra.mxu0 0.0
        %6736 = vmatprep.subr.mxu0 0.0
        %6737 = vmatpush2.msra.mxu0 0.0
        %6738 = vmatprep.subr.mxu0 0.0
        %6739 = vmatpush2.msra.mxu0 0.0
        %6740 = vmatprep.subr.mxu0 0.0
        %6741 = vmatpush2.msra.mxu0 0.0
        %6742 = vmatprep.subr.mxu0 0.0
        %6743 = vmatpush2.msra.mxu0 0.0
        %6744 = vmatprep.mubr.f32.mxu0 0.0
        %6745 = vmatmul.mubr.f32.gmra.mxu0 %v6678
        %v6746 = vpop.f32.mrf.mxu0
        %v6747 = vadd.f32 0.0, %v6746
        %v6748 = vpop.f32.mrf.mxu0
        %6749 = vdwg.mxu0
        %6750 = vmatprep.subr.mxu0 0.0
        %6751 = vmatpush1.msra.mxu0 %v3539
        %6752 = vmatprep.subr.mxu0 0.0
        %6753 = vmatpush1.msra.mxu0 %v3538
        %6754 = vmatprep.subr.mxu0 0.0
        %6755 = vmatpush1.msra.mxu0 %v3537
        %6756 = vmatprep.subr.mxu0 0.0
        %6757 = vmatpush1.msra.mxu0 %v3536
        %6758 = vmatprep.subr.mxu0 0.0
        %6759 = vmatpush1.msra.mxu0 %v3535
        %6760 = vmatprep.subr.mxu0 0.0
        %6761 = vmatpush1.msra.mxu0 %v3534
        %6762 = vmatprep.subr.mxu0 0.0
        %6763 = vmatpush1.msra.mxu0 %v3533
        %6764 = vmatprep.subr.mxu0 0.0
        %6765 = vmatpush1.msra.mxu0 %v3532
        %6766 = vmatprep.subr.mxu0 0.0
        %6767 = vmatpush1.msra.mxu0 %v3531
        %6768 = vmatprep.subr.mxu0 0.0
        %6769 = vmatpush1.msra.mxu0 %v3530
        %6770 = vmatprep.subr.mxu0 0.0
        %6771 = vmatpush1.msra.mxu0 %v3529
        %6772 = vmatprep.subr.mxu0 0.0
        %6773 = vmatpush1.msra.mxu0 %v3528
        %6774 = vmatprep.subr.mxu0 0.0
        %6775 = vmatpush1.msra.mxu0 %v3527
        %6776 = vmatprep.subr.mxu0 0.0
        %6777 = vmatpush1.msra.mxu0 %v3526
        %6778 = vmatprep.subr.mxu0 0.0
        %6779 = vmatpush1.msra.mxu0 %v3525
        %6780 = vmatprep.subr.mxu0 0.0
        %6781 = vmatpush1.msra.mxu0 %v3524
        %6782 = vmatprep.subr.mxu0 0.0
        %6783 = vmatpush2.msra.mxu0 0.0
        %6784 = vmatprep.subr.mxu0 0.0
        %6785 = vmatpush2.msra.mxu0 0.0
        %6786 = vmatprep.subr.mxu0 0.0
        %6787 = vmatpush2.msra.mxu0 0.0
        %6788 = vmatprep.subr.mxu0 0.0
        %6789 = vmatpush2.msra.mxu0 0.0
        %6790 = vmatprep.subr.mxu0 0.0
        %6791 = vmatpush2.msra.mxu0 0.0
        %6792 = vmatprep.subr.mxu0 0.0
        %6793 = vmatpush2.msra.mxu0 0.0
        %6794 = vmatprep.subr.mxu0 0.0
        %6795 = vmatpush2.msra.mxu0 0.0
        %6796 = vmatprep.subr.mxu0 0.0
        %6797 = vmatpush2.msra.mxu0 0.0
        %6798 = vmatprep.subr.mxu0 0.0
        %6799 = vmatpush2.msra.mxu0 0.0
        %6800 = vmatprep.subr.mxu0 0.0
        %6801 = vmatpush2.msra.mxu0 0.0
        %6802 = vmatprep.subr.mxu0 0.0
        %6803 = vmatpush2.msra.mxu0 0.0
        %6804 = vmatprep.subr.mxu0 0.0
        %6805 = vmatpush2.msra.mxu0 0.0
        %6806 = vmatprep.subr.mxu0 0.0
        %6807 = vmatpush2.msra.mxu0 0.0
        %6808 = vmatprep.subr.mxu0 0.0
        %6809 = vmatpush2.msra.mxu0 0.0
        %6810 = vmatprep.subr.mxu0 0.0
        %6811 = vmatpush2.msra.mxu0 0.0
        %6812 = vmatprep.subr.mxu0 0.0
        %6813 = vmatpush2.msra.mxu0 0.0
        %6814 = vmatprep.mubr.f32.mxu0 0.0
        %6815 = vmatmul.mubr.f32.gmra.mxu0 %v6747
        %v6816 = vpop.f32.mrf.mxu0
        %v6817 = vadd.f32 0.0, %v6816
        %v6818 = vpop.f32.mrf.mxu0
        %6819 = vdwg.mxu0
        %v6820 = vadd.f32 %v6676, %v6817
        %v6822 = vlaneseq
        %v6823 = vshrl.u32 %v6822, 7
        %v6824 = vsub.s32 0, %v6823
        %v6825 = vrot.slane %v3225, %v6824
        %v6826 = vlaneseq
        %v6827 = vshrl.u32 %v6826, 7
        %v6828 = vsub.s32 1, %v6827
        %v6829 = vrot.slane %v3225, %v6828
        %6832 = vmatprep.subr.mxu0 %v3257
        %6833 = vmatpush1.msra.mxu0 %v3256
        %6834 = vmatprep.subr.mxu0 %v3255
        %6835 = vmatpush1.msra.mxu0 %v3254
        %6836 = vmatprep.subr.mxu0 %v3253
        %6837 = vmatpush1.msra.mxu0 %v3252
        %6838 = vmatprep.subr.mxu0 %v3251
        %6839 = vmatpush1.msra.mxu0 %v3250
        %6840 = vmatprep.subr.mxu0 %v3249
        %6841 = vmatpush1.msra.mxu0 %v3248
        %6842 = vmatprep.subr.mxu0 %v3247
        %6843 = vmatpush1.msra.mxu0 %v3246
        %6844 = vmatprep.subr.mxu0 %v3245
        %6845 = vmatpush1.msra.mxu0 %v3244
        %6846 = vmatprep.subr.mxu0 %v3243
        %6847 = vmatpush1.msra.mxu0 %v3242
        %6848 = vmatprep.subr.mxu0 %v3241
        %6849 = vmatpush1.msra.mxu0 %v3240
        %6850 = vmatprep.subr.mxu0 %v3239
        %6851 = vmatpush1.msra.mxu0 %v3238
        %6852 = vmatprep.subr.mxu0 %v3237
        %6853 = vmatpush1.msra.mxu0 %v3236
        %6854 = vmatprep.subr.mxu0 %v3235
        %6855 = vmatpush1.msra.mxu0 %v3234
        %6856 = vmatprep.subr.mxu0 %v3233
        %6857 = vmatpush1.msra.mxu0 %v3232
        %6858 = vmatprep.subr.mxu0 %v3231
        %6859 = vmatpush1.msra.mxu0 %v3230
        %6860 = vmatprep.subr.mxu0 %v3229
        %6861 = vmatpush1.msra.mxu0 %v3228
        %6862 = vmatprep.subr.mxu0 %v3227
        %6863 = vmatpush1.msra.mxu0 %v3226
        %6864 = vmatprep.subr.mxu0 0.0
        %6865 = vmatpush2.msra.mxu0 0.0
        %6866 = vmatprep.subr.mxu0 0.0
        %6867 = vmatpush2.msra.mxu0 0.0
        %6868 = vmatprep.subr.mxu0 0.0
        %6869 = vmatpush2.msra.mxu0 0.0
        %6870 = vmatprep.subr.mxu0 0.0
        %6871 = vmatpush2.msra.mxu0 0.0
        %6872 = vmatprep.subr.mxu0 0.0
        %6873 = vmatpush2.msra.mxu0 0.0
        %6874 = vmatprep.subr.mxu0 0.0
        %6875 = vmatpush2.msra.mxu0 0.0
        %6876 = vmatprep.subr.mxu0 0.0
        %6877 = vmatpush2.msra.mxu0 0.0
        %6878 = vmatprep.subr.mxu0 0.0
        %6879 = vmatpush2.msra.mxu0 0.0
        %6880 = vmatprep.subr.mxu0 0.0
        %6881 = vmatpush2.msra.mxu0 0.0
        %6882 = vmatprep.subr.mxu0 0.0
        %6883 = vmatpush2.msra.mxu0 0.0
        %6884 = vmatprep.subr.mxu0 0.0
        %6885 = vmatpush2.msra.mxu0 0.0
        %6886 = vmatprep.subr.mxu0 0.0
        %6887 = vmatpush2.msra.mxu0 0.0
        %6888 = vmatprep.subr.mxu0 0.0
        %6889 = vmatpush2.msra.mxu0 0.0
        %6890 = vmatprep.subr.mxu0 0.0
        %6891 = vmatpush2.msra.mxu0 0.0
        %6892 = vmatprep.subr.mxu0 0.0
        %6893 = vmatpush2.msra.mxu0 0.0
        %6894 = vmatprep.subr.mxu0 0.0
        %6895 = vmatpush2.msra.mxu0 0.0
        %6896 = vmatprep.mubr.f32.mxu0 0.0
        %6897 = vmatmul.mubr.f32.gmra.mxu0 %v4125
        %v6898 = vpop.f32.mrf.mxu0
        %v6899 = vadd.f32 %v6825, %v6898
        %v6900 = vpop.f32.mrf.mxu0
        %v6901 = vadd.f32 %v6829, %v6900
        %6902 = vmatprep.mubr.f32.mxu0 0.0
        %6903 = vmatmul.mubr.f32.gmra.mxu0 %v4126
        %v6904 = vpop.f32.mrf.mxu0
        %v6905 = vadd.f32 %v6825, %v6904
        %v6906 = vpop.f32.mrf.mxu0
        %v6907 = vadd.f32 %v6829, %v6906
        %6908 = vdwg.mxu0
        %v6909 = vadd.f32 %v6899, %v6905
        %v6910 = vrot.slane %v6909, 4
        %v6911 = vadd.f32 %v6909, %v6910
        %v6912 = vrot.slane %v6911, 2
        %v6913 = vadd.f32 %v6911, %v6912
        %v6914 = vrot.slane %v6913, 1
        %v6915 = vadd.f32 %v6913, %v6914
        %v6916 = vadd.f32 %v6901, %v6907
        %v6917 = vrot.slane %v6916, 4
        %v6918 = vadd.f32 %v6916, %v6917
        %v6919 = vrot.slane %v6918, 2
        %v6920 = vadd.f32 %v6918, %v6919
        %v6921 = vrot.slane %v6920, 1
        %v6922 = vadd.f32 %v6920, %v6921
        %6923 = vmatprep.subr.mxu0 0.0
        %6924 = vmatpush1.msra.mxu0 %v3034
        %6925 = vmatprep.subr.mxu0 0.0
        %6926 = vmatpush1.msra.mxu0 %v3033
        %6927 = vmatprep.subr.mxu0 0.0
        %6928 = vmatpush1.msra.mxu0 %v3032
        %6929 = vmatprep.subr.mxu0 0.0
        %6930 = vmatpush1.msra.mxu0 %v3031
        %6931 = vmatprep.subr.mxu0 0.0
        %6932 = vmatpush1.msra.mxu0 %v3030
        %6933 = vmatprep.subr.mxu0 0.0
        %6934 = vmatpush1.msra.mxu0 %v3029
        %6935 = vmatprep.subr.mxu0 0.0
        %6936 = vmatpush1.msra.mxu0 %v3028
        %6937 = vmatprep.subr.mxu0 0.0
        %6938 = vmatpush1.msra.mxu0 %v3027
        %6939 = vmatprep.subr.mxu0 0.0
        %6940 = vmatpush1.msra.mxu0 %v3026
        %6941 = vmatprep.subr.mxu0 0.0
        %6942 = vmatpush1.msra.mxu0 %v3025
        %6943 = vmatprep.subr.mxu0 0.0
        %6944 = vmatpush1.msra.mxu0 %v3024
        %6945 = vmatprep.subr.mxu0 0.0
        %6946 = vmatpush1.msra.mxu0 %v3023
        %6947 = vmatprep.subr.mxu0 0.0
        %6948 = vmatpush1.msra.mxu0 %v3022
        %6949 = vmatprep.subr.mxu0 0.0
        %6950 = vmatpush1.msra.mxu0 %v3021
        %6951 = vmatprep.subr.mxu0 0.0
        %6952 = vmatpush1.msra.mxu0 %v3020
        %6953 = vmatprep.subr.mxu0 0.0
        %6954 = vmatpush1.msra.mxu0 %v3019
        %6955 = vmatprep.subr.mxu0 0.0
        %6956 = vmatpush2.msra.mxu0 %v3050
        %6957 = vmatprep.subr.mxu0 0.0
        %6958 = vmatpush2.msra.mxu0 %v3049
        %6959 = vmatprep.subr.mxu0 0.0
        %6960 = vmatpush2.msra.mxu0 %v3048
        %6961 = vmatprep.subr.mxu0 0.0
        %6962 = vmatpush2.msra.mxu0 %v3047
        %6963 = vmatprep.subr.mxu0 0.0
        %6964 = vmatpush2.msra.mxu0 %v3046
        %6965 = vmatprep.subr.mxu0 0.0
        %6966 = vmatpush2.msra.mxu0 %v3045
        %6967 = vmatprep.subr.mxu0 0.0
        %6968 = vmatpush2.msra.mxu0 %v3044
        %6969 = vmatprep.subr.mxu0 0.0
        %6970 = vmatpush2.msra.mxu0 %v3043
        %6971 = vmatprep.subr.mxu0 0.0
        %6972 = vmatpush2.msra.mxu0 %v3042
        %6973 = vmatprep.subr.mxu0 0.0
        %6974 = vmatpush2.msra.mxu0 %v3041
        %6975 = vmatprep.subr.mxu0 0.0
        %6976 = vmatpush2.msra.mxu0 %v3040
        %6977 = vmatprep.subr.mxu0 0.0
        %6978 = vmatpush2.msra.mxu0 %v3039
        %6979 = vmatprep.subr.mxu0 0.0
        %6980 = vmatpush2.msra.mxu0 %v3038
        %6981 = vmatprep.subr.mxu0 0.0
        %6982 = vmatpush2.msra.mxu0 %v3037
        %6983 = vmatprep.subr.mxu0 0.0
        %6984 = vmatpush2.msra.mxu0 %v3036
        %6985 = vmatprep.subr.mxu0 0.0
        %6986 = vmatpush2.msra.mxu0 %v3035
        %6987 = vmatprep.mubr.f32.mxu0 %v6922
        %6988 = vmatmul.mubr.f32.gmra.mxu0 %v6915
        %v6989 = vpop.f32.mrf.mxu0
        %v6990 = vadd.f32 0.0, %v6989
        %v6991 = vpop.f32.mrf.mxu0
        %6992 = vdwg.mxu0
        %v6994 = vsel %vm3625, %v6990, 0
        %6996 = vmatprep.subr.mxu0 0.0
        %6997 = vmatpush1.msra.mxu0 0.0
        %6998 = vmatprep.subr.mxu0 0.0
        %6999 = vmatpush1.msra.mxu0 0.0
        %7000 = vmatprep.subr.mxu0 0.0
        %7001 = vmatpush1.msra.mxu0 0.0
        %7002 = vmatprep.subr.mxu0 0.0
        %7003 = vmatpush1.msra.mxu0 0.0
        %7004 = vmatprep.subr.mxu0 0.0
        %7005 = vmatpush1.msra.mxu0 0.0
        %7006 = vmatprep.subr.mxu0 0.0
        %7007 = vmatpush1.msra.mxu0 0.0
        %7008 = vmatprep.subr.mxu0 0.0
        %7009 = vmatpush1.msra.mxu0 0.0
        %7010 = vmatprep.subr.mxu0 0.0
        %7011 = vmatpush1.msra.mxu0 0.0
        %7012 = vmatprep.subr.mxu0 0.0
        %7013 = vmatpush1.msra.mxu0 0.0
        %7014 = vmatprep.subr.mxu0 0.0
        %7015 = vmatpush1.msra.mxu0 0.0
        %7016 = vmatprep.subr.mxu0 0.0
        %7017 = vmatpush1.msra.mxu0 0.0
        %7018 = vmatprep.subr.mxu0 0.0
        %7019 = vmatpush1.msra.mxu0 0.0
        %7020 = vmatprep.subr.mxu0 0.0
        %7021 = vmatpush1.msra.mxu0 0.0
        %7022 = vmatprep.subr.mxu0 0.0
        %7023 = vmatpush1.msra.mxu0 0.0
        %7024 = vmatprep.subr.mxu0 0.0
        %7025 = vmatpush1.msra.mxu0 %v3056
        %7026 = vmatprep.subr.mxu0 0.0
        %7027 = vmatpush1.msra.mxu0 %v3055
        %7028 = vmatprep.subr.mxu0 0.0
        %7029 = vmatpush2.msra.mxu0 0.0
        %7030 = vmatprep.subr.mxu0 0.0
        %7031 = vmatpush2.msra.mxu0 0.0
        %7032 = vmatprep.subr.mxu0 0.0
        %7033 = vmatpush2.msra.mxu0 0.0
        %7034 = vmatprep.subr.mxu0 0.0
        %7035 = vmatpush2.msra.mxu0 0.0
        %7036 = vmatprep.subr.mxu0 0.0
        %7037 = vmatpush2.msra.mxu0 0.0
        %7038 = vmatprep.subr.mxu0 0.0
        %7039 = vmatpush2.msra.mxu0 0.0
        %7040 = vmatprep.subr.mxu0 0.0
        %7041 = vmatpush2.msra.mxu0 0.0
        %7042 = vmatprep.subr.mxu0 0.0
        %7043 = vmatpush2.msra.mxu0 0.0
        %7044 = vmatprep.subr.mxu0 0.0
        %7045 = vmatpush2.msra.mxu0 0.0
        %7046 = vmatprep.subr.mxu0 0.0
        %7047 = vmatpush2.msra.mxu0 0.0
        %7048 = vmatprep.subr.mxu0 0.0
        %7049 = vmatpush2.msra.mxu0 0.0
        %7050 = vmatprep.subr.mxu0 0.0
        %7051 = vmatpush2.msra.mxu0 0.0
        %7052 = vmatprep.subr.mxu0 0.0
        %7053 = vmatpush2.msra.mxu0 0.0
        %7054 = vmatprep.subr.mxu0 0.0
        %7055 = vmatpush2.msra.mxu0 0.0
        %7056 = vmatprep.subr.mxu0 0.0
        %7057 = vmatpush2.msra.mxu0 0.0
        %7058 = vmatprep.subr.mxu0 0.0
        %7059 = vmatpush2.msra.mxu0 0.0
        %7060 = vmatprep.mubr.f32.mxu0 0.0
        %7061 = vmatmul.mubr.f32.gmra.mxu0 %v6994
        %v7062 = vpop.f32.mrf.mxu0
        %v7063 = vadd.f32 %v3017, %v7062
        %v7064 = vpop.f32.mrf.mxu0
        %7065 = vdwg.mxu0
        %v7066 = vmax.f32 %v7063, 0.0
        %v7068 = vsel %vm5238, %v7066, 0
        %v7071 = vsel %vm5242, %v3057, 0
        %7073 = vmatprep.subr.mxu0 0.0
        %7074 = vmatpush1.msra.mxu0 0.0
        %7075 = vmatprep.subr.mxu0 0.0
        %7076 = vmatpush1.msra.mxu0 0.0
        %7077 = vmatprep.subr.mxu0 0.0
        %7078 = vmatpush1.msra.mxu0 0.0
        %7079 = vmatprep.subr.mxu0 0.0
        %7080 = vmatpush1.msra.mxu0 0.0
        %7081 = vmatprep.subr.mxu0 0.0
        %7082 = vmatpush1.msra.mxu0 0.0
        %7083 = vmatprep.subr.mxu0 0.0
        %7084 = vmatpush1.msra.mxu0 0.0
        %7085 = vmatprep.subr.mxu0 0.0
        %7086 = vmatpush1.msra.mxu0 0.0
        %7087 = vmatprep.subr.mxu0 0.0
        %7088 = vmatpush1.msra.mxu0 0.0
        %7089 = vmatprep.subr.mxu0 0.0
        %7090 = vmatpush1.msra.mxu0 0.0
        %7091 = vmatprep.subr.mxu0 0.0
        %7092 = vmatpush1.msra.mxu0 0.0
        %7093 = vmatprep.subr.mxu0 0.0
        %7094 = vmatpush1.msra.mxu0 0.0
        %7095 = vmatprep.subr.mxu0 0.0
        %7096 = vmatpush1.msra.mxu0 0.0
        %7097 = vmatprep.subr.mxu0 0.0
        %7098 = vmatpush1.msra.mxu0 0.0
        %7099 = vmatprep.subr.mxu0 0.0
        %7100 = vmatpush1.msra.mxu0 0.0
        %7101 = vmatprep.subr.mxu0 0.0
        %7102 = vmatpush1.msra.mxu0 0.0
        %7103 = vmatprep.subr.mxu0 0.0
        %7104 = vmatpush1.msra.mxu0 %v7071
        %7105 = vmatprep.subr.mxu0 0.0
        %7106 = vmatpush2.msra.mxu0 0.0
        %7107 = vmatprep.subr.mxu0 0.0
        %7108 = vmatpush2.msra.mxu0 0.0
        %7109 = vmatprep.subr.mxu0 0.0
        %7110 = vmatpush2.msra.mxu0 0.0
        %7111 = vmatprep.subr.mxu0 0.0
        %7112 = vmatpush2.msra.mxu0 0.0
        %7113 = vmatprep.subr.mxu0 0.0
        %7114 = vmatpush2.msra.mxu0 0.0
        %7115 = vmatprep.subr.mxu0 0.0
        %7116 = vmatpush2.msra.mxu0 0.0
        %7117 = vmatprep.subr.mxu0 0.0
        %7118 = vmatpush2.msra.mxu0 0.0
        %7119 = vmatprep.subr.mxu0 0.0
        %7120 = vmatpush2.msra.mxu0 0.0
        %7121 = vmatprep.subr.mxu0 0.0
        %7122 = vmatpush2.msra.mxu0 0.0
        %7123 = vmatprep.subr.mxu0 0.0
        %7124 = vmatpush2.msra.mxu0 0.0
        %7125 = vmatprep.subr.mxu0 0.0
        %7126 = vmatpush2.msra.mxu0 0.0
        %7127 = vmatprep.subr.mxu0 0.0
        %7128 = vmatpush2.msra.mxu0 0.0
        %7129 = vmatprep.subr.mxu0 0.0
        %7130 = vmatpush2.msra.mxu0 0.0
        %7131 = vmatprep.subr.mxu0 0.0
        %7132 = vmatpush2.msra.mxu0 0.0
        %7133 = vmatprep.subr.mxu0 0.0
        %7134 = vmatpush2.msra.mxu0 0.0
        %7135 = vmatprep.subr.mxu0 0.0
        %7136 = vmatpush2.msra.mxu0 0.0
        %7137 = vmatprep.mubr.f32.mxu0 0.0
        %7138 = vmatmul.mubr.f32.gmra.mxu0 %v7068
        %v7139 = vpop.f32.mrf.mxu0
        %v7140 = vadd.f32 %v3018, %v7139
        %v7141 = vpop.f32.mrf.mxu0
        %7142 = vdwg.mxu0
        %v7143 = vxor.u32 %v7140, 2147483648
        %v7144 = vmul.f32 %v7143, 1.442695
        %v7145 = vpow.pop %v7144
        %v7146 = vadd.f32 %v7145, 1.0
        %v7147 = vrcp.pop %v7146
        %v7148 = vmul.f32 1.0, %v7147
        %v7150 = vsel %vm3625, %v7148, 0
        %7152 = vmatprep.subr.mxu0 0.0
        %7153 = vmatpush1.msra.mxu0 0.0
        %7154 = vmatprep.subr.mxu0 0.0
        %7155 = vmatpush1.msra.mxu0 0.0
        %7156 = vmatprep.subr.mxu0 0.0
        %7157 = vmatpush1.msra.mxu0 0.0
        %7158 = vmatprep.subr.mxu0 0.0
        %7159 = vmatpush1.msra.mxu0 0.0
        %7160 = vmatprep.subr.mxu0 0.0
        %7161 = vmatpush1.msra.mxu0 0.0
        %7162 = vmatprep.subr.mxu0 0.0
        %7163 = vmatpush1.msra.mxu0 0.0
        %7164 = vmatprep.subr.mxu0 0.0
        %7165 = vmatpush1.msra.mxu0 0.0
        %7166 = vmatprep.subr.mxu0 0.0
        %7167 = vmatpush1.msra.mxu0 0.0
        %7168 = vmatprep.subr.mxu0 0.0
        %7169 = vmatpush1.msra.mxu0 0.0
        %7170 = vmatprep.subr.mxu0 0.0
        %7171 = vmatpush1.msra.mxu0 0.0
        %7172 = vmatprep.subr.mxu0 0.0
        %7173 = vmatpush1.msra.mxu0 0.0
        %7174 = vmatprep.subr.mxu0 0.0
        %7175 = vmatpush1.msra.mxu0 0.0
        %7176 = vmatprep.subr.mxu0 0.0
        %7177 = vmatpush1.msra.mxu0 0.0
        %7178 = vmatprep.subr.mxu0 0.0
        %7179 = vmatpush1.msra.mxu0 0.0
        %7180 = vmatprep.subr.mxu0 %v3054
        %7181 = vmatpush1.msra.mxu0 %v3053
        %7182 = vmatprep.subr.mxu0 %v3052
        %7183 = vmatpush1.msra.mxu0 %v3051
        %7184 = vmatprep.subr.mxu0 0.0
        %7185 = vmatpush2.msra.mxu0 0.0
        %7186 = vmatprep.subr.mxu0 0.0
        %7187 = vmatpush2.msra.mxu0 0.0
        %7188 = vmatprep.subr.mxu0 0.0
        %7189 = vmatpush2.msra.mxu0 0.0
        %7190 = vmatprep.subr.mxu0 0.0
        %7191 = vmatpush2.msra.mxu0 0.0
        %7192 = vmatprep.subr.mxu0 0.0
        %7193 = vmatpush2.msra.mxu0 0.0
        %7194 = vmatprep.subr.mxu0 0.0
        %7195 = vmatpush2.msra.mxu0 0.0
        %7196 = vmatprep.subr.mxu0 0.0
        %7197 = vmatpush2.msra.mxu0 0.0
        %7198 = vmatprep.subr.mxu0 0.0
        %7199 = vmatpush2.msra.mxu0 0.0
        %7200 = vmatprep.subr.mxu0 0.0
        %7201 = vmatpush2.msra.mxu0 0.0
        %7202 = vmatprep.subr.mxu0 0.0
        %7203 = vmatpush2.msra.mxu0 0.0
        %7204 = vmatprep.subr.mxu0 0.0
        %7205 = vmatpush2.msra.mxu0 0.0
        %7206 = vmatprep.subr.mxu0 0.0
        %7207 = vmatpush2.msra.mxu0 0.0
        %7208 = vmatprep.subr.mxu0 0.0
        %7209 = vmatpush2.msra.mxu0 0.0
        %7210 = vmatprep.subr.mxu0 0.0
        %7211 = vmatpush2.msra.mxu0 0.0
        %7212 = vmatprep.subr.mxu0 0.0
        %7213 = vmatpush2.msra.mxu0 0.0
        %7214 = vmatprep.subr.mxu0 0.0
        %7215 = vmatpush2.msra.mxu0 0.0
        %7216 = vmatprep.mubr.f32.mxu0 0.0
        %7217 = vmatmul.mubr.f32.gmra.mxu0 %v7150
        %v7218 = vpop.f32.mrf.mxu0
        %v7219 = vadd.f32 0.0, %v7218
        %v7220 = vpop.f32.mrf.mxu0
        %v7221 = vadd.f32 0.0, %v7220
        %7222 = vdwg.mxu0
        %v7223 = vlaneseq
        %v7224 = vshrl.u32 %v7223, 7
        %v7225 = vsub.s32 0, %v7224
        %v7226 = vrot.slane %v7219, %v7225
        %v7227 = vlaneseq
        %v7228 = vshrl.u32 %v7227, 7
        %v7229 = vsub.s32 0, %v7228
        %v7230 = vrot.slane %v7221, %v7229
        %v7231 = vmul.f32 %v6899, %v7226
        %v7232 = vmul.f32 %v6901, %v7230
        %v7233 = vmul.f32 %v6905, %v7226
        %v7234 = vmul.f32 %v6907, %v7230
        %v7236 = vsel %vm4566, %v3589, 0
        %v7239 = vsel %vm4566, %v3590, 0
        %7241 = vmatprep.subr.mxu0 0.0
        %7242 = vmatpush1.msra.mxu0 0.0
        %7243 = vmatprep.subr.mxu0 0.0
        %7244 = vmatpush1.msra.mxu0 0.0
        %7245 = vmatprep.subr.mxu0 0.0
        %7246 = vmatpush1.msra.mxu0 0.0
        %7247 = vmatprep.subr.mxu0 0.0
        %7248 = vmatpush1.msra.mxu0 0.0
        %7249 = vmatprep.subr.mxu0 0.0
        %7250 = vmatpush1.msra.mxu0 0.0
        %7251 = vmatprep.subr.mxu0 0.0
        %7252 = vmatpush1.msra.mxu0 0.0
        %7253 = vmatprep.subr.mxu0 0.0
        %7254 = vmatpush1.msra.mxu0 0.0
        %7255 = vmatprep.subr.mxu0 0.0
        %7256 = vmatpush1.msra.mxu0 0.0
        %7257 = vmatprep.subr.mxu0 0.0
        %7258 = vmatpush1.msra.mxu0 0.0
        %7259 = vmatprep.subr.mxu0 0.0
        %7260 = vmatpush1.msra.mxu0 0.0
        %7261 = vmatprep.subr.mxu0 0.0
        %7262 = vmatpush1.msra.mxu0 0.0
        %7263 = vmatprep.subr.mxu0 0.0
        %7264 = vmatpush1.msra.mxu0 0.0
        %7265 = vmatprep.subr.mxu0 0.0
        %7266 = vmatpush1.msra.mxu0 0.0
        %7267 = vmatprep.subr.mxu0 0.0
        %7268 = vmatpush1.msra.mxu0 0.0
        %7269 = vmatprep.subr.mxu0 0.0
        %7270 = vmatpush1.msra.mxu0 0.0
        %7271 = vmatprep.subr.mxu0 0.0
        %7272 = vmatpush1.msra.mxu0 %v6382
        %7273 = vmatprep.subr.mxu0 0.0
        %7274 = vmatpush2.msra.mxu0 0.0
        %7275 = vmatprep.subr.mxu0 0.0
        %7276 = vmatpush2.msra.mxu0 0.0
        %7277 = vmatprep.subr.mxu0 0.0
        %7278 = vmatpush2.msra.mxu0 0.0
        %7279 = vmatprep.subr.mxu0 0.0
        %7280 = vmatpush2.msra.mxu0 0.0
        %7281 = vmatprep.subr.mxu0 0.0
        %7282 = vmatpush2.msra.mxu0 0.0
        %7283 = vmatprep.subr.mxu0 0.0
        %7284 = vmatpush2.msra.mxu0 0.0
        %7285 = vmatprep.subr.mxu0 0.0
        %7286 = vmatpush2.msra.mxu0 0.0
        %7287 = vmatprep.subr.mxu0 0.0
        %7288 = vmatpush2.msra.mxu0 0.0
        %7289 = vmatprep.subr.mxu0 0.0
        %7290 = vmatpush2.msra.mxu0 0.0
        %7291 = vmatprep.subr.mxu0 0.0
        %7292 = vmatpush2.msra.mxu0 0.0
        %7293 = vmatprep.subr.mxu0 0.0
        %7294 = vmatpush2.msra.mxu0 0.0
        %7295 = vmatprep.subr.mxu0 0.0
        %7296 = vmatpush2.msra.mxu0 0.0
        %7297 = vmatprep.subr.mxu0 0.0
        %7298 = vmatpush2.msra.mxu0 0.0
        %7299 = vmatprep.subr.mxu0 0.0
        %7300 = vmatpush2.msra.mxu0 0.0
        %7301 = vmatprep.subr.mxu0 0.0
        %7302 = vmatpush2.msra.mxu0 0.0
        %7303 = vmatprep.subr.mxu0 0.0
        %7304 = vmatpush2.msra.mxu0 0.0
        %7305 = vmatprep.mubr.f32.mxu0 0.0
        %7306 = vmatmul.mubr.f32.gmra.mxu0 %v7236
        %v7307 = vpop.f32.mrf.mxu0
        %v7308 = vadd.f32 0.0, %v7307
        %v7309 = vpop.f32.mrf.mxu0
        %7310 = vmatprep.mubr.f32.mxu0 0.0
        %7311 = vmatmul.mubr.f32.gmra.mxu0 %v7239
        %v7312 = vpop.f32.mrf.mxu0
        %v7313 = vadd.f32 0.0, %v7312
        %v7314 = vpop.f32.mrf.mxu0
        %7315 = vdwg.mxu0
        %7316 = vmatprep.subr.mxu0 %v3622
        %7317 = vmatpush1.msra.mxu0 %v3621
        %7318 = vmatprep.subr.mxu0 %v3620
        %7319 = vmatpush1.msra.mxu0 %v3619
        %7320 = vmatprep.subr.mxu0 %v3618
        %7321 = vmatpush1.msra.mxu0 %v3617
        %7322 = vmatprep.subr.mxu0 %v3616
        %7323 = vmatpush1.msra.mxu0 %v3615
        %7324 = vmatprep.subr.mxu0 %v3614
        %7325 = vmatpush1.msra.mxu0 %v3613
        %7326 = vmatprep.subr.mxu0 %v3612
        %7327 = vmatpush1.msra.mxu0 %v3611
        %7328 = vmatprep.subr.mxu0 %v3610
        %7329 = vmatpush1.msra.mxu0 %v3609
        %7330 = vmatprep.subr.mxu0 %v3608
        %7331 = vmatpush1.msra.mxu0 %v3607
        %7332 = vmatprep.subr.mxu0 %v3606
        %7333 = vmatpush1.msra.mxu0 %v3605
        %7334 = vmatprep.subr.mxu0 %v3604
        %7335 = vmatpush1.msra.mxu0 %v3603
        %7336 = vmatprep.subr.mxu0 %v3602
        %7337 = vmatpush1.msra.mxu0 %v3601
        %7338 = vmatprep.subr.mxu0 %v3600
        %7339 = vmatpush1.msra.mxu0 %v3599
        %7340 = vmatprep.subr.mxu0 %v3598
        %7341 = vmatpush1.msra.mxu0 %v3597
        %7342 = vmatprep.subr.mxu0 %v3596
        %7343 = vmatpush1.msra.mxu0 %v3595
        %7344 = vmatprep.subr.mxu0 %v3594
        %7345 = vmatpush1.msra.mxu0 %v3593
        %7346 = vmatprep.subr.mxu0 %v3592
        %7347 = vmatpush1.msra.mxu0 %v3591
        %7348 = vmatprep.subr.mxu0 0.0
        %7349 = vmatpush2.msra.mxu0 0.0
        %7350 = vmatprep.subr.mxu0 0.0
        %7351 = vmatpush2.msra.mxu0 0.0
        %7352 = vmatprep.subr.mxu0 0.0
        %7353 = vmatpush2.msra.mxu0 0.0
        %7354 = vmatprep.subr.mxu0 0.0
        %7355 = vmatpush2.msra.mxu0 0.0
        %7356 = vmatprep.subr.mxu0 0.0
        %7357 = vmatpush2.msra.mxu0 0.0
        %7358 = vmatprep.subr.mxu0 0.0
        %7359 = vmatpush2.msra.mxu0 0.0
        %7360 = vmatprep.subr.mxu0 0.0
        %7361 = vmatpush2.msra.mxu0 0.0
        %7362 = vmatprep.subr.mxu0 0.0
        %7363 = vmatpush2.msra.mxu0 0.0
        %7364 = vmatprep.subr.mxu0 0.0
        %7365 = vmatpush2.msra.mxu0 0.0
        %7366 = vmatprep.subr.mxu0 0.0
        %7367 = vmatpush2.msra.mxu0 0.0
        %7368 = vmatprep.subr.mxu0 0.0
        %7369 = vmatpush2.msra.mxu0 0.0
        %7370 = vmatprep.subr.mxu0 0.0
        %7371 = vmatpush2.msra.mxu0 0.0
        %7372 = vmatprep.subr.mxu0 0.0
        %7373 = vmatpush2.msra.mxu0 0.0
        %7374 = vmatprep.subr.mxu0 0.0
        %7375 = vmatpush2.msra.mxu0 0.0
        %7376 = vmatprep.subr.mxu0 0.0
        %7377 = vmatpush2.msra.mxu0 0.0
        %7378 = vmatprep.subr.mxu0 0.0
        %7379 = vmatpush2.msra.mxu0 0.0
        %7380 = vmatprep.mubr.f32.mxu0 0.0
        %7381 = vmatmul.mubr.f32.gmra.mxu0 %v7308
        %v7382 = vpop.f32.mrf.mxu0
        %v7383 = vadd.f32 0.0, %v7382
        %v7384 = vpop.f32.mrf.mxu0
        %v7385 = vadd.f32 0.0, %v7384
        %7386 = vmatprep.mubr.f32.mxu0 0.0
        %7387 = vmatmul.mubr.f32.gmra.mxu0 %v7313
        %v7388 = vpop.f32.mrf.mxu0
        %v7389 = vadd.f32 0.0, %v7388
        %v7390 = vpop.f32.mrf.mxu0
        %v7391 = vadd.f32 0.0, %v7390
        %7392 = vdwg.mxu0
        %v7393 = vadd.f32 %v7231, %v7383
        %v7394 = vadd.f32 %v7232, %v7385
        %v7395 = vadd.f32 %v7233, %v7389
        %v7396 = vadd.f32 %v7234, %v7391
        %v7398 = vsel %vm3625, %v3485, 0
        %v7401 = vsel %vm3625, %v3486, 0
        %7403 = vmatprep.subr.mxu0 0.0
        %7404 = vmatpush1.msra.mxu0 0.0
        %7405 = vmatprep.subr.mxu0 0.0
        %7406 = vmatpush1.msra.mxu0 0.0
        %7407 = vmatprep.subr.mxu0 0.0
        %7408 = vmatpush1.msra.mxu0 0.0
        %7409 = vmatprep.subr.mxu0 0.0
        %7410 = vmatpush1.msra.mxu0 0.0
        %7411 = vmatprep.subr.mxu0 0.0
        %7412 = vmatpush1.msra.mxu0 0.0
        %7413 = vmatprep.subr.mxu0 0.0
        %7414 = vmatpush1.msra.mxu0 0.0
        %7415 = vmatprep.subr.mxu0 0.0
        %7416 = vmatpush1.msra.mxu0 0.0
        %7417 = vmatprep.subr.mxu0 0.0
        %7418 = vmatpush1.msra.mxu0 0.0
        %7419 = vmatprep.subr.mxu0 0.0
        %7420 = vmatpush1.msra.mxu0 0.0
        %7421 = vmatprep.subr.mxu0 0.0
        %7422 = vmatpush1.msra.mxu0 0.0
        %7423 = vmatprep.subr.mxu0 0.0
        %7424 = vmatpush1.msra.mxu0 0.0
        %7425 = vmatprep.subr.mxu0 0.0
        %7426 = vmatpush1.msra.mxu0 0.0
        %7427 = vmatprep.subr.mxu0 0.0
        %7428 = vmatpush1.msra.mxu0 0.0
        %7429 = vmatprep.subr.mxu0 0.0
        %7430 = vmatpush1.msra.mxu0 0.0
        %7431 = vmatprep.subr.mxu0 %v7396
        %7432 = vmatpush1.msra.mxu0 %v7395
        %7433 = vmatprep.subr.mxu0 %v7394
        %7434 = vmatpush1.msra.mxu0 %v7393
        %7435 = vmatprep.subr.mxu0 0.0
        %7436 = vmatpush2.msra.mxu0 0.0
        %7437 = vmatprep.subr.mxu0 0.0
        %7438 = vmatpush2.msra.mxu0 0.0
        %7439 = vmatprep.subr.mxu0 0.0
        %7440 = vmatpush2.msra.mxu0 0.0
        %7441 = vmatprep.subr.mxu0 0.0
        %7442 = vmatpush2.msra.mxu0 0.0
        %7443 = vmatprep.subr.mxu0 0.0
        %7444 = vmatpush2.msra.mxu0 0.0
        %7445 = vmatprep.subr.mxu0 0.0
        %7446 = vmatpush2.msra.mxu0 0.0
        %7447 = vmatprep.subr.mxu0 0.0
        %7448 = vmatpush2.msra.mxu0 0.0
        %7449 = vmatprep.subr.mxu0 0.0
        %7450 = vmatpush2.msra.mxu0 0.0
        %7451 = vmatprep.subr.mxu0 0.0
        %7452 = vmatpush2.msra.mxu0 0.0
        %7453 = vmatprep.subr.mxu0 0.0
        %7454 = vmatpush2.msra.mxu0 0.0
        %7455 = vmatprep.subr.mxu0 0.0
        %7456 = vmatpush2.msra.mxu0 0.0
        %7457 = vmatprep.subr.mxu0 0.0
        %7458 = vmatpush2.msra.mxu0 0.0
        %7459 = vmatprep.subr.mxu0 0.0
        %7460 = vmatpush2.msra.mxu0 0.0
        %7461 = vmatprep.subr.mxu0 0.0
        %7462 = vmatpush2.msra.mxu0 0.0
        %7463 = vmatprep.subr.mxu0 0.0
        %7464 = vmatpush2.msra.mxu0 0.0
        %7465 = vmatprep.subr.mxu0 0.0
        %7466 = vmatpush2.msra.mxu0 0.0
        %7467 = vmatprep.mubr.f32.mxu0 0.0
        %7468 = vmatmul.mubr.f32.gmra.mxu0 %v7398
        %v7469 = vpop.f32.mrf.mxu0
        %v7470 = vadd.f32 0.0, %v7469
        %v7471 = vpop.f32.mrf.mxu0
        %v7472 = vadd.f32 0.0, %v7471
        %7473 = vmatprep.mubr.f32.mxu0 0.0
        %7474 = vmatmul.mubr.f32.gmra.mxu0 %v7401
        %v7475 = vpop.f32.mrf.mxu0
        %v7476 = vadd.f32 0.0, %v7475
        %v7477 = vpop.f32.mrf.mxu0
        %v7478 = vadd.f32 0.0, %v7477
        %7479 = vdwg.mxu0
        %7480 = vmatprep.subr.mxu0 %v3324
        %7481 = vmatpush1.msra.mxu0 %v3323
        %7482 = vmatprep.subr.mxu0 %v3322
        %7483 = vmatpush1.msra.mxu0 %v3321
        %7484 = vmatprep.subr.mxu0 %v3320
        %7485 = vmatpush1.msra.mxu0 %v3319
        %7486 = vmatprep.subr.mxu0 %v3318
        %7487 = vmatpush1.msra.mxu0 %v3317
        %7488 = vmatprep.subr.mxu0 %v3316
        %7489 = vmatpush1.msra.mxu0 %v3315
        %7490 = vmatprep.subr.mxu0 %v3314
        %7491 = vmatpush1.msra.mxu0 %v3313
        %7492 = vmatprep.subr.mxu0 %v3312
        %7493 = vmatpush1.msra.mxu0 %v3311
        %7494 = vmatprep.subr.mxu0 %v3310
        %7495 = vmatpush1.msra.mxu0 %v3309
        %7496 = vmatprep.subr.mxu0 %v3308
        %7497 = vmatpush1.msra.mxu0 %v3307
        %7498 = vmatprep.subr.mxu0 %v3306
        %7499 = vmatpush1.msra.mxu0 %v3305
        %7500 = vmatprep.subr.mxu0 %v3304
        %7501 = vmatpush1.msra.mxu0 %v3303
        %7502 = vmatprep.subr.mxu0 %v3302
        %7503 = vmatpush1.msra.mxu0 %v3301
        %7504 = vmatprep.subr.mxu0 %v3300
        %7505 = vmatpush1.msra.mxu0 %v3299
        %7506 = vmatprep.subr.mxu0 %v3298
        %7507 = vmatpush1.msra.mxu0 %v3297
        %7508 = vmatprep.subr.mxu0 %v3296
        %7509 = vmatpush1.msra.mxu0 %v3295
        %7510 = vmatprep.subr.mxu0 %v3294
        %7511 = vmatpush1.msra.mxu0 %v3293
        %7512 = vmatprep.subr.mxu0 %v3356
        %7513 = vmatpush2.msra.mxu0 %v3355
        %7514 = vmatprep.subr.mxu0 %v3354
        %7515 = vmatpush2.msra.mxu0 %v3353
        %7516 = vmatprep.subr.mxu0 %v3352
        %7517 = vmatpush2.msra.mxu0 %v3351
        %7518 = vmatprep.subr.mxu0 %v3350
        %7519 = vmatpush2.msra.mxu0 %v3349
        %7520 = vmatprep.subr.mxu0 %v3348
        %7521 = vmatpush2.msra.mxu0 %v3347
        %7522 = vmatprep.subr.mxu0 %v3346
        %7523 = vmatpush2.msra.mxu0 %v3345
        %7524 = vmatprep.subr.mxu0 %v3344
        %7525 = vmatpush2.msra.mxu0 %v3343
        %7526 = vmatprep.subr.mxu0 %v3342
        %7527 = vmatpush2.msra.mxu0 %v3341
        %7528 = vmatprep.subr.mxu0 %v3340
        %7529 = vmatpush2.msra.mxu0 %v3339
        %7530 = vmatprep.subr.mxu0 %v3338
        %7531 = vmatpush2.msra.mxu0 %v3337
        %7532 = vmatprep.subr.mxu0 %v3336
        %7533 = vmatpush2.msra.mxu0 %v3335
        %7534 = vmatprep.subr.mxu0 %v3334
        %7535 = vmatpush2.msra.mxu0 %v3333
        %7536 = vmatprep.subr.mxu0 %v3332
        %7537 = vmatpush2.msra.mxu0 %v3331
        %7538 = vmatprep.subr.mxu0 %v3330
        %7539 = vmatpush2.msra.mxu0 %v3329
        %7540 = vmatprep.subr.mxu0 %v3328
        %7541 = vmatpush2.msra.mxu0 %v3327
        %7542 = vmatprep.subr.mxu0 %v3326
        %7543 = vmatpush2.msra.mxu0 %v3325
        %7544 = vmatprep.mubr.f32.mxu0 %v7472
        %7545 = vmatmul.mubr.f32.gmra.mxu0 %v7470
        %v7546 = vpop.f32.mrf.mxu0
        %v7547 = vadd.f32 0.0, %v7546
        %v7548 = vpop.f32.mrf.mxu0
        %v7549 = vadd.f32 0.0, %v7548
        %7550 = vmatprep.mubr.f32.mxu0 %v7478
        %7551 = vmatmul.mubr.f32.gmra.mxu0 %v7476
        %v7552 = vpop.f32.mrf.mxu0
        %v7553 = vadd.f32 0.0, %v7552
        %v7554 = vpop.f32.mrf.mxu0
        %v7555 = vadd.f32 0.0, %v7554
        %7556 = vdwg.mxu0
        %v7558 = vlaneseq
        %v7559 = vshrl.u32 %v7558, 7
        %v7560 = vsub.s32 0, %v7559
        %v7561 = vrot.slane %v3292, %v7560
        %v7562 = vlaneseq
        %v7563 = vshrl.u32 %v7562, 7
        %v7564 = vsub.s32 1, %v7563
        %v7565 = vrot.slane %v3292, %v7564
        %v7568 = vadd.f32 %v7561, %v7547
        %v7569 = vadd.f32 %v7565, %v7549
        %v7570 = vadd.f32 %v7561, %v7553
        %v7571 = vadd.f32 %v7565, %v7555
        %v7573 = vsel %vm3625, %v3487, 0
        %v7576 = vsel %vm3625, %v3488, 0
        %7578 = vmatprep.subr.mxu0 0.0
        %7579 = vmatpush1.msra.mxu0 0.0
        %7580 = vmatprep.subr.mxu0 0.0
        %7581 = vmatpush1.msra.mxu0 0.0
        %7582 = vmatprep.subr.mxu0 0.0
        %7583 = vmatpush1.msra.mxu0 0.0
        %7584 = vmatprep.subr.mxu0 0.0
        %7585 = vmatpush1.msra.mxu0 0.0
        %7586 = vmatprep.subr.mxu0 0.0
        %7587 = vmatpush1.msra.mxu0 0.0
        %7588 = vmatprep.subr.mxu0 0.0
        %7589 = vmatpush1.msra.mxu0 0.0
        %7590 = vmatprep.subr.mxu0 0.0
        %7591 = vmatpush1.msra.mxu0 0.0
        %7592 = vmatprep.subr.mxu0 0.0
        %7593 = vmatpush1.msra.mxu0 0.0
        %7594 = vmatprep.subr.mxu0 0.0
        %7595 = vmatpush1.msra.mxu0 0.0
        %7596 = vmatprep.subr.mxu0 0.0
        %7597 = vmatpush1.msra.mxu0 0.0
        %7598 = vmatprep.subr.mxu0 0.0
        %7599 = vmatpush1.msra.mxu0 0.0
        %7600 = vmatprep.subr.mxu0 0.0
        %7601 = vmatpush1.msra.mxu0 0.0
        %7602 = vmatprep.subr.mxu0 0.0
        %7603 = vmatpush1.msra.mxu0 0.0
        %7604 = vmatprep.subr.mxu0 0.0
        %7605 = vmatpush1.msra.mxu0 0.0
        %7606 = vmatprep.subr.mxu0 %v7396
        %7607 = vmatpush1.msra.mxu0 %v7395
        %7608 = vmatprep.subr.mxu0 %v7394
        %7609 = vmatpush1.msra.mxu0 %v7393
        %7610 = vmatprep.subr.mxu0 0.0
        %7611 = vmatpush2.msra.mxu0 0.0
        %7612 = vmatprep.subr.mxu0 0.0
        %7613 = vmatpush2.msra.mxu0 0.0
        %7614 = vmatprep.subr.mxu0 0.0
        %7615 = vmatpush2.msra.mxu0 0.0
        %7616 = vmatprep.subr.mxu0 0.0
        %7617 = vmatpush2.msra.mxu0 0.0
        %7618 = vmatprep.subr.mxu0 0.0
        %7619 = vmatpush2.msra.mxu0 0.0
        %7620 = vmatprep.subr.mxu0 0.0
        %7621 = vmatpush2.msra.mxu0 0.0
        %7622 = vmatprep.subr.mxu0 0.0
        %7623 = vmatpush2.msra.mxu0 0.0
        %7624 = vmatprep.subr.mxu0 0.0
        %7625 = vmatpush2.msra.mxu0 0.0
        %7626 = vmatprep.subr.mxu0 0.0
        %7627 = vmatpush2.msra.mxu0 0.0
        %7628 = vmatprep.subr.mxu0 0.0
        %7629 = vmatpush2.msra.mxu0 0.0
        %7630 = vmatprep.subr.mxu0 0.0
        %7631 = vmatpush2.msra.mxu0 0.0
        %7632 = vmatprep.subr.mxu0 0.0
        %7633 = vmatpush2.msra.mxu0 0.0
        %7634 = vmatprep.subr.mxu0 0.0
        %7635 = vmatpush2.msra.mxu0 0.0
        %7636 = vmatprep.subr.mxu0 0.0
        %7637 = vmatpush2.msra.mxu0 0.0
        %7638 = vmatprep.subr.mxu0 0.0
        %7639 = vmatpush2.msra.mxu0 0.0
        %7640 = vmatprep.subr.mxu0 0.0
        %7641 = vmatpush2.msra.mxu0 0.0
        %7642 = vmatprep.mubr.f32.mxu0 0.0
        %7643 = vmatmul.mubr.f32.gmra.mxu0 %v7573
        %v7644 = vpop.f32.mrf.mxu0
        %v7645 = vadd.f32 0.0, %v7644
        %v7646 = vpop.f32.mrf.mxu0
        %v7647 = vadd.f32 0.0, %v7646
        %7648 = vmatprep.mubr.f32.mxu0 0.0
        %7649 = vmatmul.mubr.f32.gmra.mxu0 %v7576
        %v7650 = vpop.f32.mrf.mxu0
        %v7651 = vadd.f32 0.0, %v7650
        %v7652 = vpop.f32.mrf.mxu0
        %v7653 = vadd.f32 0.0, %v7652
        %7654 = vdwg.mxu0
        %7655 = vmatprep.subr.mxu0 %v3388
        %7656 = vmatpush1.msra.mxu0 %v3387
        %7657 = vmatprep.subr.mxu0 %v3386
        %7658 = vmatpush1.msra.mxu0 %v3385
        %7659 = vmatprep.subr.mxu0 %v3384
        %7660 = vmatpush1.msra.mxu0 %v3383
        %7661 = vmatprep.subr.mxu0 %v3382
        %7662 = vmatpush1.msra.mxu0 %v3381
        %7663 = vmatprep.subr.mxu0 %v3380
        %7664 = vmatpush1.msra.mxu0 %v3379
        %7665 = vmatprep.subr.mxu0 %v3378
        %7666 = vmatpush1.msra.mxu0 %v3377
        %7667 = vmatprep.subr.mxu0 %v3376
        %7668 = vmatpush1.msra.mxu0 %v3375
        %7669 = vmatprep.subr.mxu0 %v3374
        %7670 = vmatpush1.msra.mxu0 %v3373
        %7671 = vmatprep.subr.mxu0 %v3372
        %7672 = vmatpush1.msra.mxu0 %v3371
        %7673 = vmatprep.subr.mxu0 %v3370
        %7674 = vmatpush1.msra.mxu0 %v3369
        %7675 = vmatprep.subr.mxu0 %v3368
        %7676 = vmatpush1.msra.mxu0 %v3367
        %7677 = vmatprep.subr.mxu0 %v3366
        %7678 = vmatpush1.msra.mxu0 %v3365
        %7679 = vmatprep.subr.mxu0 %v3364
        %7680 = vmatpush1.msra.mxu0 %v3363
        %7681 = vmatprep.subr.mxu0 %v3362
        %7682 = vmatpush1.msra.mxu0 %v3361
        %7683 = vmatprep.subr.mxu0 %v3360
        %7684 = vmatpush1.msra.mxu0 %v3359
        %7685 = vmatprep.subr.mxu0 %v3358
        %7686 = vmatpush1.msra.mxu0 %v3357
        %7687 = vmatprep.subr.mxu0 %v3420
        %7688 = vmatpush2.msra.mxu0 %v3419
        %7689 = vmatprep.subr.mxu0 %v3418
        %7690 = vmatpush2.msra.mxu0 %v3417
        %7691 = vmatprep.subr.mxu0 %v3416
        %7692 = vmatpush2.msra.mxu0 %v3415
        %7693 = vmatprep.subr.mxu0 %v3414
        %7694 = vmatpush2.msra.mxu0 %v3413
        %7695 = vmatprep.subr.mxu0 %v3412
        %7696 = vmatpush2.msra.mxu0 %v3411
        %7697 = vmatprep.subr.mxu0 %v3410
        %7698 = vmatpush2.msra.mxu0 %v3409
        %7699 = vmatprep.subr.mxu0 %v3408
        %7700 = vmatpush2.msra.mxu0 %v3407
        %7701 = vmatprep.subr.mxu0 %v3406
        %7702 = vmatpush2.msra.mxu0 %v3405
        %7703 = vmatprep.subr.mxu0 %v3404
        %7704 = vmatpush2.msra.mxu0 %v3403
        %7705 = vmatprep.subr.mxu0 %v3402
        %7706 = vmatpush2.msra.mxu0 %v3401
        %7707 = vmatprep.subr.mxu0 %v3400
        %7708 = vmatpush2.msra.mxu0 %v3399
        %7709 = vmatprep.subr.mxu0 %v3398
        %7710 = vmatpush2.msra.mxu0 %v3397
        %7711 = vmatprep.subr.mxu0 %v3396
        %7712 = vmatpush2.msra.mxu0 %v3395
        %7713 = vmatprep.subr.mxu0 %v3394
        %7714 = vmatpush2.msra.mxu0 %v3393
        %7715 = vmatprep.subr.mxu0 %v3392
        %7716 = vmatpush2.msra.mxu0 %v3391
        %7717 = vmatprep.subr.mxu0 %v3390
        %7718 = vmatpush2.msra.mxu0 %v3389
        %7719 = vmatprep.mubr.f32.mxu0 %v7647
        %7720 = vmatmul.mubr.f32.gmra.mxu0 %v7645
        %v7721 = vpop.f32.mrf.mxu0
        %v7722 = vadd.f32 0.0, %v7721
        %v7723 = vpop.f32.mrf.mxu0
        %v7724 = vadd.f32 0.0, %v7723
        %7725 = vmatprep.mubr.f32.mxu0 %v7653
        %7726 = vmatmul.mubr.f32.gmra.mxu0 %v7651
        %v7727 = vpop.f32.mrf.mxu0
        %v7728 = vadd.f32 0.0, %v7727
        %v7729 = vpop.f32.mrf.mxu0
        %v7730 = vadd.f32 0.0, %v7729
        %7731 = vdwg.mxu0
        %v7732 = vadd.f32 %v7568, %v7722
        %v7733 = vadd.f32 %v7569, %v7724
        %v7734 = vadd.f32 %v7570, %v7728
        %v7735 = vadd.f32 %v7571, %v7730
        %v7737 = vsel %vm3625, %v3489, 0
        %v7740 = vsel %vm3625, %v3490, 0
        %7742 = vmatprep.subr.mxu0 0.0
        %7743 = vmatpush1.msra.mxu0 0.0
        %7744 = vmatprep.subr.mxu0 0.0
        %7745 = vmatpush1.msra.mxu0 0.0
        %7746 = vmatprep.subr.mxu0 0.0
        %7747 = vmatpush1.msra.mxu0 0.0
        %7748 = vmatprep.subr.mxu0 0.0
        %7749 = vmatpush1.msra.mxu0 0.0
        %7750 = vmatprep.subr.mxu0 0.0
        %7751 = vmatpush1.msra.mxu0 0.0
        %7752 = vmatprep.subr.mxu0 0.0
        %7753 = vmatpush1.msra.mxu0 0.0
        %7754 = vmatprep.subr.mxu0 0.0
        %7755 = vmatpush1.msra.mxu0 0.0
        %7756 = vmatprep.subr.mxu0 0.0
        %7757 = vmatpush1.msra.mxu0 0.0
        %7758 = vmatprep.subr.mxu0 0.0
        %7759 = vmatpush1.msra.mxu0 0.0
        %7760 = vmatprep.subr.mxu0 0.0
        %7761 = vmatpush1.msra.mxu0 0.0
        %7762 = vmatprep.subr.mxu0 0.0
        %7763 = vmatpush1.msra.mxu0 0.0
        %7764 = vmatprep.subr.mxu0 0.0
        %7765 = vmatpush1.msra.mxu0 0.0
        %7766 = vmatprep.subr.mxu0 0.0
        %7767 = vmatpush1.msra.mxu0 0.0
        %7768 = vmatprep.subr.mxu0 0.0
        %7769 = vmatpush1.msra.mxu0 0.0
        %7770 = vmatprep.subr.mxu0 %v7396
        %7771 = vmatpush1.msra.mxu0 %v7395
        %7772 = vmatprep.subr.mxu0 %v7394
        %7773 = vmatpush1.msra.mxu0 %v7393
        %7774 = vmatprep.subr.mxu0 0.0
        %7775 = vmatpush2.msra.mxu0 0.0
        %7776 = vmatprep.subr.mxu0 0.0
        %7777 = vmatpush2.msra.mxu0 0.0
        %7778 = vmatprep.subr.mxu0 0.0
        %7779 = vmatpush2.msra.mxu0 0.0
        %7780 = vmatprep.subr.mxu0 0.0
        %7781 = vmatpush2.msra.mxu0 0.0
        %7782 = vmatprep.subr.mxu0 0.0
        %7783 = vmatpush2.msra.mxu0 0.0
        %7784 = vmatprep.subr.mxu0 0.0
        %7785 = vmatpush2.msra.mxu0 0.0
        %7786 = vmatprep.subr.mxu0 0.0
        %7787 = vmatpush2.msra.mxu0 0.0
        %7788 = vmatprep.subr.mxu0 0.0
        %7789 = vmatpush2.msra.mxu0 0.0
        %7790 = vmatprep.subr.mxu0 0.0
        %7791 = vmatpush2.msra.mxu0 0.0
        %7792 = vmatprep.subr.mxu0 0.0
        %7793 = vmatpush2.msra.mxu0 0.0
        %7794 = vmatprep.subr.mxu0 0.0
        %7795 = vmatpush2.msra.mxu0 0.0
        %7796 = vmatprep.subr.mxu0 0.0
        %7797 = vmatpush2.msra.mxu0 0.0
        %7798 = vmatprep.subr.mxu0 0.0
        %7799 = vmatpush2.msra.mxu0 0.0
        %7800 = vmatprep.subr.mxu0 0.0
        %7801 = vmatpush2.msra.mxu0 0.0
        %7802 = vmatprep.subr.mxu0 0.0
        %7803 = vmatpush2.msra.mxu0 0.0
        %7804 = vmatprep.subr.mxu0 0.0
        %7805 = vmatpush2.msra.mxu0 0.0
        %7806 = vmatprep.mubr.f32.mxu0 0.0
        %7807 = vmatmul.mubr.f32.gmra.mxu0 %v7737
        %v7808 = vpop.f32.mrf.mxu0
        %v7809 = vadd.f32 0.0, %v7808
        %v7810 = vpop.f32.mrf.mxu0
        %v7811 = vadd.f32 0.0, %v7810
        %7812 = vmatprep.mubr.f32.mxu0 0.0
        %7813 = vmatmul.mubr.f32.gmra.mxu0 %v7740
        %v7814 = vpop.f32.mrf.mxu0
        %v7815 = vadd.f32 0.0, %v7814
        %v7816 = vpop.f32.mrf.mxu0
        %v7817 = vadd.f32 0.0, %v7816
        %7818 = vdwg.mxu0
        %7819 = vmatprep.subr.mxu0 %v3452
        %7820 = vmatpush1.msra.mxu0 %v3451
        %7821 = vmatprep.subr.mxu0 %v3450
        %7822 = vmatpush1.msra.mxu0 %v3449
        %7823 = vmatprep.subr.mxu0 %v3448
        %7824 = vmatpush1.msra.mxu0 %v3447
        %7825 = vmatprep.subr.mxu0 %v3446
        %7826 = vmatpush1.msra.mxu0 %v3445
        %7827 = vmatprep.subr.mxu0 %v3444
        %7828 = vmatpush1.msra.mxu0 %v3443
        %7829 = vmatprep.subr.mxu0 %v3442
        %7830 = vmatpush1.msra.mxu0 %v3441
        %7831 = vmatprep.subr.mxu0 %v3440
        %7832 = vmatpush1.msra.mxu0 %v3439
        %7833 = vmatprep.subr.mxu0 %v3438
        %7834 = vmatpush1.msra.mxu0 %v3437
        %7835 = vmatprep.subr.mxu0 %v3436
        %7836 = vmatpush1.msra.mxu0 %v3435
        %7837 = vmatprep.subr.mxu0 %v3434
        %7838 = vmatpush1.msra.mxu0 %v3433
        %7839 = vmatprep.subr.mxu0 %v3432
        %7840 = vmatpush1.msra.mxu0 %v3431
        %7841 = vmatprep.subr.mxu0 %v3430
        %7842 = vmatpush1.msra.mxu0 %v3429
        %7843 = vmatprep.subr.mxu0 %v3428
        %7844 = vmatpush1.msra.mxu0 %v3427
        %7845 = vmatprep.subr.mxu0 %v3426
        %7846 = vmatpush1.msra.mxu0 %v3425
        %7847 = vmatprep.subr.mxu0 %v3424
        %7848 = vmatpush1.msra.mxu0 %v3423
        %7849 = vmatprep.subr.mxu0 %v3422
        %7850 = vmatpush1.msra.mxu0 %v3421
        %7851 = vmatprep.subr.mxu0 %v3484
        %7852 = vmatpush2.msra.mxu0 %v3483
        %7853 = vmatprep.subr.mxu0 %v3482
        %7854 = vmatpush2.msra.mxu0 %v3481
        %7855 = vmatprep.subr.mxu0 %v3480
        %7856 = vmatpush2.msra.mxu0 %v3479
        %7857 = vmatprep.subr.mxu0 %v3478
        %7858 = vmatpush2.msra.mxu0 %v3477
        %7859 = vmatprep.subr.mxu0 %v3476
        %7860 = vmatpush2.msra.mxu0 %v3475
        %7861 = vmatprep.subr.mxu0 %v3474
        %7862 = vmatpush2.msra.mxu0 %v3473
        %7863 = vmatprep.subr.mxu0 %v3472
        %7864 = vmatpush2.msra.mxu0 %v3471
        %7865 = vmatprep.subr.mxu0 %v3470
        %7866 = vmatpush2.msra.mxu0 %v3469
        %7867 = vmatprep.subr.mxu0 %v3468
        %7868 = vmatpush2.msra.mxu0 %v3467
        %7869 = vmatprep.subr.mxu0 %v3466
        %7870 = vmatpush2.msra.mxu0 %v3465
        %7871 = vmatprep.subr.mxu0 %v3464
        %7872 = vmatpush2.msra.mxu0 %v3463
        %7873 = vmatprep.subr.mxu0 %v3462
        %7874 = vmatpush2.msra.mxu0 %v3461
        %7875 = vmatprep.subr.mxu0 %v3460
        %7876 = vmatpush2.msra.mxu0 %v3459
        %7877 = vmatprep.subr.mxu0 %v3458
        %7878 = vmatpush2.msra.mxu0 %v3457
        %7879 = vmatprep.subr.mxu0 %v3456
        %7880 = vmatpush2.msra.mxu0 %v3455
        %7881 = vmatprep.subr.mxu0 %v3454
        %7882 = vmatpush2.msra.mxu0 %v3453
        %7883 = vmatprep.mubr.f32.mxu0 %v7811
        %7884 = vmatmul.mubr.f32.gmra.mxu0 %v7809
        %v7885 = vpop.f32.mrf.mxu0
        %v7886 = vadd.f32 0.0, %v7885
        %v7887 = vpop.f32.mrf.mxu0
        %v7888 = vadd.f32 0.0, %v7887
        %7889 = vmatprep.mubr.f32.mxu0 %v7817
        %7890 = vmatmul.mubr.f32.gmra.mxu0 %v7815
        %v7891 = vpop.f32.mrf.mxu0
        %v7892 = vadd.f32 0.0, %v7891
        %v7893 = vpop.f32.mrf.mxu0
        %v7894 = vadd.f32 0.0, %v7893
        %7895 = vdwg.mxu0
        %v7896 = vadd.f32 %v7732, %v7886
        %v7897 = vadd.f32 %v7733, %v7888
        %v7898 = vadd.f32 %v7734, %v7892
        %v7899 = vadd.f32 %v7735, %v7894
        %v7901 = vsel %vm5238, %v3571, 0
        %v7904 = vsel %vm5242, %v5849, 0
        %7906 = vmatprep.subr.mxu0 0.0
        %7907 = vmatpush1.msra.mxu0 0.0
        %7908 = vmatprep.subr.mxu0 0.0
        %7909 = vmatpush1.msra.mxu0 0.0
        %7910 = vmatprep.subr.mxu0 0.0
        %7911 = vmatpush1.msra.mxu0 0.0
        %7912 = vmatprep.subr.mxu0 0.0
        %7913 = vmatpush1.msra.mxu0 0.0
        %7914 = vmatprep.subr.mxu0 0.0
        %7915 = vmatpush1.msra.mxu0 0.0
        %7916 = vmatprep.subr.mxu0 0.0
        %7917 = vmatpush1.msra.mxu0 0.0
        %7918 = vmatprep.subr.mxu0 0.0
        %7919 = vmatpush1.msra.mxu0 0.0
        %7920 = vmatprep.subr.mxu0 0.0
        %7921 = vmatpush1.msra.mxu0 0.0
        %7922 = vmatprep.subr.mxu0 0.0
        %7923 = vmatpush1.msra.mxu0 0.0
        %7924 = vmatprep.subr.mxu0 0.0
        %7925 = vmatpush1.msra.mxu0 0.0
        %7926 = vmatprep.subr.mxu0 0.0
        %7927 = vmatpush1.msra.mxu0 0.0
        %7928 = vmatprep.subr.mxu0 0.0
        %7929 = vmatpush1.msra.mxu0 0.0
        %7930 = vmatprep.subr.mxu0 0.0
        %7931 = vmatpush1.msra.mxu0 0.0
        %7932 = vmatprep.subr.mxu0 0.0
        %7933 = vmatpush1.msra.mxu0 0.0
        %7934 = vmatprep.subr.mxu0 0.0
        %7935 = vmatpush1.msra.mxu0 0.0
        %7936 = vmatprep.subr.mxu0 0.0
        %7937 = vmatpush1.msra.mxu0 %v7904
        %7938 = vmatprep.subr.mxu0 0.0
        %7939 = vmatpush2.msra.mxu0 0.0
        %7940 = vmatprep.subr.mxu0 0.0
        %7941 = vmatpush2.msra.mxu0 0.0
        %7942 = vmatprep.subr.mxu0 0.0
        %7943 = vmatpush2.msra.mxu0 0.0
        %7944 = vmatprep.subr.mxu0 0.0
        %7945 = vmatpush2.msra.mxu0 0.0
        %7946 = vmatprep.subr.mxu0 0.0
        %7947 = vmatpush2.msra.mxu0 0.0
        %7948 = vmatprep.subr.mxu0 0.0
        %7949 = vmatpush2.msra.mxu0 0.0
        %7950 = vmatprep.subr.mxu0 0.0
        %7951 = vmatpush2.msra.mxu0 0.0
        %7952 = vmatprep.subr.mxu0 0.0
        %7953 = vmatpush2.msra.mxu0 0.0
        %7954 = vmatprep.subr.mxu0 0.0
        %7955 = vmatpush2.msra.mxu0 0.0
        %7956 = vmatprep.subr.mxu0 0.0
        %7957 = vmatpush2.msra.mxu0 0.0
        %7958 = vmatprep.subr.mxu0 0.0
        %7959 = vmatpush2.msra.mxu0 0.0
        %7960 = vmatprep.subr.mxu0 0.0
        %7961 = vmatpush2.msra.mxu0 0.0
        %7962 = vmatprep.subr.mxu0 0.0
        %7963 = vmatpush2.msra.mxu0 0.0
        %7964 = vmatprep.subr.mxu0 0.0
        %7965 = vmatpush2.msra.mxu0 0.0
        %7966 = vmatprep.subr.mxu0 0.0
        %7967 = vmatpush2.msra.mxu0 0.0
        %7968 = vmatprep.subr.mxu0 0.0
        %7969 = vmatpush2.msra.mxu0 0.0
        %7970 = vmatprep.mubr.f32.mxu0 0.0
        %7971 = vmatmul.mubr.f32.gmra.mxu0 %v7901
        %v7972 = vpop.f32.mrf.mxu0
        %v7973 = vadd.f32 0.0, %v7972
        %v7974 = vpop.f32.mrf.mxu0
        %7975 = vdwg.mxu0
        %v7977 = vsel %vm5090, %v7973, 0
        %7979 = vmatprep.subr.mxu0 0.0
        %7980 = vmatpush1.msra.mxu0 0.0
        %7981 = vmatprep.subr.mxu0 0.0
        %7982 = vmatpush1.msra.mxu0 0.0
        %7983 = vmatprep.subr.mxu0 0.0
        %7984 = vmatpush1.msra.mxu0 0.0
        %7985 = vmatprep.subr.mxu0 0.0
        %7986 = vmatpush1.msra.mxu0 0.0
        %7987 = vmatprep.subr.mxu0 0.0
        %7988 = vmatpush1.msra.mxu0 0.0
        %7989 = vmatprep.subr.mxu0 0.0
        %7990 = vmatpush1.msra.mxu0 0.0
        %7991 = vmatprep.subr.mxu0 0.0
        %7992 = vmatpush1.msra.mxu0 0.0
        %7993 = vmatprep.subr.mxu0 0.0
        %7994 = vmatpush1.msra.mxu0 0.0
        %7995 = vmatprep.subr.mxu0 0.0
        %7996 = vmatpush1.msra.mxu0 %v3579
        %7997 = vmatprep.subr.mxu0 0.0
        %7998 = vmatpush1.msra.mxu0 %v3578
        %7999 = vmatprep.subr.mxu0 0.0
        %8000 = vmatpush1.msra.mxu0 %v3577
        %8001 = vmatprep.subr.mxu0 0.0
        %8002 = vmatpush1.msra.mxu0 %v3576
        %8003 = vmatprep.subr.mxu0 0.0
        %8004 = vmatpush1.msra.mxu0 %v3575
        %8005 = vmatprep.subr.mxu0 0.0
        %8006 = vmatpush1.msra.mxu0 %v3574
        %8007 = vmatprep.subr.mxu0 0.0
        %8008 = vmatpush1.msra.mxu0 %v3573
        %8009 = vmatprep.subr.mxu0 0.0
        %8010 = vmatpush1.msra.mxu0 %v3572
        %8011 = vmatprep.subr.mxu0 0.0
        %8012 = vmatpush2.msra.mxu0 0.0
        %8013 = vmatprep.subr.mxu0 0.0
        %8014 = vmatpush2.msra.mxu0 0.0
        %8015 = vmatprep.subr.mxu0 0.0
        %8016 = vmatpush2.msra.mxu0 0.0
        %8017 = vmatprep.subr.mxu0 0.0
        %8018 = vmatpush2.msra.mxu0 0.0
        %8019 = vmatprep.subr.mxu0 0.0
        %8020 = vmatpush2.msra.mxu0 0.0
        %8021 = vmatprep.subr.mxu0 0.0
        %8022 = vmatpush2.msra.mxu0 0.0
        %8023 = vmatprep.subr.mxu0 0.0
        %8024 = vmatpush2.msra.mxu0 0.0
        %8025 = vmatprep.subr.mxu0 0.0
        %8026 = vmatpush2.msra.mxu0 0.0
        %8027 = vmatprep.subr.mxu0 0.0
        %8028 = vmatpush2.msra.mxu0 0.0
        %8029 = vmatprep.subr.mxu0 0.0
        %8030 = vmatpush2.msra.mxu0 0.0
        %8031 = vmatprep.subr.mxu0 0.0
        %8032 = vmatpush2.msra.mxu0 0.0
        %8033 = vmatprep.subr.mxu0 0.0
        %8034 = vmatpush2.msra.mxu0 0.0
        %8035 = vmatprep.subr.mxu0 0.0
        %8036 = vmatpush2.msra.mxu0 0.0
        %8037 = vmatprep.subr.mxu0 0.0
        %8038 = vmatpush2.msra.mxu0 0.0
        %8039 = vmatprep.subr.mxu0 0.0
        %8040 = vmatpush2.msra.mxu0 0.0
        %8041 = vmatprep.subr.mxu0 0.0
        %8042 = vmatpush2.msra.mxu0 0.0
        %8043 = vmatprep.mubr.f32.mxu0 0.0
        %8044 = vmatmul.mubr.f32.gmra.mxu0 %v7977
        %v8045 = vpop.f32.mrf.mxu0
        %v8046 = vadd.f32 0.0, %v8045
        %v8047 = vpop.f32.mrf.mxu0
        %8048 = vdwg.mxu0
        %8049 = vst [vmem:[%s3004] sm:$0xff] %v7896
        %8050 = vst [vmem:[%s3004 + $0x8] sm:$0xff] %v7897
        %8051 = vst [vmem:[%s3004 + $0x10] sm:$0xff] %v7898
        %8052 = vst [vmem:[%s3004 + $0x18] sm:$0xff] %v7899
        %8053 = vst [vmem:[%s3008] sm:$0xff] %v6820
        %8054 = vst.msk [vmem:[%s3012] sm:$0xf] %vm5082, %v5849
        %vm8055 = vcmask 254976
        %8056 = vst.msk [vmem:[%s3016] sm:$0x3] %vm8055, %v8046
        %p8057 = scmp.lt.s32.totalorder %s194, 1
        %s8058 = scalar_select %p8057, %s194, 1
        %s8059 = smul.addr %s8058, 4
        %s8060 = smul.addr %s8059, 8
        %s8061 = scalar_lea.vmem %s147, %s8060
        %p8062 = scmp.lt.s32.totalorder %s194, 1
        %s8063 = scalar_select %p8062, %s194, 1
        %s8064 = smul.addr %s8063, 8
        %s8065 = scalar_lea.vmem %s149, %s8064
        %p8066 = scmp.lt.s32.totalorder %s194, 1
        %s8067 = scalar_select %p8066, %s194, 1
        %s8068 = smul.addr %s8067, 4
        %s8069 = scalar_lea.vmem %s151, %s8068
        %p8070 = scmp.lt.s32.totalorder %s194, 1
        %s8071 = scalar_select %p8070, %s194, 1
        %s8072 = smul.addr %s8071, 2
        %s8073 = scalar_lea.vmem %s153, %s8072
        // Predicated region
        $region541: #{backbone_with_afpn_forward.1} parent=311 // pred_check
          %p8074 = pneg %p1750
        $region542: #{backbone_with_afpn_forward.1} parent=311 // pred_check_branch
          %8076 = sbr.rel (%p8074) target = $region544
        $region543: #{backbone_with_afpn_forward.1} parent=311 // pred_region
          _
        $region544: #{backbone_with_afpn_forward.1} parent=311 // pred_fallthru
          _
        // Predicated region
        $region545: #{backbone_with_afpn_forward.1} parent=311 // pred_check
          %p8077 = pneg %p1776
        $region546: #{backbone_with_afpn_forward.1} parent=311 // pred_check_branch
          %8079 = sbr.rel (%p8077) target = $region548
        $region547: #{backbone_with_afpn_forward.1} parent=311 // pred_region
          _
        $region548: #{backbone_with_afpn_forward.1} parent=311 // pred_fallthru
          _
        // Predicated region
        $region549: #{backbone_with_afpn_forward.1} parent=311 // pred_check
          %p8080 = pneg %p1802
        $region550: #{backbone_with_afpn_forward.1} parent=311 // pred_check_branch
          %8082 = sbr.rel (%p8080) target = $region552
        $region551: #{backbone_with_afpn_forward.1} parent=311 // pred_region
          _
        $region552: #{backbone_with_afpn_forward.1} parent=311 // pred_fallthru
          _
        // Predicated region
        $region553: #{backbone_with_afpn_forward.1} parent=311 // pred_check
          %p8083 = pneg %p1828
        $region554: #{backbone_with_afpn_forward.1} parent=311 // pred_check_branch
          %8085 = sbr.rel (%p8083) target = $region556
        $region555: #{backbone_with_afpn_forward.1} parent=311 // pred_region
          _
        $region556: #{backbone_with_afpn_forward.1} parent=311 // pred_fallthru
          _
      $region312: #{backbone_with_afpn_forward.1} parent=5 // pred_fallthru
        _
      %p8086 = scmp.le.s32.totalorder 2, %s189
      // Predicated region
      $region557: #{backbone_with_afpn_forward.1} parent=5 // pred_check
        %p8087 = pneg %p8086
      $region558: #{backbone_with_afpn_forward.1} parent=5 // pred_check_branch
        %8089 = sbr.rel (%p8087) target = $region560
      $region559: #{backbone_with_afpn_forward.1} parent=5 // pred_region
        %s8090 = ssub.s32 %s189, 2
        // Predicated region
        $region561: #{backbone_with_afpn_forward.1} parent=559 // pred_check
          %p8091 = pneg %p1756
        $region562: #{backbone_with_afpn_forward.1} parent=559 // pred_check_branch
          %8093 = sbr.rel (%p8091) target = $region564
        $region563: #{backbone_with_afpn_forward.1} parent=559 // pred_region
          %p8094 = scmp.lt.s32.totalorder %s195, 1
          %s8095 = scalar_select %p8094, %s195, 1
          %s8096 = smul.addr %s8095, 4
          %s8097 = smul.addr %s8096, 8
          %s8098 = scalar_lea.vmem %s147, %s8097
        $region564: #{backbone_with_afpn_forward.1} parent=559 // pred_fallthru
          _
        // Predicated region
        $region565: #{backbone_with_afpn_forward.1} parent=559 // pred_check
          %p8099 = pneg %p1782
        $region566: #{backbone_with_afpn_forward.1} parent=559 // pred_check_branch
          %8101 = sbr.rel (%p8099) target = $region568
        $region567: #{backbone_with_afpn_forward.1} parent=559 // pred_region
          %p8102 = scmp.lt.s32.totalorder %s195, 1
          %s8103 = scalar_select %p8102, %s195, 1
          %s8104 = smul.addr %s8103, 8
          %s8105 = scalar_lea.vmem %s149, %s8104
        $region568: #{backbone_with_afpn_forward.1} parent=559 // pred_fallthru
          _
        // Predicated region
        $region569: #{backbone_with_afpn_forward.1} parent=559 // pred_check
          %p8106 = pneg %p1808
        $region570: #{backbone_with_afpn_forward.1} parent=559 // pred_check_branch
          %8108 = sbr.rel (%p8106) target = $region572
        $region571: #{backbone_with_afpn_forward.1} parent=559 // pred_region
          %p8109 = scmp.lt.s32.totalorder %s195, 1
          %s8110 = scalar_select %p8109, %s195, 1
          %s8111 = smul.addr %s8110, 4
          %s8112 = scalar_lea.vmem %s151, %s8111
        $region572: #{backbone_with_afpn_forward.1} parent=559 // pred_fallthru
          _
        // Predicated region
        $region573: #{backbone_with_afpn_forward.1} parent=559 // pred_check
          %p8113 = pneg %p1834
        $region574: #{backbone_with_afpn_forward.1} parent=559 // pred_check_branch
          %8115 = sbr.rel (%p8113) target = $region576
        $region575: #{backbone_with_afpn_forward.1} parent=559 // pred_region
          %p8116 = scmp.lt.s32.totalorder %s195, 1
          %s8117 = scalar_select %p8116, %s195, 1
          %s8118 = smul.addr %s8117, 2
          %s8119 = scalar_lea.vmem %s153, %s8118
        $region576: #{backbone_with_afpn_forward.1} parent=559 // pred_fallthru
          _
      $region560: #{backbone_with_afpn_forward.1} parent=5 // pred_fallthru
        _
    $region6: #{backbone_with_afpn_forward.1} parent=1 // loop_footer
      %s193 = sadd.s32 1, %s189
    $region7: #{backbone_with_afpn_forward.1} parent=1 // loop_footer_branch
      %188 = sbr.rel target = $region3
    $region8: #{backbone_with_afpn_forward.1} parent=1 // loop_exit
      _
    %8120 = vsyncpa [#allocation3], 1
    %s8121 = scalar_lea.sflag [#allocation3], 1
    %8122 = vsyncpa %s8121, 1
    %8123 = vsyncpa [#allocation5], 1
    %8124 = vsyncpa [#allocation8], 1
    %8125 = vsyncpa [#allocation11], 1
    %8126 = vsyncpa [#allocation14], 1
    %8127 = vsyncpa [#allocation17], 1
    %8128 = vsyncpa [#allocation20], 1
    %8129 = vsyncpa [#allocation23], 1
    %8130 = vsyncpa [#allocation26], 1
    %8131 = vsyncpa [#allocation29], 1
    %8132 = vsyncpa [#allocation32], 1
    %8133 = vsyncpa [#allocation35], 1
    %8134 = vsyncpa [#allocation38], 1
    %8135 = vsyncpa [#allocation41], 1
    %8136 = vsyncpa [#allocation44], 1
    %8137 = vsyncpa [#allocation47], 1
    %8138 = vsyncpa [#allocation50], 1
    %8139 = vsyncpa [#allocation53], 1
    %8140 = vsyncpa [#allocation56], 1
    %8141 = vsyncpa [#allocation59], 1
    %8142 = vsyncpa [#allocation62], 1
    %8143 = vsyncpa [#allocation65], 1
    %8144 = vsyncpa [#allocation68], 1
    %8145 = vsyncpa [#allocation71], 1
    %8146 = vsyncpa [#allocation74], 1
    %8147 = vsyncpa [#allocation77], 1
    %8148 = vsyncpa [#allocation80], 1
    %8149 = vsyncpa [#allocation83], 1
    %8150 = vsyncpa [#allocation86], 1

</llo_original>
